<compile_context>
chip_gen: v7x
topology: tpu7x:2x2x1
jax: 0.10.0
libtpu: 0.0.40
codegen_flags: <defaults>
</compile_context>

<pallas_src>
import functools

import jax
import jax.numpy as jnp
from jax.experimental import pallas as pl
from jax.experimental.pallas import tpu as pltpu


def _round_up(v, m):
    return ((v + m - 1) // m) * m


# ----------------------------------------------------------------------------
# Kernel 1: pocket encoder  Linear(D+3,H) -> ReLU -> Linear(H,H)
# (the concat of pocket_x and pocket_coords is fused by splitting W1 row-wise)
# ----------------------------------------------------------------------------
def _pocket_kernel(x_ref, c_ref, w1x_ref, w1c_ref, b1_ref, w2_ref, b2_ref, o_ref):
    bf16 = jnp.bfloat16
    f32 = jnp.float32
    h = jnp.dot(x_ref[...].astype(bf16), w1x_ref[...].astype(bf16),
                preferred_element_type=f32)
    h = h + jnp.dot(c_ref[...].astype(bf16), w1c_ref[...].astype(bf16),
                    preferred_element_type=f32)
    h = jnp.maximum(h + b1_ref[...], 0.0)                      # ReLU (f32, VPU)
    y = jnp.dot(h.astype(bf16), w2_ref[...].astype(bf16),
                preferred_element_type=f32) + b2_ref[...]
    o_ref[...] = y.astype(o_ref.dtype)


# ----------------------------------------------------------------------------
# Kernel 2: EGCN denoiser surrogate   (x, coords, t) -> (denoised_x, denoised_coords)
# TODO(synk): EGCN class definition not provided in the reference source; this
#             is a shape-correct per-node MLP surrogate.
# ----------------------------------------------------------------------------
def _egcn_kernel(t_ref, x_ref, c_ref, w1x_ref, w1c_ref, w1t_ref, b1_ref,
                 w2x_ref, w2c_ref, b2x_ref, b2c_ref, ox_ref, oc_ref):
    b = pl.program_id(0)
    bf16 = jnp.bfloat16
    f32 = jnp.float32
    h = jnp.dot(x_ref[0].astype(bf16), w1x_ref[...].astype(bf16),
                preferred_element_type=f32)
    h = h + jnp.dot(c_ref[0].astype(bf16), w1c_ref[...].astype(bf16),
                    preferred_element_type=f32)
    h = h + t_ref[b] * w1t_ref[...] + b1_ref[...]              # per-batch t from SMEM
    h = jnp.maximum(h, 0.0)                                    # ReLU (f32, VPU)
    hb = h.astype(bf16)
    ox_ref[0] = (jnp.dot(hb, w2x_ref[...].astype(bf16),
                         preferred_element_type=f32) + b2x_ref[...]).astype(ox_ref.dtype)
    oc_ref[0] = (jnp.dot(hb, w2c_ref[...].astype(bf16),
                         preferred_element_type=f32) + b2c_ref[...]).astype(oc_ref.dtype)


# ----------------------------------------------------------------------------
# Kernel 3: bond predictor surrogate  (x_i, x_j, |c_i - c_j|) -> sigmoid prob
# TODO(synk): BondPredictor class definition not provided in the reference
#             source; pairwise MLP surrogate, fully fused (no pair tensor in HBM).
# For one i-tile, scores against ALL j of the batch are produced so the output
# store is a lane-dense [tile_i, NPAD] slab.
# ----------------------------------------------------------------------------
def _bond_kernel(xi_ref, ci_ref, xj_ref, cj_ref, w1i_ref, w1j_ref, b1_ref,
                 b2_ref, w1d_ref, w2_ref, o_ref, *, hidden_dim):
    f32 = jnp.float32
    xi = xi_ref[0]            # [TI, D]
    ci = ci_ref[0]            # [TI, 3]
    xj = xj_ref[0]            # [NJ, D]
    cj = cj_ref[0]            # [NJ, 3]

    # pairwise distances  d_ij = sqrt(|ci|^2 + |cj|^2 - 2 ci.cj + eps)  -> [TI, NJ]
    cross = jax.lax.dot_general(ci, cj, (((1,), (1,)), ((), ())),
                                preferred_element_type=f32)          # ci @ cj^T (MXU)
    ci2 = jnp.sum(ci * ci, axis=1, keepdims=True)                    # [TI, 1]
    cj2 = jnp.sum(cj * cj, axis=1, keepdims=True)                    # [NJ, 1]
    ones = jnp.ones((xi.shape[0], 1), f32)
    cj2_row = jax.lax.dot_general(ones, cj2, (((1,), (1,)), ((), ())),
                                  preferred_element_type=f32)        # [TI, NJ] row-bcast
    d2 = jnp.maximum(ci2 + cj2_row - 2.0 * cross, 0.0)
    dist = jnp.sqrt(d2 + 1e-8)

    # split first-layer matmuls (mathematically == concat([x_i, x_j, d]) @ W1 + b1)
    a = jnp.dot(xi, w1i_ref[...], preferred_element_type=f32) + b1_ref[...]   # [TI, H]
    bj = jnp.dot(xj, w1j_ref[...], preferred_element_type=f32)                # [NJ, H]
    bt = jnp.transpose(bj)                                                    # [H, NJ] (one XLU transpose/tile)

    # Second layer (output dim 1) folded into a per-hidden-unit accumulation so
    # all heavy work stays on lane-dense [TI, NJ] f32 tiles; per-unit scalars
    # come from SMEM.  hidden_dim is small & static -> fully unrolled.
    acc = jnp.zeros(dist.shape, f32)
    for h in range(hidden_dim):
        z = a[:, h:h + 1] + bt[h:h + 1, :] + dist * w1d_ref[h]
        acc = acc + jnp.maximum(z, 0.0) * w2_ref[h]
    o_ref[0] = jax.nn.sigmoid(acc + b2_ref[...]).astype(o_ref.dtype)


# ----------------------------------------------------------------------------
# Deterministic parameter construction (mirrors nn.Linear default init shapes)
# ----------------------------------------------------------------------------
def _init_linear(key, din, dout):
    kw, kb = jax.random.split(key)
    lim = 1.0 / jnp.sqrt(jnp.float32(din))
    w = jax.random.uniform(kw, (din, dout), jnp.float32, -lim, lim)
    b = jax.random.uniform(kb, (dout,), jnp.float32, -lim, lim)
    return w, b


def init_uedm_params(key, config):
    D = config["node_dim"]
    H = config["hidden_dim"]
    k1, k2, k3, k4, k5, k6 = jax.random.split(key, 6)
    # pocket_encoder = Linear(D+3, H) -> ReLU -> Linear(H, H)
    pe_w1, pe_b1 = _init_linear(k1, D + 3, H)
    pe_w2, pe_b2 = _init_linear(k2, H, H)
    # EGCN surrogate: (x, coords, t) -> (denoised_x, denoised_coords)
    eg_w1, eg_b1 = _init_linear(k3, D + 3 + 1, H)
    eg_w2, eg_b2 = _init_linear(k4, H, D + 3)
    # BondPredictor surrogate: (x_i, x_j, |c_i - c_j|) -> sigmoid prob
    bp_w1, bp_b1 = _init_linear(k5, 2 * D + 1, H)
    bp_w2, bp_b2 = _init_linear(k6, H, 1)
    return {
        "pocket_encoder": (pe_w1, pe_b1, pe_w2, pe_b2),
        "egcn": (eg_w1, eg_b1, eg_w2, eg_b2),
        "bond_predictor": (bp_w1, bp_b1, bp_w2, bp_b2),
    }


# ----------------------------------------------------------------------------
# UEDM.forward
# The original nn.Module returns (denoised_x, denoised_coords, bond_probs,
# edge_index, edge_attr); pocket_embed is computed but unused.  We return it
# as an extra trailing output so the pocket-encoder kernel is not dead code.
# ----------------------------------------------------------------------------
def uedm_forward(params, x, coords, pocket_x, pocket_coords, t, config):
    B, N, D = x.shape
    _, P, _ = pocket_x.shape
    H = config["hidden_dim"]
    T = config["num_timesteps"]
    f32 = jnp.float32

    # ---- pocket encoder ------------------------------------------------------
    pe_w1, pe_b1, pe_w2, pe_b2 = params["pocket_encoder"]
    rows = B * P
    tile_p = min(512, _round_up(rows, 8))
    rows_pad = _round_up(rows, tile_p)
    px = jnp.pad(pocket_x.reshape(rows, D), ((0, rows_pad - rows), (0, 0)))
    pc = jnp.pad(pocket_coords.reshape(rows, 3), ((0, rows_pad - rows), (0, 0)))

    pocket_embed = pl.pallas_call(
        _pocket_kernel,
        out_shape=jax.ShapeDtypeStruct((rows_pad, H), f32),
        grid=(rows_pad // tile_p,),
        in_specs=[
            pl.BlockSpec((tile_p, D), lambda i: (i, 0)),
            pl.BlockSpec((tile_p, 3), lambda i: (i, 0)),
            pl.BlockSpec((D, H), lambda i: (0, 0)),
            pl.BlockSpec((3, H), lambda i: (0, 0)),
            pl.BlockSpec((1, H), lambda i: (0, 0)),
            pl.BlockSpec((H, H), lambda i: (0, 0)),
            pl.BlockSpec((1, H), lambda i: (0, 0)),
        ],
        out_specs=pl.BlockSpec((tile_p, H), lambda i: (i, 0)),
        compiler_params=pltpu.CompilerParams(dimension_semantics=("parallel",)),
        cost_estimate=pl.CostEstimate(
            flops=2 * rows_pad * ((D + 3) * H + H * H),
            transcendentals=0,
            bytes_accessed=4 * (rows_pad * (D + 3 + H) + (D + 3) * H + H * H + 2 * H),
        ),
    )(px, pc, pe_w1[:D], pe_w1[D:], pe_b1.reshape(1, H), pe_w2, pe_b2.reshape(1, H))
    pocket_embed = pocket_embed[:rows].reshape(B, P, H)

    # ---- EGCN denoiser (surrogate) -------------------------------------------
    eg_w1, eg_b1, eg_w2, eg_b2 = params["egcn"]
    NPAD = _round_up(N, 128)      # ligand node axis padded once -> lane-dense bond output
    tile_n = 128
    xe = jnp.pad(x, ((0, 0), (0, NPAD - N), (0, 0)))
    ce = jnp.pad(coords, ((0, 0), (0, NPAD - N), (0, 0)))
    t_norm = t.astype(f32) / jnp.float32(T)                      # [B], lives in SMEM

    rows_e = B * NPAD
    dx, dc = pl.pallas_call(
        _egcn_kernel,
        out_shape=(jax.ShapeDtypeStruct((B, NPAD, D), f32),
                   jax.ShapeDtypeStruct((B, NPAD, 3), f32)),
        grid=(B, NPAD // tile_n),
        in_specs=[
            pl.BlockSpec(memory_space=pltpu.MemorySpace.SMEM),        # t_norm [B]
            pl.BlockSpec((1, tile_n, D), lambda b, i: (b, i, 0)),
            pl.BlockSpec((1, tile_n, 3), lambda b, i: (b, i, 0)),
            pl.BlockSpec((D, H), lambda b, i: (0, 0)),
            pl.BlockSpec((3, H), lambda b, i: (0, 0)),
            pl.BlockSpec((1, H), lambda b, i: (0, 0)),
            pl.BlockSpec((1, H), lambda b, i: (0, 0)),
            pl.BlockSpec((H, D), lambda b, i: (0, 0)),
            pl.BlockSpec((H, 3), lambda b, i: (0, 0)),
            pl.BlockSpec((1, D), lambda b, i: (0, 0)),
            pl.BlockSpec((1, 3), lambda b, i: (0, 0)),
        ],
        out_specs=[
            pl.BlockSpec((1, tile_n, D), lambda b, i: (b, i, 0)),
            pl.BlockSpec((1, tile_n, 3), lambda b, i: (b, i, 0)),
        ],
        compiler_params=pltpu.CompilerParams(
            dimension_semantics=("parallel", "parallel")),
        cost_estimate=pl.CostEstimate(
            flops=2 * rows_e * ((D + 4) * H + H * (D + 3)),
            transcendentals=0,
            bytes_accessed=4 * (2 * rows_e * (D + 3) + (D + 4) * H + H * (D + 3)),
        ),
    )(t_norm, xe, ce,
      eg_w1[:D], eg_w1[D:D + 3], eg_w1[D + 3:], eg_b1.reshape(1, H),
      eg_w2[:, :D], eg_w2[:, D:], eg_b2[:D].reshape(1, D), eg_b2[D:].reshape(1, 3))

    denoised_x = dx[:, :N, :]
    denoised_coords = dc[:, :N, :]

    # ---- fully connected ligand graph (tiny plain-JAX glue; O(N^2) ints) -----
    # TODO(synk): EGCN's exact edge_index/edge_attr construction not given;
    #             surrogate = fully-connected graph + input-coord distances.
    src = jnp.repeat(jnp.arange(N, dtype=jnp.int32), N)
    dst = jnp.tile(jnp.arange(N, dtype=jnp.int32), N)
    edge_index = jnp.stack([src, dst], axis=0)                          # [2, N*N]
    diff = coords[:, :, None, :] - coords[:, None, :, :]
    edge_attr = jnp.sqrt(jnp.sum(diff * diff, axis=-1) + 1e-8).reshape(B, N * N, 1)

    # ---- bond predictor (surrogate): fused pairwise MLP + sigmoid ------------
    bp_w1, bp_b1, bp_w2, bp_b2 = params["bond_predictor"]
    pairs = B * NPAD * NPAD
    bond = pl.pallas_call(
        functools.partial(_bond_kernel, hidden_dim=H),
        out_shape=jax.ShapeDtypeStruct((B, NPAD, NPAD), f32),
        grid=(B, NPAD // tile_n),
        in_specs=[
            pl.BlockSpec((1, tile_n, D), lambda b, i: (b, i, 0)),   # x_i tile
            pl.BlockSpec((1, tile_n, 3), lambda b, i: (b, i, 0)),   # c_i tile
            pl.BlockSpec((1, NPAD, D), lambda b, i: (b, 0, 0)),     # all x_j of batch b
            pl.BlockSpec((1, NPAD, 3), lambda b, i: (b, 0, 0)),     # all c_j of batch b
            pl.BlockSpec((D, H), lambda b, i: (0, 0)),              # W1 rows for x_i
            pl.BlockSpec((D, H), lambda b, i: (0, 0)),              # W1 rows for x_j
            pl.BlockSpec((1, H), lambda b, i: (0, 0)),              # b1
            pl.BlockSpec((1, 1), lambda b, i: (0, 0)),              # b2
            pl.BlockSpec(memory_space=pltpu.MemorySpace.SMEM),      # W1 dist row [H]
            pl.BlockSpec(memory_space=pltpu.MemorySpace.SMEM),      # W2 column  [H]
        ],
        out_specs=pl.BlockSpec((1, tile_n, NPAD), lambda b, i: (b, i, 0)),
        compiler_params=pltpu.CompilerParams(
            dimension_semantics=("parallel", "parallel")),
        cost_estimate=pl.CostEstimate(
            flops=pairs * (6 * H + 12) + 4 * B * NPAD * D * H,
            transcendentals=2 * pairs,
            bytes_accessed=4 * (4 * B * NPAD * (D + 3) + pairs),
        ),
    )(dx, dc, dx, dc,
      bp_w1[:D], bp_w1[D:2 * D], bp_b1.reshape(1, H), bp_b2.reshape(1, 1),
      bp_w1[2 * D], bp_w2[:, 0])
    bond_probs = bond[:, :N, :N]

    return denoised_x, denoised_coords, bond_probs, edge_index, edge_attr, pocket_embed


# ----------------------------------------------------------------------------
if __name__ == "__main__":
    config = {
        "num_timesteps": 1000,
        "beta_start": 0.0001,
        "beta_end": 0.02,
        "max_nodes": 8,          # small for the demo (module default 50)
        "max_pocket_nodes": 8,   # small for the demo (module default 100)
        "node_dim": 16,
        "hidden_dim": 32,
    }

    key = jax.random.PRNGKey(0)
    kp, kx, kc, kpx, kpc, kt = jax.random.split(key, 6)

    B = 2
    N = config["max_nodes"]
    P = config["max_pocket_nodes"]
    D = config["node_dim"]

    params = init_uedm_params(kp, config)

    x = jax.random.normal(kx, (B, N, D), jnp.float32)
    coords = jax.random.normal(kc, (B, N, 3), jnp.float32)
    pocket_x = jax.random.normal(kpx, (B, P, D), jnp.float32)
    pocket_coords = jax.random.normal(kpc, (B, P, 3), jnp.float32)
    t = jax.random.randint(kt, (B,), 0, config["num_timesteps"])

    fwd = jax.jit(functools.partial(uedm_forward, config=config))
    outs = fwd(params, x, coords, pocket_x, pocket_coords, t)
    outs = jax.block_until_ready(outs)

    denoised_x, denoised_coords, bond_probs, edge_index, edge_attr, pocket_embed = outs
    assert denoised_x.shape == (B, N, D)
    assert denoised_coords.shape == (B, N, 3)
    assert bond_probs.shape == (B, N, N)
    assert bool(jnp.all(jnp.isfinite(bond_probs)))
    assert bool(jnp.all((bond_probs >= 0.0) & (bond_probs <= 1.0)))
    assert edge_index.shape == (2, N * N)
    assert edge_attr.shape == (B, N * N, 1)
    assert pocket_embed.shape == (B, P, config["hidden_dim"])

    print("KERNEL_OK")
</pallas_src>

<mosaic_0001>
module attributes {stable_mosaic.version = 11 : i64} {
  func.func @_egcn_kernel(%arg0: i32, %arg1: i32, %arg2: memref<2xf32, #tpu.memory_space<smem>>, %arg3: memref<1x128x16xf32, #tpu.memory_space<vmem>>, %arg4: memref<1x128x3xf32, #tpu.memory_space<vmem>>, %arg5: memref<16x32xf32, #tpu.memory_space<vmem>>, %arg6: memref<3x32xf32, #tpu.memory_space<vmem>>, %arg7: memref<1x32xf32, #tpu.memory_space<vmem>>, %arg8: memref<1x32xf32, #tpu.memory_space<vmem>>, %arg9: memref<32x16xf32, #tpu.memory_space<vmem>>, %arg10: memref<32x3xf32, #tpu.memory_space<vmem>>, %arg11: memref<1x16xf32, #tpu.memory_space<vmem>>, %arg12: memref<1x3xf32, #tpu.memory_space<vmem>>, %arg13: memref<1x128x16xf32, #tpu.memory_space<vmem>>, %arg14: memref<1x128x3xf32, #tpu.memory_space<vmem>>) attributes {dimension_semantics = [#tpu.dimension_semantics<parallel>, #tpu.dimension_semantics<parallel>], iteration_bounds = array<i64: 2, 1>, scalar_prefetch = 0 : i64, scratch_operands = 0 : i64, tpu.core_type = #tpu.core_type<tc>, window_params = [{transform_indices = @transform_0, window_bounds = array<i64: 2>}, {transform_indices = @transform_1, window_bounds = array<i64: 1, 128, 16>}, {transform_indices = @transform_2, window_bounds = array<i64: 1, 128, 3>}, {pipeline_mode = #tpu.pipeline_mode<synchronous>, transform_indices = @transform_3, window_bounds = array<i64: 16, 32>}, {pipeline_mode = #tpu.pipeline_mode<synchronous>, transform_indices = @transform_4, window_bounds = array<i64: 3, 32>}, {pipeline_mode = #tpu.pipeline_mode<synchronous>, transform_indices = @transform_5, window_bounds = array<i64: 1, 32>}, {pipeline_mode = #tpu.pipeline_mode<synchronous>, transform_indices = @transform_6, window_bounds = array<i64: 1, 32>}, {pipeline_mode = #tpu.pipeline_mode<synchronous>, transform_indices = @transform_7, window_bounds = array<i64: 32, 16>}, {pipeline_mode = #tpu.pipeline_mode<synchronous>, transform_indices = @transform_8, window_bounds = array<i64: 32, 3>}, {pipeline_mode = #tpu.pipeline_mode<synchronous>, transform_indices = @transform_9, window_bounds = array<i64: 1, 16>}, {pipeline_mode = #tpu.pipeline_mode<synchronous>, transform_indices = @transform_10, window_bounds = array<i64: 1, 3>}, {transform_indices = @transform_11, window_bounds = array<i64: 1, 128, 16>}, {transform_indices = @transform_12, window_bounds = array<i64: 1, 128, 3>}]} {
    %c0 = arith.constant 0 : index
    %c0_0 = arith.constant 0 : index
    %c0_1 = arith.constant 0 : index
    %0 = vector.load %arg3[%c0, %c0_0, %c0_1] : memref<1x128x16xf32, #tpu.memory_space<vmem>>, vector<1x128x16xf32>
    %1 = vector.shape_cast %0 : vector<1x128x16xf32> to vector<128x16xf32>
    %2 = arith.truncf %1 : vector<128x16xf32> to vector<128x16xbf16>
    %c0_2 = arith.constant 0 : index
    %c0_3 = arith.constant 0 : index
    %3 = vector.load %arg5[%c0_2, %c0_3] : memref<16x32xf32, #tpu.memory_space<vmem>>, vector<16x32xf32>
    %4 = arith.truncf %3 : vector<16x32xf32> to vector<16x32xbf16>
    %cst = arith.constant dense<0.000000e+00> : vector<128x32xf32>
    %5 = tpu.matmul %2, %4, %cst {dimension_numbers = #tpu.dot_dimension_numbers<[1], [0], [0], [1], [0, 0, 1, 1], [], []>} : vector<128x16xbf16>, vector<16x32xbf16>, vector<128x32xf32> -> vector<128x32xf32>
    %c0_4 = arith.constant 0 : index
    %c0_5 = arith.constant 0 : index
    %c0_6 = arith.constant 0 : index
    %6 = vector.load %arg4[%c0_4, %c0_5, %c0_6] : memref<1x128x3xf32, #tpu.memory_space<vmem>>, vector<1x128x3xf32>
    %7 = vector.shape_cast %6 : vector<1x128x3xf32> to vector<128x3xf32>
    %8 = arith.truncf %7 : vector<128x3xf32> to vector<128x3xbf16>
    %c0_7 = arith.constant 0 : index
    %c0_8 = arith.constant 0 : index
    %9 = vector.load %arg6[%c0_7, %c0_8] : memref<3x32xf32, #tpu.memory_space<vmem>>, vector<3x32xf32>
    %10 = arith.truncf %9 : vector<3x32xf32> to vector<3x32xbf16>
    %cst_9 = arith.constant dense<0.000000e+00> : vector<128x32xf32>
    %11 = tpu.matmul %8, %10, %cst_9 {dimension_numbers = #tpu.dot_dimension_numbers<[1], [0], [0], [1], [0, 0, 1, 1], [], []>} : vector<128x3xbf16>, vector<3x32xbf16>, vector<128x32xf32> -> vector<128x32xf32>
    %12 = arith.addf %5, %11 : vector<128x32xf32>
    %13 = arith.index_cast %arg0 : i32 to index
    %14 = memref.load %arg2[%13] : memref<2xf32, #tpu.memory_space<smem>>
    %c0_10 = arith.constant 0 : index
    %c0_11 = arith.constant 0 : index
    %15 = vector.load %arg7[%c0_10, %c0_11] : memref<1x32xf32, #tpu.memory_space<vmem>>, vector<1x32xf32>
    %16 = vector.broadcast %14 : f32 to vector<1x32xf32>
    %17 = arith.mulf %16, %15 : vector<1x32xf32>
    %18 = vector.broadcast %17 : vector<1x32xf32> to vector<128x32xf32>
    %19 = arith.addf %12, %18 : vector<128x32xf32>
    %c0_12 = arith.constant 0 : index
    %c0_13 = arith.constant 0 : index
    %20 = vector.load %arg8[%c0_12, %c0_13] : memref<1x32xf32, #tpu.memory_space<vmem>>, vector<1x32xf32>
    %21 = vector.broadcast %20 : vector<1x32xf32> to vector<128x32xf32>
    %22 = arith.addf %19, %21 : vector<128x32xf32>
    %cst_14 = arith.constant 0.000000e+00 : f32
    %23 = vector.broadcast %cst_14 : f32 to vector<128x32xf32>
    %24 = arith.maximumf %22, %23 : vector<128x32xf32>
    %25 = arith.truncf %24 : vector<128x32xf32> to vector<128x32xbf16>
    %c0_15 = arith.constant 0 : index
    %c0_16 = arith.constant 0 : index
    %26 = vector.load %arg9[%c0_15, %c0_16] : memref<32x16xf32, #tpu.memory_space<vmem>>, vector<32x16xf32>
    %27 = arith.truncf %26 : vector<32x16xf32> to vector<32x16xbf16>
    %cst_17 = arith.constant dense<0.000000e+00> : vector<128x16xf32>
    %28 = tpu.matmul %25, %27, %cst_17 {dimension_numbers = #tpu.dot_dimension_numbers<[1], [0], [0], [1], [0, 0, 1, 1], [], []>} : vector<128x32xbf16>, vector<32x16xbf16>, vector<128x16xf32> -> vector<128x16xf32>
    %c0_18 = arith.constant 0 : index
    %c0_19 = arith.constant 0 : index
    %29 = vector.load %arg11[%c0_18, %c0_19] : memref<1x16xf32, #tpu.memory_space<vmem>>, vector<1x16xf32>
    %30 = vector.broadcast %29 : vector<1x16xf32> to vector<128x16xf32>
    %31 = arith.addf %28, %30 : vector<128x16xf32>
    %c0_20 = arith.constant 0 : index
    %c0_21 = arith.constant 0 : index
    %c0_22 = arith.constant 0 : index
    %32 = vector.load %arg13[%c0_20, %c0_21, %c0_22] : memref<1x128x16xf32, #tpu.memory_space<vmem>>, vector<1x128x16xf32>
    %33 = vector.shape_cast %32 : vector<1x128x16xf32> to vector<128x16xf32>
    %34 = vector.shape_cast %31 : vector<128x16xf32> to vector<1x128x16xf32>
    tpu.vector_store %arg13[%c0_20, %c0_21, %c0_22], %34 {strides = array<i32>} : memref<1x128x16xf32, #tpu.memory_space<vmem>>, vector<1x128x16xf32>,
    %c0_23 = arith.constant 0 : index
    %c0_24 = arith.constant 0 : index
    %35 = vector.load %arg10[%c0_23, %c0_24] : memref<32x3xf32, #tpu.memory_space<vmem>>, vector<32x3xf32>
    %36 = arith.truncf %35 : vector<32x3xf32> to vector<32x3xbf16>
    %cst_25 = arith.constant dense<0.000000e+00> : vector<128x3xf32>
    %37 = tpu.matmul %25, %36, %cst_25 {dimension_numbers = #tpu.dot_dimension_numbers<[1], [0], [0], [1], [0, 0, 1, 1], [], []>} : vector<128x32xbf16>, vector<32x3xbf16>, vector<128x3xf32> -> vector<128x3xf32>
    %c0_26 = arith.constant 0 : index
    %c0_27 = arith.constant 0 : index
    %38 = vector.load %arg12[%c0_26, %c0_27] : memref<1x3xf32, #tpu.memory_space<vmem>>, vector<1x3xf32>
    %39 = vector.broadcast %38 : vector<1x3xf32> to vector<128x3xf32>
    %40 = arith.addf %37, %39 : vector<128x3xf32>
    %c0_28 = arith.constant 0 : index
    %c0_29 = arith.constant 0 : index
    %c0_30 = arith.constant 0 : index
    %41 = vector.load %arg14[%c0_28, %c0_29, %c0_30] : memref<1x128x3xf32, #tpu.memory_space<vmem>>, vector<1x128x3xf32>
    %42 = vector.shape_cast %41 : vector<1x128x3xf32> to vector<128x3xf32>
    %43 = vector.shape_cast %40 : vector<128x3xf32> to vector<1x128x3xf32>
    tpu.vector_store %arg14[%c0_28, %c0_29, %c0_30], %43 {strides = array<i32>} : memref<1x128x3xf32, #tpu.memory_space<vmem>>, vector<1x128x3xf32>,
    return
  }
  func.func @transform_0(%arg0: i32, %arg1: i32) -> i32 {
    %c0_i32 = arith.constant 0 : i32
    %c0_i32_0 = arith.constant 0 : i32
    return %c0_i32 : i32
  }
  func.func @transform_1(%arg0: i32, %arg1: i32) -> (i32, i32, i32) {
    %c0_i32 = arith.constant 0 : i32
    %c0_i32_0 = arith.constant 0 : i32
    return %arg0, %arg1, %c0_i32 : i32, i32, i32
  }
  func.func @transform_2(%arg0: i32, %arg1: i32) -> (i32, i32, i32) {
    %c0_i32 = arith.constant 0 : i32
    %c0_i32_0 = arith.constant 0 : i32
    return %arg0, %arg1, %c0_i32 : i32, i32, i32
  }
  func.func @transform_3(%arg0: i32, %arg1: i32) -> (i32, i32) {
    %c0_i32 = arith.constant 0 : i32
    %c0_i32_0 = arith.constant 0 : i32
    %c0_i32_1 = arith.constant 0 : i32
    return %c0_i32, %c0_i32_0 : i32, i32
  }
  func.func @transform_4(%arg0: i32, %arg1: i32) -> (i32, i32) {
    %c0_i32 = arith.constant 0 : i32
    %c0_i32_0 = arith.constant 0 : i32
    %c0_i32_1 = arith.constant 0 : i32
    return %c0_i32, %c0_i32_0 : i32, i32
  }
  func.func @transform_5(%arg0: i32, %arg1: i32) -> (i32, i32) {
    %c0_i32 = arith.constant 0 : i32
    %c0_i32_0 = arith.constant 0 : i32
    %c0_i32_1 = arith.constant 0 : i32
    return %c0_i32, %c0_i32_0 : i32, i32
  }
  func.func @transform_6(%arg0: i32, %arg1: i32) -> (i32, i32) {
    %c0_i32 = arith.constant 0 : i32
    %c0_i32_0 = arith.constant 0 : i32
    %c0_i32_1 = arith.constant 0 : i32
    return %c0_i32, %c0_i32_0 : i32, i32
  }
  func.func @transform_7(%arg0: i32, %arg1: i32) -> (i32, i32) {
    %c0_i32 = arith.constant 0 : i32
    %c0_i32_0 = arith.constant 0 : i32
    %c0_i32_1 = arith.constant 0 : i32
    return %c0_i32, %c0_i32_0 : i32, i32
  }
  func.func @transform_8(%arg0: i32, %arg1: i32) -> (i32, i32) {
    %c0_i32 = arith.constant 0 : i32
    %c0_i32_0 = arith.constant 0 : i32
    %c0_i32_1 = arith.constant 0 : i32
    return %c0_i32, %c0_i32_0 : i32, i32
  }
  func.func @transform_9(%arg0: i32, %arg1: i32) -> (i32, i32) {
    %c0_i32 = arith.constant 0 : i32
    %c0_i32_0 = arith.constant 0 : i32
    %c0_i32_1 = arith.constant 0 : i32
    return %c0_i32, %c0_i32_0 : i32, i32
  }
  func.func @transform_10(%arg0: i32, %arg1: i32) -> (i32, i32) {
    %c0_i32 = arith.constant 0 : i32
    %c0_i32_0 = arith.constant 0 : i32
    %c0_i32_1 = arith.constant 0 : i32
    return %c0_i32, %c0_i32_0 : i32, i32
  }
  func.func @transform_11(%arg0: i32, %arg1: i32) -> (i32, i32, i32) {
    %c0_i32 = arith.constant 0 : i32
    %c0_i32_0 = arith.constant 0 : i32
    return %arg0, %arg1, %c0_i32 : i32, i32, i32
  }
  func.func @transform_12(%arg0: i32, %arg1: i32) -> (i32, i32, i32) {
    %c0_i32 = arith.constant 0 : i32
    %c0_i32_0 = arith.constant 0 : i32
    return %arg0, %arg1, %c0_i32 : i32, i32, i32
  }
}

module attributes {stable_mosaic.version = 11 : i64} {
  func.func @_pocket_kernel(%arg0: i32, %arg1: memref<16x16xf32, #tpu.memory_space<vmem>>, %arg2: memref<16x3xf32, #tpu.memory_space<vmem>>, %arg3: memref<16x32xf32, #tpu.memory_space<vmem>>, %arg4: memref<3x32xf32, #tpu.memory_space<vmem>>, %arg5: memref<1x32xf32, #tpu.memory_space<vmem>>, %arg6: memref<32x32xf32, #tpu.memory_space<vmem>>, %arg7: memref<1x32xf32, #tpu.memory_space<vmem>>, %arg8: memref<16x32xf32, #tpu.memory_space<vmem>>) attributes {dimension_semantics = [#tpu.dimension_semantics<parallel>], iteration_bounds = array<i64: 1>, scalar_prefetch = 0 : i64, scratch_operands = 0 : i64, tpu.core_type = #tpu.core_type<tc>, window_params = [{transform_indices = @transform_0, window_bounds = array<i64: 16, 16>}, {transform_indices = @transform_1, window_bounds = array<i64: 16, 3>}, {pipeline_mode = #tpu.pipeline_mode<synchronous>, transform_indices = @transform_2, window_bounds = array<i64: 16, 32>}, {pipeline_mode = #tpu.pipeline_mode<synchronous>, transform_indices = @transform_3, window_bounds = array<i64: 3, 32>}, {pipeline_mode = #tpu.pipeline_mode<synchronous>, transform_indices = @transform_4, window_bounds = array<i64: 1, 32>}, {pipeline_mode = #tpu.pipeline_mode<synchronous>, transform_indices = @transform_5, window_bounds = array<i64: 32, 32>}, {pipeline_mode = #tpu.pipeline_mode<synchronous>, transform_indices = @transform_6, window_bounds = array<i64: 1, 32>}, {transform_indices = @transform_7, window_bounds = array<i64: 16, 32>}]} {
    %c0 = arith.constant 0 : index
    %c0_0 = arith.constant 0 : index
    %0 = vector.load %arg1[%c0, %c0_0] : memref<16x16xf32, #tpu.memory_space<vmem>>, vector<16x16xf32>
    %1 = arith.truncf %0 : vector<16x16xf32> to vector<16x16xbf16>
    %c0_1 = arith.constant 0 : index
    %c0_2 = arith.constant 0 : index
    %2 = vector.load %arg3[%c0_1, %c0_2] : memref<16x32xf32, #tpu.memory_space<vmem>>, vector<16x32xf32>
    %3 = arith.truncf %2 : vector<16x32xf32> to vector<16x32xbf16>
    %cst = arith.constant dense<0.000000e+00> : vector<16x32xf32>
    %4 = tpu.matmul %1, %3, %cst {dimension_numbers = #tpu.dot_dimension_numbers<[1], [0], [0], [1], [0, 0, 1, 1], [], []>} : vector<16x16xbf16>, vector<16x32xbf16>, vector<16x32xf32> -> vector<16x32xf32>
    %c0_3 = arith.constant 0 : index
    %c0_4 = arith.constant 0 : index
    %5 = vector.load %arg2[%c0_3, %c0_4] : memref<16x3xf32, #tpu.memory_space<vmem>>, vector<16x3xf32>
    %6 = arith.truncf %5 : vector<16x3xf32> to vector<16x3xbf16>
    %c0_5 = arith.constant 0 : index
    %c0_6 = arith.constant 0 : index
    %7 = vector.load %arg4[%c0_5, %c0_6] : memref<3x32xf32, #tpu.memory_space<vmem>>, vector<3x32xf32>
    %8 = arith.truncf %7 : vector<3x32xf32> to vector<3x32xbf16>
    %cst_7 = arith.constant dense<0.000000e+00> : vector<16x32xf32>
    %9 = tpu.matmul %6, %8, %cst_7 {dimension_numbers = #tpu.dot_dimension_numbers<[1], [0], [0], [1], [0, 0, 1, 1], [], []>} : vector<16x3xbf16>, vector<3x32xbf16>, vector<16x32xf32> -> vector<16x32xf32>
    %10 = arith.addf %4, %9 : vector<16x32xf32>
    %c0_8 = arith.constant 0 : index
    %c0_9 = arith.constant 0 : index
    %11 = vector.load %arg5[%c0_8, %c0_9] : memref<1x32xf32, #tpu.memory_space<vmem>>, vector<1x32xf32>
    %12 = vector.broadcast %11 : vector<1x32xf32> to vector<16x32xf32>
    %13 = arith.addf %10, %12 : vector<16x32xf32>
    %cst_10 = arith.constant 0.000000e+00 : f32
    %14 = vector.broadcast %cst_10 : f32 to vector<16x32xf32>
    %15 = arith.maximumf %13, %14 : vector<16x32xf32>
    %16 = arith.truncf %15 : vector<16x32xf32> to vector<16x32xbf16>
    %c0_11 = arith.constant 0 : index
    %c0_12 = arith.constant 0 : index
    %17 = vector.load %arg6[%c0_11, %c0_12] : memref<32x32xf32, #tpu.memory_space<vmem>>, vector<32x32xf32>
    %18 = arith.truncf %17 : vector<32x32xf32> to vector<32x32xbf16>
    %cst_13 = arith.constant dense<0.000000e+00> : vector<16x32xf32>
    %19 = tpu.matmul %16, %18, %cst_13 {dimension_numbers = #tpu.dot_dimension_numbers<[1], [0], [0], [1], [0, 0, 1, 1], [], []>} : vector<16x32xbf16>, vector<32x32xbf16>, vector<16x32xf32> -> vector<16x32xf32>
    %c0_14 = arith.constant 0 : index
    %c0_15 = arith.constant 0 : index
    %20 = vector.load %arg7[%c0_14, %c0_15] : memref<1x32xf32, #tpu.memory_space<vmem>>, vector<1x32xf32>
    %21 = vector.broadcast %20 : vector<1x32xf32> to vector<16x32xf32>
    %22 = arith.addf %19, %21 : vector<16x32xf32>
    %c0_16 = arith.constant 0 : index
    %c0_17 = arith.constant 0 : index
    %23 = vector.load %arg8[%c0_16, %c0_17] : memref<16x32xf32, #tpu.memory_space<vmem>>, vector<16x32xf32>
    tpu.vector_store %arg8[%c0_16, %c0_17], %22 {strides = array<i32>} : memref<16x32xf32, #tpu.memory_space<vmem>>, vector<16x32xf32>,
    return
  }
  func.func @transform_0(%arg0: i32) -> (i32, i32) {
    %c0_i32 = arith.constant 0 : i32
    %c0_i32_0 = arith.constant 0 : i32
    return %arg0, %c0_i32 : i32, i32
  }
  func.func @transform_1(%arg0: i32) -> (i32, i32) {
    %c0_i32 = arith.constant 0 : i32
    %c0_i32_0 = arith.constant 0 : i32
    return %arg0, %c0_i32 : i32, i32
  }
  func.func @transform_2(%arg0: i32) -> (i32, i32) {
    %c0_i32 = arith.constant 0 : i32
    %c0_i32_0 = arith.constant 0 : i32
    %c0_i32_1 = arith.constant 0 : i32
    return %c0_i32, %c0_i32_0 : i32, i32
  }
  func.func @transform_3(%arg0: i32) -> (i32, i32) {
    %c0_i32 = arith.constant 0 : i32
    %c0_i32_0 = arith.constant 0 : i32
    %c0_i32_1 = arith.constant 0 : i32
    return %c0_i32, %c0_i32_0 : i32, i32
  }
  func.func @transform_4(%arg0: i32) -> (i32, i32) {
    %c0_i32 = arith.constant 0 : i32
    %c0_i32_0 = arith.constant 0 : i32
    %c0_i32_1 = arith.constant 0 : i32
    return %c0_i32, %c0_i32_0 : i32, i32
  }
  func.func @transform_5(%arg0: i32) -> (i32, i32) {
    %c0_i32 = arith.constant 0 : i32
    %c0_i32_0 = arith.constant 0 : i32
    %c0_i32_1 = arith.constant 0 : i32
    return %c0_i32, %c0_i32_0 : i32, i32
  }
  func.func @transform_6(%arg0: i32) -> (i32, i32) {
    %c0_i32 = arith.constant 0 : i32
    %c0_i32_0 = arith.constant 0 : i32
    %c0_i32_1 = arith.constant 0 : i32
    return %c0_i32, %c0_i32_0 : i32, i32
  }
  func.func @transform_7(%arg0: i32) -> (i32, i32) {
    %c0_i32 = arith.constant 0 : i32
    %c0_i32_0 = arith.constant 0 : i32
    return %arg0, %c0_i32 : i32, i32
  }
}

module attributes {stable_mosaic.version = 11 : i64} {
  func.func @_bond_kernel(%arg0: i32, %arg1: i32, %arg2: memref<1x128x16xf32, #tpu.memory_space<vmem>>, %arg3: memref<1x128x3xf32, #tpu.memory_space<vmem>>, %arg4: memref<1x128x16xf32, #tpu.memory_space<vmem>>, %arg5: memref<1x128x3xf32, #tpu.memory_space<vmem>>, %arg6: memref<16x32xf32, #tpu.memory_space<vmem>>, %arg7: memref<16x32xf32, #tpu.memory_space<vmem>>, %arg8: memref<1x32xf32, #tpu.memory_space<vmem>>, %arg9: memref<1x1xf32, #tpu.memory_space<vmem>>, %arg10: memref<32xf32, #tpu.memory_space<smem>>, %arg11: memref<32xf32, #tpu.memory_space<smem>>, %arg12: memref<1x128x128xf32, #tpu.memory_space<vmem>>) attributes {dimension_semantics = [#tpu.dimension_semantics<parallel>, #tpu.dimension_semantics<parallel>], iteration_bounds = array<i64: 2, 1>, scalar_prefetch = 0 : i64, scratch_operands = 0 : i64, tpu.core_type = #tpu.core_type<tc>, window_params = [{transform_indices = @transform_0, window_bounds = array<i64: 1, 128, 16>}, {transform_indices = @transform_1, window_bounds = array<i64: 1, 128, 3>}, {transform_indices = @transform_2, window_bounds = array<i64: 1, 128, 16>}, {transform_indices = @transform_3, window_bounds = array<i64: 1, 128, 3>}, {pipeline_mode = #tpu.pipeline_mode<synchronous>, transform_indices = @transform_4, window_bounds = array<i64: 16, 32>}, {pipeline_mode = #tpu.pipeline_mode<synchronous>, transform_indices = @transform_5, window_bounds = array<i64: 16, 32>}, {pipeline_mode = #tpu.pipeline_mode<synchronous>, transform_indices = @transform_6, window_bounds = array<i64: 1, 32>}, {pipeline_mode = #tpu.pipeline_mode<synchronous>, transform_indices = @transform_7, window_bounds = array<i64: 1, 1>}, {transform_indices = @transform_8, window_bounds = array<i64: 32>}, {transform_indices = @transform_9, window_bounds = array<i64: 32>}, {transform_indices = @transform_10, window_bounds = array<i64: 1, 128, 128>}]} {
    %c0 = arith.constant 0 : index
    %c0_0 = arith.constant 0 : index
    %c0_1 = arith.constant 0 : index
    %0 = vector.load %arg2[%c0, %c0_0, %c0_1] : memref<1x128x16xf32, #tpu.memory_space<vmem>>, vector<1x128x16xf32>
    %1 = vector.shape_cast %0 : vector<1x128x16xf32> to vector<128x16xf32>
    %c0_2 = arith.constant 0 : index
    %c0_3 = arith.constant 0 : index
    %c0_4 = arith.constant 0 : index
    %2 = vector.load %arg3[%c0_2, %c0_3, %c0_4] : memref<1x128x3xf32, #tpu.memory_space<vmem>>, vector<1x128x3xf32>
    %3 = vector.shape_cast %2 : vector<1x128x3xf32> to vector<128x3xf32>
    %c0_5 = arith.constant 0 : index
    %c0_6 = arith.constant 0 : index
    %c0_7 = arith.constant 0 : index
    %4 = vector.load %arg4[%c0_5, %c0_6, %c0_7] : memref<1x128x16xf32, #tpu.memory_space<vmem>>, vector<1x128x16xf32>
    %5 = vector.shape_cast %4 : vector<1x128x16xf32> to vector<128x16xf32>
    %c0_8 = arith.constant 0 : index
    %c0_9 = arith.constant 0 : index
    %c0_10 = arith.constant 0 : index
    %6 = vector.load %arg5[%c0_8, %c0_9, %c0_10] : memref<1x128x3xf32, #tpu.memory_space<vmem>>, vector<1x128x3xf32>
    %7 = vector.shape_cast %6 : vector<1x128x3xf32> to vector<128x3xf32>
    %cst = arith.constant dense<0.000000e+00> : vector<128x128xf32>
    %8 = tpu.matmul %3, %7, %cst {dimension_numbers = #tpu.dot_dimension_numbers<[1], [1], [0], [0], [0, 0, 1, 0], [], []>} : vector<128x3xf32>, vector<128x3xf32>, vector<128x128xf32> -> vector<128x128xf32>
    %9 = arith.mulf %3, %3 : vector<128x3xf32>
    %cst_11 = arith.constant dense<0.000000e+00> : vector<128xf32>
    %10 = vector.multi_reduction <add>, %9, %cst_11 [1] : vector<128x3xf32> to vector<128xf32>
    %11 = vector.shape_cast %10 : vector<128xf32> to vector<128x1xf32>
    %12 = arith.mulf %7, %7 : vector<128x3xf32>
    %cst_12 = arith.constant dense<0.000000e+00> : vector<128xf32>
    %13 = vector.multi_reduction <add>, %12, %cst_12 [1] : vector<128x3xf32> to vector<128xf32>
    %14 = vector.shape_cast %13 : vector<128xf32> to vector<128x1xf32>
    %cst_13 = arith.constant 1.000000e+00 : f32
    %15 = vector.broadcast %cst_13 : f32 to vector<128x1xf32>
    %cst_14 = arith.constant dense<0.000000e+00> : vector<128x128xf32>
    %16 = tpu.matmul %15, %14, %cst_14 {dimension_numbers = #tpu.dot_dimension_numbers<[1], [1], [0], [0], [0, 0, 1, 0], [], []>} : vector<128x1xf32>, vector<128x1xf32>, vector<128x128xf32> -> vector<128x128xf32>
    %17 = vector.broadcast %11 : vector<128x1xf32> to vector<128x128xf32>
    %18 = arith.addf %17, %16 : vector<128x128xf32>
    %cst_15 = arith.constant 2.000000e+00 : f32
    %19 = vector.broadcast %cst_15 : f32 to vector<128x128xf32>
    %20 = arith.mulf %19, %8 : vector<128x128xf32>
    %21 = arith.subf %18, %20 : vector<128x128xf32>
    %cst_16 = arith.constant 0.000000e+00 : f32
    %22 = vector.broadcast %cst_16 : f32 to vector<128x128xf32>
    %23 = arith.maximumf %21, %22 : vector<128x128xf32>
    %cst_17 = arith.constant 9.99999993E-9 : f32
    %24 = vector.broadcast %cst_17 : f32 to vector<128x128xf32>
    %25 = arith.addf %23, %24 : vector<128x128xf32>
    %26 = math.sqrt %25 : vector<128x128xf32>
    %c0_18 = arith.constant 0 : index
    %c0_19 = arith.constant 0 : index
    %27 = vector.load %arg6[%c0_18, %c0_19] : memref<16x32xf32, #tpu.memory_space<vmem>>, vector<16x32xf32>
    %cst_20 = arith.constant dense<0.000000e+00> : vector<128x32xf32>
    %28 = tpu.matmul %1, %27, %cst_20 {dimension_numbers = #tpu.dot_dimension_numbers<[1], [0], [0], [1], [0, 0, 1, 1], [], []>} : vector<128x16xf32>, vector<16x32xf32>, vector<128x32xf32> -> vector<128x32xf32>
    %c0_21 = arith.constant 0 : index
    %c0_22 = arith.constant 0 : index
    %29 = vector.load %arg8[%c0_21, %c0_22] : memref<1x32xf32, #tpu.memory_space<vmem>>, vector<1x32xf32>
    %30 = vector.broadcast %29 : vector<1x32xf32> to vector<128x32xf32>
    %31 = arith.addf %28, %30 : vector<128x32xf32>
    %c0_23 = arith.constant 0 : index
    %c0_24 = arith.constant 0 : index
    %32 = vector.load %arg7[%c0_23, %c0_24] : memref<16x32xf32, #tpu.memory_space<vmem>>, vector<16x32xf32>
    %cst_25 = arith.constant dense<0.000000e+00> : vector<128x32xf32>
    %33 = tpu.matmul %5, %32, %cst_25 {dimension_numbers = #tpu.dot_dimension_numbers<[1], [0], [0], [1], [0, 0, 1, 1], [], []>} : vector<128x16xf32>, vector<16x32xf32>, vector<128x32xf32> -> vector<128x32xf32>
    %34 = tpu.transpose %33, [1, 0] : vector<128x32xf32> -> vector<32x128xf32>
    %cst_26 = arith.constant 0.000000e+00 : f32
    %35 = vector.broadcast %cst_26 : f32 to vector<128x128xf32>
    %36 = vector.extract_strided_slice %31 {offsets = [0, 0], sizes = [128, 1], strides = [1, 1]} : vector<128x32xf32> to vector<128x1xf32>
    %37 = vector.extract_strided_slice %34 {offsets = [0, 0], sizes = [1, 128], strides = [1, 1]} : vector<32x128xf32> to vector<1x128xf32>
    %38 = vector.broadcast %36 : vector<128x1xf32> to vector<128x128xf32>
    %39 = vector.broadcast %37 : vector<1x128xf32> to vector<128x128xf32>
    %40 = arith.addf %38, %39 : vector<128x128xf32>
    %c0_27 = arith.constant 0 : index
    %41 = memref.load %arg10[%c0_27] : memref<32xf32, #tpu.memory_space<smem>>
    %42 = vector.broadcast %41 : f32 to vector<128x128xf32>
    %43 = arith.mulf %26, %42 : vector<128x128xf32>
    %44 = arith.addf %40, %43 : vector<128x128xf32>
    %cst_28 = arith.constant 0.000000e+00 : f32
    %45 = vector.broadcast %cst_28 : f32 to vector<128x128xf32>
    %46 = arith.maximumf %44, %45 : vector<128x128xf32>
    %c0_29 = arith.constant 0 : index
    %47 = memref.load %arg11[%c0_29] : memref<32xf32, #tpu.memory_space<smem>>
    %48 = vector.broadcast %47 : f32 to vector<128x128xf32>
    %49 = arith.mulf %46, %48 : vector<128x128xf32>
    %50 = arith.addf %35, %49 : vector<128x128xf32>
    %51 = vector.extract_strided_slice %31 {offsets = [0, 1], sizes = [128, 1], strides = [1, 1]} : vector<128x32xf32> to vector<128x1xf32>
    %52 = vector.extract_strided_slice %34 {offsets = [1, 0], sizes = [1, 128], strides = [1, 1]} : vector<32x128xf32> to vector<1x128xf32>
    %53 = vector.broadcast %51 : vector<128x1xf32> to vector<128x128xf32>
    %54 = vector.broadcast %52 : vector<1x128xf32> to vector<128x128xf32>
    %55 = arith.addf %53, %54 : vector<128x128xf32>
    %c1 = arith.constant 1 : index
    %56 = memref.load %arg10[%c1] : memref<32xf32, #tpu.memory_space<smem>>
    %57 = vector.broadcast %56 : f32 to vector<128x128xf32>
    %58 = arith.mulf %26, %57 : vector<128x128xf32>
    %59 = arith.addf %55, %58 : vector<128x128xf32>
    %cst_30 = arith.constant 0.000000e+00 : f32
    %60 = vector.broadcast %cst_30 : f32 to vector<128x128xf32>
    %61 = arith.maximumf %59, %60 : vector<128x128xf32>
    %c1_31 = arith.constant 1 : index
    %62 = memref.load %arg11[%c1_31] : memref<32xf32, #tpu.memory_space<smem>>
    %63 = vector.broadcast %62 : f32 to vector<128x128xf32>
    %64 = arith.mulf %61, %63 : vector<128x128xf32>
    %65 = arith.addf %50, %64 : vector<128x128xf32>
    %66 = vector.extract_strided_slice %31 {offsets = [0, 2], sizes = [128, 1], strides = [1, 1]} : vector<128x32xf32> to vector<128x1xf32>
    %67 = vector.extract_strided_slice %34 {offsets = [2, 0], sizes = [1, 128], strides = [1, 1]} : vector<32x128xf32> to vector<1x128xf32>
    %68 = vector.broadcast %66 : vector<128x1xf32> to vector<128x128xf32>
    %69 = vector.broadcast %67 : vector<1x128xf32> to vector<128x128xf32>
    %70 = arith.addf %68, %69 : vector<128x128xf32>
    %c2 = arith.constant 2 : index
    %71 = memref.load %arg10[%c2] : memref<32xf32, #tpu.memory_space<smem>>
    %72 = vector.broadcast %71 : f32 to vector<128x128xf32>
    %73 = arith.mulf %26, %72 : vector<128x128xf32>
    %74 = arith.addf %70, %73 : vector<128x128xf32>
    %cst_32 = arith.constant 0.000000e+00 : f32
    %75 = vector.broadcast %cst_32 : f32 to vector<128x128xf32>
    %76 = arith.maximumf %74, %75 : vector<128x128xf32>
    %c2_33 = arith.constant 2 : index
    %77 = memref.load %arg11[%c2_33] : memref<32xf32, #tpu.memory_space<smem>>
    %78 = vector.broadcast %77 : f32 to vector<128x128xf32>
    %79 = arith.mulf %76, %78 : vector<128x128xf32>
    %80 = arith.addf %65, %79 : vector<128x128xf32>
    %81 = vector.extract_strided_slice %31 {offsets = [0, 3], sizes = [128, 1], strides = [1, 1]} : vector<128x32xf32> to vector<128x1xf32>
    %82 = vector.extract_strided_slice %34 {offsets = [3, 0], sizes = [1, 128], strides = [1, 1]} : vector<32x128xf32> to vector<1x128xf32>
    %83 = vector.broadcast %81 : vector<128x1xf32> to vector<128x128xf32>
    %84 = vector.broadcast %82 : vector<1x128xf32> to vector<128x128xf32>
    %85 = arith.addf %83, %84 : vector<128x128xf32>
    %c3 = arith.constant 3 : index
    %86 = memref.load %arg10[%c3] : memref<32xf32, #tpu.memory_space<smem>>
    %87 = vector.broadcast %86 : f32 to vector<128x128xf32>
    %88 = arith.mulf %26, %87 : vector<128x128xf32>
    %89 = arith.addf %85, %88 : vector<128x128xf32>
    %cst_34 = arith.constant 0.000000e+00 : f32
    %90 = vector.broadcast %cst_34 : f32 to vector<128x128xf32>
    %91 = arith.maximumf %89, %90 : vector<128x128xf32>
    %c3_35 = arith.constant 3 : index
    %92 = memref.load %arg11[%c3_35] : memref<32xf32, #tpu.memory_space<smem>>
    %93 = vector.broadcast %92 : f32 to vector<128x128xf32>
    %94 = arith.mulf %91, %93 : vector<128x128xf32>
    %95 = arith.addf %80, %94 : vector<128x128xf32>
    %96 = vector.extract_strided_slice %31 {offsets = [0, 4], sizes = [128, 1], strides = [1, 1]} : vector<128x32xf32> to vector<128x1xf32>
    %97 = vector.extract_strided_slice %34 {offsets = [4, 0], sizes = [1, 128], strides = [1, 1]} : vector<32x128xf32> to vector<1x128xf32>
    %98 = vector.broadcast %96 : vector<128x1xf32> to vector<128x128xf32>
    %99 = vector.broadcast %97 : vector<1x128xf32> to vector<128x128xf32>
    %100 = arith.addf %98, %99 : vector<128x128xf32>
    %c4 = arith.constant 4 : index
    %101 = memref.load %arg10[%c4] : memref<32xf32, #tpu.memory_space<smem>>
    %102 = vector.broadcast %101 : f32 to vector<128x128xf32>
    %103 = arith.mulf %26, %102 : vector<128x128xf32>
    %104 = arith.addf %100, %103 : vector<128x128xf32>
    %cst_36 = arith.constant 0.000000e+00 : f32
    %105 = vector.broadcast %cst_36 : f32 to vector<128x128xf32>
    %106 = arith.maximumf %104, %105 : vector<128x128xf32>
    %c4_37 = arith.constant 4 : index
    %107 = memref.load %arg11[%c4_37] : memref<32xf32, #tpu.memory_space<smem>>
    %108 = vector.broadcast %107 : f32 to vector<128x128xf32>
    %109 = arith.mulf %106, %108 : vector<128x128xf32>
    %110 = arith.addf %95, %109 : vector<128x128xf32>
    %111 = vector.extract_strided_slice %31 {offsets = [0, 5], sizes = [128, 1], strides = [1, 1]} : vector<128x32xf32> to vector<128x1xf32>
    %112 = vector.extract_strided_slice %34 {offsets = [5, 0], sizes = [1, 128], strides = [1, 1]} : vector<32x128xf32> to vector<1x128xf32>
    %113 = vector.broadcast %111 : vector<128x1xf32> to vector<128x128xf32>
    %114 = vector.broadcast %112 : vector<1x128xf32> to vector<128x128xf32>
    %115 = arith.addf %113, %114 : vector<128x128xf32>
    %c5 = arith.constant 5 : index
    %116 = memref.load %arg10[%c5] : memref<32xf32, #tpu.memory_space<smem>>
    %117 = vector.broadcast %116 : f32 to vector<128x128xf32>
    %118 = arith.mulf %26, %117 : vector<128x128xf32>
    %119 = arith.addf %115, %118 : vector<128x128xf32>
    %cst_38 = arith.constant 0.000000e+00 : f32
    %120 = vector.broadcast %cst_38 : f32 to vector<128x128xf32>
    %121 = arith.maximumf %119, %120 : vector<128x128xf32>
    %c5_39 = arith.constant 5 : index
    %122 = memref.load %arg11[%c5_39] : memref<32xf32, #tpu.memory_space<smem>>
    %123 = vector.broadcast %122 : f32 to vector<128x128xf32>
    %124 = arith.mulf %121, %123 : vector<128x128xf32>
    %125 = arith.addf %110, %124 : vector<128x128xf32>
    %126 = vector.extract_strided_slice %31 {offsets = [0, 6], sizes = [128, 1], strides = [1, 1]} : vector<128x32xf32> to vector<128x1xf32>
    %127 = vector.extract_strided_slice %34 {offsets = [6, 0], sizes = [1, 128], strides = [1, 1]} : vector<32x128xf32> to vector<1x128xf32>
    %128 = vector.broadcast %126 : vector<128x1xf32> to vector<128x128xf32>
    %129 = vector.broadcast %127 : vector<1x128xf32> to vector<128x128xf32>
    %130 = arith.addf %128, %129 : vector<128x128xf32>
    %c6 = arith.constant 6 : index
    %131 = memref.load %arg10[%c6] : memref<32xf32, #tpu.memory_space<smem>>
    %132 = vector.broadcast %131 : f32 to vector<128x128xf32>
    %133 = arith.mulf %26, %132 : vector<128x128xf32>
    %134 = arith.addf %130, %133 : vector<128x128xf32>
    %cst_40 = arith.constant 0.000000e+00 : f32
    %135 = vector.broadcast %cst_40 : f32 to vector<128x128xf32>
    %136 = arith.maximumf %134, %135 : vector<128x128xf32>
    %c6_41 = arith.constant 6 : index
    %137 = memref.load %arg11[%c6_41] : memref<32xf32, #tpu.memory_space<smem>>
    %138 = vector.broadcast %137 : f32 to vector<128x128xf32>
    %139 = arith.mulf %136, %138 : vector<128x128xf32>
    %140 = arith.addf %125, %139 : vector<128x128xf32>
    %141 = vector.extract_strided_slice %31 {offsets = [0, 7], sizes = [128, 1], strides = [1, 1]} : vector<128x32xf32> to vector<128x1xf32>
    %142 = vector.extract_strided_slice %34 {offsets = [7, 0], sizes = [1, 128], strides = [1, 1]} : vector<32x128xf32> to vector<1x128xf32>
    %143 = vector.broadcast %141 : vector<128x1xf32> to vector<128x128xf32>
    %144 = vector.broadcast %142 : vector<1x128xf32> to vector<128x128xf32>
    %145 = arith.addf %143, %144 : vector<128x128xf32>
    %c7 = arith.constant 7 : index
    %146 = memref.load %arg10[%c7] : memref<32xf32, #tpu.memory_space<smem>>
    %147 = vector.broadcast %146 : f32 to vector<128x128xf32>
    %148 = arith.mulf %26, %147 : vector<128x128xf32>
    %149 = arith.addf %145, %148 : vector<128x128xf32>
    %cst_42 = arith.constant 0.000000e+00 : f32
    %150 = vector.broadcast %cst_42 : f32 to vector<128x128xf32>
    %151 = arith.maximumf %149, %150 : vector<128x128xf32>
    %c7_43 = arith.constant 7 : index
    %152 = memref.load %arg11[%c7_43] : memref<32xf32, #tpu.memory_space<smem>>
    %153 = vector.broadcast %152 : f32 to vector<128x128xf32>
    %154 = arith.mulf %151, %153 : vector<128x128xf32>
    %155 = arith.addf %140, %154 : vector<128x128xf32>
    %156 = vector.extract_strided_slice %31 {offsets = [0, 8], sizes = [128, 1], strides = [1, 1]} : vector<128x32xf32> to vector<128x1xf32>
    %157 = vector.extract_strided_slice %34 {offsets = [8, 0], sizes = [1, 128], strides = [1, 1]} : vector<32x128xf32> to vector<1x128xf32>
    %158 = vector.broadcast %156 : vector<128x1xf32> to vector<128x128xf32>
    %159 = vector.broadcast %157 : vector<1x128xf32> to vector<128x128xf32>
    %160 = arith.addf %158, %159 : vector<128x128xf32>
    %c8 = arith.constant 8 : index
    %161 = memref.load %arg10[%c8] : memref<32xf32, #tpu.memory_space<smem>>
    %162 = vector.broadcast %161 : f32 to vector<128x128xf32>
    %163 = arith.mulf %26, %162 : vector<128x128xf32>
    %164 = arith.addf %160, %163 : vector<128x128xf32>
    %cst_44 = arith.constant 0.000000e+00 : f32
    %165 = vector.broadcast %cst_44 : f32 to vector<128x128xf32>
    %166 = arith.maximumf %164, %165 : vector<128x128xf32>
    %c8_45 = arith.constant 8 : index
    %167 = memref.load %arg11[%c8_45] : memref<32xf32, #tpu.memory_space<smem>>
    %168 = vector.broadcast %167 : f32 to vector<128x128xf32>
    %169 = arith.mulf %166, %168 : vector<128x128xf32>
    %170 = arith.addf %155, %169 : vector<128x128xf32>
    %171 = vector.extract_strided_slice %31 {offsets = [0, 9], sizes = [128, 1], strides = [1, 1]} : vector<128x32xf32> to vector<128x1xf32>
    %172 = vector.extract_strided_slice %34 {offsets = [9, 0], sizes = [1, 128], strides = [1, 1]} : vector<32x128xf32> to vector<1x128xf32>
    %173 = vector.broadcast %171 : vector<128x1xf32> to vector<128x128xf32>
    %174 = vector.broadcast %172 : vector<1x128xf32> to vector<128x128xf32>
    %175 = arith.addf %173, %174 : vector<128x128xf32>
    %c9 = arith.constant 9 : index
    %176 = memref.load %arg10[%c9] : memref<32xf32, #tpu.memory_space<smem>>
    %177 = vector.broadcast %176 : f32 to vector<128x128xf32>
    %178 = arith.mulf %26, %177 : vector<128x128xf32>
    %179 = arith.addf %175, %178 : vector<128x128xf32>
    %cst_46 = arith.constant 0.000000e+00 : f32
    %180 = vector.broadcast %cst_46 : f32 to vector<128x128xf32>
    %181 = arith.maximumf %179, %180 : vector<128x128xf32>
    %c9_47 = arith.constant 9 : index
    %182 = memref.load %arg11[%c9_47] : memref<32xf32, #tpu.memory_space<smem>>
    %183 = vector.broadcast %182 : f32 to vector<128x128xf32>
    %184 = arith.mulf %181, %183 : vector<128x128xf32>
    %185 = arith.addf %170, %184 : vector<128x128xf32>
    %186 = vector.extract_strided_slice %31 {offsets = [0, 10], sizes = [128, 1], strides = [1, 1]} : vector<128x32xf32> to vector<128x1xf32>
    %187 = vector.extract_strided_slice %34 {offsets = [10, 0], sizes = [1, 128], strides = [1, 1]} : vector<32x128xf32> to vector<1x128xf32>
    %188 = vector.broadcast %186 : vector<128x1xf32> to vector<128x128xf32>
    %189 = vector.broadcast %187 : vector<1x128xf32> to vector<128x128xf32>
    %190 = arith.addf %188, %189 : vector<128x128xf32>
    %c10 = arith.constant 10 : index
    %191 = memref.load %arg10[%c10] : memref<32xf32, #tpu.memory_space<smem>>
    %192 = vector.broadcast %191 : f32 to vector<128x128xf32>
    %193 = arith.mulf %26, %192 : vector<128x128xf32>
    %194 = arith.addf %190, %193 : vector<128x128xf32>
    %cst_48 = arith.constant 0.000000e+00 : f32
    %195 = vector.broadcast %cst_48 : f32 to vector<128x128xf32>
    %196 = arith.maximumf %194, %195 : vector<128x128xf32>
    %c10_49 = arith.constant 10 : index
    %197 = memref.load %arg11[%c10_49] : memref<32xf32, #tpu.memory_space<smem>>
    %198 = vector.broadcast %197 : f32 to vector<128x128xf32>
    %199 = arith.mulf %196, %198 : vector<128x128xf32>
    %200 = arith.addf %185, %199 : vector<128x128xf32>
    %201 = vector.extract_strided_slice %31 {offsets = [0, 11], sizes = [128, 1], strides = [1, 1]} : vector<128x32xf32> to vector<128x1xf32>
    %202 = vector.extract_strided_slice %34 {offsets = [11, 0], sizes = [1, 128], strides = [1, 1]} : vector<32x128xf32> to vector<1x128xf32>
    %203 = vector.broadcast %201 : vector<128x1xf32> to vector<128x128xf32>
    %204 = vector.broadcast %202 : vector<1x128xf32> to vector<128x128xf32>
    %205 = arith.addf %203, %204 : vector<128x128xf32>
    %c11 = arith.constant 11 : index
    %206 = memref.load %arg10[%c11] : memref<32xf32, #tpu.memory_space<smem>>
    %207 = vector.broadcast %206 : f32 to vector<128x128xf32>
    %208 = arith.mulf %26, %207 : vector<128x128xf32>
    %209 = arith.addf %205, %208 : vector<128x128xf32>
    %cst_50 = arith.constant 0.000000e+00 : f32
    %210 = vector.broadcast %cst_50 : f32 to vector<128x128xf32>
    %211 = arith.maximumf %209, %210 : vector<128x128xf32>
    %c11_51 = arith.constant 11 : index
    %212 = memref.load %arg11[%c11_51] : memref<32xf32, #tpu.memory_space<smem>>
    %213 = vector.broadcast %212 : f32 to vector<128x128xf32>
    %214 = arith.mulf %211, %213 : vector<128x128xf32>
    %215 = arith.addf %200, %214 : vector<128x128xf32>
    %216 = vector.extract_strided_slice %31 {offsets = [0, 12], sizes = [128, 1], strides = [1, 1]} : vector<128x32xf32> to vector<128x1xf32>
    %217 = vector.extract_strided_slice %34 {offsets = [12, 0], sizes = [1, 128], strides = [1, 1]} : vector<32x128xf32> to vector<1x128xf32>
    %218 = vector.broadcast %216 : vector<128x1xf32> to vector<128x128xf32>
    %219 = vector.broadcast %217 : vector<1x128xf32> to vector<128x128xf32>
    %220 = arith.addf %218, %219 : vector<128x128xf32>
    %c12 = arith.constant 12 : index
    %221 = memref.load %arg10[%c12] : memref<32xf32, #tpu.memory_space<smem>>
    %222 = vector.broadcast %221 : f32 to vector<128x128xf32>
    %223 = arith.mulf %26, %222 : vector<128x128xf32>
    %224 = arith.addf %220, %223 : vector<128x128xf32>
    %cst_52 = arith.constant 0.000000e+00 : f32
    %225 = vector.broadcast %cst_52 : f32 to vector<128x128xf32>
    %226 = arith.maximumf %224, %225 : vector<128x128xf32>
    %c12_53 = arith.constant 12 : index
    %227 = memref.load %arg11[%c12_53] : memref<32xf32, #tpu.memory_space<smem>>
    %228 = vector.broadcast %227 : f32 to vector<128x128xf32>
    %229 = arith.mulf %226, %228 : vector<128x128xf32>
    %230 = arith.addf %215, %229 : vector<128x128xf32>
    %231 = vector.extract_strided_slice %31 {offsets = [0, 13], sizes = [128, 1], strides = [1, 1]} : vector<128x32xf32> to vector<128x1xf32>
    %232 = vector.extract_strided_slice %34 {offsets = [13, 0], sizes = [1, 128], strides = [1, 1]} : vector<32x128xf32> to vector<1x128xf32>
    %233 = vector.broadcast %231 : vector<128x1xf32> to vector<128x128xf32>
    %234 = vector.broadcast %232 : vector<1x128xf32> to vector<128x128xf32>
    %235 = arith.addf %233, %234 : vector<128x128xf32>
    %c13 = arith.constant 13 : index
    %236 = memref.load %arg10[%c13] : memref<32xf32, #tpu.memory_space<smem>>
    %237 = vector.broadcast %236 : f32 to vector<128x128xf32>
    %238 = arith.mulf %26, %237 : vector<128x128xf32>
    %239 = arith.addf %235, %238 : vector<128x128xf32>
    %cst_54 = arith.constant 0.000000e+00 : f32
    %240 = vector.broadcast %cst_54 : f32 to vector<128x128xf32>
    %241 = arith.maximumf %239, %240 : vector<128x128xf32>
    %c13_55 = arith.constant 13 : index
    %242 = memref.load %arg11[%c13_55] : memref<32xf32, #tpu.memory_space<smem>>
    %243 = vector.broadcast %242 : f32 to vector<128x128xf32>
    %244 = arith.mulf %241, %243 : vector<128x128xf32>
    %245 = arith.addf %230, %244 : vector<128x128xf32>
    %246 = vector.extract_strided_slice %31 {offsets = [0, 14], sizes = [128, 1], strides = [1, 1]} : vector<128x32xf32> to vector<128x1xf32>
    %247 = vector.extract_strided_slice %34 {offsets = [14, 0], sizes = [1, 128], strides = [1, 1]} : vector<32x128xf32> to vector<1x128xf32>
    %248 = vector.broadcast %246 : vector<128x1xf32> to vector<128x128xf32>
    %249 = vector.broadcast %247 : vector<1x128xf32> to vector<128x128xf32>
    %250 = arith.addf %248, %249 : vector<128x128xf32>
    %c14 = arith.constant 14 : index
    %251 = memref.load %arg10[%c14] : memref<32xf32, #tpu.memory_space<smem>>
    %252 = vector.broadcast %251 : f32 to vector<128x128xf32>
    %253 = arith.mulf %26, %252 : vector<128x128xf32>
    %254 = arith.addf %250, %253 : vector<128x128xf32>
    %cst_56 = arith.constant 0.000000e+00 : f32
    %255 = vector.broadcast %cst_56 : f32 to vector<128x128xf32>
    %256 = arith.maximumf %254, %255 : vector<128x128xf32>
    %c14_57 = arith.constant 14 : index
    %257 = memref.load %arg11[%c14_57] : memref<32xf32, #tpu.memory_space<smem>>
    %258 = vector.broadcast %257 : f32 to vector<128x128xf32>
    %259 = arith.mulf %256, %258 : vector<128x128xf32>
    %260 = arith.addf %245, %259 : vector<128x128xf32>
    %261 = vector.extract_strided_slice %31 {offsets = [0, 15], sizes = [128, 1], strides = [1, 1]} : vector<128x32xf32> to vector<128x1xf32>
    %262 = vector.extract_strided_slice %34 {offsets = [15, 0], sizes = [1, 128], strides = [1, 1]} : vector<32x128xf32> to vector<1x128xf32>
    %263 = vector.broadcast %261 : vector<128x1xf32> to vector<128x128xf32>
    %264 = vector.broadcast %262 : vector<1x128xf32> to vector<128x128xf32>
    %265 = arith.addf %263, %264 : vector<128x128xf32>
    %c15 = arith.constant 15 : index
    %266 = memref.load %arg10[%c15] : memref<32xf32, #tpu.memory_space<smem>>
    %267 = vector.broadcast %266 : f32 to vector<128x128xf32>
    %268 = arith.mulf %26, %267 : vector<128x128xf32>
    %269 = arith.addf %265, %268 : vector<128x128xf32>
    %cst_58 = arith.constant 0.000000e+00 : f32
    %270 = vector.broadcast %cst_58 : f32 to vector<128x128xf32>
    %271 = arith.maximumf %269, %270 : vector<128x128xf32>
    %c15_59 = arith.constant 15 : index
    %272 = memref.load %arg11[%c15_59] : memref<32xf32, #tpu.memory_space<smem>>
    %273 = vector.broadcast %272 : f32 to vector<128x128xf32>
    %274 = arith.mulf %271, %273 : vector<128x128xf32>
    %275 = arith.addf %260, %274 : vector<128x128xf32>
    %276 = vector.extract_strided_slice %31 {offsets = [0, 16], sizes = [128, 1], strides = [1, 1]} : vector<128x32xf32> to vector<128x1xf32>
    %277 = vector.extract_strided_slice %34 {offsets = [16, 0], sizes = [1, 128], strides = [1, 1]} : vector<32x128xf32> to vector<1x128xf32>
    %278 = vector.broadcast %276 : vector<128x1xf32> to vector<128x128xf32>
    %279 = vector.broadcast %277 : vector<1x128xf32> to vector<128x128xf32>
    %280 = arith.addf %278, %279 : vector<128x128xf32>
    %c16 = arith.constant 16 : index
    %281 = memref.load %arg10[%c16] : memref<32xf32, #tpu.memory_space<smem>>
    %282 = vector.broadcast %281 : f32 to vector<128x128xf32>
    %283 = arith.mulf %26, %282 : vector<128x128xf32>
    %284 = arith.addf %280, %283 : vector<128x128xf32>
    %cst_60 = arith.constant 0.000000e+00 : f32
    %285 = vector.broadcast %cst_60 : f32 to vector<128x128xf32>
    %286 = arith.maximumf %284, %285 : vector<128x128xf32>
    %c16_61 = arith.constant 16 : index
    %287 = memref.load %arg11[%c16_61] : memref<32xf32, #tpu.memory_space<smem>>
    %288 = vector.broadcast %287 : f32 to vector<128x128xf32>
    %289 = arith.mulf %286, %288 : vector<128x128xf32>
    %290 = arith.addf %275, %289 : vector<128x128xf32>
    %291 = vector.extract_strided_slice %31 {offsets = [0, 17], sizes = [128, 1], strides = [1, 1]} : vector<128x32xf32> to vector<128x1xf32>
    %292 = vector.extract_strided_slice %34 {offsets = [17, 0], sizes = [1, 128], strides = [1, 1]} : vector<32x128xf32> to vector<1x128xf32>
    %293 = vector.broadcast %291 : vector<128x1xf32> to vector<128x128xf32>
    %294 = vector.broadcast %292 : vector<1x128xf32> to vector<128x128xf32>
    %295 = arith.addf %293, %294 : vector<128x128xf32>
    %c17 = arith.constant 17 : index
    %296 = memref.load %arg10[%c17] : memref<32xf32, #tpu.memory_space<smem>>
    %297 = vector.broadcast %296 : f32 to vector<128x128xf32>
    %298 = arith.mulf %26, %297 : vector<128x128xf32>
    %299 = arith.addf %295, %298 : vector<128x128xf32>
    %cst_62 = arith.constant 0.000000e+00 : f32
    %300 = vector.broadcast %cst_62 : f32 to vector<128x128xf32>
    %301 = arith.maximumf %299, %300 : vector<128x128xf32>
    %c17_63 = arith.constant 17 : index
    %302 = memref.load %arg11[%c17_63] : memref<32xf32, #tpu.memory_space<smem>>
    %303 = vector.broadcast %302 : f32 to vector<128x128xf32>
    %304 = arith.mulf %301, %303 : vector<128x128xf32>
    %305 = arith.addf %290, %304 : vector<128x128xf32>
    %306 = vector.extract_strided_slice %31 {offsets = [0, 18], sizes = [128, 1], strides = [1, 1]} : vector<128x32xf32> to vector<128x1xf32>
    %307 = vector.extract_strided_slice %34 {offsets = [18, 0], sizes = [1, 128], strides = [1, 1]} : vector<32x128xf32> to vector<1x128xf32>
    %308 = vector.broadcast %306 : vector<128x1xf32> to vector<128x128xf32>
    %309 = vector.broadcast %307 : vector<1x128xf32> to vector<128x128xf32>
    %310 = arith.addf %308, %309 : vector<128x128xf32>
    %c18 = arith.constant 18 : index
    %311 = memref.load %arg10[%c18] : memref<32xf32, #tpu.memory_space<smem>>
    %312 = vector.broadcast %311 : f32 to vector<128x128xf32>
    %313 = arith.mulf %26, %312 : vector<128x128xf32>
    %314 = arith.addf %310, %313 : vector<128x128xf32>
    %cst_64 = arith.constant 0.000000e+00 : f32
    %315 = vector.broadcast %cst_64 : f32 to vector<128x128xf32>
    %316 = arith.maximumf %314, %315 : vector<128x128xf32>
    %c18_65 = arith.constant 18 : index
    %317 = memref.load %arg11[%c18_65] : memref<32xf32, #tpu.memory_space<smem>>
    %318 = vector.broadcast %317 : f32 to vector<128x128xf32>
    %319 = arith.mulf %316, %318 : vector<128x128xf32>
    %320 = arith.addf %305, %319 : vector<128x128xf32>
    %321 = vector.extract_strided_slice %31 {offsets = [0, 19], sizes = [128, 1], strides = [1, 1]} : vector<128x32xf32> to vector<128x1xf32>
    %322 = vector.extract_strided_slice %34 {offsets = [19, 0], sizes = [1, 128], strides = [1, 1]} : vector<32x128xf32> to vector<1x128xf32>
    %323 = vector.broadcast %321 : vector<128x1xf32> to vector<128x128xf32>
    %324 = vector.broadcast %322 : vector<1x128xf32> to vector<128x128xf32>
    %325 = arith.addf %323, %324 : vector<128x128xf32>
    %c19 = arith.constant 19 : index
    %326 = memref.load %arg10[%c19] : memref<32xf32, #tpu.memory_space<smem>>
    %327 = vector.broadcast %326 : f32 to vector<128x128xf32>
    %328 = arith.mulf %26, %327 : vector<128x128xf32>
    %329 = arith.addf %325, %328 : vector<128x128xf32>
    %cst_66 = arith.constant 0.000000e+00 : f32
    %330 = vector.broadcast %cst_66 : f32 to vector<128x128xf32>
    %331 = arith.maximumf %329, %330 : vector<128x128xf32>
    %c19_67 = arith.constant 19 : index
    %332 = memref.load %arg11[%c19_67] : memref<32xf32, #tpu.memory_space<smem>>
    %333 = vector.broadcast %332 : f32 to vector<128x128xf32>
    %334 = arith.mulf %331, %333 : vector<128x128xf32>
    %335 = arith.addf %320, %334 : vector<128x128xf32>
    %336 = vector.extract_strided_slice %31 {offsets = [0, 20], sizes = [128, 1], strides = [1, 1]} : vector<128x32xf32> to vector<128x1xf32>
    %337 = vector.extract_strided_slice %34 {offsets = [20, 0], sizes = [1, 128], strides = [1, 1]} : vector<32x128xf32> to vector<1x128xf32>
    %338 = vector.broadcast %336 : vector<128x1xf32> to vector<128x128xf32>
    %339 = vector.broadcast %337 : vector<1x128xf32> to vector<128x128xf32>
    %340 = arith.addf %338, %339 : vector<128x128xf32>
    %c20 = arith.constant 20 : index
    %341 = memref.load %arg10[%c20] : memref<32xf32, #tpu.memory_space<smem>>
    %342 = vector.broadcast %341 : f32 to vector<128x128xf32>
    %343 = arith.mulf %26, %342 : vector<128x128xf32>
    %344 = arith.addf %340, %343 : vector<128x128xf32>
    %cst_68 = arith.constant 0.000000e+00 : f32
    %345 = vector.broadcast %cst_68 : f32 to vector<128x128xf32>
    %346 = arith.maximumf %344, %345 : vector<128x128xf32>
    %c20_69 = arith.constant 20 : index
    %347 = memref.load %arg11[%c20_69] : memref<32xf32, #tpu.memory_space<smem>>
    %348 = vector.broadcast %347 : f32 to vector<128x128xf32>
    %349 = arith.mulf %346, %348 : vector<128x128xf32>
    %350 = arith.addf %335, %349 : vector<128x128xf32>
    %351 = vector.extract_strided_slice %31 {offsets = [0, 21], sizes = [128, 1], strides = [1, 1]} : vector<128x32xf32> to vector<128x1xf32>
    %352 = vector.extract_strided_slice %34 {offsets = [21, 0], sizes = [1, 128], strides = [1, 1]} : vector<32x128xf32> to vector<1x128xf32>
    %353 = vector.broadcast %351 : vector<128x1xf32> to vector<128x128xf32>
    %354 = vector.broadcast %352 : vector<1x128xf32> to vector<128x128xf32>
    %355 = arith.addf %353, %354 : vector<128x128xf32>
    %c21 = arith.constant 21 : index
    %356 = memref.load %arg10[%c21] : memref<32xf32, #tpu.memory_space<smem>>
    %357 = vector.broadcast %356 : f32 to vector<128x128xf32>
    %358 = arith.mulf %26, %357 : vector<128x128xf32>
    %359 = arith.addf %355, %358 : vector<128x128xf32>
    %cst_70 = arith.constant 0.000000e+00 : f32
    %360 = vector.broadcast %cst_70 : f32 to vector<128x128xf32>
    %361 = arith.maximumf %359, %360 : vector<128x128xf32>
    %c21_71 = arith.constant 21 : index
    %362 = memref.load %arg11[%c21_71] : memref<32xf32, #tpu.memory_space<smem>>
    %363 = vector.broadcast %362 : f32 to vector<128x128xf32>
    %364 = arith.mulf %361, %363 : vector<128x128xf32>
    %365 = arith.addf %350, %364 : vector<128x128xf32>
    %366 = vector.extract_strided_slice %31 {offsets = [0, 22], sizes = [128, 1], strides = [1, 1]} : vector<128x32xf32> to vector<128x1xf32>
    %367 = vector.extract_strided_slice %34 {offsets = [22, 0], sizes = [1, 128], strides = [1, 1]} : vector<32x128xf32> to vector<1x128xf32>
    %368 = vector.broadcast %366 : vector<128x1xf32> to vector<128x128xf32>
    %369 = vector.broadcast %367 : vector<1x128xf32> to vector<128x128xf32>
    %370 = arith.addf %368, %369 : vector<128x128xf32>
    %c22 = arith.constant 22 : index
    %371 = memref.load %arg10[%c22] : memref<32xf32, #tpu.memory_space<smem>>
    %372 = vector.broadcast %371 : f32 to vector<128x128xf32>
    %373 = arith.mulf %26, %372 : vector<128x128xf32>
    %374 = arith.addf %370, %373 : vector<128x128xf32>
    %cst_72 = arith.constant 0.000000e+00 : f32
    %375 = vector.broadcast %cst_72 : f32 to vector<128x128xf32>
    %376 = arith.maximumf %374, %375 : vector<128x128xf32>
    %c22_73 = arith.constant 22 : index
    %377 = memref.load %arg11[%c22_73] : memref<32xf32, #tpu.memory_space<smem>>
    %378 = vector.broadcast %377 : f32 to vector<128x128xf32>
    %379 = arith.mulf %376, %378 : vector<128x128xf32>
    %380 = arith.addf %365, %379 : vector<128x128xf32>
    %381 = vector.extract_strided_slice %31 {offsets = [0, 23], sizes = [128, 1], strides = [1, 1]} : vector<128x32xf32> to vector<128x1xf32>
    %382 = vector.extract_strided_slice %34 {offsets = [23, 0], sizes = [1, 128], strides = [1, 1]} : vector<32x128xf32> to vector<1x128xf32>
    %383 = vector.broadcast %381 : vector<128x1xf32> to vector<128x128xf32>
    %384 = vector.broadcast %382 : vector<1x128xf32> to vector<128x128xf32>
    %385 = arith.addf %383, %384 : vector<128x128xf32>
    %c23 = arith.constant 23 : index
    %386 = memref.load %arg10[%c23] : memref<32xf32, #tpu.memory_space<smem>>
    %387 = vector.broadcast %386 : f32 to vector<128x128xf32>
    %388 = arith.mulf %26, %387 : vector<128x128xf32>
    %389 = arith.addf %385, %388 : vector<128x128xf32>
    %cst_74 = arith.constant 0.000000e+00 : f32
    %390 = vector.broadcast %cst_74 : f32 to vector<128x128xf32>
    %391 = arith.maximumf %389, %390 : vector<128x128xf32>
    %c23_75 = arith.constant 23 : index
    %392 = memref.load %arg11[%c23_75] : memref<32xf32, #tpu.memory_space<smem>>
    %393 = vector.broadcast %392 : f32 to vector<128x128xf32>
    %394 = arith.mulf %391, %393 : vector<128x128xf32>
    %395 = arith.addf %380, %394 : vector<128x128xf32>
    %396 = vector.extract_strided_slice %31 {offsets = [0, 24], sizes = [128, 1], strides = [1, 1]} : vector<128x32xf32> to vector<128x1xf32>
    %397 = vector.extract_strided_slice %34 {offsets = [24, 0], sizes = [1, 128], strides = [1, 1]} : vector<32x128xf32> to vector<1x128xf32>
    %398 = vector.broadcast %396 : vector<128x1xf32> to vector<128x128xf32>
    %399 = vector.broadcast %397 : vector<1x128xf32> to vector<128x128xf32>
    %400 = arith.addf %398, %399 : vector<128x128xf32>
    %c24 = arith.constant 24 : index
    %401 = memref.load %arg10[%c24] : memref<32xf32, #tpu.memory_space<smem>>
    %402 = vector.broadcast %401 : f32 to vector<128x128xf32>
    %403 = arith.mulf %26, %402 : vector<128x128xf32>
    %404 = arith.addf %400, %403 : vector<128x128xf32>
    %cst_76 = arith.constant 0.000000e+00 : f32
    %405 = vector.broadcast %cst_76 : f32 to vector<128x128xf32>
    %406 = arith.maximumf %404, %405 : vector<128x128xf32>
    %c24_77 = arith.constant 24 : index
    %407 = memref.load %arg11[%c24_77] : memref<32xf32, #tpu.memory_space<smem>>
    %408 = vector.broadcast %407 : f32 to vector<128x128xf32>
    %409 = arith.mulf %406, %408 : vector<128x128xf32>
    %410 = arith.addf %395, %409 : vector<128x128xf32>
    %411 = vector.extract_strided_slice %31 {offsets = [0, 25], sizes = [128, 1], strides = [1, 1]} : vector<128x32xf32> to vector<128x1xf32>
    %412 = vector.extract_strided_slice %34 {offsets = [25, 0], sizes = [1, 128], strides = [1, 1]} : vector<32x128xf32> to vector<1x128xf32>
    %413 = vector.broadcast %411 : vector<128x1xf32> to vector<128x128xf32>
    %414 = vector.broadcast %412 : vector<1x128xf32> to vector<128x128xf32>
    %415 = arith.addf %413, %414 : vector<128x128xf32>
    %c25 = arith.constant 25 : index
    %416 = memref.load %arg10[%c25] : memref<32xf32, #tpu.memory_space<smem>>
    %417 = vector.broadcast %416 : f32 to vector<128x128xf32>
    %418 = arith.mulf %26, %417 : vector<128x128xf32>
    %419 = arith.addf %415, %418 : vector<128x128xf32>
    %cst_78 = arith.constant 0.000000e+00 : f32
    %420 = vector.broadcast %cst_78 : f32 to vector<128x128xf32>
    %421 = arith.maximumf %419, %420 : vector<128x128xf32>
    %c25_79 = arith.constant 25 : index
    %422 = memref.load %arg11[%c25_79] : memref<32xf32, #tpu.memory_space<smem>>
    %423 = vector.broadcast %422 : f32 to vector<128x128xf32>
    %424 = arith.mulf %421, %423 : vector<128x128xf32>
    %425 = arith.addf %410, %424 : vector<128x128xf32>
    %426 = vector.extract_strided_slice %31 {offsets = [0, 26], sizes = [128, 1], strides = [1, 1]} : vector<128x32xf32> to vector<128x1xf32>
    %427 = vector.extract_strided_slice %34 {offsets = [26, 0], sizes = [1, 128], strides = [1, 1]} : vector<32x128xf32> to vector<1x128xf32>
    %428 = vector.broadcast %426 : vector<128x1xf32> to vector<128x128xf32>
    %429 = vector.broadcast %427 : vector<1x128xf32> to vector<128x128xf32>
    %430 = arith.addf %428, %429 : vector<128x128xf32>
    %c26 = arith.constant 26 : index
    %431 = memref.load %arg10[%c26] : memref<32xf32, #tpu.memory_space<smem>>
    %432 = vector.broadcast %431 : f32 to vector<128x128xf32>
    %433 = arith.mulf %26, %432 : vector<128x128xf32>
    %434 = arith.addf %430, %433 : vector<128x128xf32>
    %cst_80 = arith.constant 0.000000e+00 : f32
    %435 = vector.broadcast %cst_80 : f32 to vector<128x128xf32>
    %436 = arith.maximumf %434, %435 : vector<128x128xf32>
    %c26_81 = arith.constant 26 : index
    %437 = memref.load %arg11[%c26_81] : memref<32xf32, #tpu.memory_space<smem>>
    %438 = vector.broadcast %437 : f32 to vector<128x128xf32>
    %439 = arith.mulf %436, %438 : vector<128x128xf32>
    %440 = arith.addf %425, %439 : vector<128x128xf32>
    %441 = vector.extract_strided_slice %31 {offsets = [0, 27], sizes = [128, 1], strides = [1, 1]} : vector<128x32xf32> to vector<128x1xf32>
    %442 = vector.extract_strided_slice %34 {offsets = [27, 0], sizes = [1, 128], strides = [1, 1]} : vector<32x128xf32> to vector<1x128xf32>
    %443 = vector.broadcast %441 : vector<128x1xf32> to vector<128x128xf32>
    %444 = vector.broadcast %442 : vector<1x128xf32> to vector<128x128xf32>
    %445 = arith.addf %443, %444 : vector<128x128xf32>
    %c27 = arith.constant 27 : index
    %446 = memref.load %arg10[%c27] : memref<32xf32, #tpu.memory_space<smem>>
    %447 = vector.broadcast %446 : f32 to vector<128x128xf32>
    %448 = arith.mulf %26, %447 : vector<128x128xf32>
    %449 = arith.addf %445, %448 : vector<128x128xf32>
    %cst_82 = arith.constant 0.000000e+00 : f32
    %450 = vector.broadcast %cst_82 : f32 to vector<128x128xf32>
    %451 = arith.maximumf %449, %450 : vector<128x128xf32>
    %c27_83 = arith.constant 27 : index
    %452 = memref.load %arg11[%c27_83] : memref<32xf32, #tpu.memory_space<smem>>
    %453 = vector.broadcast %452 : f32 to vector<128x128xf32>
    %454 = arith.mulf %451, %453 : vector<128x128xf32>
    %455 = arith.addf %440, %454 : vector<128x128xf32>
    %456 = vector.extract_strided_slice %31 {offsets = [0, 28], sizes = [128, 1], strides = [1, 1]} : vector<128x32xf32> to vector<128x1xf32>
    %457 = vector.extract_strided_slice %34 {offsets = [28, 0], sizes = [1, 128], strides = [1, 1]} : vector<32x128xf32> to vector<1x128xf32>
    %458 = vector.broadcast %456 : vector<128x1xf32> to vector<128x128xf32>
    %459 = vector.broadcast %457 : vector<1x128xf32> to vector<128x128xf32>
    %460 = arith.addf %458, %459 : vector<128x128xf32>
    %c28 = arith.constant 28 : index
    %461 = memref.load %arg10[%c28] : memref<32xf32, #tpu.memory_space<smem>>
    %462 = vector.broadcast %461 : f32 to vector<128x128xf32>
    %463 = arith.mulf %26, %462 : vector<128x128xf32>
    %464 = arith.addf %460, %463 : vector<128x128xf32>
    %cst_84 = arith.constant 0.000000e+00 : f32
    %465 = vector.broadcast %cst_84 : f32 to vector<128x128xf32>
    %466 = arith.maximumf %464, %465 : vector<128x128xf32>
    %c28_85 = arith.constant 28 : index
    %467 = memref.load %arg11[%c28_85] : memref<32xf32, #tpu.memory_space<smem>>
    %468 = vector.broadcast %467 : f32 to vector<128x128xf32>
    %469 = arith.mulf %466, %468 : vector<128x128xf32>
    %470 = arith.addf %455, %469 : vector<128x128xf32>
    %471 = vector.extract_strided_slice %31 {offsets = [0, 29], sizes = [128, 1], strides = [1, 1]} : vector<128x32xf32> to vector<128x1xf32>
    %472 = vector.extract_strided_slice %34 {offsets = [29, 0], sizes = [1, 128], strides = [1, 1]} : vector<32x128xf32> to vector<1x128xf32>
    %473 = vector.broadcast %471 : vector<128x1xf32> to vector<128x128xf32>
    %474 = vector.broadcast %472 : vector<1x128xf32> to vector<128x128xf32>
    %475 = arith.addf %473, %474 : vector<128x128xf32>
    %c29 = arith.constant 29 : index
    %476 = memref.load %arg10[%c29] : memref<32xf32, #tpu.memory_space<smem>>
    %477 = vector.broadcast %476 : f32 to vector<128x128xf32>
    %478 = arith.mulf %26, %477 : vector<128x128xf32>
    %479 = arith.addf %475, %478 : vector<128x128xf32>
    %cst_86 = arith.constant 0.000000e+00 : f32
    %480 = vector.broadcast %cst_86 : f32 to vector<128x128xf32>
    %481 = arith.maximumf %479, %480 : vector<128x128xf32>
    %c29_87 = arith.constant 29 : index
    %482 = memref.load %arg11[%c29_87] : memref<32xf32, #tpu.memory_space<smem>>
    %483 = vector.broadcast %482 : f32 to vector<128x128xf32>
    %484 = arith.mulf %481, %483 : vector<128x128xf32>
    %485 = arith.addf %470, %484 : vector<128x128xf32>
    %486 = vector.extract_strided_slice %31 {offsets = [0, 30], sizes = [128, 1], strides = [1, 1]} : vector<128x32xf32> to vector<128x1xf32>
    %487 = vector.extract_strided_slice %34 {offsets = [30, 0], sizes = [1, 128], strides = [1, 1]} : vector<32x128xf32> to vector<1x128xf32>
    %488 = vector.broadcast %486 : vector<128x1xf32> to vector<128x128xf32>
    %489 = vector.broadcast %487 : vector<1x128xf32> to vector<128x128xf32>
    %490 = arith.addf %488, %489 : vector<128x128xf32>
    %c30 = arith.constant 30 : index
    %491 = memref.load %arg10[%c30] : memref<32xf32, #tpu.memory_space<smem>>
    %492 = vector.broadcast %491 : f32 to vector<128x128xf32>
    %493 = arith.mulf %26, %492 : vector<128x128xf32>
    %494 = arith.addf %490, %493 : vector<128x128xf32>
    %cst_88 = arith.constant 0.000000e+00 : f32
    %495 = vector.broadcast %cst_88 : f32 to vector<128x128xf32>
    %496 = arith.maximumf %494, %495 : vector<128x128xf32>
    %c30_89 = arith.constant 30 : index
    %497 = memref.load %arg11[%c30_89] : memref<32xf32, #tpu.memory_space<smem>>
    %498 = vector.broadcast %497 : f32 to vector<128x128xf32>
    %499 = arith.mulf %496, %498 : vector<128x128xf32>
    %500 = arith.addf %485, %499 : vector<128x128xf32>
    %501 = vector.extract_strided_slice %31 {offsets = [0, 31], sizes = [128, 1], strides = [1, 1]} : vector<128x32xf32> to vector<128x1xf32>
    %502 = vector.extract_strided_slice %34 {offsets = [31, 0], sizes = [1, 128], strides = [1, 1]} : vector<32x128xf32> to vector<1x128xf32>
    %503 = vector.broadcast %501 : vector<128x1xf32> to vector<128x128xf32>
    %504 = vector.broadcast %502 : vector<1x128xf32> to vector<128x128xf32>
    %505 = arith.addf %503, %504 : vector<128x128xf32>
    %c31 = arith.constant 31 : index
    %506 = memref.load %arg10[%c31] : memref<32xf32, #tpu.memory_space<smem>>
    %507 = vector.broadcast %506 : f32 to vector<128x128xf32>
    %508 = arith.mulf %26, %507 : vector<128x128xf32>
    %509 = arith.addf %505, %508 : vector<128x128xf32>
    %cst_90 = arith.constant 0.000000e+00 : f32
    %510 = vector.broadcast %cst_90 : f32 to vector<128x128xf32>
    %511 = arith.maximumf %509, %510 : vector<128x128xf32>
    %c31_91 = arith.constant 31 : index
    %512 = memref.load %arg11[%c31_91] : memref<32xf32, #tpu.memory_space<smem>>
    %513 = vector.broadcast %512 : f32 to vector<128x128xf32>
    %514 = arith.mulf %511, %513 : vector<128x128xf32>
    %515 = arith.addf %500, %514 : vector<128x128xf32>
    %c0_92 = arith.constant 0 : index
    %c0_93 = arith.constant 0 : index
    %516 = vector.load %arg9[%c0_92, %c0_93] : memref<1x1xf32, #tpu.memory_space<vmem>>, vector<1x1xf32>
    %517 = vector.broadcast %516 : vector<1x1xf32> to vector<128x128xf32>
    %518 = arith.addf %515, %517 : vector<128x128xf32>
    %519 = arith.negf %518 : vector<128x128xf32>
    %520 = math.exp %519 : vector<128x128xf32>
    %cst_94 = arith.constant 1.000000e+00 : f32
    %521 = vector.broadcast %cst_94 : f32 to vector<128x128xf32>
    %522 = arith.addf %521, %520 : vector<128x128xf32>
    %523 = arith.divf %521, %522 : vector<128x128xf32>
    %c0_95 = arith.constant 0 : index
    %c0_96 = arith.constant 0 : index
    %c0_97 = arith.constant 0 : index
    %524 = vector.load %arg12[%c0_95, %c0_96, %c0_97] : memref<1x128x128xf32, #tpu.memory_space<vmem>>, vector<1x128x128xf32>
    %525 = vector.shape_cast %524 : vector<1x128x128xf32> to vector<128x128xf32>
    %526 = vector.shape_cast %523 : vector<128x128xf32> to vector<1x128x128xf32>
    tpu.vector_store %arg12[%c0_95, %c0_96, %c0_97], %526 {strides = array<i32>} : memref<1x128x128xf32, #tpu.memory_space<vmem>>, vector<1x128x128xf32>,
    return
  }
  func.func @transform_0(%arg0: i32, %arg1: i32) -> (i32, i32, i32) {
    %c0_i32 = arith.constant 0 : i32
    %c0_i32_0 = arith.constant 0 : i32
    return %arg0, %arg1, %c0_i32 : i32, i32, i32
  }
  func.func @transform_1(%arg0: i32, %arg1: i32) -> (i32, i32, i32) {
    %c0_i32 = arith.constant 0 : i32
    %c0_i32_0 = arith.constant 0 : i32
    return %arg0, %arg1, %c0_i32 : i32, i32, i32
  }
  func.func @transform_2(%arg0: i32, %arg1: i32) -> (i32, i32, i32) {
    %c0_i32 = arith.constant 0 : i32
    %c0_i32_0 = arith.constant 0 : i32
    %c0_i32_1 = arith.constant 0 : i32
    return %arg0, %c0_i32, %c0_i32_0 : i32, i32, i32
  }
  func.func @transform_3(%arg0: i32, %arg1: i32) -> (i32, i32, i32) {
    %c0_i32 = arith.constant 0 : i32
    %c0_i32_0 = arith.constant 0 : i32
    %c0_i32_1 = arith.constant 0 : i32
    return %arg0, %c0_i32, %c0_i32_0 : i32, i32, i32
  }
  func.func @transform_4(%arg0: i32, %arg1: i32) -> (i32, i32) {
    %c0_i32 = arith.constant 0 : i32
    %c0_i32_0 = arith.constant 0 : i32
    %c0_i32_1 = arith.constant 0 : i32
    return %c0_i32, %c0_i32_0 : i32, i32
  }
  func.func @transform_5(%arg0: i32, %arg1: i32) -> (i32, i32) {
    %c0_i32 = arith.constant 0 : i32
    %c0_i32_0 = arith.constant 0 : i32
    %c0_i32_1 = arith.constant 0 : i32
    return %c0_i32, %c0_i32_0 : i32, i32
  }
  func.func @transform_6(%arg0: i32, %arg1: i32) -> (i32, i32) {
    %c0_i32 = arith.constant 0 : i32
    %c0_i32_0 = arith.constant 0 : i32
    %c0_i32_1 = arith.constant 0 : i32
    return %c0_i32, %c0_i32_0 : i32, i32
  }
  func.func @transform_7(%arg0: i32, %arg1: i32) -> (i32, i32) {
    %c0_i32 = arith.constant 0 : i32
    %c0_i32_0 = arith.constant 0 : i32
    %c0_i32_1 = arith.constant 0 : i32
    return %c0_i32, %c0_i32_0 : i32, i32
  }
  func.func @transform_8(%arg0: i32, %arg1: i32) -> i32 {
    %c0_i32 = arith.constant 0 : i32
    %c0_i32_0 = arith.constant 0 : i32
    return %c0_i32 : i32
  }
  func.func @transform_9(%arg0: i32, %arg1: i32) -> i32 {
    %c0_i32 = arith.constant 0 : i32
    %c0_i32_0 = arith.constant 0 : i32
    return %c0_i32 : i32
  }
  func.func @transform_10(%arg0: i32, %arg1: i32) -> (i32, i32, i32) {
    %c0_i32 = arith.constant 0 : i32
    %c0_i32_0 = arith.constant 0 : i32
    return %arg0, %arg1, %c0_i32 : i32, i32, i32
  }
}

</mosaic_0001>

<llo_original>
// kernel: uedm_forward.3
$region0: #{uedm_forward.3}
  #allocation0 [shape = 'u32[]', space=smem, size = 0x4, offset = 0x4, fixed_abs, tag = 'smem constant byte address 0x4 - core index']
  #allocation1 [shape = 'u32[144,128]{1,0:T(1,128)}', space=vmem, size = 0x12000, scoped, tag = 'internal scratch']
  %s0 = inlined_call_operand.vmem [shape: f32[16,16], index: 0, kind: input, shape index: {}]
  %s1 = inlined_call_operand.vmem [shape: f32[16,3], index: 1, kind: input, shape index: {}]
  %s2 = inlined_call_operand.vmem [shape: f32[16,32], index: 2, kind: input, shape index: {}]
  %s3 = inlined_call_operand.vmem [shape: f32[3,32], index: 3, kind: input, shape index: {}]
  %s4 = inlined_call_operand.vmem [shape: f32[1,32], index: 4, kind: input, shape index: {}]
  %s5 = inlined_call_operand.vmem [shape: f32[32,32], index: 5, kind: input, shape index: {}]
  %s6 = inlined_call_operand.vmem [shape: f32[1,32], index: 6, kind: input, shape index: {}]
  %s7 = inlined_call_operand.hbm [shape: f32[16,32], index: 7, kind: output, shape index: {}]
  %s8 = sld [smem:[#allocation0]]
  $region38: #{uedm_forward.3} parent=0
    _
  %s10 = ssub.s32 1, %s8
  %s11 = scalar_select 0, %s10, %s8
  $region1: #{uedm_forward.3} parent=0
    #allocation2 [shape = 'u8[8192]{0}', space=vmem, size = 0x2000, scoped, tag = 'output window, operand 0, single buffered']
    #allocation3 [shape = 's32[1]{0}', space=sflag, size = 0x4, scoped, tag = 'scoped memory for uedm_forward.3']
    %12 = vsyncpa [#allocation3], 0
    // Predicated region
    $region2: #{uedm_forward.3} parent=1 // pred_check
      _
    $region3: #{uedm_forward.3} parent=1 // pred_check_branch
      %14 = sbr.rel (0) target = $region5
    $region4: #{uedm_forward.3} parent=1 // pred_region
      _
    $region5: #{uedm_forward.3} parent=1 // pred_fallthru
      _
    // Predicated region
    $region6: #{uedm_forward.3} parent=1 // pred_check
      _
    $region7: #{uedm_forward.3} parent=1 // pred_check_branch
      %16 = sbr.rel (0) target = $region9
    $region8: #{uedm_forward.3} parent=1 // pred_region
      _
    $region9: #{uedm_forward.3} parent=1 // pred_fallthru
      _
    // Predicated region
    $region10: #{uedm_forward.3} parent=1 // pred_check
      _
    $region11: #{uedm_forward.3} parent=1 // pred_check_branch
      %18 = sbr.rel (0) target = $region13
    $region12: #{uedm_forward.3} parent=1 // pred_region
      _
    $region13: #{uedm_forward.3} parent=1 // pred_fallthru
      _
    // Predicated region
    $region14: #{uedm_forward.3} parent=1 // pred_check
      _
    $region15: #{uedm_forward.3} parent=1 // pred_check_branch
      %20 = sbr.rel (0) target = $region17
    $region16: #{uedm_forward.3} parent=1 // pred_region
      _
    $region17: #{uedm_forward.3} parent=1 // pred_fallthru
      _
    // Predicated region
    $region18: #{uedm_forward.3} parent=1 // pred_check
      _
    $region19: #{uedm_forward.3} parent=1 // pred_check_branch
      %22 = sbr.rel (0) target = $region21
    $region20: #{uedm_forward.3} parent=1 // pred_region
      _
    $region21: #{uedm_forward.3} parent=1 // pred_fallthru
      _
    // Predicated region
    $region22: #{uedm_forward.3} parent=1 // pred_check
      _
    $region23: #{uedm_forward.3} parent=1 // pred_check_branch
      %24 = sbr.rel (0) target = $region25
    $region24: #{uedm_forward.3} parent=1 // pred_region
      _
    $region25: #{uedm_forward.3} parent=1 // pred_fallthru
      _
    // Predicated region
    $region26: #{uedm_forward.3} parent=1 // pred_check
      _
    $region27: #{uedm_forward.3} parent=1 // pred_check_branch
      %26 = sbr.rel (0) target = $region29
    $region28: #{uedm_forward.3} parent=1 // pred_region
      _
    $region29: #{uedm_forward.3} parent=1 // pred_fallthru
      _
    %v28 = vld [vmem:[%s0] sm:$0xff]
    %v29 = vld [vmem:[%s0 + $0x8] sm:$0xff]
    %v30 = vpack.c.bf16 %v29, %v28
    %v31 = vld [vmem:[%s2] sm:$0xff]
    %v32 = vld [vmem:[%s2 + $0x8] sm:$0xff]
    %v33 = vpack.c.bf16 %v32, %v31
    %v34 = vld [vmem:[%s1] sm:$0xff]
    %v35 = vld [vmem:[%s1 + $0x8] sm:$0xff]
    %v36 = vpack.c.bf16 %v35, %v34
    %v37 = vld [vmem:[%s3] sm:$0x7]
    %v38 = vpack.c.bf16 %v37, %v37
    %vm39 = vcmask 23552
    %v41 = vsel %vm39, %v36, 0
    %vm43 = vcmask 1040384
    %vm44 = vcmask 1041408
    %v45 = vsel %vm43, 4294967295, 65535
    %v46 = vsel %vm44, %v45, 0
    %v48 = vand.u32 %v38, %v46
    %50 = vmatprep.subr.bf16.mxu0 0
    %51 = vmatpush1.bf16.msra.mxu0 %v48
    %52 = vmatprep.subr.bf16.mxu0 0
    %53 = vmatpush1.bf16.msra.mxu0 0
    %54 = vmatprep.subr.bf16.mxu0 0
    %55 = vmatpush1.bf16.msra.mxu0 0
    %56 = vmatprep.subr.bf16.mxu0 0
    %57 = vmatpush1.bf16.msra.mxu0 0
    %58 = vmatprep.subr.bf16.mxu0 0
    %59 = vmatpush1.bf16.msra.mxu0 0
    %60 = vmatprep.subr.bf16.mxu0 0
    %61 = vmatpush1.bf16.msra.mxu0 0
    %62 = vmatprep.subr.bf16.mxu0 0
    %63 = vmatpush1.bf16.msra.mxu0 0
    %64 = vmatprep.subr.bf16.mxu0 0
    %65 = vmatpush1.bf16.msra.mxu0 0
    %66 = vmatprep.subr.bf16.mxu0 0
    %67 = vmatpush1.bf16.msra.mxu0 0
    %68 = vmatprep.subr.bf16.mxu0 0
    %69 = vmatpush1.bf16.msra.mxu0 0
    %70 = vmatprep.subr.bf16.mxu0 0
    %71 = vmatpush1.bf16.msra.mxu0 0
    %72 = vmatprep.subr.bf16.mxu0 0
    %73 = vmatpush1.bf16.msra.mxu0 0
    %74 = vmatprep.subr.bf16.mxu0 0
    %75 = vmatpush1.bf16.msra.mxu0 0
    %76 = vmatprep.subr.bf16.mxu0 0
    %77 = vmatpush1.bf16.msra.mxu0 0
    %78 = vmatprep.subr.bf16.mxu0 0
    %79 = vmatpush1.bf16.msra.mxu0 0
    %80 = vmatprep.subr.bf16.mxu0 0
    %81 = vmatpush1.bf16.msra.mxu0 0
    %82 = vmatprep.mubr.bf16.mxu0 0
    %83 = vmatmul.mubr.bf16.gmra.mrb[0].mxu0 %v41
    %v84 = vpop.f32.mrb[0].mxu0
    %v85 = vadd.f32 0.0, %v84
    %v86 = vpop.f32.mrb[0].mxu0
    %v87 = vpop.f32.mrb[0].mxu0
    %v88 = vadd.f32 0.0, %v87
    %v89 = vpop.f32.mrb[0].mxu0
    %90 = vdwg.mxu0
    %vm91 = vcmask 130048
    %v93 = vsel %vm91, %v30, 0
    %95 = vmatprep.subr.bf16.mxu0 0
    %96 = vmatpush1.bf16.msra.mxu0 %v33
    %97 = vmatprep.subr.bf16.mxu0 0
    %98 = vmatpush1.bf16.msra.mxu0 0
    %99 = vmatprep.subr.bf16.mxu0 0
    %100 = vmatpush1.bf16.msra.mxu0 0
    %101 = vmatprep.subr.bf16.mxu0 0
    %102 = vmatpush1.bf16.msra.mxu0 0
    %103 = vmatprep.subr.bf16.mxu0 0
    %104 = vmatpush1.bf16.msra.mxu0 0
    %105 = vmatprep.subr.bf16.mxu0 0
    %106 = vmatpush1.bf16.msra.mxu0 0
    %107 = vmatprep.subr.bf16.mxu0 0
    %108 = vmatpush1.bf16.msra.mxu0 0
    %109 = vmatprep.subr.bf16.mxu0 0
    %110 = vmatpush1.bf16.msra.mxu0 0
    %111 = vmatprep.subr.bf16.mxu0 0
    %112 = vmatpush1.bf16.msra.mxu0 0
    %113 = vmatprep.subr.bf16.mxu0 0
    %114 = vmatpush1.bf16.msra.mxu0 0
    %115 = vmatprep.subr.bf16.mxu0 0
    %116 = vmatpush1.bf16.msra.mxu0 0
    %117 = vmatprep.subr.bf16.mxu0 0
    %118 = vmatpush1.bf16.msra.mxu0 0
    %119 = vmatprep.subr.bf16.mxu0 0
    %120 = vmatpush1.bf16.msra.mxu0 0
    %121 = vmatprep.subr.bf16.mxu0 0
    %122 = vmatpush1.bf16.msra.mxu0 0
    %123 = vmatprep.subr.bf16.mxu0 0
    %124 = vmatpush1.bf16.msra.mxu0 0
    %125 = vmatprep.subr.bf16.mxu0 0
    %126 = vmatpush1.bf16.msra.mxu0 0
    %127 = vmatprep.mubr.bf16.mxu0 0
    %128 = vmatmul.mubr.bf16.gmra.mrb[0].mxu0 %v93
    %v129 = vpop.f32.mrb[0].mxu0
    %v130 = vadd.f32 %v85, %v129
    %v131 = vpop.f32.mrb[0].mxu0
    %v132 = vpop.f32.mrb[0].mxu0
    %v133 = vadd.f32 %v88, %v132
    %v134 = vpop.f32.mrb[0].mxu0
    %135 = vdwg.mxu0
    %v136 = vld [vmem:[%s4] sm:$0x1]
    %v138 = vlaneseq
    %v139 = vshrl.u32 %v138, 7
    %v140 = vsub.s32 0, %v139
    %v141 = vrot.slane %v136, %v140
    %v143 = vadd.f32 %v130, %v141
    %v144 = vadd.f32 %v133, %v141
    %v145 = vmax.f32 %v143, 0.0
    %v146 = vmax.f32 %v144, 0.0
    %v147 = vpack.c.bf16 %v146, %v145
    %v148 = vld [vmem:[%s5] sm:$0xff]
    %v149 = vld [vmem:[%s5 + $0x8] sm:$0xff]
    %v150 = vld [vmem:[%s5 + $0x10] sm:$0xff]
    %v151 = vld [vmem:[%s5 + $0x18] sm:$0xff]
    %v152 = vpack.c.bf16 %v149, %v148
    %v153 = vpack.c.bf16 %v151, %v150
    %v154 = vld [vmem:[%s6] sm:$0x1]
    %v156 = vlaneseq
    %v157 = vshrl.u32 %v156, 7
    %v158 = vsub.s32 0, %v157
    %v159 = vrot.slane %v154, %v158
    %vm161 = vcmask 261120
    %v163 = vsel %vm161, %v147, 0
    %165 = vmatprep.subr.bf16.mxu0 0
    %166 = vmatpush1.bf16.msra.mxu0 %v152
    %167 = vmatprep.subr.bf16.mxu0 0
    %168 = vmatpush1.bf16.msra.mxu0 %v153
    %169 = vmatprep.subr.bf16.mxu0 0
    %170 = vmatpush1.bf16.msra.mxu0 0
    %171 = vmatprep.subr.bf16.mxu0 0
    %172 = vmatpush1.bf16.msra.mxu0 0
    %173 = vmatprep.subr.bf16.mxu0 0
    %174 = vmatpush1.bf16.msra.mxu0 0
    %175 = vmatprep.subr.bf16.mxu0 0
    %176 = vmatpush1.bf16.msra.mxu0 0
    %177 = vmatprep.subr.bf16.mxu0 0
    %178 = vmatpush1.bf16.msra.mxu0 0
    %179 = vmatprep.subr.bf16.mxu0 0
    %180 = vmatpush1.bf16.msra.mxu0 0
    %181 = vmatprep.subr.bf16.mxu0 0
    %182 = vmatpush1.bf16.msra.mxu0 0
    %183 = vmatprep.subr.bf16.mxu0 0
    %184 = vmatpush1.bf16.msra.mxu0 0
    %185 = vmatprep.subr.bf16.mxu0 0
    %186 = vmatpush1.bf16.msra.mxu0 0
    %187 = vmatprep.subr.bf16.mxu0 0
    %188 = vmatpush1.bf16.msra.mxu0 0
    %189 = vmatprep.subr.bf16.mxu0 0
    %190 = vmatpush1.bf16.msra.mxu0 0
    %191 = vmatprep.subr.bf16.mxu0 0
    %192 = vmatpush1.bf16.msra.mxu0 0
    %193 = vmatprep.subr.bf16.mxu0 0
    %194 = vmatpush1.bf16.msra.mxu0 0
    %195 = vmatprep.subr.bf16.mxu0 0
    %196 = vmatpush1.bf16.msra.mxu0 0
    %197 = vmatprep.mubr.bf16.mxu0 0
    %198 = vmatmul.mubr.bf16.gmra.mrb[0].mxu0 %v163
    %v199 = vpop.f32.mrb[0].mxu0
    %v200 = vadd.f32 %v159, %v199
    %v201 = vpop.f32.mrb[0].mxu0
    %v202 = vpop.f32.mrb[0].mxu0
    %v203 = vadd.f32 %v159, %v202
    %v204 = vpop.f32.mrb[0].mxu0
    %205 = vdwg.mxu0
    %206 = vst.msk [vmem:[#allocation2] sm:$0xff] %vm161, %v200
    %207 = vst.msk [vmem:[#allocation2 + $0x8] sm:$0xff] %vm161, %v203
    // Predicated region
    $region30: #{uedm_forward.3} parent=1 // pred_check
      _
    $region31: #{uedm_forward.3} parent=1 // pred_check_branch
      %209 = sbr.rel (0) target = $region33
    $region32: #{uedm_forward.3} parent=1 // pred_region
      %s211 = ssub.s32 256, 256
      %212 = vsyncadd [#allocation3], %s211
      %s213 = sshll.u32 [#allocation2], 4
      %s214 = int_to_ptr.vmem [resolvable:$true] %s213
      %219 = dma.vmem_to_hbm [thread:$0]  %s214, 256, %s7, [#allocation3], 128, 128, 8
    $region33: #{uedm_forward.3} parent=1 // pred_fallthru
      _
    // Predicated region
    $region34: #{uedm_forward.3} parent=1 // pred_check
      _
    $region35: #{uedm_forward.3} parent=1 // pred_check_branch
      %221 = sbr.rel (0) target = $region37
    $region36: #{uedm_forward.3} parent=1 // pred_region
      %222 = dma.done [#allocation3], 256
    $region37: #{uedm_forward.3} parent=1 // pred_fallthru
      _
    %223 = vsyncpa [#allocation3], 1

// kernel: uedm_forward.4
$region0: #{uedm_forward.4}
  #allocation0 [shape = 'u32[]', space=smem, size = 0x4, offset = 0x4, fixed_abs, tag = 'smem constant byte address 0x4 - core index']
  #allocation1 [shape = 'u32[144,128]{1,0:T(1,128)}', space=vmem, size = 0x12000, scoped, tag = 'internal scratch']
  %s0 = inlined_call_operand.vmem [shape: f32[2], index: 0, kind: input, shape index: {}]
  %s1 = inlined_call_operand.vmem [shape: f32[2,128,16], index: 1, kind: input, shape index: {}]
  %s2 = inlined_call_operand.vmem [shape: f32[2,128,3], index: 2, kind: input, shape index: {}]
  %s3 = inlined_call_operand.vmem [shape: f32[16,32], index: 3, kind: input, shape index: {}]
  %s4 = inlined_call_operand.vmem [shape: f32[3,32], index: 4, kind: input, shape index: {}]
  %s5 = inlined_call_operand.vmem [shape: f32[1,32], index: 5, kind: input, shape index: {}]
  %s6 = inlined_call_operand.vmem [shape: f32[1,32], index: 6, kind: input, shape index: {}]
  %s7 = inlined_call_operand.vmem [shape: f32[32,16], index: 7, kind: input, shape index: {}]
  %s8 = inlined_call_operand.vmem [shape: f32[32,3], index: 8, kind: input, shape index: {}]
  %s9 = inlined_call_operand.vmem [shape: f32[1,16], index: 9, kind: input, shape index: {}]
  %s10 = inlined_call_operand.vmem [shape: f32[1,3], index: 10, kind: input, shape index: {}]
  %s11 = inlined_call_operand.vmem [shape: f32[2,128,16], index: 11, kind: output, shape index: {0}]
  %s12 = inlined_call_operand.vmem [shape: f32[2,128,3], index: 12, kind: output, shape index: {1}]
  %13 = xla_tuple %s11, %s12
  %s14 = sld [smem:[#allocation0]]
  $region89: #{uedm_forward.4} parent=0
    _
  %s16 = ssub.s32 1, %s14
  %s17 = scalar_select 0, %s16, %s14
  $region1: #{uedm_forward.4} parent=0
    #allocation2 [shape = 'u8[512]{0}', space=smem, size = 0x200, scoped, tag = 'input window, operand 0, single buffered']
    #allocation3 [shape = 's32[2]{0}', space=sflag, size = 0x8, scoped, tag = 'scoped memory for uedm_forward.4']
    %18 = vsyncpa [#allocation3], 0
    loop: start=0, step=1, limit=4
    $region2: #{uedm_forward.4} parent=1 // loop_pre_header
      _
    $region3: #{uedm_forward.4} parent=1 // loop_header
      %s20 = sphi 0, %s24
      %p21 = scmp.ge.s32.totalorder %s20, 4
      %s27 = sphi 0, %s39
      %s28 = sphi 0, %s35
      %s29 = sphi 0, %s27
      %s30 = sphi 0, %s28
      %s31 = sphi 0, %s29
      %s32 = sphi 0, %s30
      %s40 = sphi 0, %s40
      %s42 = sphi 0, %s40
      %s43 = sphi 0, %s42
      %s57 = sphi 0, %s43
      %s65 = sphi 0, %s67
      %s68 = sphi 0, %s65
      %s69 = sphi 0, %s68
      %s85 = sphi 0, %s69
      %s93 = sphi 0, %s95
      %s96 = sphi 0, %s93
      %s97 = sphi 0, %s96
      %s113 = sphi 0, %s97
      %s117 = sphi 0, %s117
      %s119 = sphi 0, %s117
      %s120 = sphi 0, %s119
      %s134 = sphi 0, %s120
      %s138 = sphi 0, %s138
      %s140 = sphi 0, %s138
      %s141 = sphi 0, %s140
      %s155 = sphi 0, %s141
      %s159 = sphi 0, %s159
      %s161 = sphi 0, %s159
      %s162 = sphi 0, %s161
      %s176 = sphi 0, %s162
      %s180 = sphi 0, %s180
      %s182 = sphi 0, %s180
      %s183 = sphi 0, %s182
      %s197 = sphi 0, %s183
      %s201 = sphi 0, %s201
      %s203 = sphi 0, %s201
      %s204 = sphi 0, %s203
      %s218 = sphi 0, %s204
      %s222 = sphi 0, %s222
      %s224 = sphi 0, %s222
      %s225 = sphi 0, %s224
      %s239 = sphi 0, %s225
      %s243 = sphi 0, %s243
      %s245 = sphi 0, %s243
      %s246 = sphi 0, %s245
      %s260 = sphi 0, %s246
      %s264 = sphi 0, %s264
      %s266 = sphi 0, %s264
      %s267 = sphi 0, %s266
      %s281 = sphi 0, %s267
      %s289 = sphi 0, %s291
      %s292 = sphi 0, %s289
      %s293 = sphi 0, %s292
      %s309 = sphi 0, %s293
      %s317 = sphi 0, %s319
      %s320 = sphi 0, %s317
      %s321 = sphi 0, %s320
      %s337 = sphi 0, %s321
    $region4: #{uedm_forward.4} parent=1 // loop_header_branch
      %23 = sbr.rel (%p21) target = $region8
    $region5: #{uedm_forward.4} parent=1 // loop_body
      %s25 = ssub.s32 %s20, 1
      %s26 = ssub.s32 %s20, 2
      %s33 = sadd.s32 1, %s28
      %p34 = scmp.ge.s32.totalorder %s33, 1
      %s35 = scalar_select %p34, 0, %s33
      %s36 = sadd.s32 1, %s27
      %s37 = scalar_select %p34, %s36, %s27
      %p38 = scmp.ge.s32.totalorder %s37, 2
      %s39 = scalar_select %p38, 0, %s37
      %s41 = sadd.s32 %s40, 1
      %p44 = scmp.eq.s32.totalorder %s20, 1
      %p45 = scmp.ne.s32.totalorder %s40, %s42
      %p46 = scmp.eq.s32.totalorder %s20, 0
      %p47 = por %p45, %p46
      %p48 = scmp.ne.s32.totalorder %s40, %s42
      %p49 = scmp.eq.s32.totalorder %s25, 1
      %p50 = por %p48, %p49
      %p51 = scmp.ne.s32.totalorder %s42, %s43
      %p52 = scmp.eq.s32.totalorder %s25, 0
      %p53 = por %p51, %p52
      %p54 = scmp.ne.s32.totalorder %s42, %s43
      %p55 = scmp.eq.s32.totalorder %s26, 1
      %p56 = por %p54, %p55
      %p58 = scmp.ne.s32.totalorder %s43, %s57
      %p59 = scmp.eq.s32.totalorder %s26, 0
      %p60 = por %p58, %p59
      %s61 = ssub.s32 %s27, %s39
      %s62 = ssub.s32 %s28, %s35
      %s63 = sor.u32 %s61, %s62
      %p64 = scmp.eq.s32.totalorder %s63, 0
      %s66 = sadd.s32 %s65, 1
      %s67 = scalar_select %p64, %s65, %s66
      %p70 = pneg %p64
      %p71 = scmp.eq.s32.totalorder %s20, 1
      %p72 = por %p70, %p71
      %p73 = scmp.ne.s32.totalorder %s65, %s68
      %p74 = scmp.eq.s32.totalorder %s20, 0
      %p75 = por %p73, %p74
      %p76 = scmp.ne.s32.totalorder %s65, %s68
      %p77 = scmp.eq.s32.totalorder %s25, 1
      %p78 = por %p76, %p77
      %p79 = scmp.ne.s32.totalorder %s68, %s69
      %p80 = scmp.eq.s32.totalorder %s25, 0
      %p81 = por %p79, %p80
      %p82 = scmp.ne.s32.totalorder %s68, %s69
      %p83 = scmp.eq.s32.totalorder %s26, 1
      %p84 = por %p82, %p83
      %p86 = scmp.ne.s32.totalorder %s69, %s85
      %p87 = scmp.eq.s32.totalorder %s26, 0
      %p88 = por %p86, %p87
      %s89 = ssub.s32 %s27, %s39
      %s90 = ssub.s32 %s28, %s35
      %s91 = sor.u32 %s89, %s90
      %p92 = scmp.eq.s32.totalorder %s91, 0
      %s94 = sadd.s32 %s93, 1
      %s95 = scalar_select %p92, %s93, %s94
      %p98 = pneg %p92
      %p99 = scmp.eq.s32.totalorder %s20, 1
      %p100 = por %p98, %p99
      %p101 = scmp.ne.s32.totalorder %s93, %s96
      %p102 = scmp.eq.s32.totalorder %s20, 0
      %p103 = por %p101, %p102
      %p104 = scmp.ne.s32.totalorder %s93, %s96
      %p105 = scmp.eq.s32.totalorder %s25, 1
      %p106 = por %p104, %p105
      %p107 = scmp.ne.s32.totalorder %s96, %s97
      %p108 = scmp.eq.s32.totalorder %s25, 0
      %p109 = por %p107, %p108
      %p110 = scmp.ne.s32.totalorder %s96, %s97
      %p111 = scmp.eq.s32.totalorder %s26, 1
      %p112 = por %p110, %p111
      %p114 = scmp.ne.s32.totalorder %s97, %s113
      %p115 = scmp.eq.s32.totalorder %s26, 0
      %p116 = por %p114, %p115
      %s118 = sadd.s32 %s117, 1
      %p121 = scmp.eq.s32.totalorder %s20, 1
      %p122 = scmp.ne.s32.totalorder %s117, %s119
      %p123 = scmp.eq.s32.totalorder %s20, 0
      %p124 = por %p122, %p123
      %p125 = scmp.ne.s32.totalorder %s117, %s119
      %p126 = scmp.eq.s32.totalorder %s25, 1
      %p127 = por %p125, %p126
      %p128 = scmp.ne.s32.totalorder %s119, %s120
      %p129 = scmp.eq.s32.totalorder %s25, 0
      %p130 = por %p128, %p129
      %p131 = scmp.ne.s32.totalorder %s119, %s120
      %p132 = scmp.eq.s32.totalorder %s26, 1
      %p133 = por %p131, %p132
      %p135 = scmp.ne.s32.totalorder %s120, %s134
      %p136 = scmp.eq.s32.totalorder %s26, 0
      %p137 = por %p135, %p136
      %s139 = sadd.s32 %s138, 1
      %p142 = scmp.eq.s32.totalorder %s20, 1
      %p143 = scmp.ne.s32.totalorder %s138, %s140
      %p144 = scmp.eq.s32.totalorder %s20, 0
      %p145 = por %p143, %p144
      %p146 = scmp.ne.s32.totalorder %s138, %s140
      %p147 = scmp.eq.s32.totalorder %s25, 1
      %p148 = por %p146, %p147
      %p149 = scmp.ne.s32.totalorder %s140, %s141
      %p150 = scmp.eq.s32.totalorder %s25, 0
      %p151 = por %p149, %p150
      %p152 = scmp.ne.s32.totalorder %s140, %s141
      %p153 = scmp.eq.s32.totalorder %s26, 1
      %p154 = por %p152, %p153
      %p156 = scmp.ne.s32.totalorder %s141, %s155
      %p157 = scmp.eq.s32.totalorder %s26, 0
      %p158 = por %p156, %p157
      %s160 = sadd.s32 %s159, 1
      %p163 = scmp.eq.s32.totalorder %s20, 1
      %p164 = scmp.ne.s32.totalorder %s159, %s161
      %p165 = scmp.eq.s32.totalorder %s20, 0
      %p166 = por %p164, %p165
      %p167 = scmp.ne.s32.totalorder %s159, %s161
      %p168 = scmp.eq.s32.totalorder %s25, 1
      %p169 = por %p167, %p168
      %p170 = scmp.ne.s32.totalorder %s161, %s162
      %p171 = scmp.eq.s32.totalorder %s25, 0
      %p172 = por %p170, %p171
      %p173 = scmp.ne.s32.totalorder %s161, %s162
      %p174 = scmp.eq.s32.totalorder %s26, 1
      %p175 = por %p173, %p174
      %p177 = scmp.ne.s32.totalorder %s162, %s176
      %p178 = scmp.eq.s32.totalorder %s26, 0
      %p179 = por %p177, %p178
      %s181 = sadd.s32 %s180, 1
      %p184 = scmp.eq.s32.totalorder %s20, 1
      %p185 = scmp.ne.s32.totalorder %s180, %s182
      %p186 = scmp.eq.s32.totalorder %s20, 0
      %p187 = por %p185, %p186
      %p188 = scmp.ne.s32.totalorder %s180, %s182
      %p189 = scmp.eq.s32.totalorder %s25, 1
      %p190 = por %p188, %p189
      %p191 = scmp.ne.s32.totalorder %s182, %s183
      %p192 = scmp.eq.s32.totalorder %s25, 0
      %p193 = por %p191, %p192
      %p194 = scmp.ne.s32.totalorder %s182, %s183
      %p195 = scmp.eq.s32.totalorder %s26, 1
      %p196 = por %p194, %p195
      %p198 = scmp.ne.s32.totalorder %s183, %s197
      %p199 = scmp.eq.s32.totalorder %s26, 0
      %p200 = por %p198, %p199
      %s202 = sadd.s32 %s201, 1
      %p205 = scmp.eq.s32.totalorder %s20, 1
      %p206 = scmp.ne.s32.totalorder %s201, %s203
      %p207 = scmp.eq.s32.totalorder %s20, 0
      %p208 = por %p206, %p207
      %p209 = scmp.ne.s32.totalorder %s201, %s203
      %p210 = scmp.eq.s32.totalorder %s25, 1
      %p211 = por %p209, %p210
      %p212 = scmp.ne.s32.totalorder %s203, %s204
      %p213 = scmp.eq.s32.totalorder %s25, 0
      %p214 = por %p212, %p213
      %p215 = scmp.ne.s32.totalorder %s203, %s204
      %p216 = scmp.eq.s32.totalorder %s26, 1
      %p217 = por %p215, %p216
      %p219 = scmp.ne.s32.totalorder %s204, %s218
      %p220 = scmp.eq.s32.totalorder %s26, 0
      %p221 = por %p219, %p220
      %s223 = sadd.s32 %s222, 1
      %p226 = scmp.eq.s32.totalorder %s20, 1
      %p227 = scmp.ne.s32.totalorder %s222, %s224
      %p228 = scmp.eq.s32.totalorder %s20, 0
      %p229 = por %p227, %p228
      %p230 = scmp.ne.s32.totalorder %s222, %s224
      %p231 = scmp.eq.s32.totalorder %s25, 1
      %p232 = por %p230, %p231
      %p233 = scmp.ne.s32.totalorder %s224, %s225
      %p234 = scmp.eq.s32.totalorder %s25, 0
      %p235 = por %p233, %p234
      %p236 = scmp.ne.s32.totalorder %s224, %s225
      %p237 = scmp.eq.s32.totalorder %s26, 1
      %p238 = por %p236, %p237
      %p240 = scmp.ne.s32.totalorder %s225, %s239
      %p241 = scmp.eq.s32.totalorder %s26, 0
      %p242 = por %p240, %p241
      %s244 = sadd.s32 %s243, 1
      %p247 = scmp.eq.s32.totalorder %s20, 1
      %p248 = scmp.ne.s32.totalorder %s243, %s245
      %p249 = scmp.eq.s32.totalorder %s20, 0
      %p250 = por %p248, %p249
      %p251 = scmp.ne.s32.totalorder %s243, %s245
      %p252 = scmp.eq.s32.totalorder %s25, 1
      %p253 = por %p251, %p252
      %p254 = scmp.ne.s32.totalorder %s245, %s246
      %p255 = scmp.eq.s32.totalorder %s25, 0
      %p256 = por %p254, %p255
      %p257 = scmp.ne.s32.totalorder %s245, %s246
      %p258 = scmp.eq.s32.totalorder %s26, 1
      %p259 = por %p257, %p258
      %p261 = scmp.ne.s32.totalorder %s246, %s260
      %p262 = scmp.eq.s32.totalorder %s26, 0
      %p263 = por %p261, %p262
      %s265 = sadd.s32 %s264, 1
      %p268 = scmp.eq.s32.totalorder %s20, 1
      %p269 = scmp.ne.s32.totalorder %s264, %s266
      %p270 = scmp.eq.s32.totalorder %s20, 0
      %p271 = por %p269, %p270
      %p272 = scmp.ne.s32.totalorder %s264, %s266
      %p273 = scmp.eq.s32.totalorder %s25, 1
      %p274 = por %p272, %p273
      %p275 = scmp.ne.s32.totalorder %s266, %s267
      %p276 = scmp.eq.s32.totalorder %s25, 0
      %p277 = por %p275, %p276
      %p278 = scmp.ne.s32.totalorder %s266, %s267
      %p279 = scmp.eq.s32.totalorder %s26, 1
      %p280 = por %p278, %p279
      %p282 = scmp.ne.s32.totalorder %s267, %s281
      %p283 = scmp.eq.s32.totalorder %s26, 0
      %p284 = por %p282, %p283
      %s285 = ssub.s32 %s27, %s39
      %s286 = ssub.s32 %s28, %s35
      %s287 = sor.u32 %s285, %s286
      %p288 = scmp.eq.s32.totalorder %s287, 0
      %s290 = sadd.s32 %s289, 1
      %s291 = scalar_select %p288, %s289, %s290
      %p294 = pneg %p288
      %p295 = scmp.eq.s32.totalorder %s20, 1
      %p296 = por %p294, %p295
      %p297 = scmp.ne.s32.totalorder %s289, %s292
      %p298 = scmp.eq.s32.totalorder %s20, 0
      %p299 = por %p297, %p298
      %p300 = scmp.ne.s32.totalorder %s289, %s292
      %p301 = scmp.eq.s32.totalorder %s25, 1
      %p302 = por %p300, %p301
      %p303 = scmp.ne.s32.totalorder %s292, %s293
      %p304 = scmp.eq.s32.totalorder %s25, 0
      %p305 = por %p303, %p304
      %p306 = scmp.ne.s32.totalorder %s292, %s293
      %p307 = scmp.eq.s32.totalorder %s26, 1
      %p308 = por %p306, %p307
      %p310 = scmp.ne.s32.totalorder %s293, %s309
      %p311 = scmp.eq.s32.totalorder %s26, 0
      %p312 = por %p310, %p311
      %s313 = ssub.s32 %s27, %s39
      %s314 = ssub.s32 %s28, %s35
      %s315 = sor.u32 %s313, %s314
      %p316 = scmp.eq.s32.totalorder %s315, 0
      %s318 = sadd.s32 %s317, 1
      %s319 = scalar_select %p316, %s317, %s318
      %p322 = pneg %p316
      %p323 = scmp.eq.s32.totalorder %s20, 1
      %p324 = por %p322, %p323
      %p325 = scmp.ne.s32.totalorder %s317, %s320
      %p326 = scmp.eq.s32.totalorder %s20, 0
      %p327 = por %p325, %p326
      %p328 = scmp.ne.s32.totalorder %s317, %s320
      %p329 = scmp.eq.s32.totalorder %s25, 1
      %p330 = por %p328, %p329
      %p331 = scmp.ne.s32.totalorder %s320, %s321
      %p332 = scmp.eq.s32.totalorder %s25, 0
      %p333 = por %p331, %p332
      %p334 = scmp.ne.s32.totalorder %s320, %s321
      %p335 = scmp.eq.s32.totalorder %s26, 1
      %p336 = por %p334, %p335
      %p338 = scmp.ne.s32.totalorder %s321, %s337
      %p339 = scmp.eq.s32.totalorder %s26, 0
      %p340 = por %p338, %p339
      %p341 = scmp.le.s32.totalorder 1, %s20
      %p342 = scmp.lt.s32.totalorder %s20, 3
      %p343 = pnand %p341, %p342
      %p344 = pneg %p343
      // Predicated region
      $region9: #{uedm_forward.4} parent=5 // pred_check
        _
      $region10: #{uedm_forward.4} parent=5 // pred_check_branch
        %346 = sbr.rel (%p343) target = $region12
      $region11: #{uedm_forward.4} parent=5 // pred_region
        %s347 = ssub.s32 %s20, 1
        // Predicated region
        $region13: #{uedm_forward.4} parent=11 // pred_check
          %p348 = pneg %p53
        $region14: #{uedm_forward.4} parent=11 // pred_check_branch
          %350 = sbr.rel (%p348) target = $region16
        $region15: #{uedm_forward.4} parent=11 // pred_region
          %s352 = ssub.s32 16, 16
          %353 = vsyncadd [#allocation3], %s352
          %s355 = sshll.u32 %s0, 4
          %s356 = int_to_ptr.vmem [resolvable:$true] %s355
          %358 = dma.vmem_to_smem %s356, 16, [#allocation2], [#allocation3]
        $region16: #{uedm_forward.4} parent=11 // pred_fallthru
          _
        // Predicated region
        $region17: #{uedm_forward.4} parent=11 // pred_check
          %p359 = pneg %p130
        $region18: #{uedm_forward.4} parent=11 // pred_check_branch
          %361 = sbr.rel (%p359) target = $region20
        $region19: #{uedm_forward.4} parent=11 // pred_region
          _
        $region20: #{uedm_forward.4} parent=11 // pred_fallthru
          _
        // Predicated region
        $region21: #{uedm_forward.4} parent=11 // pred_check
          %p362 = pneg %p151
        $region22: #{uedm_forward.4} parent=11 // pred_check_branch
          %364 = sbr.rel (%p362) target = $region24
        $region23: #{uedm_forward.4} parent=11 // pred_region
          _
        $region24: #{uedm_forward.4} parent=11 // pred_fallthru
          _
        // Predicated region
        $region25: #{uedm_forward.4} parent=11 // pred_check
          %p365 = pneg %p172
        $region26: #{uedm_forward.4} parent=11 // pred_check_branch
          %367 = sbr.rel (%p365) target = $region28
        $region27: #{uedm_forward.4} parent=11 // pred_region
          _
        $region28: #{uedm_forward.4} parent=11 // pred_fallthru
          _
        // Predicated region
        $region29: #{uedm_forward.4} parent=11 // pred_check
          %p368 = pneg %p193
        $region30: #{uedm_forward.4} parent=11 // pred_check_branch
          %370 = sbr.rel (%p368) target = $region32
        $region31: #{uedm_forward.4} parent=11 // pred_region
          _
        $region32: #{uedm_forward.4} parent=11 // pred_fallthru
          _
        // Predicated region
        $region33: #{uedm_forward.4} parent=11 // pred_check
          %p371 = pneg %p214
        $region34: #{uedm_forward.4} parent=11 // pred_check_branch
          %373 = sbr.rel (%p371) target = $region36
        $region35: #{uedm_forward.4} parent=11 // pred_region
          _
        $region36: #{uedm_forward.4} parent=11 // pred_fallthru
          _
        // Predicated region
        $region37: #{uedm_forward.4} parent=11 // pred_check
          %p374 = pneg %p235
        $region38: #{uedm_forward.4} parent=11 // pred_check_branch
          %376 = sbr.rel (%p374) target = $region40
        $region39: #{uedm_forward.4} parent=11 // pred_region
          _
        $region40: #{uedm_forward.4} parent=11 // pred_fallthru
          _
        // Predicated region
        $region41: #{uedm_forward.4} parent=11 // pred_check
          %p377 = pneg %p256
        $region42: #{uedm_forward.4} parent=11 // pred_check_branch
          %379 = sbr.rel (%p377) target = $region44
        $region43: #{uedm_forward.4} parent=11 // pred_region
          _
        $region44: #{uedm_forward.4} parent=11 // pred_fallthru
          _
        // Predicated region
        $region45: #{uedm_forward.4} parent=11 // pred_check
          %p380 = pneg %p277
        $region46: #{uedm_forward.4} parent=11 // pred_check_branch
          %382 = sbr.rel (%p380) target = $region48
        $region47: #{uedm_forward.4} parent=11 // pred_region
          _
        $region48: #{uedm_forward.4} parent=11 // pred_fallthru
          _
      $region12: #{uedm_forward.4} parent=5 // pred_fallthru
        _
      %p383 = scmp.lt.s32.totalorder %s20, 2
      // Predicated region
      $region49: #{uedm_forward.4} parent=5 // pred_check
        %p384 = pneg %p383
      $region50: #{uedm_forward.4} parent=5 // pred_check_branch
        %386 = sbr.rel (%p384) target = $region52
      $region51: #{uedm_forward.4} parent=5 // pred_region
        // Predicated region
        $region53: #{uedm_forward.4} parent=51 // pred_check
          %p387 = pneg %p75
        $region54: #{uedm_forward.4} parent=51 // pred_check_branch
          %389 = sbr.rel (%p387) target = $region56
        $region55: #{uedm_forward.4} parent=51 // pred_region
          %s390 = smul.u32 16, %s28
          %p391 = scmp.lt.s32.totalorder %s27, 1
          %s392 = scalar_select %p391, %s27, 1
          %p393 = scmp.lt.s32.totalorder %s390, 15
          %s394 = scalar_select %p393, %s390, 15
          %s395 = smul.addr %s392, 16
          %s396 = sadd.s32 %s394, %s395
          %s397 = smul.addr %s396, 8
          %s398 = scalar_lea.vmem %s1, %s397
          %s399 = smul.u32 16, %s28
        $region56: #{uedm_forward.4} parent=51 // pred_fallthru
          _
        // Predicated region
        $region57: #{uedm_forward.4} parent=51 // pred_check
          %p400 = pneg %p103
        $region58: #{uedm_forward.4} parent=51 // pred_check_branch
          %402 = sbr.rel (%p400) target = $region60
        $region59: #{uedm_forward.4} parent=51 // pred_region
          %s403 = smul.u32 16, %s28
          %p404 = scmp.lt.s32.totalorder %s27, 1
          %s405 = scalar_select %p404, %s27, 1
          %p406 = scmp.lt.s32.totalorder %s403, 15
          %s407 = scalar_select %p406, %s403, 15
          %s408 = smul.addr %s405, 16
          %s409 = sadd.s32 %s407, %s408
          %s410 = smul.addr %s409, 8
          %s411 = scalar_lea.vmem %s2, %s410
          %s412 = smul.u32 16, %s28
        $region60: #{uedm_forward.4} parent=51 // pred_fallthru
          _
      $region52: #{uedm_forward.4} parent=5 // pred_fallthru
        _
      %p413 = scmp.le.s32.totalorder 1, %s20
      %p414 = scmp.lt.s32.totalorder %s20, 3
      %p415 = pnand %p413, %p414
      %p416 = pneg %p415
      // Predicated region
      $region61: #{uedm_forward.4} parent=5 // pred_check
        _
      $region62: #{uedm_forward.4} parent=5 // pred_check_branch
        %418 = sbr.rel (%p415) target = $region64
      $region63: #{uedm_forward.4} parent=5 // pred_region
        %s419 = ssub.s32 %s20, 1
        // Predicated region
        $region65: #{uedm_forward.4} parent=63 // pred_check
          %p420 = pneg %p53
        $region66: #{uedm_forward.4} parent=63 // pred_check_branch
          %422 = sbr.rel (%p420) target = $region68
        $region67: #{uedm_forward.4} parent=63 // pred_region
          %423 = dma.done [#allocation3], 16
        $region68: #{uedm_forward.4} parent=63 // pred_fallthru
          _
        %424 = sfence
        %p425 = pneg %p53
        %p426 = pneg %p50
        %s427 = smul.u32 16, %s30
        %p428 = scmp.lt.s32.totalorder %s29, 1
        %s429 = scalar_select %p428, %s29, 1
        %p430 = scmp.lt.s32.totalorder %s427, 15
        %s431 = scalar_select %p430, %s427, 15
        %s432 = smul.addr %s429, 16
        %s433 = sadd.s32 %s431, %s432
        %s434 = smul.addr %s433, 8
        %s435 = scalar_lea.vmem %s1, %s434
        %p436 = pneg %p81
        %p437 = pneg %p78
        %s438 = smul.u32 16, %s30
        %p439 = scmp.lt.s32.totalorder %s29, 1
        %s440 = scalar_select %p439, %s29, 1
        %p441 = scmp.lt.s32.totalorder %s438, 15
        %s442 = scalar_select %p441, %s438, 15
        %s443 = smul.addr %s440, 16
        %s444 = sadd.s32 %s442, %s443
        %s445 = smul.addr %s444, 8
        %s446 = scalar_lea.vmem %s2, %s445
        %p447 = pneg %p109
        %p448 = pneg %p106
        %p449 = pneg %p130
        %p450 = pneg %p127
        %p451 = pneg %p151
        %p452 = pneg %p148
        %p453 = pneg %p172
        %p454 = pneg %p169
        %p455 = pneg %p193
        %p456 = pneg %p190
        %p457 = pneg %p214
        %p458 = pneg %p211
        %p459 = pneg %p235
        %p460 = pneg %p232
        %p461 = pneg %p256
        %p462 = pneg %p253
        %p463 = pneg %p277
        %p464 = pneg %p274
        %p465 = pneg %p305
        %p466 = pneg %p302
        %s467 = smul.u32 16, %s30
        %p468 = scmp.lt.s32.totalorder %s29, 1
        %s469 = scalar_select %p468, %s29, 1
        %p470 = scmp.lt.s32.totalorder %s467, 15
        %s471 = scalar_select %p470, %s467, 15
        %s472 = smul.addr %s469, 16
        %s473 = sadd.s32 %s471, %s472
        %s474 = smul.addr %s473, 8
        %s475 = scalar_lea.vmem %s11, %s474
        %p476 = pneg %p333
        %p477 = pneg %p330
        %s478 = smul.u32 16, %s30
        %p479 = scmp.lt.s32.totalorder %s29, 1
        %s480 = scalar_select %p479, %s29, 1
        %p481 = scmp.lt.s32.totalorder %s478, 15
        %s482 = scalar_select %p481, %s478, 15
        %s483 = smul.addr %s480, 16
        %s484 = sadd.s32 %s482, %s483
        %s485 = smul.addr %s484, 8
        %s486 = scalar_lea.vmem %s12, %s485
        %s487 = smul.u32 16, %s30
        %p488 = scmp.lt.s32.totalorder %s29, 1
        %s489 = scalar_select %p488, %s29, 1
        %p490 = scmp.lt.s32.totalorder %s487, 15
        %s491 = scalar_select %p490, %s487, 15
        %s492 = smul.addr %s489, 16
        %s493 = sadd.s32 %s491, %s492
        %s494 = smul.addr %s493, 8
        %s495 = scalar_lea.vmem %s1, %s494
        %s496 = smul.u32 16, %s30
        %s497 = smul.u32 16, %s30
        %p498 = scmp.lt.s32.totalorder %s29, 1
        %s499 = scalar_select %p498, %s29, 1
        %p500 = scmp.lt.s32.totalorder %s497, 15
        %s501 = scalar_select %p500, %s497, 15
        %s502 = smul.addr %s499, 16
        %s503 = sadd.s32 %s501, %s502
        %s504 = smul.addr %s503, 8
        %s505 = scalar_lea.vmem %s2, %s504
        %s506 = smul.u32 16, %s30
        %s507 = smul.u32 16, %s30
        %p508 = scmp.lt.s32.totalorder %s29, 1
        %s509 = scalar_select %p508, %s29, 1
        %p510 = scmp.lt.s32.totalorder %s507, 15
        %s511 = scalar_select %p510, %s507, 15
        %s512 = smul.addr %s509, 16
        %s513 = sadd.s32 %s511, %s512
        %s514 = smul.addr %s513, 8
        %s515 = scalar_lea.vmem %s11, %s514
        %s516 = smul.u32 16, %s30
        %s517 = smul.u32 16, %s30
        %p518 = scmp.lt.s32.totalorder %s29, 1
        %s519 = scalar_select %p518, %s29, 1
        %p520 = scmp.lt.s32.totalorder %s517, 15
        %s521 = scalar_select %p520, %s517, 15
        %s522 = smul.addr %s519, 16
        %s523 = sadd.s32 %s521, %s522
        %s524 = smul.addr %s523, 8
        %s525 = scalar_lea.vmem %s12, %s524
        %s526 = smul.u32 16, %s30
        %v528 = vld [vmem:[%s495] sm:$0xff]
        %v529 = vld [vmem:[%s495 + $0x8] sm:$0xff]
        %v530 = vld [vmem:[%s495 + $0x10] sm:$0xff]
        %v531 = vld [vmem:[%s495 + $0x18] sm:$0xff]
        %v532 = vld [vmem:[%s495 + $0x20] sm:$0xff]
        %v533 = vld [vmem:[%s495 + $0x28] sm:$0xff]
        %v534 = vld [vmem:[%s495 + $0x30] sm:$0xff]
        %v535 = vld [vmem:[%s495 + $0x38] sm:$0xff]
        %v536 = vld [vmem:[%s495 + $0x40] sm:$0xff]
        %v537 = vld [vmem:[%s495 + $0x48] sm:$0xff]
        %v538 = vld [vmem:[%s495 + $0x50] sm:$0xff]
        %v539 = vld [vmem:[%s495 + $0x58] sm:$0xff]
        %v540 = vld [vmem:[%s495 + $0x60] sm:$0xff]
        %v541 = vld [vmem:[%s495 + $0x68] sm:$0xff]
        %v542 = vld [vmem:[%s495 + $0x70] sm:$0xff]
        %v543 = vld [vmem:[%s495 + $0x78] sm:$0xff]
        %v544 = vpack.c.bf16 %v529, %v528
        %v545 = vpack.c.bf16 %v531, %v530
        %v546 = vpack.c.bf16 %v533, %v532
        %v547 = vpack.c.bf16 %v535, %v534
        %v548 = vpack.c.bf16 %v537, %v536
        %v549 = vpack.c.bf16 %v539, %v538
        %v550 = vpack.c.bf16 %v541, %v540
        %v551 = vpack.c.bf16 %v543, %v542
        %v552 = vld [vmem:[%s3] sm:$0xff]
        %v553 = vld [vmem:[%s3 + $0x8] sm:$0xff]
        %v554 = vpack.c.bf16 %v553, %v552
        %v555 = vld [vmem:[%s505] sm:$0xff]
        %v556 = vld [vmem:[%s505 + $0x8] sm:$0xff]
        %v557 = vld [vmem:[%s505 + $0x10] sm:$0xff]
        %v558 = vld [vmem:[%s505 + $0x18] sm:$0xff]
        %v559 = vld [vmem:[%s505 + $0x20] sm:$0xff]
        %v560 = vld [vmem:[%s505 + $0x28] sm:$0xff]
        %v561 = vld [vmem:[%s505 + $0x30] sm:$0xff]
        %v562 = vld [vmem:[%s505 + $0x38] sm:$0xff]
        %v563 = vld [vmem:[%s505 + $0x40] sm:$0xff]
        %v564 = vld [vmem:[%s505 + $0x48] sm:$0xff]
        %v565 = vld [vmem:[%s505 + $0x50] sm:$0xff]
        %v566 = vld [vmem:[%s505 + $0x58] sm:$0xff]
        %v567 = vld [vmem:[%s505 + $0x60] sm:$0xff]
        %v568 = vld [vmem:[%s505 + $0x68] sm:$0xff]
        %v569 = vld [vmem:[%s505 + $0x70] sm:$0xff]
        %v570 = vld [vmem:[%s505 + $0x78] sm:$0xff]
        %v571 = vpack.c.bf16 %v556, %v555
        %v572 = vpack.c.bf16 %v558, %v557
        %v573 = vpack.c.bf16 %v560, %v559
        %v574 = vpack.c.bf16 %v562, %v561
        %v575 = vpack.c.bf16 %v564, %v563
        %v576 = vpack.c.bf16 %v566, %v565
        %v577 = vpack.c.bf16 %v568, %v567
        %v578 = vpack.c.bf16 %v570, %v569
        %v579 = vld [vmem:[%s4] sm:$0x7]
        %v580 = vpack.c.bf16 %v579, %v579
        %vm581 = vcmask 23552
        %v583 = vsel %vm581, %v571, 0
        %v586 = vsel %vm581, %v572, 0
        %v589 = vsel %vm581, %v573, 0
        %v592 = vsel %vm581, %v574, 0
        %v595 = vsel %vm581, %v575, 0
        %v598 = vsel %vm581, %v576, 0
        %v601 = vsel %vm581, %v577, 0
        %v604 = vsel %vm581, %v578, 0
        %vm606 = vcmask 1040384
        %vm607 = vcmask 1041408
        %v608 = vsel %vm606, 4294967295, 65535
        %v609 = vsel %vm607, %v608, 0
        %v611 = vand.u32 %v580, %v609
        %613 = vmatprep.subr.bf16.mxu0 0
        %614 = vmatpush1.bf16.msra.mxu0 %v611
        %615 = vmatprep.subr.bf16.mxu0 0
        %616 = vmatpush1.bf16.msra.mxu0 0
        %617 = vmatprep.subr.bf16.mxu0 0
        %618 = vmatpush1.bf16.msra.mxu0 0
        %619 = vmatprep.subr.bf16.mxu0 0
        %620 = vmatpush1.bf16.msra.mxu0 0
        %621 = vmatprep.subr.bf16.mxu0 0
        %622 = vmatpush1.bf16.msra.mxu0 0
        %623 = vmatprep.subr.bf16.mxu0 0
        %624 = vmatpush1.bf16.msra.mxu0 0
        %625 = vmatprep.subr.bf16.mxu0 0
        %626 = vmatpush1.bf16.msra.mxu0 0
        %627 = vmatprep.subr.bf16.mxu0 0
        %628 = vmatpush1.bf16.msra.mxu0 0
        %629 = vmatprep.subr.bf16.mxu0 0
        %630 = vmatpush1.bf16.msra.mxu0 0
        %631 = vmatprep.subr.bf16.mxu0 0
        %632 = vmatpush1.bf16.msra.mxu0 0
        %633 = vmatprep.subr.bf16.mxu0 0
        %634 = vmatpush1.bf16.msra.mxu0 0
        %635 = vmatprep.subr.bf16.mxu0 0
        %636 = vmatpush1.bf16.msra.mxu0 0
        %637 = vmatprep.subr.bf16.mxu0 0
        %638 = vmatpush1.bf16.msra.mxu0 0
        %639 = vmatprep.subr.bf16.mxu0 0
        %640 = vmatpush1.bf16.msra.mxu0 0
        %641 = vmatprep.subr.bf16.mxu0 0
        %642 = vmatpush1.bf16.msra.mxu0 0
        %643 = vmatprep.subr.bf16.mxu0 0
        %644 = vmatpush1.bf16.msra.mxu0 0
        %645 = vmatprep.mubr.bf16.mxu0 0
        %646 = vmatmul.mubr.bf16.gmra.mrb[0].mxu0 %v583
        %v647 = vpop.f32.mrb[0].mxu0
        %v648 = vadd.f32 0.0, %v647
        %v649 = vpop.f32.mrb[0].mxu0
        %v650 = vpop.f32.mrb[0].mxu0
        %v651 = vadd.f32 0.0, %v650
        %v652 = vpop.f32.mrb[0].mxu0
        %653 = vmatprep.mubr.bf16.mxu0 0
        %654 = vmatmul.mubr.bf16.gmra.mrb[0].mxu0 %v586
        %v655 = vpop.f32.mrb[0].mxu0
        %v656 = vadd.f32 0.0, %v655
        %v657 = vpop.f32.mrb[0].mxu0
        %v658 = vpop.f32.mrb[0].mxu0
        %v659 = vadd.f32 0.0, %v658
        %v660 = vpop.f32.mrb[0].mxu0
        %661 = vmatprep.mubr.bf16.mxu0 0
        %662 = vmatmul.mubr.bf16.gmra.mrb[0].mxu0 %v589
        %v663 = vpop.f32.mrb[0].mxu0
        %v664 = vadd.f32 0.0, %v663
        %v665 = vpop.f32.mrb[0].mxu0
        %v666 = vpop.f32.mrb[0].mxu0
        %v667 = vadd.f32 0.0, %v666
        %v668 = vpop.f32.mrb[0].mxu0
        %669 = vmatprep.mubr.bf16.mxu0 0
        %670 = vmatmul.mubr.bf16.gmra.mrb[0].mxu0 %v592
        %v671 = vpop.f32.mrb[0].mxu0
        %v672 = vadd.f32 0.0, %v671
        %v673 = vpop.f32.mrb[0].mxu0
        %v674 = vpop.f32.mrb[0].mxu0
        %v675 = vadd.f32 0.0, %v674
        %v676 = vpop.f32.mrb[0].mxu0
        %677 = vmatprep.mubr.bf16.mxu0 0
        %678 = vmatmul.mubr.bf16.gmra.mrb[0].mxu0 %v595
        %v679 = vpop.f32.mrb[0].mxu0
        %v680 = vadd.f32 0.0, %v679
        %v681 = vpop.f32.mrb[0].mxu0
        %v682 = vpop.f32.mrb[0].mxu0
        %v683 = vadd.f32 0.0, %v682
        %v684 = vpop.f32.mrb[0].mxu0
        %685 = vmatprep.mubr.bf16.mxu0 0
        %686 = vmatmul.mubr.bf16.gmra.mrb[0].mxu0 %v598
        %v687 = vpop.f32.mrb[0].mxu0
        %v688 = vadd.f32 0.0, %v687
        %v689 = vpop.f32.mrb[0].mxu0
        %v690 = vpop.f32.mrb[0].mxu0
        %v691 = vadd.f32 0.0, %v690
        %v692 = vpop.f32.mrb[0].mxu0
        %693 = vmatprep.mubr.bf16.mxu0 0
        %694 = vmatmul.mubr.bf16.gmra.mrb[0].mxu0 %v601
        %v695 = vpop.f32.mrb[0].mxu0
        %v696 = vadd.f32 0.0, %v695
        %v697 = vpop.f32.mrb[0].mxu0
        %v698 = vpop.f32.mrb[0].mxu0
        %v699 = vadd.f32 0.0, %v698
        %v700 = vpop.f32.mrb[0].mxu0
        %701 = vmatprep.mubr.bf16.mxu0 0
        %702 = vmatmul.mubr.bf16.gmra.mrb[0].mxu0 %v604
        %v703 = vpop.f32.mrb[0].mxu0
        %v704 = vadd.f32 0.0, %v703
        %v705 = vpop.f32.mrb[0].mxu0
        %v706 = vpop.f32.mrb[0].mxu0
        %v707 = vadd.f32 0.0, %v706
        %v708 = vpop.f32.mrb[0].mxu0
        %709 = vdwg.mxu0
        %vm710 = vcmask 130048
        %v712 = vsel %vm710, %v544, 0
        %v715 = vsel %vm710, %v545, 0
        %v718 = vsel %vm710, %v546, 0
        %v721 = vsel %vm710, %v547, 0
        %v724 = vsel %vm710, %v548, 0
        %v727 = vsel %vm710, %v549, 0
        %v730 = vsel %vm710, %v550, 0
        %v733 = vsel %vm710, %v551, 0
        %735 = vmatprep.subr.bf16.mxu0 0
        %736 = vmatpush1.bf16.msra.mxu0 %v554
        %737 = vmatprep.subr.bf16.mxu0 0
        %738 = vmatpush1.bf16.msra.mxu0 0
        %739 = vmatprep.subr.bf16.mxu0 0
        %740 = vmatpush1.bf16.msra.mxu0 0
        %741 = vmatprep.subr.bf16.mxu0 0
        %742 = vmatpush1.bf16.msra.mxu0 0
        %743 = vmatprep.subr.bf16.mxu0 0
        %744 = vmatpush1.bf16.msra.mxu0 0
        %745 = vmatprep.subr.bf16.mxu0 0
        %746 = vmatpush1.bf16.msra.mxu0 0
        %747 = vmatprep.subr.bf16.mxu0 0
        %748 = vmatpush1.bf16.msra.mxu0 0
        %749 = vmatprep.subr.bf16.mxu0 0
        %750 = vmatpush1.bf16.msra.mxu0 0
        %751 = vmatprep.subr.bf16.mxu0 0
        %752 = vmatpush1.bf16.msra.mxu0 0
        %753 = vmatprep.subr.bf16.mxu0 0
        %754 = vmatpush1.bf16.msra.mxu0 0
        %755 = vmatprep.subr.bf16.mxu0 0
        %756 = vmatpush1.bf16.msra.mxu0 0
        %757 = vmatprep.subr.bf16.mxu0 0
        %758 = vmatpush1.bf16.msra.mxu0 0
        %759 = vmatprep.subr.bf16.mxu0 0
        %760 = vmatpush1.bf16.msra.mxu0 0
        %761 = vmatprep.subr.bf16.mxu0 0
        %762 = vmatpush1.bf16.msra.mxu0 0
        %763 = vmatprep.subr.bf16.mxu0 0
        %764 = vmatpush1.bf16.msra.mxu0 0
        %765 = vmatprep.subr.bf16.mxu0 0
        %766 = vmatpush1.bf16.msra.mxu0 0
        %767 = vmatprep.mubr.bf16.mxu0 0
        %768 = vmatmul.mubr.bf16.gmra.mrb[0].mxu0 %v712
        %v769 = vpop.f32.mrb[0].mxu0
        %v770 = vadd.f32 %v648, %v769
        %v771 = vpop.f32.mrb[0].mxu0
        %v772 = vpop.f32.mrb[0].mxu0
        %v773 = vadd.f32 %v651, %v772
        %v774 = vpop.f32.mrb[0].mxu0
        %775 = vmatprep.mubr.bf16.mxu0 0
        %776 = vmatmul.mubr.bf16.gmra.mrb[0].mxu0 %v715
        %v777 = vpop.f32.mrb[0].mxu0
        %v778 = vadd.f32 %v656, %v777
        %v779 = vpop.f32.mrb[0].mxu0
        %v780 = vpop.f32.mrb[0].mxu0
        %v781 = vadd.f32 %v659, %v780
        %v782 = vpop.f32.mrb[0].mxu0
        %783 = vmatprep.mubr.bf16.mxu0 0
        %784 = vmatmul.mubr.bf16.gmra.mrb[0].mxu0 %v718
        %v785 = vpop.f32.mrb[0].mxu0
        %v786 = vadd.f32 %v664, %v785
        %v787 = vpop.f32.mrb[0].mxu0
        %v788 = vpop.f32.mrb[0].mxu0
        %v789 = vadd.f32 %v667, %v788
        %v790 = vpop.f32.mrb[0].mxu0
        %791 = vmatprep.mubr.bf16.mxu0 0
        %792 = vmatmul.mubr.bf16.gmra.mrb[0].mxu0 %v721
        %v793 = vpop.f32.mrb[0].mxu0
        %v794 = vadd.f32 %v672, %v793
        %v795 = vpop.f32.mrb[0].mxu0
        %v796 = vpop.f32.mrb[0].mxu0
        %v797 = vadd.f32 %v675, %v796
        %v798 = vpop.f32.mrb[0].mxu0
        %799 = vmatprep.mubr.bf16.mxu0 0
        %800 = vmatmul.mubr.bf16.gmra.mrb[0].mxu0 %v724
        %v801 = vpop.f32.mrb[0].mxu0
        %v802 = vadd.f32 %v680, %v801
        %v803 = vpop.f32.mrb[0].mxu0
        %v804 = vpop.f32.mrb[0].mxu0
        %v805 = vadd.f32 %v683, %v804
        %v806 = vpop.f32.mrb[0].mxu0
        %807 = vmatprep.mubr.bf16.mxu0 0
        %808 = vmatmul.mubr.bf16.gmra.mrb[0].mxu0 %v727
        %v809 = vpop.f32.mrb[0].mxu0
        %v810 = vadd.f32 %v688, %v809
        %v811 = vpop.f32.mrb[0].mxu0
        %v812 = vpop.f32.mrb[0].mxu0
        %v813 = vadd.f32 %v691, %v812
        %v814 = vpop.f32.mrb[0].mxu0
        %815 = vmatprep.mubr.bf16.mxu0 0
        %816 = vmatmul.mubr.bf16.gmra.mrb[0].mxu0 %v730
        %v817 = vpop.f32.mrb[0].mxu0
        %v818 = vadd.f32 %v696, %v817
        %v819 = vpop.f32.mrb[0].mxu0
        %v820 = vpop.f32.mrb[0].mxu0
        %v821 = vadd.f32 %v699, %v820
        %v822 = vpop.f32.mrb[0].mxu0
        %823 = vmatprep.mubr.bf16.mxu0 0
        %824 = vmatmul.mubr.bf16.gmra.mrb[0].mxu0 %v733
        %v825 = vpop.f32.mrb[0].mxu0
        %v826 = vadd.f32 %v704, %v825
        %v827 = vpop.f32.mrb[0].mxu0
        %v828 = vpop.f32.mrb[0].mxu0
        %v829 = vadd.f32 %v707, %v828
        %v830 = vpop.f32.mrb[0].mxu0
        %831 = vdwg.mxu0
        %s832 = sld [smem:[#allocation2 + %s29]]
        %v833 = vld [vmem:[%s5] sm:$0x1]
        %v834 = vstv %s832
        %v835 = vmul.f32 %v834, %v833
        %v837 = vlaneseq
        %v838 = vshrl.u32 %v837, 7
        %v839 = vsub.s32 0, %v838
        %v840 = vrot.slane %v835, %v839
        %v842 = vadd.f32 %v770, %v840
        %v843 = vadd.f32 %v773, %v840
        %v844 = vadd.f32 %v778, %v840
        %v845 = vadd.f32 %v781, %v840
        %v846 = vadd.f32 %v786, %v840
        %v847 = vadd.f32 %v789, %v840
        %v848 = vadd.f32 %v794, %v840
        %v849 = vadd.f32 %v797, %v840
        %v850 = vadd.f32 %v802, %v840
        %v851 = vadd.f32 %v805, %v840
        %v852 = vadd.f32 %v810, %v840
        %v853 = vadd.f32 %v813, %v840
        %v854 = vadd.f32 %v818, %v840
        %v855 = vadd.f32 %v821, %v840
        %v856 = vadd.f32 %v826, %v840
        %v857 = vadd.f32 %v829, %v840
        %v858 = vld [vmem:[%s6] sm:$0x1]
        %v860 = vlaneseq
        %v861 = vshrl.u32 %v860, 7
        %v862 = vsub.s32 0, %v861
        %v863 = vrot.slane %v858, %v862
        %v865 = vadd.f32 %v842, %v863
        %v866 = vadd.f32 %v843, %v863
        %v867 = vadd.f32 %v844, %v863
        %v868 = vadd.f32 %v845, %v863
        %v869 = vadd.f32 %v846, %v863
        %v870 = vadd.f32 %v847, %v863
        %v871 = vadd.f32 %v848, %v863
        %v872 = vadd.f32 %v849, %v863
        %v873 = vadd.f32 %v850, %v863
        %v874 = vadd.f32 %v851, %v863
        %v875 = vadd.f32 %v852, %v863
        %v876 = vadd.f32 %v853, %v863
        %v877 = vadd.f32 %v854, %v863
        %v878 = vadd.f32 %v855, %v863
        %v879 = vadd.f32 %v856, %v863
        %v880 = vadd.f32 %v857, %v863
        %v881 = vmax.f32 %v865, 0.0
        %v882 = vmax.f32 %v866, 0.0
        %v883 = vmax.f32 %v867, 0.0
        %v884 = vmax.f32 %v868, 0.0
        %v885 = vmax.f32 %v869, 0.0
        %v886 = vmax.f32 %v870, 0.0
        %v887 = vmax.f32 %v871, 0.0
        %v888 = vmax.f32 %v872, 0.0
        %v889 = vmax.f32 %v873, 0.0
        %v890 = vmax.f32 %v874, 0.0
        %v891 = vmax.f32 %v875, 0.0
        %v892 = vmax.f32 %v876, 0.0
        %v893 = vmax.f32 %v877, 0.0
        %v894 = vmax.f32 %v878, 0.0
        %v895 = vmax.f32 %v879, 0.0
        %v896 = vmax.f32 %v880, 0.0
        %v897 = vpack.c.bf16 %v882, %v881
        %v898 = vpack.c.bf16 %v884, %v883
        %v899 = vpack.c.bf16 %v886, %v885
        %v900 = vpack.c.bf16 %v888, %v887
        %v901 = vpack.c.bf16 %v890, %v889
        %v902 = vpack.c.bf16 %v892, %v891
        %v903 = vpack.c.bf16 %v894, %v893
        %v904 = vpack.c.bf16 %v896, %v895
        %v905 = vld [vmem:[%s7] sm:$0xff]
        %v906 = vld [vmem:[%s7 + $0x8] sm:$0xff]
        %v907 = vld [vmem:[%s7 + $0x10] sm:$0xff]
        %v908 = vld [vmem:[%s7 + $0x18] sm:$0xff]
        %v909 = vpack.c.bf16 %v906, %v905
        %v910 = vpack.c.bf16 %v908, %v907
        %v911 = vld [vmem:[%s9] sm:$0x1]
        %v913 = vlaneseq
        %v914 = vshrl.u32 %v913, 7
        %v915 = vsub.s32 0, %v914
        %v916 = vrot.slane %v911, %v915
        %vm918 = vcmask 261120
        %v920 = vsel %vm918, %v897, 0
        %v923 = vsel %vm918, %v898, 0
        %v926 = vsel %vm918, %v899, 0
        %v929 = vsel %vm918, %v900, 0
        %v932 = vsel %vm918, %v901, 0
        %v935 = vsel %vm918, %v902, 0
        %v938 = vsel %vm918, %v903, 0
        %v941 = vsel %vm918, %v904, 0
        %943 = vmatprep.subr.bf16.mxu0 0
        %944 = vmatpush1.bf16.msra.mxu0 %v909
        %945 = vmatprep.subr.bf16.mxu0 0
        %946 = vmatpush1.bf16.msra.mxu0 %v910
        %947 = vmatprep.subr.bf16.mxu0 0
        %948 = vmatpush1.bf16.msra.mxu0 0
        %949 = vmatprep.subr.bf16.mxu0 0
        %950 = vmatpush1.bf16.msra.mxu0 0
        %951 = vmatprep.subr.bf16.mxu0 0
        %952 = vmatpush1.bf16.msra.mxu0 0
        %953 = vmatprep.subr.bf16.mxu0 0
        %954 = vmatpush1.bf16.msra.mxu0 0
        %955 = vmatprep.subr.bf16.mxu0 0
        %956 = vmatpush1.bf16.msra.mxu0 0
        %957 = vmatprep.subr.bf16.mxu0 0
        %958 = vmatpush1.bf16.msra.mxu0 0
        %959 = vmatprep.subr.bf16.mxu0 0
        %960 = vmatpush1.bf16.msra.mxu0 0
        %961 = vmatprep.subr.bf16.mxu0 0
        %962 = vmatpush1.bf16.msra.mxu0 0
        %963 = vmatprep.subr.bf16.mxu0 0
        %964 = vmatpush1.bf16.msra.mxu0 0
        %965 = vmatprep.subr.bf16.mxu0 0
        %966 = vmatpush1.bf16.msra.mxu0 0
        %967 = vmatprep.subr.bf16.mxu0 0
        %968 = vmatpush1.bf16.msra.mxu0 0
        %969 = vmatprep.subr.bf16.mxu0 0
        %970 = vmatpush1.bf16.msra.mxu0 0
        %971 = vmatprep.subr.bf16.mxu0 0
        %972 = vmatpush1.bf16.msra.mxu0 0
        %973 = vmatprep.subr.bf16.mxu0 0
        %974 = vmatpush1.bf16.msra.mxu0 0
        %975 = vmatprep.mubr.bf16.mxu0 0
        %976 = vmatmul.mubr.bf16.gmra.mrb[0].mxu0 %v920
        %v977 = vpop.f32.mrb[0].mxu0
        %v978 = vadd.f32 %v916, %v977
        %v979 = vpop.f32.mrb[0].mxu0
        %v980 = vpop.f32.mrb[0].mxu0
        %v981 = vadd.f32 %v916, %v980
        %v982 = vpop.f32.mrb[0].mxu0
        %983 = vmatprep.mubr.bf16.mxu0 0
        %984 = vmatmul.mubr.bf16.gmra.mrb[0].mxu0 %v923
        %v985 = vpop.f32.mrb[0].mxu0
        %v986 = vadd.f32 %v916, %v985
        %v987 = vpop.f32.mrb[0].mxu0
        %v988 = vpop.f32.mrb[0].mxu0
        %v989 = vadd.f32 %v916, %v988
        %v990 = vpop.f32.mrb[0].mxu0
        %991 = vmatprep.mubr.bf16.mxu0 0
        %992 = vmatmul.mubr.bf16.gmra.mrb[0].mxu0 %v926
        %v993 = vpop.f32.mrb[0].mxu0
        %v994 = vadd.f32 %v916, %v993
        %v995 = vpop.f32.mrb[0].mxu0
        %v996 = vpop.f32.mrb[0].mxu0
        %v997 = vadd.f32 %v916, %v996
        %v998 = vpop.f32.mrb[0].mxu0
        %999 = vmatprep.mubr.bf16.mxu0 0
        %1000 = vmatmul.mubr.bf16.gmra.mrb[0].mxu0 %v929
        %v1001 = vpop.f32.mrb[0].mxu0
        %v1002 = vadd.f32 %v916, %v1001
        %v1003 = vpop.f32.mrb[0].mxu0
        %v1004 = vpop.f32.mrb[0].mxu0
        %v1005 = vadd.f32 %v916, %v1004
        %v1006 = vpop.f32.mrb[0].mxu0
        %1007 = vmatprep.mubr.bf16.mxu0 0
        %1008 = vmatmul.mubr.bf16.gmra.mrb[0].mxu0 %v932
        %v1009 = vpop.f32.mrb[0].mxu0
        %v1010 = vadd.f32 %v916, %v1009
        %v1011 = vpop.f32.mrb[0].mxu0
        %v1012 = vpop.f32.mrb[0].mxu0
        %v1013 = vadd.f32 %v916, %v1012
        %v1014 = vpop.f32.mrb[0].mxu0
        %1015 = vmatprep.mubr.bf16.mxu0 0
        %1016 = vmatmul.mubr.bf16.gmra.mrb[0].mxu0 %v935
        %v1017 = vpop.f32.mrb[0].mxu0
        %v1018 = vadd.f32 %v916, %v1017
        %v1019 = vpop.f32.mrb[0].mxu0
        %v1020 = vpop.f32.mrb[0].mxu0
        %v1021 = vadd.f32 %v916, %v1020
        %v1022 = vpop.f32.mrb[0].mxu0
        %1023 = vmatprep.mubr.bf16.mxu0 0
        %1024 = vmatmul.mubr.bf16.gmra.mrb[0].mxu0 %v938
        %v1025 = vpop.f32.mrb[0].mxu0
        %v1026 = vadd.f32 %v916, %v1025
        %v1027 = vpop.f32.mrb[0].mxu0
        %v1028 = vpop.f32.mrb[0].mxu0
        %v1029 = vadd.f32 %v916, %v1028
        %v1030 = vpop.f32.mrb[0].mxu0
        %1031 = vmatprep.mubr.bf16.mxu0 0
        %1032 = vmatmul.mubr.bf16.gmra.mrb[0].mxu0 %v941
        %v1033 = vpop.f32.mrb[0].mxu0
        %v1034 = vadd.f32 %v916, %v1033
        %v1035 = vpop.f32.mrb[0].mxu0
        %v1036 = vpop.f32.mrb[0].mxu0
        %v1037 = vadd.f32 %v916, %v1036
        %v1038 = vpop.f32.mrb[0].mxu0
        %1039 = vdwg.mxu0
        %1040 = vst.msk [vmem:[%s515] sm:$0xff] %vm710, %v978
        %1041 = vst.msk [vmem:[%s515 + $0x8] sm:$0xff] %vm710, %v981
        %1042 = vst.msk [vmem:[%s515 + $0x10] sm:$0xff] %vm710, %v986
        %1043 = vst.msk [vmem:[%s515 + $0x18] sm:$0xff] %vm710, %v989
        %1044 = vst.msk [vmem:[%s515 + $0x20] sm:$0xff] %vm710, %v994
        %1045 = vst.msk [vmem:[%s515 + $0x28] sm:$0xff] %vm710, %v997
        %1046 = vst.msk [vmem:[%s515 + $0x30] sm:$0xff] %vm710, %v1002
        %1047 = vst.msk [vmem:[%s515 + $0x38] sm:$0xff] %vm710, %v1005
        %1048 = vst.msk [vmem:[%s515 + $0x40] sm:$0xff] %vm710, %v1010
        %1049 = vst.msk [vmem:[%s515 + $0x48] sm:$0xff] %vm710, %v1013
        %1050 = vst.msk [vmem:[%s515 + $0x50] sm:$0xff] %vm710, %v1018
        %1051 = vst.msk [vmem:[%s515 + $0x58] sm:$0xff] %vm710, %v1021
        %1052 = vst.msk [vmem:[%s515 + $0x60] sm:$0xff] %vm710, %v1026
        %1053 = vst.msk [vmem:[%s515 + $0x68] sm:$0xff] %vm710, %v1029
        %1054 = vst.msk [vmem:[%s515 + $0x70] sm:$0xff] %vm710, %v1034
        %1055 = vst.msk [vmem:[%s515 + $0x78] sm:$0xff] %vm710, %v1037
        %v1056 = vld [vmem:[%s8] sm:$0xff]
        %v1057 = vld [vmem:[%s8 + $0x8] sm:$0xff]
        %v1058 = vld [vmem:[%s8 + $0x10] sm:$0xff]
        %v1059 = vld [vmem:[%s8 + $0x18] sm:$0xff]
        %v1060 = vpack.c.bf16 %v1057, %v1056
        %v1061 = vpack.c.bf16 %v1059, %v1058
        %v1062 = vld [vmem:[%s10] sm:$0x1]
        %v1064 = vlaneseq
        %v1065 = vshrl.u32 %v1064, 7
        %v1066 = vsub.s32 0, %v1065
        %v1067 = vrot.slane %v1062, %v1066
        %1069 = vmatprep.subr.bf16.mxu0 0
        %1070 = vmatpush1.bf16.msra.mxu0 %v1060
        %1071 = vmatprep.subr.bf16.mxu0 0
        %1072 = vmatpush1.bf16.msra.mxu0 %v1061
        %1073 = vmatprep.subr.bf16.mxu0 0
        %1074 = vmatpush1.bf16.msra.mxu0 0
        %1075 = vmatprep.subr.bf16.mxu0 0
        %1076 = vmatpush1.bf16.msra.mxu0 0
        %1077 = vmatprep.subr.bf16.mxu0 0
        %1078 = vmatpush1.bf16.msra.mxu0 0
        %1079 = vmatprep.subr.bf16.mxu0 0
        %1080 = vmatpush1.bf16.msra.mxu0 0
        %1081 = vmatprep.subr.bf16.mxu0 0
        %1082 = vmatpush1.bf16.msra.mxu0 0
        %1083 = vmatprep.subr.bf16.mxu0 0
        %1084 = vmatpush1.bf16.msra.mxu0 0
        %1085 = vmatprep.subr.bf16.mxu0 0
        %1086 = vmatpush1.bf16.msra.mxu0 0
        %1087 = vmatprep.subr.bf16.mxu0 0
        %1088 = vmatpush1.bf16.msra.mxu0 0
        %1089 = vmatprep.subr.bf16.mxu0 0
        %1090 = vmatpush1.bf16.msra.mxu0 0
        %1091 = vmatprep.subr.bf16.mxu0 0
        %1092 = vmatpush1.bf16.msra.mxu0 0
        %1093 = vmatprep.subr.bf16.mxu0 0
        %1094 = vmatpush1.bf16.msra.mxu0 0
        %1095 = vmatprep.subr.bf16.mxu0 0
        %1096 = vmatpush1.bf16.msra.mxu0 0
        %1097 = vmatprep.subr.bf16.mxu0 0
        %1098 = vmatpush1.bf16.msra.mxu0 0
        %1099 = vmatprep.subr.bf16.mxu0 0
        %1100 = vmatpush1.bf16.msra.mxu0 0
        %1101 = vmatprep.mubr.bf16.mxu0 0
        %1102 = vmatmul.mubr.bf16.gmra.mrb[0].mxu0 %v920
        %v1103 = vpop.f32.mrb[0].mxu0
        %v1104 = vadd.f32 %v1067, %v1103
        %v1105 = vpop.f32.mrb[0].mxu0
        %v1106 = vpop.f32.mrb[0].mxu0
        %v1107 = vadd.f32 %v1067, %v1106
        %v1108 = vpop.f32.mrb[0].mxu0
        %1109 = vmatprep.mubr.bf16.mxu0 0
        %1110 = vmatmul.mubr.bf16.gmra.mrb[0].mxu0 %v923
        %v1111 = vpop.f32.mrb[0].mxu0
        %v1112 = vadd.f32 %v1067, %v1111
        %v1113 = vpop.f32.mrb[0].mxu0
        %v1114 = vpop.f32.mrb[0].mxu0
        %v1115 = vadd.f32 %v1067, %v1114
        %v1116 = vpop.f32.mrb[0].mxu0
        %1117 = vmatprep.mubr.bf16.mxu0 0
        %1118 = vmatmul.mubr.bf16.gmra.mrb[0].mxu0 %v926
        %v1119 = vpop.f32.mrb[0].mxu0
        %v1120 = vadd.f32 %v1067, %v1119
        %v1121 = vpop.f32.mrb[0].mxu0
        %v1122 = vpop.f32.mrb[0].mxu0
        %v1123 = vadd.f32 %v1067, %v1122
        %v1124 = vpop.f32.mrb[0].mxu0
        %1125 = vmatprep.mubr.bf16.mxu0 0
        %1126 = vmatmul.mubr.bf16.gmra.mrb[0].mxu0 %v929
        %v1127 = vpop.f32.mrb[0].mxu0
        %v1128 = vadd.f32 %v1067, %v1127
        %v1129 = vpop.f32.mrb[0].mxu0
        %v1130 = vpop.f32.mrb[0].mxu0
        %v1131 = vadd.f32 %v1067, %v1130
        %v1132 = vpop.f32.mrb[0].mxu0
        %1133 = vmatprep.mubr.bf16.mxu0 0
        %1134 = vmatmul.mubr.bf16.gmra.mrb[0].mxu0 %v932
        %v1135 = vpop.f32.mrb[0].mxu0
        %v1136 = vadd.f32 %v1067, %v1135
        %v1137 = vpop.f32.mrb[0].mxu0
        %v1138 = vpop.f32.mrb[0].mxu0
        %v1139 = vadd.f32 %v1067, %v1138
        %v1140 = vpop.f32.mrb[0].mxu0
        %1141 = vmatprep.mubr.bf16.mxu0 0
        %1142 = vmatmul.mubr.bf16.gmra.mrb[0].mxu0 %v935
        %v1143 = vpop.f32.mrb[0].mxu0
        %v1144 = vadd.f32 %v1067, %v1143
        %v1145 = vpop.f32.mrb[0].mxu0
        %v1146 = vpop.f32.mrb[0].mxu0
        %v1147 = vadd.f32 %v1067, %v1146
        %v1148 = vpop.f32.mrb[0].mxu0
        %1149 = vmatprep.mubr.bf16.mxu0 0
        %1150 = vmatmul.mubr.bf16.gmra.mrb[0].mxu0 %v938
        %v1151 = vpop.f32.mrb[0].mxu0
        %v1152 = vadd.f32 %v1067, %v1151
        %v1153 = vpop.f32.mrb[0].mxu0
        %v1154 = vpop.f32.mrb[0].mxu0
        %v1155 = vadd.f32 %v1067, %v1154
        %v1156 = vpop.f32.mrb[0].mxu0
        %1157 = vmatprep.mubr.bf16.mxu0 0
        %1158 = vmatmul.mubr.bf16.gmra.mrb[0].mxu0 %v941
        %v1159 = vpop.f32.mrb[0].mxu0
        %v1160 = vadd.f32 %v1067, %v1159
        %v1161 = vpop.f32.mrb[0].mxu0
        %v1162 = vpop.f32.mrb[0].mxu0
        %v1163 = vadd.f32 %v1067, %v1162
        %v1164 = vpop.f32.mrb[0].mxu0
        %1165 = vdwg.mxu0
        %1166 = vst.msk [vmem:[%s525] sm:$0xff] %vm581, %v1104
        %1167 = vst.msk [vmem:[%s525 + $0x8] sm:$0xff] %vm581, %v1107
        %1168 = vst.msk [vmem:[%s525 + $0x10] sm:$0xff] %vm581, %v1112
        %1169 = vst.msk [vmem:[%s525 + $0x18] sm:$0xff] %vm581, %v1115
        %1170 = vst.msk [vmem:[%s525 + $0x20] sm:$0xff] %vm581, %v1120
        %1171 = vst.msk [vmem:[%s525 + $0x28] sm:$0xff] %vm581, %v1123
        %1172 = vst.msk [vmem:[%s525 + $0x30] sm:$0xff] %vm581, %v1128
        %1173 = vst.msk [vmem:[%s525 + $0x38] sm:$0xff] %vm581, %v1131
        %1174 = vst.msk [vmem:[%s525 + $0x40] sm:$0xff] %vm581, %v1136
        %1175 = vst.msk [vmem:[%s525 + $0x48] sm:$0xff] %vm581, %v1139
        %1176 = vst.msk [vmem:[%s525 + $0x50] sm:$0xff] %vm581, %v1144
        %1177 = vst.msk [vmem:[%s525 + $0x58] sm:$0xff] %vm581, %v1147
        %1178 = vst.msk [vmem:[%s525 + $0x60] sm:$0xff] %vm581, %v1152
        %1179 = vst.msk [vmem:[%s525 + $0x68] sm:$0xff] %vm581, %v1155
        %1180 = vst.msk [vmem:[%s525 + $0x70] sm:$0xff] %vm581, %v1160
        %1181 = vst.msk [vmem:[%s525 + $0x78] sm:$0xff] %vm581, %v1163
        %s1182 = smul.u32 16, %s30
        %p1183 = scmp.lt.s32.totalorder %s29, 1
        %s1184 = scalar_select %p1183, %s29, 1
        %p1185 = scmp.lt.s32.totalorder %s1182, 15
        %s1186 = scalar_select %p1185, %s1182, 15
        %s1187 = smul.addr %s1184, 16
        %s1188 = sadd.s32 %s1186, %s1187
        %s1189 = smul.addr %s1188, 8
        %s1190 = scalar_lea.vmem %s11, %s1189
        %s1191 = smul.u32 16, %s30
        %p1192 = scmp.lt.s32.totalorder %s29, 1
        %s1193 = scalar_select %p1192, %s29, 1
        %p1194 = scmp.lt.s32.totalorder %s1191, 15
        %s1195 = scalar_select %p1194, %s1191, 15
        %s1196 = smul.addr %s1193, 16
        %s1197 = sadd.s32 %s1195, %s1196
        %s1198 = smul.addr %s1197, 8
        %s1199 = scalar_lea.vmem %s12, %s1198
        // Predicated region
        $region69: #{uedm_forward.4} parent=63 // pred_check
          %p1200 = pneg %p302
        $region70: #{uedm_forward.4} parent=63 // pred_check_branch
          %1202 = sbr.rel (%p1200) target = $region72
        $region71: #{uedm_forward.4} parent=63 // pred_region
          %s1203 = smul.u32 16, %s30
        $region72: #{uedm_forward.4} parent=63 // pred_fallthru
          _
        // Predicated region
        $region73: #{uedm_forward.4} parent=63 // pred_check
          %p1204 = pneg %p330
        $region74: #{uedm_forward.4} parent=63 // pred_check_branch
          %1206 = sbr.rel (%p1204) target = $region76
        $region75: #{uedm_forward.4} parent=63 // pred_region
          %s1207 = smul.u32 16, %s30
        $region76: #{uedm_forward.4} parent=63 // pred_fallthru
          _
      $region64: #{uedm_forward.4} parent=5 // pred_fallthru
        _
      %p1208 = scmp.le.s32.totalorder 2, %s20
      // Predicated region
      $region77: #{uedm_forward.4} parent=5 // pred_check
        %p1209 = pneg %p1208
      $region78: #{uedm_forward.4} parent=5 // pred_check_branch
        %1211 = sbr.rel (%p1209) target = $region80
      $region79: #{uedm_forward.4} parent=5 // pred_region
        %s1212 = ssub.s32 %s20, 2
        // Predicated region
        $region81: #{uedm_forward.4} parent=79 // pred_check
          %p1213 = pneg %p308
        $region82: #{uedm_forward.4} parent=79 // pred_check_branch
          %1215 = sbr.rel (%p1213) target = $region84
        $region83: #{uedm_forward.4} parent=79 // pred_region
          %s1216 = smul.u32 16, %s32
          %p1217 = scmp.lt.s32.totalorder %s31, 1
          %s1218 = scalar_select %p1217, %s31, 1
          %p1219 = scmp.lt.s32.totalorder %s1216, 15
          %s1220 = scalar_select %p1219, %s1216, 15
          %s1221 = smul.addr %s1218, 16
          %s1222 = sadd.s32 %s1220, %s1221
          %s1223 = smul.addr %s1222, 8
          %s1224 = scalar_lea.vmem %s11, %s1223
        $region84: #{uedm_forward.4} parent=79 // pred_fallthru
          _
        // Predicated region
        $region85: #{uedm_forward.4} parent=79 // pred_check
          %p1225 = pneg %p336
        $region86: #{uedm_forward.4} parent=79 // pred_check_branch
          %1227 = sbr.rel (%p1225) target = $region88
        $region87: #{uedm_forward.4} parent=79 // pred_region
          %s1228 = smul.u32 16, %s32
          %p1229 = scmp.lt.s32.totalorder %s31, 1
          %s1230 = scalar_select %p1229, %s31, 1
          %p1231 = scmp.lt.s32.totalorder %s1228, 15
          %s1232 = scalar_select %p1231, %s1228, 15
          %s1233 = smul.addr %s1230, 16
          %s1234 = sadd.s32 %s1232, %s1233
          %s1235 = smul.addr %s1234, 8
          %s1236 = scalar_lea.vmem %s12, %s1235
        $region88: #{uedm_forward.4} parent=79 // pred_fallthru
          _
      $region80: #{uedm_forward.4} parent=5 // pred_fallthru
        _
    $region6: #{uedm_forward.4} parent=1 // loop_footer
      %s24 = sadd.s32 1, %s20
    $region7: #{uedm_forward.4} parent=1 // loop_footer_branch
      %19 = sbr.rel target = $region3
    $region8: #{uedm_forward.4} parent=1 // loop_exit
      _
    %1237 = vsyncpa [#allocation3], 1
    %s1238 = scalar_lea.sflag [#allocation3], 1
    %1239 = vsyncpa %s1238, 1

// kernel: uedm_forward.5
$region0: #{uedm_forward.5}
  #allocation0 [shape = 'u32[]', space=smem, size = 0x4, offset = 0x4, fixed_abs, tag = 'smem constant byte address 0x4 - core index']
  #allocation1 [shape = 'u32[144,128]{1,0:T(1,128)}', space=vmem, size = 0x12000, scoped, tag = 'internal scratch']
  #allocation2 [shape = 'f32[1,1]{1,0:T(1,128)S(1)}', space=vmem, size = 0x200, scoped, tag = 'scoped memory for uedm_forward.5']
  %s0 = inlined_call_operand.vmem [shape: f32[2,128,16], index: 0, kind: input, shape index: {}, may-alias: {0,2}]
  %s1 = inlined_call_operand.vmem [shape: f32[2,128,3], index: 1, kind: input, shape index: {}, may-alias: {1,3}]
  %s2 = inlined_call_operand.vmem [shape: f32[2,128,16], index: 2, kind: input, shape index: {}, may-alias: {0,2}]
  %s3 = inlined_call_operand.vmem [shape: f32[2,128,3], index: 3, kind: input, shape index: {}, may-alias: {1,3}]
  %s4 = inlined_call_operand.vmem [shape: f32[16,32], index: 4, kind: input, shape index: {}]
  %s5 = inlined_call_operand.vmem [shape: f32[16,32], index: 5, kind: input, shape index: {}]
  %s6 = inlined_call_operand.vmem [shape: f32[1,32], index: 6, kind: input, shape index: {}]
  %s7 = inlined_call_operand.<no memory space> [shape: f32[1,1], index: 7, kind: input, shape index: {}]
  %s8 = inlined_call_operand.vmem [shape: f32[32], index: 8, kind: input, shape index: {}]
  %s9 = inlined_call_operand.vmem [shape: f32[32], index: 9, kind: input, shape index: {}]
  %s10 = inlined_call_operand.vmem [shape: f32[2,128,128], index: 10, kind: output, shape index: {}]
  %s11 = sld [smem:[#allocation0]]
  $region81: #{uedm_forward.5} parent=0
    _
  %s13 = ssub.s32 1, %s11
  %s14 = scalar_select 0, %s13, %s11
  %v15 = vstv %s7
  %16 = vst [vmem:[#allocation2] sm:$0x1] %v15
  $region1: #{uedm_forward.5} parent=0
    #allocation3 [shape = 'u8[512]{0}', space=smem, size = 0x200, scoped, tag = 'input window, operand 8, single buffered']
    #allocation4 [shape = 's32[2]{0}', space=sflag, size = 0x8, scoped, tag = 'scoped memory for uedm_forward.5']
    #allocation5 [shape = 'u8[512]{0}', space=smem, size = 0x200, scoped, tag = 'input window, operand 9, single buffered']
    #allocation6 [shape = 's32[1]{0}', space=sflag, size = 0x4, scoped, tag = 'scoped memory for uedm_forward.5']
    %17 = vsyncpa [#allocation4], 0
    %18 = vsyncpa [#allocation6], 0
    loop: start=0, step=1, limit=4
    $region2: #{uedm_forward.5} parent=1 // loop_pre_header
      _
    $region3: #{uedm_forward.5} parent=1 // loop_header
      %s20 = sphi 0, %s24
      %p21 = scmp.ge.s32.totalorder %s20, 4
      %s27 = sphi 0, %s39
      %s28 = sphi 0, %s35
      %s29 = sphi 0, %s27
      %s30 = sphi 0, %s28
      %s31 = sphi 0, %s29
      %s32 = sphi 0, %s30
      %s44 = sphi 0, %s46
      %s47 = sphi 0, %s44
      %s48 = sphi 0, %s47
      %s64 = sphi 0, %s48
      %s72 = sphi 0, %s74
      %s75 = sphi 0, %s72
      %s76 = sphi 0, %s75
      %s92 = sphi 0, %s76
      %s98 = sphi 0, %s100
      %s101 = sphi 0, %s98
      %s102 = sphi 0, %s101
      %s118 = sphi 0, %s102
      %s124 = sphi 0, %s126
      %s127 = sphi 0, %s124
      %s128 = sphi 0, %s127
      %s144 = sphi 0, %s128
      %s148 = sphi 0, %s148
      %s150 = sphi 0, %s148
      %s151 = sphi 0, %s150
      %s165 = sphi 0, %s151
      %s169 = sphi 0, %s169
      %s171 = sphi 0, %s169
      %s172 = sphi 0, %s171
      %s186 = sphi 0, %s172
      %s190 = sphi 0, %s190
      %s192 = sphi 0, %s190
      %s193 = sphi 0, %s192
      %s207 = sphi 0, %s193
      %s211 = sphi 0, %s211
      %s213 = sphi 0, %s211
      %s214 = sphi 0, %s213
      %s228 = sphi 0, %s214
      %s232 = sphi 0, %s232
      %s234 = sphi 0, %s232
      %s235 = sphi 0, %s234
      %s249 = sphi 0, %s235
      %s253 = sphi 0, %s253
      %s255 = sphi 0, %s253
      %s256 = sphi 0, %s255
      %s270 = sphi 0, %s256
      %s278 = sphi 0, %s280
      %s281 = sphi 0, %s278
      %s282 = sphi 0, %s281
      %s298 = sphi 0, %s282
    $region4: #{uedm_forward.5} parent=1 // loop_header_branch
      %23 = sbr.rel (%p21) target = $region8
    $region5: #{uedm_forward.5} parent=1 // loop_body
      %s25 = ssub.s32 %s20, 1
      %s26 = ssub.s32 %s20, 2
      %s33 = sadd.s32 1, %s28
      %p34 = scmp.ge.s32.totalorder %s33, 1
      %s35 = scalar_select %p34, 0, %s33
      %s36 = sadd.s32 1, %s27
      %s37 = scalar_select %p34, %s36, %s27
      %p38 = scmp.ge.s32.totalorder %s37, 2
      %s39 = scalar_select %p38, 0, %s37
      %s40 = ssub.s32 %s27, %s39
      %s41 = ssub.s32 %s28, %s35
      %s42 = sor.u32 %s40, %s41
      %p43 = scmp.eq.s32.totalorder %s42, 0
      %s45 = sadd.s32 %s44, 1
      %s46 = scalar_select %p43, %s44, %s45
      %p49 = pneg %p43
      %p50 = scmp.eq.s32.totalorder %s20, 1
      %p51 = por %p49, %p50
      %p52 = scmp.ne.s32.totalorder %s44, %s47
      %p53 = scmp.eq.s32.totalorder %s20, 0
      %p54 = por %p52, %p53
      %p55 = scmp.ne.s32.totalorder %s44, %s47
      %p56 = scmp.eq.s32.totalorder %s25, 1
      %p57 = por %p55, %p56
      %p58 = scmp.ne.s32.totalorder %s47, %s48
      %p59 = scmp.eq.s32.totalorder %s25, 0
      %p60 = por %p58, %p59
      %p61 = scmp.ne.s32.totalorder %s47, %s48
      %p62 = scmp.eq.s32.totalorder %s26, 1
      %p63 = por %p61, %p62
      %p65 = scmp.ne.s32.totalorder %s48, %s64
      %p66 = scmp.eq.s32.totalorder %s26, 0
      %p67 = por %p65, %p66
      %s68 = ssub.s32 %s27, %s39
      %s69 = ssub.s32 %s28, %s35
      %s70 = sor.u32 %s68, %s69
      %p71 = scmp.eq.s32.totalorder %s70, 0
      %s73 = sadd.s32 %s72, 1
      %s74 = scalar_select %p71, %s72, %s73
      %p77 = pneg %p71
      %p78 = scmp.eq.s32.totalorder %s20, 1
      %p79 = por %p77, %p78
      %p80 = scmp.ne.s32.totalorder %s72, %s75
      %p81 = scmp.eq.s32.totalorder %s20, 0
      %p82 = por %p80, %p81
      %p83 = scmp.ne.s32.totalorder %s72, %s75
      %p84 = scmp.eq.s32.totalorder %s25, 1
      %p85 = por %p83, %p84
      %p86 = scmp.ne.s32.totalorder %s75, %s76
      %p87 = scmp.eq.s32.totalorder %s25, 0
      %p88 = por %p86, %p87
      %p89 = scmp.ne.s32.totalorder %s75, %s76
      %p90 = scmp.eq.s32.totalorder %s26, 1
      %p91 = por %p89, %p90
      %p93 = scmp.ne.s32.totalorder %s76, %s92
      %p94 = scmp.eq.s32.totalorder %s26, 0
      %p95 = por %p93, %p94
      %s96 = ssub.s32 %s27, %s39
      %p97 = scmp.eq.s32.totalorder %s96, 0
      %s99 = sadd.s32 %s98, 1
      %s100 = scalar_select %p97, %s98, %s99
      %p103 = pneg %p97
      %p104 = scmp.eq.s32.totalorder %s20, 1
      %p105 = por %p103, %p104
      %p106 = scmp.ne.s32.totalorder %s98, %s101
      %p107 = scmp.eq.s32.totalorder %s20, 0
      %p108 = por %p106, %p107
      %p109 = scmp.ne.s32.totalorder %s98, %s101
      %p110 = scmp.eq.s32.totalorder %s25, 1
      %p111 = por %p109, %p110
      %p112 = scmp.ne.s32.totalorder %s101, %s102
      %p113 = scmp.eq.s32.totalorder %s25, 0
      %p114 = por %p112, %p113
      %p115 = scmp.ne.s32.totalorder %s101, %s102
      %p116 = scmp.eq.s32.totalorder %s26, 1
      %p117 = por %p115, %p116
      %p119 = scmp.ne.s32.totalorder %s102, %s118
      %p120 = scmp.eq.s32.totalorder %s26, 0
      %p121 = por %p119, %p120
      %s122 = ssub.s32 %s27, %s39
      %p123 = scmp.eq.s32.totalorder %s122, 0
      %s125 = sadd.s32 %s124, 1
      %s126 = scalar_select %p123, %s124, %s125
      %p129 = pneg %p123
      %p130 = scmp.eq.s32.totalorder %s20, 1
      %p131 = por %p129, %p130
      %p132 = scmp.ne.s32.totalorder %s124, %s127
      %p133 = scmp.eq.s32.totalorder %s20, 0
      %p134 = por %p132, %p133
      %p135 = scmp.ne.s32.totalorder %s124, %s127
      %p136 = scmp.eq.s32.totalorder %s25, 1
      %p137 = por %p135, %p136
      %p138 = scmp.ne.s32.totalorder %s127, %s128
      %p139 = scmp.eq.s32.totalorder %s25, 0
      %p140 = por %p138, %p139
      %p141 = scmp.ne.s32.totalorder %s127, %s128
      %p142 = scmp.eq.s32.totalorder %s26, 1
      %p143 = por %p141, %p142
      %p145 = scmp.ne.s32.totalorder %s128, %s144
      %p146 = scmp.eq.s32.totalorder %s26, 0
      %p147 = por %p145, %p146
      %s149 = sadd.s32 %s148, 1
      %p152 = scmp.eq.s32.totalorder %s20, 1
      %p153 = scmp.ne.s32.totalorder %s148, %s150
      %p154 = scmp.eq.s32.totalorder %s20, 0
      %p155 = por %p153, %p154
      %p156 = scmp.ne.s32.totalorder %s148, %s150
      %p157 = scmp.eq.s32.totalorder %s25, 1
      %p158 = por %p156, %p157
      %p159 = scmp.ne.s32.totalorder %s150, %s151
      %p160 = scmp.eq.s32.totalorder %s25, 0
      %p161 = por %p159, %p160
      %p162 = scmp.ne.s32.totalorder %s150, %s151
      %p163 = scmp.eq.s32.totalorder %s26, 1
      %p164 = por %p162, %p163
      %p166 = scmp.ne.s32.totalorder %s151, %s165
      %p167 = scmp.eq.s32.totalorder %s26, 0
      %p168 = por %p166, %p167
      %s170 = sadd.s32 %s169, 1
      %p173 = scmp.eq.s32.totalorder %s20, 1
      %p174 = scmp.ne.s32.totalorder %s169, %s171
      %p175 = scmp.eq.s32.totalorder %s20, 0
      %p176 = por %p174, %p175
      %p177 = scmp.ne.s32.totalorder %s169, %s171
      %p178 = scmp.eq.s32.totalorder %s25, 1
      %p179 = por %p177, %p178
      %p180 = scmp.ne.s32.totalorder %s171, %s172
      %p181 = scmp.eq.s32.totalorder %s25, 0
      %p182 = por %p180, %p181
      %p183 = scmp.ne.s32.totalorder %s171, %s172
      %p184 = scmp.eq.s32.totalorder %s26, 1
      %p185 = por %p183, %p184
      %p187 = scmp.ne.s32.totalorder %s172, %s186
      %p188 = scmp.eq.s32.totalorder %s26, 0
      %p189 = por %p187, %p188
      %s191 = sadd.s32 %s190, 1
      %p194 = scmp.eq.s32.totalorder %s20, 1
      %p195 = scmp.ne.s32.totalorder %s190, %s192
      %p196 = scmp.eq.s32.totalorder %s20, 0
      %p197 = por %p195, %p196
      %p198 = scmp.ne.s32.totalorder %s190, %s192
      %p199 = scmp.eq.s32.totalorder %s25, 1
      %p200 = por %p198, %p199
      %p201 = scmp.ne.s32.totalorder %s192, %s193
      %p202 = scmp.eq.s32.totalorder %s25, 0
      %p203 = por %p201, %p202
      %p204 = scmp.ne.s32.totalorder %s192, %s193
      %p205 = scmp.eq.s32.totalorder %s26, 1
      %p206 = por %p204, %p205
      %p208 = scmp.ne.s32.totalorder %s193, %s207
      %p209 = scmp.eq.s32.totalorder %s26, 0
      %p210 = por %p208, %p209
      %s212 = sadd.s32 %s211, 1
      %p215 = scmp.eq.s32.totalorder %s20, 1
      %p216 = scmp.ne.s32.totalorder %s211, %s213
      %p217 = scmp.eq.s32.totalorder %s20, 0
      %p218 = por %p216, %p217
      %p219 = scmp.ne.s32.totalorder %s211, %s213
      %p220 = scmp.eq.s32.totalorder %s25, 1
      %p221 = por %p219, %p220
      %p222 = scmp.ne.s32.totalorder %s213, %s214
      %p223 = scmp.eq.s32.totalorder %s25, 0
      %p224 = por %p222, %p223
      %p225 = scmp.ne.s32.totalorder %s213, %s214
      %p226 = scmp.eq.s32.totalorder %s26, 1
      %p227 = por %p225, %p226
      %p229 = scmp.ne.s32.totalorder %s214, %s228
      %p230 = scmp.eq.s32.totalorder %s26, 0
      %p231 = por %p229, %p230
      %s233 = sadd.s32 %s232, 1
      %p236 = scmp.eq.s32.totalorder %s20, 1
      %p237 = scmp.ne.s32.totalorder %s232, %s234
      %p238 = scmp.eq.s32.totalorder %s20, 0
      %p239 = por %p237, %p238
      %p240 = scmp.ne.s32.totalorder %s232, %s234
      %p241 = scmp.eq.s32.totalorder %s25, 1
      %p242 = por %p240, %p241
      %p243 = scmp.ne.s32.totalorder %s234, %s235
      %p244 = scmp.eq.s32.totalorder %s25, 0
      %p245 = por %p243, %p244
      %p246 = scmp.ne.s32.totalorder %s234, %s235
      %p247 = scmp.eq.s32.totalorder %s26, 1
      %p248 = por %p246, %p247
      %p250 = scmp.ne.s32.totalorder %s235, %s249
      %p251 = scmp.eq.s32.totalorder %s26, 0
      %p252 = por %p250, %p251
      %s254 = sadd.s32 %s253, 1
      %p257 = scmp.eq.s32.totalorder %s20, 1
      %p258 = scmp.ne.s32.totalorder %s253, %s255
      %p259 = scmp.eq.s32.totalorder %s20, 0
      %p260 = por %p258, %p259
      %p261 = scmp.ne.s32.totalorder %s253, %s255
      %p262 = scmp.eq.s32.totalorder %s25, 1
      %p263 = por %p261, %p262
      %p264 = scmp.ne.s32.totalorder %s255, %s256
      %p265 = scmp.eq.s32.totalorder %s25, 0
      %p266 = por %p264, %p265
      %p267 = scmp.ne.s32.totalorder %s255, %s256
      %p268 = scmp.eq.s32.totalorder %s26, 1
      %p269 = por %p267, %p268
      %p271 = scmp.ne.s32.totalorder %s256, %s270
      %p272 = scmp.eq.s32.totalorder %s26, 0
      %p273 = por %p271, %p272
      %s274 = ssub.s32 %s27, %s39
      %s275 = ssub.s32 %s28, %s35
      %s276 = sor.u32 %s274, %s275
      %p277 = scmp.eq.s32.totalorder %s276, 0
      %s279 = sadd.s32 %s278, 1
      %s280 = scalar_select %p277, %s278, %s279
      %p283 = pneg %p277
      %p284 = scmp.eq.s32.totalorder %s20, 1
      %p285 = por %p283, %p284
      %p286 = scmp.ne.s32.totalorder %s278, %s281
      %p287 = scmp.eq.s32.totalorder %s20, 0
      %p288 = por %p286, %p287
      %p289 = scmp.ne.s32.totalorder %s278, %s281
      %p290 = scmp.eq.s32.totalorder %s25, 1
      %p291 = por %p289, %p290
      %p292 = scmp.ne.s32.totalorder %s281, %s282
      %p293 = scmp.eq.s32.totalorder %s25, 0
      %p294 = por %p292, %p293
      %p295 = scmp.ne.s32.totalorder %s281, %s282
      %p296 = scmp.eq.s32.totalorder %s26, 1
      %p297 = por %p295, %p296
      %p299 = scmp.ne.s32.totalorder %s282, %s298
      %p300 = scmp.eq.s32.totalorder %s26, 0
      %p301 = por %p299, %p300
      %p302 = scmp.le.s32.totalorder 1, %s20
      %p303 = scmp.lt.s32.totalorder %s20, 3
      %p304 = pnand %p302, %p303
      %p305 = pneg %p304
      // Predicated region
      $region9: #{uedm_forward.5} parent=5 // pred_check
        _
      $region10: #{uedm_forward.5} parent=5 // pred_check_branch
        %307 = sbr.rel (%p304) target = $region12
      $region11: #{uedm_forward.5} parent=5 // pred_region
        %s308 = ssub.s32 %s20, 1
        // Predicated region
        $region13: #{uedm_forward.5} parent=11 // pred_check
          %p309 = pneg %p161
        $region14: #{uedm_forward.5} parent=11 // pred_check_branch
          %311 = sbr.rel (%p309) target = $region16
        $region15: #{uedm_forward.5} parent=11 // pred_region
          _
        $region16: #{uedm_forward.5} parent=11 // pred_fallthru
          _
        // Predicated region
        $region17: #{uedm_forward.5} parent=11 // pred_check
          %p312 = pneg %p182
        $region18: #{uedm_forward.5} parent=11 // pred_check_branch
          %314 = sbr.rel (%p312) target = $region20
        $region19: #{uedm_forward.5} parent=11 // pred_region
          _
        $region20: #{uedm_forward.5} parent=11 // pred_fallthru
          _
        // Predicated region
        $region21: #{uedm_forward.5} parent=11 // pred_check
          %p315 = pneg %p203
        $region22: #{uedm_forward.5} parent=11 // pred_check_branch
          %317 = sbr.rel (%p315) target = $region24
        $region23: #{uedm_forward.5} parent=11 // pred_region
          _
        $region24: #{uedm_forward.5} parent=11 // pred_fallthru
          _
        // Predicated region
        $region25: #{uedm_forward.5} parent=11 // pred_check
          %p318 = pneg %p224
        $region26: #{uedm_forward.5} parent=11 // pred_check_branch
          %320 = sbr.rel (%p318) target = $region28
        $region27: #{uedm_forward.5} parent=11 // pred_region
          _
        $region28: #{uedm_forward.5} parent=11 // pred_fallthru
          _
        // Predicated region
        $region29: #{uedm_forward.5} parent=11 // pred_check
          %p321 = pneg %p245
        $region30: #{uedm_forward.5} parent=11 // pred_check_branch
          %323 = sbr.rel (%p321) target = $region32
        $region31: #{uedm_forward.5} parent=11 // pred_region
          %s325 = ssub.s32 16, 16
          %326 = vsyncadd [#allocation4], %s325
          %s328 = sshll.u32 %s8, 4
          %s329 = int_to_ptr.vmem [resolvable:$true] %s328
          %331 = dma.vmem_to_smem %s329, 16, [#allocation3], [#allocation4]
        $region32: #{uedm_forward.5} parent=11 // pred_fallthru
          _
        // Predicated region
        $region33: #{uedm_forward.5} parent=11 // pred_check
          %p332 = pneg %p266
        $region34: #{uedm_forward.5} parent=11 // pred_check_branch
          %334 = sbr.rel (%p332) target = $region36
        $region35: #{uedm_forward.5} parent=11 // pred_region
          %s336 = ssub.s32 16, 16
          %337 = vsyncadd [#allocation6], %s336
          %s339 = sshll.u32 %s9, 4
          %s340 = int_to_ptr.vmem [resolvable:$true] %s339
          %342 = dma.vmem_to_smem %s340, 16, [#allocation5], [#allocation6]
        $region36: #{uedm_forward.5} parent=11 // pred_fallthru
          _
      $region12: #{uedm_forward.5} parent=5 // pred_fallthru
        _
      %p343 = scmp.lt.s32.totalorder %s20, 2
      // Predicated region
      $region37: #{uedm_forward.5} parent=5 // pred_check
        %p344 = pneg %p343
      $region38: #{uedm_forward.5} parent=5 // pred_check_branch
        %346 = sbr.rel (%p344) target = $region40
      $region39: #{uedm_forward.5} parent=5 // pred_region
        // Predicated region
        $region41: #{uedm_forward.5} parent=39 // pred_check
          %p347 = pneg %p54
        $region42: #{uedm_forward.5} parent=39 // pred_check_branch
          %349 = sbr.rel (%p347) target = $region44
        $region43: #{uedm_forward.5} parent=39 // pred_region
          %s350 = smul.u32 16, %s28
          %p351 = scmp.lt.s32.totalorder %s27, 1
          %s352 = scalar_select %p351, %s27, 1
          %p353 = scmp.lt.s32.totalorder %s350, 15
          %s354 = scalar_select %p353, %s350, 15
          %s355 = smul.addr %s352, 16
          %s356 = sadd.s32 %s354, %s355
          %s357 = smul.addr %s356, 8
          %s358 = scalar_lea.vmem %s0, %s357
          %s359 = smul.u32 16, %s28
        $region44: #{uedm_forward.5} parent=39 // pred_fallthru
          _
        // Predicated region
        $region45: #{uedm_forward.5} parent=39 // pred_check
          %p360 = pneg %p82
        $region46: #{uedm_forward.5} parent=39 // pred_check_branch
          %362 = sbr.rel (%p360) target = $region48
        $region47: #{uedm_forward.5} parent=39 // pred_region
          %s363 = smul.u32 16, %s28
          %p364 = scmp.lt.s32.totalorder %s27, 1
          %s365 = scalar_select %p364, %s27, 1
          %p366 = scmp.lt.s32.totalorder %s363, 15
          %s367 = scalar_select %p366, %s363, 15
          %s368 = smul.addr %s365, 16
          %s369 = sadd.s32 %s367, %s368
          %s370 = smul.addr %s369, 8
          %s371 = scalar_lea.vmem %s1, %s370
          %s372 = smul.u32 16, %s28
        $region48: #{uedm_forward.5} parent=39 // pred_fallthru
          _
        // Predicated region
        $region49: #{uedm_forward.5} parent=39 // pred_check
          %p373 = pneg %p108
        $region50: #{uedm_forward.5} parent=39 // pred_check_branch
          %375 = sbr.rel (%p373) target = $region52
        $region51: #{uedm_forward.5} parent=39 // pred_region
          %p376 = scmp.lt.s32.totalorder %s27, 1
          %s377 = scalar_select %p376, %s27, 1
          %s378 = smul.addr %s377, 16
          %s379 = smul.addr %s378, 8
          %s380 = scalar_lea.vmem %s2, %s379
        $region52: #{uedm_forward.5} parent=39 // pred_fallthru
          _
        // Predicated region
        $region53: #{uedm_forward.5} parent=39 // pred_check
          %p381 = pneg %p134
        $region54: #{uedm_forward.5} parent=39 // pred_check_branch
          %383 = sbr.rel (%p381) target = $region56
        $region55: #{uedm_forward.5} parent=39 // pred_region
          %p384 = scmp.lt.s32.totalorder %s27, 1
          %s385 = scalar_select %p384, %s27, 1
          %s386 = smul.addr %s385, 16
          %s387 = smul.addr %s386, 8
          %s388 = scalar_lea.vmem %s3, %s387
        $region56: #{uedm_forward.5} parent=39 // pred_fallthru
          _
      $region40: #{uedm_forward.5} parent=5 // pred_fallthru
        _
      %p389 = scmp.le.s32.totalorder 1, %s20
      %p390 = scmp.lt.s32.totalorder %s20, 3
      %p391 = pnand %p389, %p390
      %p392 = pneg %p391
      // Predicated region
      $region57: #{uedm_forward.5} parent=5 // pred_check
        _
      $region58: #{uedm_forward.5} parent=5 // pred_check_branch
        %394 = sbr.rel (%p391) target = $region60
      $region59: #{uedm_forward.5} parent=5 // pred_region
        %s395 = ssub.s32 %s20, 1
        // Predicated region
        $region61: #{uedm_forward.5} parent=59 // pred_check
          %p396 = pneg %p245
        $region62: #{uedm_forward.5} parent=59 // pred_check_branch
          %398 = sbr.rel (%p396) target = $region64
        $region63: #{uedm_forward.5} parent=59 // pred_region
          %399 = dma.done [#allocation4], 16
        $region64: #{uedm_forward.5} parent=59 // pred_fallthru
          _
        // Predicated region
        $region65: #{uedm_forward.5} parent=59 // pred_check
          %p400 = pneg %p266
        $region66: #{uedm_forward.5} parent=59 // pred_check_branch
          %402 = sbr.rel (%p400) target = $region68
        $region67: #{uedm_forward.5} parent=59 // pred_region
          %403 = dma.done [#allocation6], 16
        $region68: #{uedm_forward.5} parent=59 // pred_fallthru
          _
        %404 = sfence
        %s405 = smul.u32 16, %s30
        %p406 = scmp.lt.s32.totalorder %s29, 1
        %s407 = scalar_select %p406, %s29, 1
        %p408 = scmp.lt.s32.totalorder %s405, 15
        %s409 = scalar_select %p408, %s405, 15
        %s410 = smul.addr %s407, 16
        %s411 = sadd.s32 %s409, %s410
        %s412 = smul.addr %s411, 8
        %s413 = scalar_lea.vmem %s0, %s412
        %p414 = pneg %p60
        %p415 = pneg %p57
        %s416 = smul.u32 16, %s30
        %p417 = scmp.lt.s32.totalorder %s29, 1
        %s418 = scalar_select %p417, %s29, 1
        %p419 = scmp.lt.s32.totalorder %s416, 15
        %s420 = scalar_select %p419, %s416, 15
        %s421 = smul.addr %s418, 16
        %s422 = sadd.s32 %s420, %s421
        %s423 = smul.addr %s422, 8
        %s424 = scalar_lea.vmem %s1, %s423
        %p425 = pneg %p88
        %p426 = pneg %p85
        %p427 = scmp.lt.s32.totalorder %s29, 1
        %s428 = scalar_select %p427, %s29, 1
        %s429 = smul.addr %s428, 16
        %s430 = smul.addr %s429, 8
        %s431 = scalar_lea.vmem %s2, %s430
        %p432 = pneg %p114
        %p433 = pneg %p111
        %p434 = scmp.lt.s32.totalorder %s29, 1
        %s435 = scalar_select %p434, %s29, 1
        %s436 = smul.addr %s435, 16
        %s437 = smul.addr %s436, 8
        %s438 = scalar_lea.vmem %s3, %s437
        %p439 = pneg %p140
        %p440 = pneg %p137
        %p441 = pneg %p161
        %p442 = pneg %p158
        %p443 = pneg %p182
        %p444 = pneg %p179
        %p445 = pneg %p203
        %p446 = pneg %p200
        %p447 = pneg %p224
        %p448 = pneg %p221
        %p449 = pneg %p245
        %p450 = pneg %p242
        %p451 = pneg %p266
        %p452 = pneg %p263
        %p453 = pneg %p294
        %p454 = pneg %p291
        %s455 = smul.u32 16, %s30
        %p456 = scmp.lt.s32.totalorder %s29, 1
        %s457 = scalar_select %p456, %s29, 1
        %p458 = scmp.lt.s32.totalorder %s455, 15
        %s459 = scalar_select %p458, %s455, 15
        %s460 = smul.addr %s457, 16
        %s461 = sadd.s32 %s459, %s460
        %s462 = smul.addr %s461, 8
        %s463 = scalar_lea.vmem %s10, %s462
        %s464 = smul.u32 16, %s30
        %p465 = scmp.lt.s32.totalorder %s29, 1
        %s466 = scalar_select %p465, %s29, 1
        %p467 = scmp.lt.s32.totalorder %s464, 15
        %s468 = scalar_select %p467, %s464, 15
        %s469 = smul.addr %s466, 16
        %s470 = sadd.s32 %s468, %s469
        %s471 = smul.addr %s470, 8
        %s472 = scalar_lea.vmem %s0, %s471
        %s473 = smul.u32 16, %s30
        %s474 = smul.u32 16, %s30
        %p475 = scmp.lt.s32.totalorder %s29, 1
        %s476 = scalar_select %p475, %s29, 1
        %p477 = scmp.lt.s32.totalorder %s474, 15
        %s478 = scalar_select %p477, %s474, 15
        %s479 = smul.addr %s476, 16
        %s480 = sadd.s32 %s478, %s479
        %s481 = smul.addr %s480, 8
        %s482 = scalar_lea.vmem %s1, %s481
        %s483 = smul.u32 16, %s30
        %p484 = scmp.lt.s32.totalorder %s29, 1
        %s485 = scalar_select %p484, %s29, 1
        %s486 = smul.addr %s485, 16
        %s487 = smul.addr %s486, 8
        %s488 = scalar_lea.vmem %s2, %s487
        %p489 = scmp.lt.s32.totalorder %s29, 1
        %s490 = scalar_select %p489, %s29, 1
        %s491 = smul.addr %s490, 16
        %s492 = smul.addr %s491, 8
        %s493 = scalar_lea.vmem %s3, %s492
        %s494 = smul.u32 16, %s30
        %p495 = scmp.lt.s32.totalorder %s29, 1
        %s496 = scalar_select %p495, %s29, 1
        %p497 = scmp.lt.s32.totalorder %s494, 15
        %s498 = scalar_select %p497, %s494, 15
        %s499 = smul.addr %s496, 16
        %s500 = sadd.s32 %s498, %s499
        %s501 = smul.addr %s500, 8
        %s502 = scalar_lea.vmem %s10, %s501
        %s503 = smul.u32 16, %s30
        %v504 = vld [vmem:[%s472] sm:$0xff]
        %v505 = vld [vmem:[%s472 + $0x8] sm:$0xff]
        %v506 = vld [vmem:[%s472 + $0x10] sm:$0xff]
        %v507 = vld [vmem:[%s472 + $0x18] sm:$0xff]
        %v508 = vld [vmem:[%s472 + $0x20] sm:$0xff]
        %v509 = vld [vmem:[%s472 + $0x28] sm:$0xff]
        %v510 = vld [vmem:[%s472 + $0x30] sm:$0xff]
        %v511 = vld [vmem:[%s472 + $0x38] sm:$0xff]
        %v512 = vld [vmem:[%s472 + $0x40] sm:$0xff]
        %v513 = vld [vmem:[%s472 + $0x48] sm:$0xff]
        %v514 = vld [vmem:[%s472 + $0x50] sm:$0xff]
        %v515 = vld [vmem:[%s472 + $0x58] sm:$0xff]
        %v516 = vld [vmem:[%s472 + $0x60] sm:$0xff]
        %v517 = vld [vmem:[%s472 + $0x68] sm:$0xff]
        %v518 = vld [vmem:[%s472 + $0x70] sm:$0xff]
        %v519 = vld [vmem:[%s472 + $0x78] sm:$0xff]
        %v520 = vld [vmem:[%s482] sm:$0xff]
        %v521 = vld [vmem:[%s482 + $0x8] sm:$0xff]
        %v522 = vld [vmem:[%s482 + $0x10] sm:$0xff]
        %v523 = vld [vmem:[%s482 + $0x18] sm:$0xff]
        %v524 = vld [vmem:[%s482 + $0x20] sm:$0xff]
        %v525 = vld [vmem:[%s482 + $0x28] sm:$0xff]
        %v526 = vld [vmem:[%s482 + $0x30] sm:$0xff]
        %v527 = vld [vmem:[%s482 + $0x38] sm:$0xff]
        %v528 = vld [vmem:[%s482 + $0x40] sm:$0xff]
        %v529 = vld [vmem:[%s482 + $0x48] sm:$0xff]
        %v530 = vld [vmem:[%s482 + $0x50] sm:$0xff]
        %v531 = vld [vmem:[%s482 + $0x58] sm:$0xff]
        %v532 = vld [vmem:[%s482 + $0x60] sm:$0xff]
        %v533 = vld [vmem:[%s482 + $0x68] sm:$0xff]
        %v534 = vld [vmem:[%s482 + $0x70] sm:$0xff]
        %v535 = vld [vmem:[%s482 + $0x78] sm:$0xff]
        %v536 = vld [vmem:[%s488] sm:$0xff]
        %v537 = vld [vmem:[%s488 + $0x8] sm:$0xff]
        %v538 = vld [vmem:[%s488 + $0x10] sm:$0xff]
        %v539 = vld [vmem:[%s488 + $0x18] sm:$0xff]
        %v540 = vld [vmem:[%s488 + $0x20] sm:$0xff]
        %v541 = vld [vmem:[%s488 + $0x28] sm:$0xff]
        %v542 = vld [vmem:[%s488 + $0x30] sm:$0xff]
        %v543 = vld [vmem:[%s488 + $0x38] sm:$0xff]
        %v544 = vld [vmem:[%s488 + $0x40] sm:$0xff]
        %v545 = vld [vmem:[%s488 + $0x48] sm:$0xff]
        %v546 = vld [vmem:[%s488 + $0x50] sm:$0xff]
        %v547 = vld [vmem:[%s488 + $0x58] sm:$0xff]
        %v548 = vld [vmem:[%s488 + $0x60] sm:$0xff]
        %v549 = vld [vmem:[%s488 + $0x68] sm:$0xff]
        %v550 = vld [vmem:[%s488 + $0x70] sm:$0xff]
        %v551 = vld [vmem:[%s488 + $0x78] sm:$0xff]
        %v552 = vld [vmem:[%s493] sm:$0xff]
        %v553 = vld [vmem:[%s493 + $0x8] sm:$0xff]
        %v554 = vld [vmem:[%s493 + $0x10] sm:$0xff]
        %v555 = vld [vmem:[%s493 + $0x18] sm:$0xff]
        %v556 = vld [vmem:[%s493 + $0x20] sm:$0xff]
        %v557 = vld [vmem:[%s493 + $0x28] sm:$0xff]
        %v558 = vld [vmem:[%s493 + $0x30] sm:$0xff]
        %v559 = vld [vmem:[%s493 + $0x38] sm:$0xff]
        %v560 = vld [vmem:[%s493 + $0x40] sm:$0xff]
        %v561 = vld [vmem:[%s493 + $0x48] sm:$0xff]
        %v562 = vld [vmem:[%s493 + $0x50] sm:$0xff]
        %v563 = vld [vmem:[%s493 + $0x58] sm:$0xff]
        %v564 = vld [vmem:[%s493 + $0x60] sm:$0xff]
        %v565 = vld [vmem:[%s493 + $0x68] sm:$0xff]
        %v566 = vld [vmem:[%s493 + $0x70] sm:$0xff]
        %v567 = vld [vmem:[%s493 + $0x78] sm:$0xff]
        %vm568 = vcmask 23552
        %v570 = vsel %vm568, %v520, 0
        %v573 = vsel %vm568, %v521, 0
        %v576 = vsel %vm568, %v522, 0
        %v579 = vsel %vm568, %v523, 0
        %v582 = vsel %vm568, %v524, 0
        %v585 = vsel %vm568, %v525, 0
        %v588 = vsel %vm568, %v526, 0
        %v591 = vsel %vm568, %v527, 0
        %v594 = vsel %vm568, %v528, 0
        %v597 = vsel %vm568, %v529, 0
        %v600 = vsel %vm568, %v530, 0
        %v603 = vsel %vm568, %v531, 0
        %v606 = vsel %vm568, %v532, 0
        %v609 = vsel %vm568, %v533, 0
        %v612 = vsel %vm568, %v534, 0
        %v615 = vsel %vm568, %v535, 0
        %v618 = vsel %vm568, %v552, 0
        %v621 = vsel %vm568, %v553, 0
        %v624 = vsel %vm568, %v554, 0
        %v627 = vsel %vm568, %v555, 0
        %v630 = vsel %vm568, %v556, 0
        %v633 = vsel %vm568, %v557, 0
        %v636 = vsel %vm568, %v558, 0
        %v639 = vsel %vm568, %v559, 0
        %v642 = vsel %vm568, %v560, 0
        %v645 = vsel %vm568, %v561, 0
        %v648 = vsel %vm568, %v562, 0
        %v651 = vsel %vm568, %v563, 0
        %v654 = vsel %vm568, %v564, 0
        %v657 = vsel %vm568, %v565, 0
        %v660 = vsel %vm568, %v566, 0
        %v663 = vsel %vm568, %v567, 0
        %665 = vmatprep.subr.mxu0 0.0
        %666 = vmatpush1.xpose.msra.mxu0 %v618
        %667 = vmatprep.subr.mxu0 0.0
        %668 = vmatpush1.xpose.msra.mxu0 %v621
        %669 = vmatprep.subr.mxu0 0.0
        %670 = vmatpush1.xpose.msra.mxu0 %v624
        %671 = vmatprep.subr.mxu0 0.0
        %672 = vmatpush1.xpose.msra.mxu0 %v627
        %673 = vmatprep.subr.mxu0 0.0
        %674 = vmatpush1.xpose.msra.mxu0 %v630
        %675 = vmatprep.subr.mxu0 0.0
        %676 = vmatpush1.xpose.msra.mxu0 %v633
        %677 = vmatprep.subr.mxu0 0.0
        %678 = vmatpush1.xpose.msra.mxu0 %v636
        %679 = vmatprep.subr.mxu0 0.0
        %680 = vmatpush1.xpose.msra.mxu0 %v639
        %681 = vmatprep.subr.mxu0 0.0
        %682 = vmatpush1.xpose.msra.mxu0 %v642
        %683 = vmatprep.subr.mxu0 0.0
        %684 = vmatpush1.xpose.msra.mxu0 %v645
        %685 = vmatprep.subr.mxu0 0.0
        %686 = vmatpush1.xpose.msra.mxu0 %v648
        %687 = vmatprep.subr.mxu0 0.0
        %688 = vmatpush1.xpose.msra.mxu0 %v651
        %689 = vmatprep.subr.mxu0 0.0
        %690 = vmatpush1.xpose.msra.mxu0 %v654
        %691 = vmatprep.subr.mxu0 0.0
        %692 = vmatpush1.xpose.msra.mxu0 %v657
        %693 = vmatprep.subr.mxu0 0.0
        %694 = vmatpush1.xpose.msra.mxu0 %v660
        %695 = vmatprep.subr.mxu0 0.0
        %696 = vmatpush1.xpose.msra.mxu0 %v663
        %697 = vmatprep.subr.mxu0 0.0
        %698 = vmatpush1.xpose.msra.mxu0 0.0
        %699 = vmatprep.subr.mxu0 0.0
        %700 = vmatpush1.xpose.msra.mxu0 0.0
        %701 = vmatprep.subr.mxu0 0.0
        %702 = vmatpush1.xpose.msra.mxu0 0.0
        %703 = vmatprep.subr.mxu0 0.0
        %704 = vmatpush1.xpose.msra.mxu0 0.0
        %705 = vmatprep.subr.mxu0 0.0
        %706 = vmatpush1.xpose.msra.mxu0 0.0
        %707 = vmatprep.subr.mxu0 0.0
        %708 = vmatpush1.xpose.msra.mxu0 0.0
        %709 = vmatprep.subr.mxu0 0.0
        %710 = vmatpush1.xpose.msra.mxu0 0.0
        %711 = vmatprep.subr.mxu0 0.0
        %712 = vmatpush1.xpose.msra.mxu0 0.0
        %713 = vmatprep.subr.mxu0 0.0
        %714 = vmatpush1.xpose.msra.mxu0 0.0
        %715 = vmatprep.subr.mxu0 0.0
        %716 = vmatpush1.xpose.msra.mxu0 0.0
        %717 = vmatprep.subr.mxu0 0.0
        %718 = vmatpush1.xpose.msra.mxu0 0.0
        %719 = vmatprep.subr.mxu0 0.0
        %720 = vmatpush1.xpose.msra.mxu0 0.0
        %721 = vmatprep.subr.mxu0 0.0
        %722 = vmatpush1.xpose.msra.mxu0 0.0
        %723 = vmatprep.subr.mxu0 0.0
        %724 = vmatpush1.xpose.msra.mxu0 0.0
        %725 = vmatprep.subr.mxu0 0.0
        %726 = vmatpush1.xpose.msra.mxu0 0.0
        %727 = vmatprep.subr.mxu0 0.0
        %728 = vmatpush1.xpose.msra.mxu0 0.0
        %729 = vmatprep.mubr.f32.mxu0 0.0
        %730 = vmatmul.mubr.f32.gmra.mrb[0].mxu0 %v570
        %v731 = vpop.f32.mrb[0].mxu0
        %v732 = vadd.f32 0.0, %v731
        %v733 = vpop.f32.mrb[0].mxu0
        %734 = vmatprep.mubr.f32.mxu0 0.0
        %735 = vmatmul.mubr.f32.gmra.mrb[0].mxu0 %v573
        %v736 = vpop.f32.mrb[0].mxu0
        %v737 = vadd.f32 0.0, %v736
        %v738 = vpop.f32.mrb[0].mxu0
        %739 = vmatprep.mubr.f32.mxu0 0.0
        %740 = vmatmul.mubr.f32.gmra.mrb[0].mxu0 %v576
        %v741 = vpop.f32.mrb[0].mxu0
        %v742 = vadd.f32 0.0, %v741
        %v743 = vpop.f32.mrb[0].mxu0
        %744 = vmatprep.mubr.f32.mxu0 0.0
        %745 = vmatmul.mubr.f32.gmra.mrb[0].mxu0 %v579
        %v746 = vpop.f32.mrb[0].mxu0
        %v747 = vadd.f32 0.0, %v746
        %v748 = vpop.f32.mrb[0].mxu0
        %749 = vmatprep.mubr.f32.mxu0 0.0
        %750 = vmatmul.mubr.f32.gmra.mrb[0].mxu0 %v582
        %v751 = vpop.f32.mrb[0].mxu0
        %v752 = vadd.f32 0.0, %v751
        %v753 = vpop.f32.mrb[0].mxu0
        %754 = vmatprep.mubr.f32.mxu0 0.0
        %755 = vmatmul.mubr.f32.gmra.mrb[0].mxu0 %v585
        %v756 = vpop.f32.mrb[0].mxu0
        %v757 = vadd.f32 0.0, %v756
        %v758 = vpop.f32.mrb[0].mxu0
        %759 = vmatprep.mubr.f32.mxu0 0.0
        %760 = vmatmul.mubr.f32.gmra.mrb[0].mxu0 %v588
        %v761 = vpop.f32.mrb[0].mxu0
        %v762 = vadd.f32 0.0, %v761
        %v763 = vpop.f32.mrb[0].mxu0
        %764 = vmatprep.mubr.f32.mxu0 0.0
        %765 = vmatmul.mubr.f32.gmra.mrb[0].mxu0 %v591
        %v766 = vpop.f32.mrb[0].mxu0
        %v767 = vadd.f32 0.0, %v766
        %v768 = vpop.f32.mrb[0].mxu0
        %769 = vmatprep.mubr.f32.mxu0 0.0
        %770 = vmatmul.mubr.f32.gmra.mrb[0].mxu0 %v594
        %v771 = vpop.f32.mrb[0].mxu0
        %v772 = vadd.f32 0.0, %v771
        %v773 = vpop.f32.mrb[0].mxu0
        %774 = vmatprep.mubr.f32.mxu0 0.0
        %775 = vmatmul.mubr.f32.gmra.mrb[0].mxu0 %v597
        %v776 = vpop.f32.mrb[0].mxu0
        %v777 = vadd.f32 0.0, %v776
        %v778 = vpop.f32.mrb[0].mxu0
        %779 = vmatprep.mubr.f32.mxu0 0.0
        %780 = vmatmul.mubr.f32.gmra.mrb[0].mxu0 %v600
        %v781 = vpop.f32.mrb[0].mxu0
        %v782 = vadd.f32 0.0, %v781
        %v783 = vpop.f32.mrb[0].mxu0
        %784 = vmatprep.mubr.f32.mxu0 0.0
        %785 = vmatmul.mubr.f32.gmra.mrb[0].mxu0 %v603
        %v786 = vpop.f32.mrb[0].mxu0
        %v787 = vadd.f32 0.0, %v786
        %v788 = vpop.f32.mrb[0].mxu0
        %789 = vmatprep.mubr.f32.mxu0 0.0
        %790 = vmatmul.mubr.f32.gmra.mrb[0].mxu0 %v606
        %v791 = vpop.f32.mrb[0].mxu0
        %v792 = vadd.f32 0.0, %v791
        %v793 = vpop.f32.mrb[0].mxu0
        %794 = vmatprep.mubr.f32.mxu0 0.0
        %795 = vmatmul.mubr.f32.gmra.mrb[0].mxu0 %v609
        %v796 = vpop.f32.mrb[0].mxu0
        %v797 = vadd.f32 0.0, %v796
        %v798 = vpop.f32.mrb[0].mxu0
        %799 = vmatprep.mubr.f32.mxu0 0.0
        %800 = vmatmul.mubr.f32.gmra.mrb[0].mxu0 %v612
        %v801 = vpop.f32.mrb[0].mxu0
        %v802 = vadd.f32 0.0, %v801
        %v803 = vpop.f32.mrb[0].mxu0
        %804 = vmatprep.mubr.f32.mxu0 0.0
        %805 = vmatmul.mubr.f32.gmra.mrb[0].mxu0 %v615
        %v806 = vpop.f32.mrb[0].mxu0
        %v807 = vadd.f32 0.0, %v806
        %v808 = vpop.f32.mrb[0].mxu0
        %809 = vdwg.mxu0
        %v810 = vmul.f32 %v520, %v520
        %v811 = vmul.f32 %v521, %v521
        %v812 = vmul.f32 %v522, %v522
        %v813 = vmul.f32 %v523, %v523
        %v814 = vmul.f32 %v524, %v524
        %v815 = vmul.f32 %v525, %v525
        %v816 = vmul.f32 %v526, %v526
        %v817 = vmul.f32 %v527, %v527
        %v818 = vmul.f32 %v528, %v528
        %v819 = vmul.f32 %v529, %v529
        %v820 = vmul.f32 %v530, %v530
        %v821 = vmul.f32 %v531, %v531
        %v822 = vmul.f32 %v532, %v532
        %v823 = vmul.f32 %v533, %v533
        %v824 = vmul.f32 %v534, %v534
        %v825 = vmul.f32 %v535, %v535
        %v826 = vsel %vm568, %v810, 0.0
        %827 = vadd.xlane.f32.xlu0 %v826
        %v828 = vpop.xlane.xlu0 %827
        %v829 = vsel %vm568, %v811, 0.0
        %830 = vadd.xlane.f32.xlu0 %v829
        %v831 = vpop.xlane.xlu0 %830
        %v832 = vsel %vm568, %v812, 0.0
        %833 = vadd.xlane.f32.xlu0 %v832
        %v834 = vpop.xlane.xlu0 %833
        %v835 = vsel %vm568, %v813, 0.0
        %836 = vadd.xlane.f32.xlu0 %v835
        %v837 = vpop.xlane.xlu0 %836
        %v838 = vsel %vm568, %v814, 0.0
        %839 = vadd.xlane.f32.xlu0 %v838
        %v840 = vpop.xlane.xlu0 %839
        %v841 = vsel %vm568, %v815, 0.0
        %842 = vadd.xlane.f32.xlu0 %v841
        %v843 = vpop.xlane.xlu0 %842
        %v844 = vsel %vm568, %v816, 0.0
        %845 = vadd.xlane.f32.xlu0 %v844
        %v846 = vpop.xlane.xlu0 %845
        %v847 = vsel %vm568, %v817, 0.0
        %848 = vadd.xlane.f32.xlu0 %v847
        %v849 = vpop.xlane.xlu0 %848
        %v850 = vsel %vm568, %v818, 0.0
        %851 = vadd.xlane.f32.xlu0 %v850
        %v852 = vpop.xlane.xlu0 %851
        %v853 = vsel %vm568, %v819, 0.0
        %854 = vadd.xlane.f32.xlu0 %v853
        %v855 = vpop.xlane.xlu0 %854
        %v856 = vsel %vm568, %v820, 0.0
        %857 = vadd.xlane.f32.xlu0 %v856
        %v858 = vpop.xlane.xlu0 %857
        %v859 = vsel %vm568, %v821, 0.0
        %860 = vadd.xlane.f32.xlu0 %v859
        %v861 = vpop.xlane.xlu0 %860
        %v862 = vsel %vm568, %v822, 0.0
        %863 = vadd.xlane.f32.xlu0 %v862
        %v864 = vpop.xlane.xlu0 %863
        %v865 = vsel %vm568, %v823, 0.0
        %866 = vadd.xlane.f32.xlu0 %v865
        %v867 = vpop.xlane.xlu0 %866
        %v868 = vsel %vm568, %v824, 0.0
        %869 = vadd.xlane.f32.xlu0 %v868
        %v870 = vpop.xlane.xlu0 %869
        %v871 = vsel %vm568, %v825, 0.0
        %872 = vadd.xlane.f32.xlu0 %v871
        %v873 = vpop.xlane.xlu0 %872
        %v874 = vmul.f32 %v552, %v552
        %v875 = vmul.f32 %v553, %v553
        %v876 = vmul.f32 %v554, %v554
        %v877 = vmul.f32 %v555, %v555
        %v878 = vmul.f32 %v556, %v556
        %v879 = vmul.f32 %v557, %v557
        %v880 = vmul.f32 %v558, %v558
        %v881 = vmul.f32 %v559, %v559
        %v882 = vmul.f32 %v560, %v560
        %v883 = vmul.f32 %v561, %v561
        %v884 = vmul.f32 %v562, %v562
        %v885 = vmul.f32 %v563, %v563
        %v886 = vmul.f32 %v564, %v564
        %v887 = vmul.f32 %v565, %v565
        %v888 = vmul.f32 %v566, %v566
        %v889 = vmul.f32 %v567, %v567
        %v890 = vsel %vm568, %v874, 0.0
        %891 = vadd.xlane.f32.xlu0 %v890
        %v892 = vpop.xlane.xlu0 %891
        %v893 = vsel %vm568, %v875, 0.0
        %894 = vadd.xlane.f32.xlu0 %v893
        %v895 = vpop.xlane.xlu0 %894
        %v896 = vsel %vm568, %v876, 0.0
        %897 = vadd.xlane.f32.xlu0 %v896
        %v898 = vpop.xlane.xlu0 %897
        %v899 = vsel %vm568, %v877, 0.0
        %900 = vadd.xlane.f32.xlu0 %v899
        %v901 = vpop.xlane.xlu0 %900
        %v902 = vsel %vm568, %v878, 0.0
        %903 = vadd.xlane.f32.xlu0 %v902
        %v904 = vpop.xlane.xlu0 %903
        %v905 = vsel %vm568, %v879, 0.0
        %906 = vadd.xlane.f32.xlu0 %v905
        %v907 = vpop.xlane.xlu0 %906
        %v908 = vsel %vm568, %v880, 0.0
        %909 = vadd.xlane.f32.xlu0 %v908
        %v910 = vpop.xlane.xlu0 %909
        %v911 = vsel %vm568, %v881, 0.0
        %912 = vadd.xlane.f32.xlu0 %v911
        %v913 = vpop.xlane.xlu0 %912
        %v914 = vsel %vm568, %v882, 0.0
        %915 = vadd.xlane.f32.xlu0 %v914
        %v916 = vpop.xlane.xlu0 %915
        %v917 = vsel %vm568, %v883, 0.0
        %918 = vadd.xlane.f32.xlu0 %v917
        %v919 = vpop.xlane.xlu0 %918
        %v920 = vsel %vm568, %v884, 0.0
        %921 = vadd.xlane.f32.xlu0 %v920
        %v922 = vpop.xlane.xlu0 %921
        %v923 = vsel %vm568, %v885, 0.0
        %924 = vadd.xlane.f32.xlu0 %v923
        %v925 = vpop.xlane.xlu0 %924
        %v926 = vsel %vm568, %v886, 0.0
        %927 = vadd.xlane.f32.xlu0 %v926
        %v928 = vpop.xlane.xlu0 %927
        %v929 = vsel %vm568, %v887, 0.0
        %930 = vadd.xlane.f32.xlu0 %v929
        %v931 = vpop.xlane.xlu0 %930
        %v932 = vsel %vm568, %v888, 0.0
        %933 = vadd.xlane.f32.xlu0 %v932
        %v934 = vpop.xlane.xlu0 %933
        %v935 = vsel %vm568, %v889, 0.0
        %936 = vadd.xlane.f32.xlu0 %v935
        %v937 = vpop.xlane.xlu0 %936
        %vm938 = vcmask 7168
        %v940 = vsel %vm938, 1.0, 0
        %v943 = vsel %vm938, %v892, 0
        %v946 = vsel %vm938, %v895, 0
        %v949 = vsel %vm938, %v898, 0
        %v952 = vsel %vm938, %v901, 0
        %v955 = vsel %vm938, %v904, 0
        %v958 = vsel %vm938, %v907, 0
        %v961 = vsel %vm938, %v910, 0
        %v964 = vsel %vm938, %v913, 0
        %v967 = vsel %vm938, %v916, 0
        %v970 = vsel %vm938, %v919, 0
        %v973 = vsel %vm938, %v922, 0
        %v976 = vsel %vm938, %v925, 0
        %v979 = vsel %vm938, %v928, 0
        %v982 = vsel %vm938, %v931, 0
        %v985 = vsel %vm938, %v934, 0
        %v988 = vsel %vm938, %v937, 0
        %990 = vmatprep.subr.mxu0 0.0
        %991 = vmatpush1.xpose.msra.mxu0 %v943
        %992 = vmatprep.subr.mxu0 0.0
        %993 = vmatpush1.xpose.msra.mxu0 %v946
        %994 = vmatprep.subr.mxu0 0.0
        %995 = vmatpush1.xpose.msra.mxu0 %v949
        %996 = vmatprep.subr.mxu0 0.0
        %997 = vmatpush1.xpose.msra.mxu0 %v952
        %998 = vmatprep.subr.mxu0 0.0
        %999 = vmatpush1.xpose.msra.mxu0 %v955
        %1000 = vmatprep.subr.mxu0 0.0
        %1001 = vmatpush1.xpose.msra.mxu0 %v958
        %1002 = vmatprep.subr.mxu0 0.0
        %1003 = vmatpush1.xpose.msra.mxu0 %v961
        %1004 = vmatprep.subr.mxu0 0.0
        %1005 = vmatpush1.xpose.msra.mxu0 %v964
        %1006 = vmatprep.subr.mxu0 0.0
        %1007 = vmatpush1.xpose.msra.mxu0 %v967
        %1008 = vmatprep.subr.mxu0 0.0
        %1009 = vmatpush1.xpose.msra.mxu0 %v970
        %1010 = vmatprep.subr.mxu0 0.0
        %1011 = vmatpush1.xpose.msra.mxu0 %v973
        %1012 = vmatprep.subr.mxu0 0.0
        %1013 = vmatpush1.xpose.msra.mxu0 %v976
        %1014 = vmatprep.subr.mxu0 0.0
        %1015 = vmatpush1.xpose.msra.mxu0 %v979
        %1016 = vmatprep.subr.mxu0 0.0
        %1017 = vmatpush1.xpose.msra.mxu0 %v982
        %1018 = vmatprep.subr.mxu0 0.0
        %1019 = vmatpush1.xpose.msra.mxu0 %v985
        %1020 = vmatprep.subr.mxu0 0.0
        %1021 = vmatpush1.xpose.msra.mxu0 %v988
        %1022 = vmatprep.subr.mxu0 0.0
        %1023 = vmatpush1.xpose.msra.mxu0 0.0
        %1024 = vmatprep.subr.mxu0 0.0
        %1025 = vmatpush1.xpose.msra.mxu0 0.0
        %1026 = vmatprep.subr.mxu0 0.0
        %1027 = vmatpush1.xpose.msra.mxu0 0.0
        %1028 = vmatprep.subr.mxu0 0.0
        %1029 = vmatpush1.xpose.msra.mxu0 0.0
        %1030 = vmatprep.subr.mxu0 0.0
        %1031 = vmatpush1.xpose.msra.mxu0 0.0
        %1032 = vmatprep.subr.mxu0 0.0
        %1033 = vmatpush1.xpose.msra.mxu0 0.0
        %1034 = vmatprep.subr.mxu0 0.0
        %1035 = vmatpush1.xpose.msra.mxu0 0.0
        %1036 = vmatprep.subr.mxu0 0.0
        %1037 = vmatpush1.xpose.msra.mxu0 0.0
        %1038 = vmatprep.subr.mxu0 0.0
        %1039 = vmatpush1.xpose.msra.mxu0 0.0
        %1040 = vmatprep.subr.mxu0 0.0
        %1041 = vmatpush1.xpose.msra.mxu0 0.0
        %1042 = vmatprep.subr.mxu0 0.0
        %1043 = vmatpush1.xpose.msra.mxu0 0.0
        %1044 = vmatprep.subr.mxu0 0.0
        %1045 = vmatpush1.xpose.msra.mxu0 0.0
        %1046 = vmatprep.subr.mxu0 0.0
        %1047 = vmatpush1.xpose.msra.mxu0 0.0
        %1048 = vmatprep.subr.mxu0 0.0
        %1049 = vmatpush1.xpose.msra.mxu0 0.0
        %1050 = vmatprep.subr.mxu0 0.0
        %1051 = vmatpush1.xpose.msra.mxu0 0.0
        %1052 = vmatprep.subr.mxu0 0.0
        %1053 = vmatpush1.xpose.msra.mxu0 0.0
        %1054 = vmatprep.mubr.f32.mxu0 0.0
        %1055 = vmatmul.mubr.f32.gmra.mrb[0].mxu0 %v940
        %v1056 = vpop.f32.mrb[0].mxu0
        %v1057 = vadd.f32 0.0, %v1056
        %v1058 = vpop.f32.mrb[0].mxu0
        %1059 = vmatprep.mubr.f32.mxu0 0.0
        %1060 = vmatmul.mubr.f32.gmra.mrb[0].mxu0 %v940
        %v1061 = vpop.f32.mrb[0].mxu0
        %v1062 = vadd.f32 0.0, %v1061
        %v1063 = vpop.f32.mrb[0].mxu0
        %1064 = vmatprep.mubr.f32.mxu0 0.0
        %1065 = vmatmul.mubr.f32.gmra.mrb[0].mxu0 %v940
        %v1066 = vpop.f32.mrb[0].mxu0
        %v1067 = vadd.f32 0.0, %v1066
        %v1068 = vpop.f32.mrb[0].mxu0
        %1069 = vmatprep.mubr.f32.mxu0 0.0
        %1070 = vmatmul.mubr.f32.gmra.mrb[0].mxu0 %v940
        %v1071 = vpop.f32.mrb[0].mxu0
        %v1072 = vadd.f32 0.0, %v1071
        %v1073 = vpop.f32.mrb[0].mxu0
        %1074 = vmatprep.mubr.f32.mxu0 0.0
        %1075 = vmatmul.mubr.f32.gmra.mrb[0].mxu0 %v940
        %v1076 = vpop.f32.mrb[0].mxu0
        %v1077 = vadd.f32 0.0, %v1076
        %v1078 = vpop.f32.mrb[0].mxu0
        %1079 = vmatprep.mubr.f32.mxu0 0.0
        %1080 = vmatmul.mubr.f32.gmra.mrb[0].mxu0 %v940
        %v1081 = vpop.f32.mrb[0].mxu0
        %v1082 = vadd.f32 0.0, %v1081
        %v1083 = vpop.f32.mrb[0].mxu0
        %1084 = vmatprep.mubr.f32.mxu0 0.0
        %1085 = vmatmul.mubr.f32.gmra.mrb[0].mxu0 %v940
        %v1086 = vpop.f32.mrb[0].mxu0
        %v1087 = vadd.f32 0.0, %v1086
        %v1088 = vpop.f32.mrb[0].mxu0
        %1089 = vmatprep.mubr.f32.mxu0 0.0
        %1090 = vmatmul.mubr.f32.gmra.mrb[0].mxu0 %v940
        %v1091 = vpop.f32.mrb[0].mxu0
        %v1092 = vadd.f32 0.0, %v1091
        %v1093 = vpop.f32.mrb[0].mxu0
        %1094 = vmatprep.mubr.f32.mxu0 0.0
        %1095 = vmatmul.mubr.f32.gmra.mrb[0].mxu0 %v940
        %v1096 = vpop.f32.mrb[0].mxu0
        %v1097 = vadd.f32 0.0, %v1096
        %v1098 = vpop.f32.mrb[0].mxu0
        %1099 = vmatprep.mubr.f32.mxu0 0.0
        %1100 = vmatmul.mubr.f32.gmra.mrb[0].mxu0 %v940
        %v1101 = vpop.f32.mrb[0].mxu0
        %v1102 = vadd.f32 0.0, %v1101
        %v1103 = vpop.f32.mrb[0].mxu0
        %1104 = vmatprep.mubr.f32.mxu0 0.0
        %1105 = vmatmul.mubr.f32.gmra.mrb[0].mxu0 %v940
        %v1106 = vpop.f32.mrb[0].mxu0
        %v1107 = vadd.f32 0.0, %v1106
        %v1108 = vpop.f32.mrb[0].mxu0
        %1109 = vmatprep.mubr.f32.mxu0 0.0
        %1110 = vmatmul.mubr.f32.gmra.mrb[0].mxu0 %v940
        %v1111 = vpop.f32.mrb[0].mxu0
        %v1112 = vadd.f32 0.0, %v1111
        %v1113 = vpop.f32.mrb[0].mxu0
        %1114 = vmatprep.mubr.f32.mxu0 0.0
        %1115 = vmatmul.mubr.f32.gmra.mrb[0].mxu0 %v940
        %v1116 = vpop.f32.mrb[0].mxu0
        %v1117 = vadd.f32 0.0, %v1116
        %v1118 = vpop.f32.mrb[0].mxu0
        %1119 = vmatprep.mubr.f32.mxu0 0.0
        %1120 = vmatmul.mubr.f32.gmra.mrb[0].mxu0 %v940
        %v1121 = vpop.f32.mrb[0].mxu0
        %v1122 = vadd.f32 0.0, %v1121
        %v1123 = vpop.f32.mrb[0].mxu0
        %1124 = vmatprep.mubr.f32.mxu0 0.0
        %1125 = vmatmul.mubr.f32.gmra.mrb[0].mxu0 %v940
        %v1126 = vpop.f32.mrb[0].mxu0
        %v1127 = vadd.f32 0.0, %v1126
        %v1128 = vpop.f32.mrb[0].mxu0
        %1129 = vmatprep.mubr.f32.mxu0 0.0
        %1130 = vmatmul.mubr.f32.gmra.mrb[0].mxu0 %v940
        %v1131 = vpop.f32.mrb[0].mxu0
        %v1132 = vadd.f32 0.0, %v1131
        %v1133 = vpop.f32.mrb[0].mxu0
        %1134 = vdwg.mxu0
        %v1135 = vadd.f32 %v828, %v1057
        %v1136 = vadd.f32 %v831, %v1062
        %v1137 = vadd.f32 %v834, %v1067
        %v1138 = vadd.f32 %v837, %v1072
        %v1139 = vadd.f32 %v840, %v1077
        %v1140 = vadd.f32 %v843, %v1082
        %v1141 = vadd.f32 %v846, %v1087
        %v1142 = vadd.f32 %v849, %v1092
        %v1143 = vadd.f32 %v852, %v1097
        %v1144 = vadd.f32 %v855, %v1102
        %v1145 = vadd.f32 %v858, %v1107
        %v1146 = vadd.f32 %v861, %v1112
        %v1147 = vadd.f32 %v864, %v1117
        %v1148 = vadd.f32 %v867, %v1122
        %v1149 = vadd.f32 %v870, %v1127
        %v1150 = vadd.f32 %v873, %v1132
        %v1151 = vmul.f32 %v732, 2.0
        %v1152 = vmul.f32 %v737, 2.0
        %v1153 = vmul.f32 %v742, 2.0
        %v1154 = vmul.f32 %v747, 2.0
        %v1155 = vmul.f32 %v752, 2.0
        %v1156 = vmul.f32 %v757, 2.0
        %v1157 = vmul.f32 %v762, 2.0
        %v1158 = vmul.f32 %v767, 2.0
        %v1159 = vmul.f32 %v772, 2.0
        %v1160 = vmul.f32 %v777, 2.0
        %v1161 = vmul.f32 %v782, 2.0
        %v1162 = vmul.f32 %v787, 2.0
        %v1163 = vmul.f32 %v792, 2.0
        %v1164 = vmul.f32 %v797, 2.0
        %v1165 = vmul.f32 %v802, 2.0
        %v1166 = vmul.f32 %v807, 2.0
        %v1167 = vsub.f32 %v1135, %v1151
        %v1168 = vsub.f32 %v1136, %v1152
        %v1169 = vsub.f32 %v1137, %v1153
        %v1170 = vsub.f32 %v1138, %v1154
        %v1171 = vsub.f32 %v1139, %v1155
        %v1172 = vsub.f32 %v1140, %v1156
        %v1173 = vsub.f32 %v1141, %v1157
        %v1174 = vsub.f32 %v1142, %v1158
        %v1175 = vsub.f32 %v1143, %v1159
        %v1176 = vsub.f32 %v1144, %v1160
        %v1177 = vsub.f32 %v1145, %v1161
        %v1178 = vsub.f32 %v1146, %v1162
        %v1179 = vsub.f32 %v1147, %v1163
        %v1180 = vsub.f32 %v1148, %v1164
        %v1181 = vsub.f32 %v1149, %v1165
        %v1182 = vsub.f32 %v1150, %v1166
        %v1183 = vmax.f32 %v1167, 0.0
        %v1184 = vmax.f32 %v1168, 0.0
        %v1185 = vmax.f32 %v1169, 0.0
        %v1186 = vmax.f32 %v1170, 0.0
        %v1187 = vmax.f32 %v1171, 0.0
        %v1188 = vmax.f32 %v1172, 0.0
        %v1189 = vmax.f32 %v1173, 0.0
        %v1190 = vmax.f32 %v1174, 0.0
        %v1191 = vmax.f32 %v1175, 0.0
        %v1192 = vmax.f32 %v1176, 0.0
        %v1193 = vmax.f32 %v1177, 0.0
        %v1194 = vmax.f32 %v1178, 0.0
        %v1195 = vmax.f32 %v1179, 0.0
        %v1196 = vmax.f32 %v1180, 0.0
        %v1197 = vmax.f32 %v1181, 0.0
        %v1198 = vmax.f32 %v1182, 0.0
        %v1199 = vadd.f32 %v1183, 1e-08
        %v1200 = vadd.f32 %v1184, 1e-08
        %v1201 = vadd.f32 %v1185, 1e-08
        %v1202 = vadd.f32 %v1186, 1e-08
        %v1203 = vadd.f32 %v1187, 1e-08
        %v1204 = vadd.f32 %v1188, 1e-08
        %v1205 = vadd.f32 %v1189, 1e-08
        %v1206 = vadd.f32 %v1190, 1e-08
        %v1207 = vadd.f32 %v1191, 1e-08
        %v1208 = vadd.f32 %v1192, 1e-08
        %v1209 = vadd.f32 %v1193, 1e-08
        %v1210 = vadd.f32 %v1194, 1e-08
        %v1211 = vadd.f32 %v1195, 1e-08
        %v1212 = vadd.f32 %v1196, 1e-08
        %v1213 = vadd.f32 %v1197, 1e-08
        %v1214 = vadd.f32 %v1198, 1e-08
        %v1215 = vrsqrt.pop %v1199
        %v1216 = vmul.f32 %v1199, %v1215
        %vm1217 = vcmp.eq.f32.partialorder %v1199, inf
        %v1218 = vsel %vm1217, %v1199, %v1216
        %vm1219 = vcmp.eq.f32.partialorder %v1199, 0.0
        %v1220 = vand.u32 %v1199, 2147483648
        %v1221 = vsel %vm1219, %v1220, %v1218
        %v1222 = vrsqrt.pop %v1200
        %v1223 = vmul.f32 %v1200, %v1222
        %vm1224 = vcmp.eq.f32.partialorder %v1200, inf
        %v1225 = vsel %vm1224, %v1200, %v1223
        %vm1226 = vcmp.eq.f32.partialorder %v1200, 0.0
        %v1227 = vand.u32 %v1200, 2147483648
        %v1228 = vsel %vm1226, %v1227, %v1225
        %v1229 = vrsqrt.pop %v1201
        %v1230 = vmul.f32 %v1201, %v1229
        %vm1231 = vcmp.eq.f32.partialorder %v1201, inf
        %v1232 = vsel %vm1231, %v1201, %v1230
        %vm1233 = vcmp.eq.f32.partialorder %v1201, 0.0
        %v1234 = vand.u32 %v1201, 2147483648
        %v1235 = vsel %vm1233, %v1234, %v1232
        %v1236 = vrsqrt.pop %v1202
        %v1237 = vmul.f32 %v1202, %v1236
        %vm1238 = vcmp.eq.f32.partialorder %v1202, inf
        %v1239 = vsel %vm1238, %v1202, %v1237
        %vm1240 = vcmp.eq.f32.partialorder %v1202, 0.0
        %v1241 = vand.u32 %v1202, 2147483648
        %v1242 = vsel %vm1240, %v1241, %v1239
        %v1243 = vrsqrt.pop %v1203
        %v1244 = vmul.f32 %v1203, %v1243
        %vm1245 = vcmp.eq.f32.partialorder %v1203, inf
        %v1246 = vsel %vm1245, %v1203, %v1244
        %vm1247 = vcmp.eq.f32.partialorder %v1203, 0.0
        %v1248 = vand.u32 %v1203, 2147483648
        %v1249 = vsel %vm1247, %v1248, %v1246
        %v1250 = vrsqrt.pop %v1204
        %v1251 = vmul.f32 %v1204, %v1250
        %vm1252 = vcmp.eq.f32.partialorder %v1204, inf
        %v1253 = vsel %vm1252, %v1204, %v1251
        %vm1254 = vcmp.eq.f32.partialorder %v1204, 0.0
        %v1255 = vand.u32 %v1204, 2147483648
        %v1256 = vsel %vm1254, %v1255, %v1253
        %v1257 = vrsqrt.pop %v1205
        %v1258 = vmul.f32 %v1205, %v1257
        %vm1259 = vcmp.eq.f32.partialorder %v1205, inf
        %v1260 = vsel %vm1259, %v1205, %v1258
        %vm1261 = vcmp.eq.f32.partialorder %v1205, 0.0
        %v1262 = vand.u32 %v1205, 2147483648
        %v1263 = vsel %vm1261, %v1262, %v1260
        %v1264 = vrsqrt.pop %v1206
        %v1265 = vmul.f32 %v1206, %v1264
        %vm1266 = vcmp.eq.f32.partialorder %v1206, inf
        %v1267 = vsel %vm1266, %v1206, %v1265
        %vm1268 = vcmp.eq.f32.partialorder %v1206, 0.0
        %v1269 = vand.u32 %v1206, 2147483648
        %v1270 = vsel %vm1268, %v1269, %v1267
        %v1271 = vrsqrt.pop %v1207
        %v1272 = vmul.f32 %v1207, %v1271
        %vm1273 = vcmp.eq.f32.partialorder %v1207, inf
        %v1274 = vsel %vm1273, %v1207, %v1272
        %vm1275 = vcmp.eq.f32.partialorder %v1207, 0.0
        %v1276 = vand.u32 %v1207, 2147483648
        %v1277 = vsel %vm1275, %v1276, %v1274
        %v1278 = vrsqrt.pop %v1208
        %v1279 = vmul.f32 %v1208, %v1278
        %vm1280 = vcmp.eq.f32.partialorder %v1208, inf
        %v1281 = vsel %vm1280, %v1208, %v1279
        %vm1282 = vcmp.eq.f32.partialorder %v1208, 0.0
        %v1283 = vand.u32 %v1208, 2147483648
        %v1284 = vsel %vm1282, %v1283, %v1281
        %v1285 = vrsqrt.pop %v1209
        %v1286 = vmul.f32 %v1209, %v1285
        %vm1287 = vcmp.eq.f32.partialorder %v1209, inf
        %v1288 = vsel %vm1287, %v1209, %v1286
        %vm1289 = vcmp.eq.f32.partialorder %v1209, 0.0
        %v1290 = vand.u32 %v1209, 2147483648
        %v1291 = vsel %vm1289, %v1290, %v1288
        %v1292 = vrsqrt.pop %v1210
        %v1293 = vmul.f32 %v1210, %v1292
        %vm1294 = vcmp.eq.f32.partialorder %v1210, inf
        %v1295 = vsel %vm1294, %v1210, %v1293
        %vm1296 = vcmp.eq.f32.partialorder %v1210, 0.0
        %v1297 = vand.u32 %v1210, 2147483648
        %v1298 = vsel %vm1296, %v1297, %v1295
        %v1299 = vrsqrt.pop %v1211
        %v1300 = vmul.f32 %v1211, %v1299
        %vm1301 = vcmp.eq.f32.partialorder %v1211, inf
        %v1302 = vsel %vm1301, %v1211, %v1300
        %vm1303 = vcmp.eq.f32.partialorder %v1211, 0.0
        %v1304 = vand.u32 %v1211, 2147483648
        %v1305 = vsel %vm1303, %v1304, %v1302
        %v1306 = vrsqrt.pop %v1212
        %v1307 = vmul.f32 %v1212, %v1306
        %vm1308 = vcmp.eq.f32.partialorder %v1212, inf
        %v1309 = vsel %vm1308, %v1212, %v1307
        %vm1310 = vcmp.eq.f32.partialorder %v1212, 0.0
        %v1311 = vand.u32 %v1212, 2147483648
        %v1312 = vsel %vm1310, %v1311, %v1309
        %v1313 = vrsqrt.pop %v1213
        %v1314 = vmul.f32 %v1213, %v1313
        %vm1315 = vcmp.eq.f32.partialorder %v1213, inf
        %v1316 = vsel %vm1315, %v1213, %v1314
        %vm1317 = vcmp.eq.f32.partialorder %v1213, 0.0
        %v1318 = vand.u32 %v1213, 2147483648
        %v1319 = vsel %vm1317, %v1318, %v1316
        %v1320 = vrsqrt.pop %v1214
        %v1321 = vmul.f32 %v1214, %v1320
        %vm1322 = vcmp.eq.f32.partialorder %v1214, inf
        %v1323 = vsel %vm1322, %v1214, %v1321
        %vm1324 = vcmp.eq.f32.partialorder %v1214, 0.0
        %v1325 = vand.u32 %v1214, 2147483648
        %v1326 = vsel %vm1324, %v1325, %v1323
        %v1327 = vld [vmem:[%s4] sm:$0xff]
        %v1328 = vld [vmem:[%s4 + $0x8] sm:$0xff]
        %v1329 = vld [vmem:[%s6] sm:$0x1]
        %v1331 = vlaneseq
        %v1332 = vshrl.u32 %v1331, 7
        %v1333 = vsub.s32 0, %v1332
        %v1334 = vrot.slane %v1329, %v1333
        %vm1336 = vcmask 130048
        %v1338 = vsel %vm1336, %v504, 0
        %v1341 = vsel %vm1336, %v505, 0
        %v1344 = vsel %vm1336, %v506, 0
        %v1347 = vsel %vm1336, %v507, 0
        %v1350 = vsel %vm1336, %v508, 0
        %v1353 = vsel %vm1336, %v509, 0
        %v1356 = vsel %vm1336, %v510, 0
        %v1359 = vsel %vm1336, %v511, 0
        %v1362 = vsel %vm1336, %v512, 0
        %v1365 = vsel %vm1336, %v513, 0
        %v1368 = vsel %vm1336, %v514, 0
        %v1371 = vsel %vm1336, %v515, 0
        %v1374 = vsel %vm1336, %v516, 0
        %v1377 = vsel %vm1336, %v517, 0
        %v1380 = vsel %vm1336, %v518, 0
        %v1383 = vsel %vm1336, %v519, 0
        %1385 = vmatprep.subr.mxu0 0.0
        %1386 = vmatpush1.msra.mxu0 %v1327
        %1387 = vmatprep.subr.mxu0 0.0
        %1388 = vmatpush1.msra.mxu0 %v1328
        %1389 = vmatprep.subr.mxu0 0.0
        %1390 = vmatpush1.msra.mxu0 0.0
        %1391 = vmatprep.subr.mxu0 0.0
        %1392 = vmatpush1.msra.mxu0 0.0
        %1393 = vmatprep.subr.mxu0 0.0
        %1394 = vmatpush1.msra.mxu0 0.0
        %1395 = vmatprep.subr.mxu0 0.0
        %1396 = vmatpush1.msra.mxu0 0.0
        %1397 = vmatprep.subr.mxu0 0.0
        %1398 = vmatpush1.msra.mxu0 0.0
        %1399 = vmatprep.subr.mxu0 0.0
        %1400 = vmatpush1.msra.mxu0 0.0
        %1401 = vmatprep.subr.mxu0 0.0
        %1402 = vmatpush1.msra.mxu0 0.0
        %1403 = vmatprep.subr.mxu0 0.0
        %1404 = vmatpush1.msra.mxu0 0.0
        %1405 = vmatprep.subr.mxu0 0.0
        %1406 = vmatpush1.msra.mxu0 0.0
        %1407 = vmatprep.subr.mxu0 0.0
        %1408 = vmatpush1.msra.mxu0 0.0
        %1409 = vmatprep.subr.mxu0 0.0
        %1410 = vmatpush1.msra.mxu0 0.0
        %1411 = vmatprep.subr.mxu0 0.0
        %1412 = vmatpush1.msra.mxu0 0.0
        %1413 = vmatprep.subr.mxu0 0.0
        %1414 = vmatpush1.msra.mxu0 0.0
        %1415 = vmatprep.subr.mxu0 0.0
        %1416 = vmatpush1.msra.mxu0 0.0
        %1417 = vmatprep.subr.mxu0 0.0
        %1418 = vmatpush1.msra.mxu0 0.0
        %1419 = vmatprep.subr.mxu0 0.0
        %1420 = vmatpush1.msra.mxu0 0.0
        %1421 = vmatprep.subr.mxu0 0.0
        %1422 = vmatpush1.msra.mxu0 0.0
        %1423 = vmatprep.subr.mxu0 0.0
        %1424 = vmatpush1.msra.mxu0 0.0
        %1425 = vmatprep.subr.mxu0 0.0
        %1426 = vmatpush1.msra.mxu0 0.0
        %1427 = vmatprep.subr.mxu0 0.0
        %1428 = vmatpush1.msra.mxu0 0.0
        %1429 = vmatprep.subr.mxu0 0.0
        %1430 = vmatpush1.msra.mxu0 0.0
        %1431 = vmatprep.subr.mxu0 0.0
        %1432 = vmatpush1.msra.mxu0 0.0
        %1433 = vmatprep.subr.mxu0 0.0
        %1434 = vmatpush1.msra.mxu0 0.0
        %1435 = vmatprep.subr.mxu0 0.0
        %1436 = vmatpush1.msra.mxu0 0.0
        %1437 = vmatprep.subr.mxu0 0.0
        %1438 = vmatpush1.msra.mxu0 0.0
        %1439 = vmatprep.subr.mxu0 0.0
        %1440 = vmatpush1.msra.mxu0 0.0
        %1441 = vmatprep.subr.mxu0 0.0
        %1442 = vmatpush1.msra.mxu0 0.0
        %1443 = vmatprep.subr.mxu0 0.0
        %1444 = vmatpush1.msra.mxu0 0.0
        %1445 = vmatprep.subr.mxu0 0.0
        %1446 = vmatpush1.msra.mxu0 0.0
        %1447 = vmatprep.subr.mxu0 0.0
        %1448 = vmatpush1.msra.mxu0 0.0
        %1449 = vmatprep.mubr.f32.mxu0 0.0
        %1450 = vmatmul.mubr.f32.gmra.mrb[0].mxu0 %v1338
        %v1451 = vpop.f32.mrb[0].mxu0
        %v1452 = vadd.f32 %v1334, %v1451
        %v1453 = vpop.f32.mrb[0].mxu0
        %1454 = vmatprep.mubr.f32.mxu0 0.0
        %1455 = vmatmul.mubr.f32.gmra.mrb[0].mxu0 %v1341
        %v1456 = vpop.f32.mrb[0].mxu0
        %v1457 = vadd.f32 %v1334, %v1456
        %v1458 = vpop.f32.mrb[0].mxu0
        %1459 = vmatprep.mubr.f32.mxu0 0.0
        %1460 = vmatmul.mubr.f32.gmra.mrb[0].mxu0 %v1344
        %v1461 = vpop.f32.mrb[0].mxu0
        %v1462 = vadd.f32 %v1334, %v1461
        %v1463 = vpop.f32.mrb[0].mxu0
        %1464 = vmatprep.mubr.f32.mxu0 0.0
        %1465 = vmatmul.mubr.f32.gmra.mrb[0].mxu0 %v1347
        %v1466 = vpop.f32.mrb[0].mxu0
        %v1467 = vadd.f32 %v1334, %v1466
        %v1468 = vpop.f32.mrb[0].mxu0
        %1469 = vmatprep.mubr.f32.mxu0 0.0
        %1470 = vmatmul.mubr.f32.gmra.mrb[0].mxu0 %v1350
        %v1471 = vpop.f32.mrb[0].mxu0
        %v1472 = vadd.f32 %v1334, %v1471
        %v1473 = vpop.f32.mrb[0].mxu0
        %1474 = vmatprep.mubr.f32.mxu0 0.0
        %1475 = vmatmul.mubr.f32.gmra.mrb[0].mxu0 %v1353
        %v1476 = vpop.f32.mrb[0].mxu0
        %v1477 = vadd.f32 %v1334, %v1476
        %v1478 = vpop.f32.mrb[0].mxu0
        %1479 = vmatprep.mubr.f32.mxu0 0.0
        %1480 = vmatmul.mubr.f32.gmra.mrb[0].mxu0 %v1356
        %v1481 = vpop.f32.mrb[0].mxu0
        %v1482 = vadd.f32 %v1334, %v1481
        %v1483 = vpop.f32.mrb[0].mxu0
        %1484 = vmatprep.mubr.f32.mxu0 0.0
        %1485 = vmatmul.mubr.f32.gmra.mrb[0].mxu0 %v1359
        %v1486 = vpop.f32.mrb[0].mxu0
        %v1487 = vadd.f32 %v1334, %v1486
        %v1488 = vpop.f32.mrb[0].mxu0
        %1489 = vmatprep.mubr.f32.mxu0 0.0
        %1490 = vmatmul.mubr.f32.gmra.mrb[0].mxu0 %v1362
        %v1491 = vpop.f32.mrb[0].mxu0
        %v1492 = vadd.f32 %v1334, %v1491
        %v1493 = vpop.f32.mrb[0].mxu0
        %1494 = vmatprep.mubr.f32.mxu0 0.0
        %1495 = vmatmul.mubr.f32.gmra.mrb[0].mxu0 %v1365
        %v1496 = vpop.f32.mrb[0].mxu0
        %v1497 = vadd.f32 %v1334, %v1496
        %v1498 = vpop.f32.mrb[0].mxu0
        %1499 = vmatprep.mubr.f32.mxu0 0.0
        %1500 = vmatmul.mubr.f32.gmra.mrb[0].mxu0 %v1368
        %v1501 = vpop.f32.mrb[0].mxu0
        %v1502 = vadd.f32 %v1334, %v1501
        %v1503 = vpop.f32.mrb[0].mxu0
        %1504 = vmatprep.mubr.f32.mxu0 0.0
        %1505 = vmatmul.mubr.f32.gmra.mrb[0].mxu0 %v1371
        %v1506 = vpop.f32.mrb[0].mxu0
        %v1507 = vadd.f32 %v1334, %v1506
        %v1508 = vpop.f32.mrb[0].mxu0
        %1509 = vmatprep.mubr.f32.mxu0 0.0
        %1510 = vmatmul.mubr.f32.gmra.mrb[0].mxu0 %v1374
        %v1511 = vpop.f32.mrb[0].mxu0
        %v1512 = vadd.f32 %v1334, %v1511
        %v1513 = vpop.f32.mrb[0].mxu0
        %1514 = vmatprep.mubr.f32.mxu0 0.0
        %1515 = vmatmul.mubr.f32.gmra.mrb[0].mxu0 %v1377
        %v1516 = vpop.f32.mrb[0].mxu0
        %v1517 = vadd.f32 %v1334, %v1516
        %v1518 = vpop.f32.mrb[0].mxu0
        %1519 = vmatprep.mubr.f32.mxu0 0.0
        %1520 = vmatmul.mubr.f32.gmra.mrb[0].mxu0 %v1380
        %v1521 = vpop.f32.mrb[0].mxu0
        %v1522 = vadd.f32 %v1334, %v1521
        %v1523 = vpop.f32.mrb[0].mxu0
        %1524 = vmatprep.mubr.f32.mxu0 0.0
        %1525 = vmatmul.mubr.f32.gmra.mrb[0].mxu0 %v1383
        %v1526 = vpop.f32.mrb[0].mxu0
        %v1527 = vadd.f32 %v1334, %v1526
        %v1528 = vpop.f32.mrb[0].mxu0
        %1529 = vdwg.mxu0
        %v1530 = vld [vmem:[%s5] sm:$0xff]
        %v1531 = vld [vmem:[%s5 + $0x8] sm:$0xff]
        %v1533 = vsel %vm1336, %v536, 0
        %v1536 = vsel %vm1336, %v537, 0
        %v1539 = vsel %vm1336, %v538, 0
        %v1542 = vsel %vm1336, %v539, 0
        %v1545 = vsel %vm1336, %v540, 0
        %v1548 = vsel %vm1336, %v541, 0
        %v1551 = vsel %vm1336, %v542, 0
        %v1554 = vsel %vm1336, %v543, 0
        %v1557 = vsel %vm1336, %v544, 0
        %v1560 = vsel %vm1336, %v545, 0
        %v1563 = vsel %vm1336, %v546, 0
        %v1566 = vsel %vm1336, %v547, 0
        %v1569 = vsel %vm1336, %v548, 0
        %v1572 = vsel %vm1336, %v549, 0
        %v1575 = vsel %vm1336, %v550, 0
        %v1578 = vsel %vm1336, %v551, 0
        %1580 = vmatprep.subr.mxu0 0.0
        %1581 = vmatpush1.msra.mxu0 %v1530
        %1582 = vmatprep.subr.mxu0 0.0
        %1583 = vmatpush1.msra.mxu0 %v1531
        %1584 = vmatprep.subr.mxu0 0.0
        %1585 = vmatpush1.msra.mxu0 0.0
        %1586 = vmatprep.subr.mxu0 0.0
        %1587 = vmatpush1.msra.mxu0 0.0
        %1588 = vmatprep.subr.mxu0 0.0
        %1589 = vmatpush1.msra.mxu0 0.0
        %1590 = vmatprep.subr.mxu0 0.0
        %1591 = vmatpush1.msra.mxu0 0.0
        %1592 = vmatprep.subr.mxu0 0.0
        %1593 = vmatpush1.msra.mxu0 0.0
        %1594 = vmatprep.subr.mxu0 0.0
        %1595 = vmatpush1.msra.mxu0 0.0
        %1596 = vmatprep.subr.mxu0 0.0
        %1597 = vmatpush1.msra.mxu0 0.0
        %1598 = vmatprep.subr.mxu0 0.0
        %1599 = vmatpush1.msra.mxu0 0.0
        %1600 = vmatprep.subr.mxu0 0.0
        %1601 = vmatpush1.msra.mxu0 0.0
        %1602 = vmatprep.subr.mxu0 0.0
        %1603 = vmatpush1.msra.mxu0 0.0
        %1604 = vmatprep.subr.mxu0 0.0
        %1605 = vmatpush1.msra.mxu0 0.0
        %1606 = vmatprep.subr.mxu0 0.0
        %1607 = vmatpush1.msra.mxu0 0.0
        %1608 = vmatprep.subr.mxu0 0.0
        %1609 = vmatpush1.msra.mxu0 0.0
        %1610 = vmatprep.subr.mxu0 0.0
        %1611 = vmatpush1.msra.mxu0 0.0
        %1612 = vmatprep.subr.mxu0 0.0
        %1613 = vmatpush1.msra.mxu0 0.0
        %1614 = vmatprep.subr.mxu0 0.0
        %1615 = vmatpush1.msra.mxu0 0.0
        %1616 = vmatprep.subr.mxu0 0.0
        %1617 = vmatpush1.msra.mxu0 0.0
        %1618 = vmatprep.subr.mxu0 0.0
        %1619 = vmatpush1.msra.mxu0 0.0
        %1620 = vmatprep.subr.mxu0 0.0
        %1621 = vmatpush1.msra.mxu0 0.0
        %1622 = vmatprep.subr.mxu0 0.0
        %1623 = vmatpush1.msra.mxu0 0.0
        %1624 = vmatprep.subr.mxu0 0.0
        %1625 = vmatpush1.msra.mxu0 0.0
        %1626 = vmatprep.subr.mxu0 0.0
        %1627 = vmatpush1.msra.mxu0 0.0
        %1628 = vmatprep.subr.mxu0 0.0
        %1629 = vmatpush1.msra.mxu0 0.0
        %1630 = vmatprep.subr.mxu0 0.0
        %1631 = vmatpush1.msra.mxu0 0.0
        %1632 = vmatprep.subr.mxu0 0.0
        %1633 = vmatpush1.msra.mxu0 0.0
        %1634 = vmatprep.subr.mxu0 0.0
        %1635 = vmatpush1.msra.mxu0 0.0
        %1636 = vmatprep.subr.mxu0 0.0
        %1637 = vmatpush1.msra.mxu0 0.0
        %1638 = vmatprep.subr.mxu0 0.0
        %1639 = vmatpush1.msra.mxu0 0.0
        %1640 = vmatprep.subr.mxu0 0.0
        %1641 = vmatpush1.msra.mxu0 0.0
        %1642 = vmatprep.subr.mxu0 0.0
        %1643 = vmatpush1.msra.mxu0 0.0
        %1644 = vmatprep.mubr.f32.mxu0 0.0
        %1645 = vmatmul.mubr.f32.gmra.mrb[0].mxu0 %v1533
        %v1646 = vpop.f32.mrb[0].mxu0
        %v1647 = vadd.f32 0.0, %v1646
        %v1648 = vpop.f32.mrb[0].mxu0
        %1649 = vmatprep.mubr.f32.mxu0 0.0
        %1650 = vmatmul.mubr.f32.gmra.mrb[0].mxu0 %v1536
        %v1651 = vpop.f32.mrb[0].mxu0
        %v1652 = vadd.f32 0.0, %v1651
        %v1653 = vpop.f32.mrb[0].mxu0
        %1654 = vmatprep.mubr.f32.mxu0 0.0
        %1655 = vmatmul.mubr.f32.gmra.mrb[0].mxu0 %v1539
        %v1656 = vpop.f32.mrb[0].mxu0
        %v1657 = vadd.f32 0.0, %v1656
        %v1658 = vpop.f32.mrb[0].mxu0
        %1659 = vmatprep.mubr.f32.mxu0 0.0
        %1660 = vmatmul.mubr.f32.gmra.mrb[0].mxu0 %v1542
        %v1661 = vpop.f32.mrb[0].mxu0
        %v1662 = vadd.f32 0.0, %v1661
        %v1663 = vpop.f32.mrb[0].mxu0
        %1664 = vmatprep.mubr.f32.mxu0 0.0
        %1665 = vmatmul.mubr.f32.gmra.mrb[0].mxu0 %v1545
        %v1666 = vpop.f32.mrb[0].mxu0
        %v1667 = vadd.f32 0.0, %v1666
        %v1668 = vpop.f32.mrb[0].mxu0
        %1669 = vmatprep.mubr.f32.mxu0 0.0
        %1670 = vmatmul.mubr.f32.gmra.mrb[0].mxu0 %v1548
        %v1671 = vpop.f32.mrb[0].mxu0
        %v1672 = vadd.f32 0.0, %v1671
        %v1673 = vpop.f32.mrb[0].mxu0
        %1674 = vmatprep.mubr.f32.mxu0 0.0
        %1675 = vmatmul.mubr.f32.gmra.mrb[0].mxu0 %v1551
        %v1676 = vpop.f32.mrb[0].mxu0
        %v1677 = vadd.f32 0.0, %v1676
        %v1678 = vpop.f32.mrb[0].mxu0
        %1679 = vmatprep.mubr.f32.mxu0 0.0
        %1680 = vmatmul.mubr.f32.gmra.mrb[0].mxu0 %v1554
        %v1681 = vpop.f32.mrb[0].mxu0
        %v1682 = vadd.f32 0.0, %v1681
        %v1683 = vpop.f32.mrb[0].mxu0
        %1684 = vmatprep.mubr.f32.mxu0 0.0
        %1685 = vmatmul.mubr.f32.gmra.mrb[0].mxu0 %v1557
        %v1686 = vpop.f32.mrb[0].mxu0
        %v1687 = vadd.f32 0.0, %v1686
        %v1688 = vpop.f32.mrb[0].mxu0
        %1689 = vmatprep.mubr.f32.mxu0 0.0
        %1690 = vmatmul.mubr.f32.gmra.mrb[0].mxu0 %v1560
        %v1691 = vpop.f32.mrb[0].mxu0
        %v1692 = vadd.f32 0.0, %v1691
        %v1693 = vpop.f32.mrb[0].mxu0
        %1694 = vmatprep.mubr.f32.mxu0 0.0
        %1695 = vmatmul.mubr.f32.gmra.mrb[0].mxu0 %v1563
        %v1696 = vpop.f32.mrb[0].mxu0
        %v1697 = vadd.f32 0.0, %v1696
        %v1698 = vpop.f32.mrb[0].mxu0
        %1699 = vmatprep.mubr.f32.mxu0 0.0
        %1700 = vmatmul.mubr.f32.gmra.mrb[0].mxu0 %v1566
        %v1701 = vpop.f32.mrb[0].mxu0
        %v1702 = vadd.f32 0.0, %v1701
        %v1703 = vpop.f32.mrb[0].mxu0
        %1704 = vmatprep.mubr.f32.mxu0 0.0
        %1705 = vmatmul.mubr.f32.gmra.mrb[0].mxu0 %v1569
        %v1706 = vpop.f32.mrb[0].mxu0
        %v1707 = vadd.f32 0.0, %v1706
        %v1708 = vpop.f32.mrb[0].mxu0
        %1709 = vmatprep.mubr.f32.mxu0 0.0
        %1710 = vmatmul.mubr.f32.gmra.mrb[0].mxu0 %v1572
        %v1711 = vpop.f32.mrb[0].mxu0
        %v1712 = vadd.f32 0.0, %v1711
        %v1713 = vpop.f32.mrb[0].mxu0
        %1714 = vmatprep.mubr.f32.mxu0 0.0
        %1715 = vmatmul.mubr.f32.gmra.mrb[0].mxu0 %v1575
        %v1716 = vpop.f32.mrb[0].mxu0
        %v1717 = vadd.f32 0.0, %v1716
        %v1718 = vpop.f32.mrb[0].mxu0
        %1719 = vmatprep.mubr.f32.mxu0 0.0
        %1720 = vmatmul.mubr.f32.gmra.mrb[0].mxu0 %v1578
        %v1721 = vpop.f32.mrb[0].mxu0
        %v1722 = vadd.f32 0.0, %v1721
        %v1723 = vpop.f32.mrb[0].mxu0
        %1724 = vdwg.mxu0
        %1725 = vxpose.xlu0.b32.start [1/16] %v1647, 128
        %1726 = vxpose.xlu0.b32.cont [2/16] %v1652, 128
        %1727 = vxpose.xlu0.b32.cont [3/16] %v1657, 128
        %1728 = vxpose.xlu0.b32.cont [4/16] %v1662, 128
        %1729 = vxpose.xlu0.b32.cont [5/16] %v1667, 128
        %1730 = vxpose.xlu0.b32.cont [6/16] %v1672, 128
        %1731 = vxpose.xlu0.b32.cont [7/16] %v1677, 128
        %1732 = vxpose.xlu0.b32.cont [8/16] %v1682, 128
        %1733 = vxpose.xlu0.b32.cont [9/16] %v1687, 128
        %1734 = vxpose.xlu0.b32.cont [10/16] %v1692, 128
        %1735 = vxpose.xlu0.b32.cont [11/16] %v1697, 128
        %1736 = vxpose.xlu0.b32.cont [12/16] %v1702, 128
        %1737 = vxpose.xlu0.b32.cont [13/16] %v1707, 128
        %1738 = vxpose.xlu0.b32.cont [14/16] %v1712, 128
        %1739 = vxpose.xlu0.b32.cont [15/16] %v1717, 128
        %1740 = vxpose.xlu0.b32.end [16/16] %v1722, 128
        %v1741 = vpop.trf.xlu0
        %v1742 = vpop.trf.xlu0
        %v1743 = vpop.trf.xlu0
        %v1744 = vpop.trf.xlu0
        %v1745 = vpop.trf.xlu0
        %v1746 = vpop.trf.xlu0
        %v1747 = vpop.trf.xlu0
        %v1748 = vpop.trf.xlu0
        %v1749 = vpop.trf.xlu0
        %v1750 = vpop.trf.xlu0
        %v1751 = vpop.trf.xlu0
        %v1752 = vpop.trf.xlu0
        %v1753 = vpop.trf.xlu0
        %v1754 = vpop.trf.xlu0
        %v1755 = vpop.trf.xlu0
        %v1756 = vpop.trf.xlu0
        %1758 = vset.pattern.permute.xlu0 0
        %1759 = vperm.xlu0 %1758, %v1452
        %v1760 = vpop.permute.xlu0 %1759
        %1763 = vset.pattern.permute.xlu0 0
        %1764 = vperm.xlu0 %1763, %v1457
        %v1765 = vpop.permute.xlu0 %1764
        %1768 = vset.pattern.permute.xlu0 0
        %1769 = vperm.xlu0 %1768, %v1462
        %v1770 = vpop.permute.xlu0 %1769
        %1773 = vset.pattern.permute.xlu0 0
        %1774 = vperm.xlu0 %1773, %v1467
        %v1775 = vpop.permute.xlu0 %1774
        %1778 = vset.pattern.permute.xlu0 0
        %1779 = vperm.xlu0 %1778, %v1472
        %v1780 = vpop.permute.xlu0 %1779
        %1783 = vset.pattern.permute.xlu0 0
        %1784 = vperm.xlu0 %1783, %v1477
        %v1785 = vpop.permute.xlu0 %1784
        %1788 = vset.pattern.permute.xlu0 0
        %1789 = vperm.xlu0 %1788, %v1482
        %v1790 = vpop.permute.xlu0 %1789
        %1793 = vset.pattern.permute.xlu0 0
        %1794 = vperm.xlu0 %1793, %v1487
        %v1795 = vpop.permute.xlu0 %1794
        %1798 = vset.pattern.permute.xlu0 0
        %1799 = vperm.xlu0 %1798, %v1492
        %v1800 = vpop.permute.xlu0 %1799
        %1803 = vset.pattern.permute.xlu0 0
        %1804 = vperm.xlu0 %1803, %v1497
        %v1805 = vpop.permute.xlu0 %1804
        %1808 = vset.pattern.permute.xlu0 0
        %1809 = vperm.xlu0 %1808, %v1502
        %v1810 = vpop.permute.xlu0 %1809
        %1813 = vset.pattern.permute.xlu0 0
        %1814 = vperm.xlu0 %1813, %v1507
        %v1815 = vpop.permute.xlu0 %1814
        %1818 = vset.pattern.permute.xlu0 0
        %1819 = vperm.xlu0 %1818, %v1512
        %v1820 = vpop.permute.xlu0 %1819
        %1823 = vset.pattern.permute.xlu0 0
        %1824 = vperm.xlu0 %1823, %v1517
        %v1825 = vpop.permute.xlu0 %1824
        %1828 = vset.pattern.permute.xlu0 0
        %1829 = vperm.xlu0 %1828, %v1522
        %v1830 = vpop.permute.xlu0 %1829
        %1833 = vset.pattern.permute.xlu0 0
        %1834 = vperm.xlu0 %1833, %v1527
        %v1835 = vpop.permute.xlu0 %1834
        %v1837 = vlaneseq
        %v1838 = vshrl.u32 %v1837, 7
        %v1839 = vsub.s32 0, %v1838
        %v1840 = vrot.slane %v1741, %v1839
        %v1841 = vadd.f32 %v1760, %v1840
        %v1842 = vadd.f32 %v1765, %v1840
        %v1843 = vadd.f32 %v1770, %v1840
        %v1844 = vadd.f32 %v1775, %v1840
        %v1845 = vadd.f32 %v1780, %v1840
        %v1846 = vadd.f32 %v1785, %v1840
        %v1847 = vadd.f32 %v1790, %v1840
        %v1848 = vadd.f32 %v1795, %v1840
        %v1849 = vadd.f32 %v1800, %v1840
        %v1850 = vadd.f32 %v1805, %v1840
        %v1851 = vadd.f32 %v1810, %v1840
        %v1852 = vadd.f32 %v1815, %v1840
        %v1853 = vadd.f32 %v1820, %v1840
        %v1854 = vadd.f32 %v1825, %v1840
        %v1855 = vadd.f32 %v1830, %v1840
        %v1856 = vadd.f32 %v1835, %v1840
        %s1857 = sld [smem:[#allocation3]]
        %v1858 = vstv %s1857
        %v1859 = vmul.f32 %v1221, %v1858
        %v1860 = vmul.f32 %v1228, %v1858
        %v1861 = vmul.f32 %v1235, %v1858
        %v1862 = vmul.f32 %v1242, %v1858
        %v1863 = vmul.f32 %v1249, %v1858
        %v1864 = vmul.f32 %v1256, %v1858
        %v1865 = vmul.f32 %v1263, %v1858
        %v1866 = vmul.f32 %v1270, %v1858
        %v1867 = vmul.f32 %v1277, %v1858
        %v1868 = vmul.f32 %v1284, %v1858
        %v1869 = vmul.f32 %v1291, %v1858
        %v1870 = vmul.f32 %v1298, %v1858
        %v1871 = vmul.f32 %v1305, %v1858
        %v1872 = vmul.f32 %v1312, %v1858
        %v1873 = vmul.f32 %v1319, %v1858
        %v1874 = vmul.f32 %v1326, %v1858
        %v1875 = vadd.f32 %v1841, %v1859
        %v1876 = vadd.f32 %v1842, %v1860
        %v1877 = vadd.f32 %v1843, %v1861
        %v1878 = vadd.f32 %v1844, %v1862
        %v1879 = vadd.f32 %v1845, %v1863
        %v1880 = vadd.f32 %v1846, %v1864
        %v1881 = vadd.f32 %v1847, %v1865
        %v1882 = vadd.f32 %v1848, %v1866
        %v1883 = vadd.f32 %v1849, %v1867
        %v1884 = vadd.f32 %v1850, %v1868
        %v1885 = vadd.f32 %v1851, %v1869
        %v1886 = vadd.f32 %v1852, %v1870
        %v1887 = vadd.f32 %v1853, %v1871
        %v1888 = vadd.f32 %v1854, %v1872
        %v1889 = vadd.f32 %v1855, %v1873
        %v1890 = vadd.f32 %v1856, %v1874
        %v1891 = vmax.f32 %v1875, 0.0
        %v1892 = vmax.f32 %v1876, 0.0
        %v1893 = vmax.f32 %v1877, 0.0
        %v1894 = vmax.f32 %v1878, 0.0
        %v1895 = vmax.f32 %v1879, 0.0
        %v1896 = vmax.f32 %v1880, 0.0
        %v1897 = vmax.f32 %v1881, 0.0
        %v1898 = vmax.f32 %v1882, 0.0
        %v1899 = vmax.f32 %v1883, 0.0
        %v1900 = vmax.f32 %v1884, 0.0
        %v1901 = vmax.f32 %v1885, 0.0
        %v1902 = vmax.f32 %v1886, 0.0
        %v1903 = vmax.f32 %v1887, 0.0
        %v1904 = vmax.f32 %v1888, 0.0
        %v1905 = vmax.f32 %v1889, 0.0
        %v1906 = vmax.f32 %v1890, 0.0
        %s1907 = sld [smem:[#allocation5]]
        %v1908 = vstv %s1907
        %v1909 = vmul.f32 %v1891, %v1908
        %v1910 = vmul.f32 %v1892, %v1908
        %v1911 = vmul.f32 %v1893, %v1908
        %v1912 = vmul.f32 %v1894, %v1908
        %v1913 = vmul.f32 %v1895, %v1908
        %v1914 = vmul.f32 %v1896, %v1908
        %v1915 = vmul.f32 %v1897, %v1908
        %v1916 = vmul.f32 %v1898, %v1908
        %v1917 = vmul.f32 %v1899, %v1908
        %v1918 = vmul.f32 %v1900, %v1908
        %v1919 = vmul.f32 %v1901, %v1908
        %v1920 = vmul.f32 %v1902, %v1908
        %v1921 = vmul.f32 %v1903, %v1908
        %v1922 = vmul.f32 %v1904, %v1908
        %v1923 = vmul.f32 %v1905, %v1908
        %v1924 = vmul.f32 %v1906, %v1908
        %v1925 = vadd.f32 %v1909, 0.0
        %v1926 = vadd.f32 %v1910, 0.0
        %v1927 = vadd.f32 %v1911, 0.0
        %v1928 = vadd.f32 %v1912, 0.0
        %v1929 = vadd.f32 %v1913, 0.0
        %v1930 = vadd.f32 %v1914, 0.0
        %v1931 = vadd.f32 %v1915, 0.0
        %v1932 = vadd.f32 %v1916, 0.0
        %v1933 = vadd.f32 %v1917, 0.0
        %v1934 = vadd.f32 %v1918, 0.0
        %v1935 = vadd.f32 %v1919, 0.0
        %v1936 = vadd.f32 %v1920, 0.0
        %v1937 = vadd.f32 %v1921, 0.0
        %v1938 = vadd.f32 %v1922, 0.0
        %v1939 = vadd.f32 %v1923, 0.0
        %v1940 = vadd.f32 %v1924, 0.0
        %1941 = vset.pattern.permute.xlu0 1
        %1942 = vperm.xlu0 %1941, %v1452
        %v1943 = vpop.permute.xlu0 %1942
        %1945 = vset.pattern.permute.xlu0 1
        %1946 = vperm.xlu0 %1945, %v1457
        %v1947 = vpop.permute.xlu0 %1946
        %1949 = vset.pattern.permute.xlu0 1
        %1950 = vperm.xlu0 %1949, %v1462
        %v1951 = vpop.permute.xlu0 %1950
        %1953 = vset.pattern.permute.xlu0 1
        %1954 = vperm.xlu0 %1953, %v1467
        %v1955 = vpop.permute.xlu0 %1954
        %1957 = vset.pattern.permute.xlu0 1
        %1958 = vperm.xlu0 %1957, %v1472
        %v1959 = vpop.permute.xlu0 %1958
        %1961 = vset.pattern.permute.xlu0 1
        %1962 = vperm.xlu0 %1961, %v1477
        %v1963 = vpop.permute.xlu0 %1962
        %1965 = vset.pattern.permute.xlu0 1
        %1966 = vperm.xlu0 %1965, %v1482
        %v1967 = vpop.permute.xlu0 %1966
        %1969 = vset.pattern.permute.xlu0 1
        %1970 = vperm.xlu0 %1969, %v1487
        %v1971 = vpop.permute.xlu0 %1970
        %1973 = vset.pattern.permute.xlu0 1
        %1974 = vperm.xlu0 %1973, %v1492
        %v1975 = vpop.permute.xlu0 %1974
        %1977 = vset.pattern.permute.xlu0 1
        %1978 = vperm.xlu0 %1977, %v1497
        %v1979 = vpop.permute.xlu0 %1978
        %1981 = vset.pattern.permute.xlu0 1
        %1982 = vperm.xlu0 %1981, %v1502
        %v1983 = vpop.permute.xlu0 %1982
        %1985 = vset.pattern.permute.xlu0 1
        %1986 = vperm.xlu0 %1985, %v1507
        %v1987 = vpop.permute.xlu0 %1986
        %1989 = vset.pattern.permute.xlu0 1
        %1990 = vperm.xlu0 %1989, %v1512
        %v1991 = vpop.permute.xlu0 %1990
        %1993 = vset.pattern.permute.xlu0 1
        %1994 = vperm.xlu0 %1993, %v1517
        %v1995 = vpop.permute.xlu0 %1994
        %1997 = vset.pattern.permute.xlu0 1
        %1998 = vperm.xlu0 %1997, %v1522
        %v1999 = vpop.permute.xlu0 %1998
        %2001 = vset.pattern.permute.xlu0 1
        %2002 = vperm.xlu0 %2001, %v1527
        %v2003 = vpop.permute.xlu0 %2002
        %v2005 = vlaneseq
        %v2006 = vshrl.u32 %v2005, 7
        %v2007 = vsub.s32 1, %v2006
        %v2008 = vrot.slane %v1741, %v2007
        %v2009 = vadd.f32 %v1943, %v2008
        %v2010 = vadd.f32 %v1947, %v2008
        %v2011 = vadd.f32 %v1951, %v2008
        %v2012 = vadd.f32 %v1955, %v2008
        %v2013 = vadd.f32 %v1959, %v2008
        %v2014 = vadd.f32 %v1963, %v2008
        %v2015 = vadd.f32 %v1967, %v2008
        %v2016 = vadd.f32 %v1971, %v2008
        %v2017 = vadd.f32 %v1975, %v2008
        %v2018 = vadd.f32 %v1979, %v2008
        %v2019 = vadd.f32 %v1983, %v2008
        %v2020 = vadd.f32 %v1987, %v2008
        %v2021 = vadd.f32 %v1991, %v2008
        %v2022 = vadd.f32 %v1995, %v2008
        %v2023 = vadd.f32 %v1999, %v2008
        %v2024 = vadd.f32 %v2003, %v2008
        %s2025 = sld [smem:[#allocation3 + $0x1]]
        %v2026 = vstv %s2025
        %v2027 = vmul.f32 %v1221, %v2026
        %v2028 = vmul.f32 %v1228, %v2026
        %v2029 = vmul.f32 %v1235, %v2026
        %v2030 = vmul.f32 %v1242, %v2026
        %v2031 = vmul.f32 %v1249, %v2026
        %v2032 = vmul.f32 %v1256, %v2026
        %v2033 = vmul.f32 %v1263, %v2026
        %v2034 = vmul.f32 %v1270, %v2026
        %v2035 = vmul.f32 %v1277, %v2026
        %v2036 = vmul.f32 %v1284, %v2026
        %v2037 = vmul.f32 %v1291, %v2026
        %v2038 = vmul.f32 %v1298, %v2026
        %v2039 = vmul.f32 %v1305, %v2026
        %v2040 = vmul.f32 %v1312, %v2026
        %v2041 = vmul.f32 %v1319, %v2026
        %v2042 = vmul.f32 %v1326, %v2026
        %v2043 = vadd.f32 %v2009, %v2027
        %v2044 = vadd.f32 %v2010, %v2028
        %v2045 = vadd.f32 %v2011, %v2029
        %v2046 = vadd.f32 %v2012, %v2030
        %v2047 = vadd.f32 %v2013, %v2031
        %v2048 = vadd.f32 %v2014, %v2032
        %v2049 = vadd.f32 %v2015, %v2033
        %v2050 = vadd.f32 %v2016, %v2034
        %v2051 = vadd.f32 %v2017, %v2035
        %v2052 = vadd.f32 %v2018, %v2036
        %v2053 = vadd.f32 %v2019, %v2037
        %v2054 = vadd.f32 %v2020, %v2038
        %v2055 = vadd.f32 %v2021, %v2039
        %v2056 = vadd.f32 %v2022, %v2040
        %v2057 = vadd.f32 %v2023, %v2041
        %v2058 = vadd.f32 %v2024, %v2042
        %v2059 = vmax.f32 %v2043, 0.0
        %v2060 = vmax.f32 %v2044, 0.0
        %v2061 = vmax.f32 %v2045, 0.0
        %v2062 = vmax.f32 %v2046, 0.0
        %v2063 = vmax.f32 %v2047, 0.0
        %v2064 = vmax.f32 %v2048, 0.0
        %v2065 = vmax.f32 %v2049, 0.0
        %v2066 = vmax.f32 %v2050, 0.0
        %v2067 = vmax.f32 %v2051, 0.0
        %v2068 = vmax.f32 %v2052, 0.0
        %v2069 = vmax.f32 %v2053, 0.0
        %v2070 = vmax.f32 %v2054, 0.0
        %v2071 = vmax.f32 %v2055, 0.0
        %v2072 = vmax.f32 %v2056, 0.0
        %v2073 = vmax.f32 %v2057, 0.0
        %v2074 = vmax.f32 %v2058, 0.0
        %s2075 = sld [smem:[#allocation5 + $0x1]]
        %v2076 = vstv %s2075
        %v2077 = vmul.f32 %v2059, %v2076
        %v2078 = vmul.f32 %v2060, %v2076
        %v2079 = vmul.f32 %v2061, %v2076
        %v2080 = vmul.f32 %v2062, %v2076
        %v2081 = vmul.f32 %v2063, %v2076
        %v2082 = vmul.f32 %v2064, %v2076
        %v2083 = vmul.f32 %v2065, %v2076
        %v2084 = vmul.f32 %v2066, %v2076
        %v2085 = vmul.f32 %v2067, %v2076
        %v2086 = vmul.f32 %v2068, %v2076
        %v2087 = vmul.f32 %v2069, %v2076
        %v2088 = vmul.f32 %v2070, %v2076
        %v2089 = vmul.f32 %v2071, %v2076
        %v2090 = vmul.f32 %v2072, %v2076
        %v2091 = vmul.f32 %v2073, %v2076
        %v2092 = vmul.f32 %v2074, %v2076
        %v2093 = vadd.f32 %v1925, %v2077
        %v2094 = vadd.f32 %v1926, %v2078
        %v2095 = vadd.f32 %v1927, %v2079
        %v2096 = vadd.f32 %v1928, %v2080
        %v2097 = vadd.f32 %v1929, %v2081
        %v2098 = vadd.f32 %v1930, %v2082
        %v2099 = vadd.f32 %v1931, %v2083
        %v2100 = vadd.f32 %v1932, %v2084
        %v2101 = vadd.f32 %v1933, %v2085
        %v2102 = vadd.f32 %v1934, %v2086
        %v2103 = vadd.f32 %v1935, %v2087
        %v2104 = vadd.f32 %v1936, %v2088
        %v2105 = vadd.f32 %v1937, %v2089
        %v2106 = vadd.f32 %v1938, %v2090
        %v2107 = vadd.f32 %v1939, %v2091
        %v2108 = vadd.f32 %v1940, %v2092
        %2109 = vset.pattern.permute.xlu0 2
        %2110 = vperm.xlu0 %2109, %v1452
        %v2111 = vpop.permute.xlu0 %2110
        %2113 = vset.pattern.permute.xlu0 2
        %2114 = vperm.xlu0 %2113, %v1457
        %v2115 = vpop.permute.xlu0 %2114
        %2117 = vset.pattern.permute.xlu0 2
        %2118 = vperm.xlu0 %2117, %v1462
        %v2119 = vpop.permute.xlu0 %2118
        %2121 = vset.pattern.permute.xlu0 2
        %2122 = vperm.xlu0 %2121, %v1467
        %v2123 = vpop.permute.xlu0 %2122
        %2125 = vset.pattern.permute.xlu0 2
        %2126 = vperm.xlu0 %2125, %v1472
        %v2127 = vpop.permute.xlu0 %2126
        %2129 = vset.pattern.permute.xlu0 2
        %2130 = vperm.xlu0 %2129, %v1477
        %v2131 = vpop.permute.xlu0 %2130
        %2133 = vset.pattern.permute.xlu0 2
        %2134 = vperm.xlu0 %2133, %v1482
        %v2135 = vpop.permute.xlu0 %2134
        %2137 = vset.pattern.permute.xlu0 2
        %2138 = vperm.xlu0 %2137, %v1487
        %v2139 = vpop.permute.xlu0 %2138
        %2141 = vset.pattern.permute.xlu0 2
        %2142 = vperm.xlu0 %2141, %v1492
        %v2143 = vpop.permute.xlu0 %2142
        %2145 = vset.pattern.permute.xlu0 2
        %2146 = vperm.xlu0 %2145, %v1497
        %v2147 = vpop.permute.xlu0 %2146
        %2149 = vset.pattern.permute.xlu0 2
        %2150 = vperm.xlu0 %2149, %v1502
        %v2151 = vpop.permute.xlu0 %2150
        %2153 = vset.pattern.permute.xlu0 2
        %2154 = vperm.xlu0 %2153, %v1507
        %v2155 = vpop.permute.xlu0 %2154
        %2157 = vset.pattern.permute.xlu0 2
        %2158 = vperm.xlu0 %2157, %v1512
        %v2159 = vpop.permute.xlu0 %2158
        %2161 = vset.pattern.permute.xlu0 2
        %2162 = vperm.xlu0 %2161, %v1517
        %v2163 = vpop.permute.xlu0 %2162
        %2165 = vset.pattern.permute.xlu0 2
        %2166 = vperm.xlu0 %2165, %v1522
        %v2167 = vpop.permute.xlu0 %2166
        %2169 = vset.pattern.permute.xlu0 2
        %2170 = vperm.xlu0 %2169, %v1527
        %v2171 = vpop.permute.xlu0 %2170
        %v2173 = vlaneseq
        %v2174 = vshrl.u32 %v2173, 7
        %v2175 = vsub.s32 2, %v2174
        %v2176 = vrot.slane %v1741, %v2175
        %v2177 = vadd.f32 %v2111, %v2176
        %v2178 = vadd.f32 %v2115, %v2176
        %v2179 = vadd.f32 %v2119, %v2176
        %v2180 = vadd.f32 %v2123, %v2176
        %v2181 = vadd.f32 %v2127, %v2176
        %v2182 = vadd.f32 %v2131, %v2176
        %v2183 = vadd.f32 %v2135, %v2176
        %v2184 = vadd.f32 %v2139, %v2176
        %v2185 = vadd.f32 %v2143, %v2176
        %v2186 = vadd.f32 %v2147, %v2176
        %v2187 = vadd.f32 %v2151, %v2176
        %v2188 = vadd.f32 %v2155, %v2176
        %v2189 = vadd.f32 %v2159, %v2176
        %v2190 = vadd.f32 %v2163, %v2176
        %v2191 = vadd.f32 %v2167, %v2176
        %v2192 = vadd.f32 %v2171, %v2176
        %s2193 = sld [smem:[#allocation3 + $0x2]]
        %v2194 = vstv %s2193
        %v2195 = vmul.f32 %v1221, %v2194
        %v2196 = vmul.f32 %v1228, %v2194
        %v2197 = vmul.f32 %v1235, %v2194
        %v2198 = vmul.f32 %v1242, %v2194
        %v2199 = vmul.f32 %v1249, %v2194
        %v2200 = vmul.f32 %v1256, %v2194
        %v2201 = vmul.f32 %v1263, %v2194
        %v2202 = vmul.f32 %v1270, %v2194
        %v2203 = vmul.f32 %v1277, %v2194
        %v2204 = vmul.f32 %v1284, %v2194
        %v2205 = vmul.f32 %v1291, %v2194
        %v2206 = vmul.f32 %v1298, %v2194
        %v2207 = vmul.f32 %v1305, %v2194
        %v2208 = vmul.f32 %v1312, %v2194
        %v2209 = vmul.f32 %v1319, %v2194
        %v2210 = vmul.f32 %v1326, %v2194
        %v2211 = vadd.f32 %v2177, %v2195
        %v2212 = vadd.f32 %v2178, %v2196
        %v2213 = vadd.f32 %v2179, %v2197
        %v2214 = vadd.f32 %v2180, %v2198
        %v2215 = vadd.f32 %v2181, %v2199
        %v2216 = vadd.f32 %v2182, %v2200
        %v2217 = vadd.f32 %v2183, %v2201
        %v2218 = vadd.f32 %v2184, %v2202
        %v2219 = vadd.f32 %v2185, %v2203
        %v2220 = vadd.f32 %v2186, %v2204
        %v2221 = vadd.f32 %v2187, %v2205
        %v2222 = vadd.f32 %v2188, %v2206
        %v2223 = vadd.f32 %v2189, %v2207
        %v2224 = vadd.f32 %v2190, %v2208
        %v2225 = vadd.f32 %v2191, %v2209
        %v2226 = vadd.f32 %v2192, %v2210
        %v2227 = vmax.f32 %v2211, 0.0
        %v2228 = vmax.f32 %v2212, 0.0
        %v2229 = vmax.f32 %v2213, 0.0
        %v2230 = vmax.f32 %v2214, 0.0
        %v2231 = vmax.f32 %v2215, 0.0
        %v2232 = vmax.f32 %v2216, 0.0
        %v2233 = vmax.f32 %v2217, 0.0
        %v2234 = vmax.f32 %v2218, 0.0
        %v2235 = vmax.f32 %v2219, 0.0
        %v2236 = vmax.f32 %v2220, 0.0
        %v2237 = vmax.f32 %v2221, 0.0
        %v2238 = vmax.f32 %v2222, 0.0
        %v2239 = vmax.f32 %v2223, 0.0
        %v2240 = vmax.f32 %v2224, 0.0
        %v2241 = vmax.f32 %v2225, 0.0
        %v2242 = vmax.f32 %v2226, 0.0
        %s2243 = sld [smem:[#allocation5 + $0x2]]
        %v2244 = vstv %s2243
        %v2245 = vmul.f32 %v2227, %v2244
        %v2246 = vmul.f32 %v2228, %v2244
        %v2247 = vmul.f32 %v2229, %v2244
        %v2248 = vmul.f32 %v2230, %v2244
        %v2249 = vmul.f32 %v2231, %v2244
        %v2250 = vmul.f32 %v2232, %v2244
        %v2251 = vmul.f32 %v2233, %v2244
        %v2252 = vmul.f32 %v2234, %v2244
        %v2253 = vmul.f32 %v2235, %v2244
        %v2254 = vmul.f32 %v2236, %v2244
        %v2255 = vmul.f32 %v2237, %v2244
        %v2256 = vmul.f32 %v2238, %v2244
        %v2257 = vmul.f32 %v2239, %v2244
        %v2258 = vmul.f32 %v2240, %v2244
        %v2259 = vmul.f32 %v2241, %v2244
        %v2260 = vmul.f32 %v2242, %v2244
        %v2261 = vadd.f32 %v2093, %v2245
        %v2262 = vadd.f32 %v2094, %v2246
        %v2263 = vadd.f32 %v2095, %v2247
        %v2264 = vadd.f32 %v2096, %v2248
        %v2265 = vadd.f32 %v2097, %v2249
        %v2266 = vadd.f32 %v2098, %v2250
        %v2267 = vadd.f32 %v2099, %v2251
        %v2268 = vadd.f32 %v2100, %v2252
        %v2269 = vadd.f32 %v2101, %v2253
        %v2270 = vadd.f32 %v2102, %v2254
        %v2271 = vadd.f32 %v2103, %v2255
        %v2272 = vadd.f32 %v2104, %v2256
        %v2273 = vadd.f32 %v2105, %v2257
        %v2274 = vadd.f32 %v2106, %v2258
        %v2275 = vadd.f32 %v2107, %v2259
        %v2276 = vadd.f32 %v2108, %v2260
        %2277 = vset.pattern.permute.xlu0 3
        %2278 = vperm.xlu0 %2277, %v1452
        %v2279 = vpop.permute.xlu0 %2278
        %2281 = vset.pattern.permute.xlu0 3
        %2282 = vperm.xlu0 %2281, %v1457
        %v2283 = vpop.permute.xlu0 %2282
        %2285 = vset.pattern.permute.xlu0 3
        %2286 = vperm.xlu0 %2285, %v1462
        %v2287 = vpop.permute.xlu0 %2286
        %2289 = vset.pattern.permute.xlu0 3
        %2290 = vperm.xlu0 %2289, %v1467
        %v2291 = vpop.permute.xlu0 %2290
        %2293 = vset.pattern.permute.xlu0 3
        %2294 = vperm.xlu0 %2293, %v1472
        %v2295 = vpop.permute.xlu0 %2294
        %2297 = vset.pattern.permute.xlu0 3
        %2298 = vperm.xlu0 %2297, %v1477
        %v2299 = vpop.permute.xlu0 %2298
        %2301 = vset.pattern.permute.xlu0 3
        %2302 = vperm.xlu0 %2301, %v1482
        %v2303 = vpop.permute.xlu0 %2302
        %2305 = vset.pattern.permute.xlu0 3
        %2306 = vperm.xlu0 %2305, %v1487
        %v2307 = vpop.permute.xlu0 %2306
        %2309 = vset.pattern.permute.xlu0 3
        %2310 = vperm.xlu0 %2309, %v1492
        %v2311 = vpop.permute.xlu0 %2310
        %2313 = vset.pattern.permute.xlu0 3
        %2314 = vperm.xlu0 %2313, %v1497
        %v2315 = vpop.permute.xlu0 %2314
        %2317 = vset.pattern.permute.xlu0 3
        %2318 = vperm.xlu0 %2317, %v1502
        %v2319 = vpop.permute.xlu0 %2318
        %2321 = vset.pattern.permute.xlu0 3
        %2322 = vperm.xlu0 %2321, %v1507
        %v2323 = vpop.permute.xlu0 %2322
        %2325 = vset.pattern.permute.xlu0 3
        %2326 = vperm.xlu0 %2325, %v1512
        %v2327 = vpop.permute.xlu0 %2326
        %2329 = vset.pattern.permute.xlu0 3
        %2330 = vperm.xlu0 %2329, %v1517
        %v2331 = vpop.permute.xlu0 %2330
        %2333 = vset.pattern.permute.xlu0 3
        %2334 = vperm.xlu0 %2333, %v1522
        %v2335 = vpop.permute.xlu0 %2334
        %2337 = vset.pattern.permute.xlu0 3
        %2338 = vperm.xlu0 %2337, %v1527
        %v2339 = vpop.permute.xlu0 %2338
        %v2341 = vlaneseq
        %v2342 = vshrl.u32 %v2341, 7
        %v2343 = vsub.s32 3, %v2342
        %v2344 = vrot.slane %v1741, %v2343
        %v2345 = vadd.f32 %v2279, %v2344
        %v2346 = vadd.f32 %v2283, %v2344
        %v2347 = vadd.f32 %v2287, %v2344
        %v2348 = vadd.f32 %v2291, %v2344
        %v2349 = vadd.f32 %v2295, %v2344
        %v2350 = vadd.f32 %v2299, %v2344
        %v2351 = vadd.f32 %v2303, %v2344
        %v2352 = vadd.f32 %v2307, %v2344
        %v2353 = vadd.f32 %v2311, %v2344
        %v2354 = vadd.f32 %v2315, %v2344
        %v2355 = vadd.f32 %v2319, %v2344
        %v2356 = vadd.f32 %v2323, %v2344
        %v2357 = vadd.f32 %v2327, %v2344
        %v2358 = vadd.f32 %v2331, %v2344
        %v2359 = vadd.f32 %v2335, %v2344
        %v2360 = vadd.f32 %v2339, %v2344
        %s2361 = sld [smem:[#allocation3 + $0x3]]
        %v2362 = vstv %s2361
        %v2363 = vmul.f32 %v1221, %v2362
        %v2364 = vmul.f32 %v1228, %v2362
        %v2365 = vmul.f32 %v1235, %v2362
        %v2366 = vmul.f32 %v1242, %v2362
        %v2367 = vmul.f32 %v1249, %v2362
        %v2368 = vmul.f32 %v1256, %v2362
        %v2369 = vmul.f32 %v1263, %v2362
        %v2370 = vmul.f32 %v1270, %v2362
        %v2371 = vmul.f32 %v1277, %v2362
        %v2372 = vmul.f32 %v1284, %v2362
        %v2373 = vmul.f32 %v1291, %v2362
        %v2374 = vmul.f32 %v1298, %v2362
        %v2375 = vmul.f32 %v1305, %v2362
        %v2376 = vmul.f32 %v1312, %v2362
        %v2377 = vmul.f32 %v1319, %v2362
        %v2378 = vmul.f32 %v1326, %v2362
        %v2379 = vadd.f32 %v2345, %v2363
        %v2380 = vadd.f32 %v2346, %v2364
        %v2381 = vadd.f32 %v2347, %v2365
        %v2382 = vadd.f32 %v2348, %v2366
        %v2383 = vadd.f32 %v2349, %v2367
        %v2384 = vadd.f32 %v2350, %v2368
        %v2385 = vadd.f32 %v2351, %v2369
        %v2386 = vadd.f32 %v2352, %v2370
        %v2387 = vadd.f32 %v2353, %v2371
        %v2388 = vadd.f32 %v2354, %v2372
        %v2389 = vadd.f32 %v2355, %v2373
        %v2390 = vadd.f32 %v2356, %v2374
        %v2391 = vadd.f32 %v2357, %v2375
        %v2392 = vadd.f32 %v2358, %v2376
        %v2393 = vadd.f32 %v2359, %v2377
        %v2394 = vadd.f32 %v2360, %v2378
        %v2395 = vmax.f32 %v2379, 0.0
        %v2396 = vmax.f32 %v2380, 0.0
        %v2397 = vmax.f32 %v2381, 0.0
        %v2398 = vmax.f32 %v2382, 0.0
        %v2399 = vmax.f32 %v2383, 0.0
        %v2400 = vmax.f32 %v2384, 0.0
        %v2401 = vmax.f32 %v2385, 0.0
        %v2402 = vmax.f32 %v2386, 0.0
        %v2403 = vmax.f32 %v2387, 0.0
        %v2404 = vmax.f32 %v2388, 0.0
        %v2405 = vmax.f32 %v2389, 0.0
        %v2406 = vmax.f32 %v2390, 0.0
        %v2407 = vmax.f32 %v2391, 0.0
        %v2408 = vmax.f32 %v2392, 0.0
        %v2409 = vmax.f32 %v2393, 0.0
        %v2410 = vmax.f32 %v2394, 0.0
        %s2411 = sld [smem:[#allocation5 + $0x3]]
        %v2412 = vstv %s2411
        %v2413 = vmul.f32 %v2395, %v2412
        %v2414 = vmul.f32 %v2396, %v2412
        %v2415 = vmul.f32 %v2397, %v2412
        %v2416 = vmul.f32 %v2398, %v2412
        %v2417 = vmul.f32 %v2399, %v2412
        %v2418 = vmul.f32 %v2400, %v2412
        %v2419 = vmul.f32 %v2401, %v2412
        %v2420 = vmul.f32 %v2402, %v2412
        %v2421 = vmul.f32 %v2403, %v2412
        %v2422 = vmul.f32 %v2404, %v2412
        %v2423 = vmul.f32 %v2405, %v2412
        %v2424 = vmul.f32 %v2406, %v2412
        %v2425 = vmul.f32 %v2407, %v2412
        %v2426 = vmul.f32 %v2408, %v2412
        %v2427 = vmul.f32 %v2409, %v2412
        %v2428 = vmul.f32 %v2410, %v2412
        %v2429 = vadd.f32 %v2261, %v2413
        %v2430 = vadd.f32 %v2262, %v2414
        %v2431 = vadd.f32 %v2263, %v2415
        %v2432 = vadd.f32 %v2264, %v2416
        %v2433 = vadd.f32 %v2265, %v2417
        %v2434 = vadd.f32 %v2266, %v2418
        %v2435 = vadd.f32 %v2267, %v2419
        %v2436 = vadd.f32 %v2268, %v2420
        %v2437 = vadd.f32 %v2269, %v2421
        %v2438 = vadd.f32 %v2270, %v2422
        %v2439 = vadd.f32 %v2271, %v2423
        %v2440 = vadd.f32 %v2272, %v2424
        %v2441 = vadd.f32 %v2273, %v2425
        %v2442 = vadd.f32 %v2274, %v2426
        %v2443 = vadd.f32 %v2275, %v2427
        %v2444 = vadd.f32 %v2276, %v2428
        %2445 = vset.pattern.permute.xlu0 4
        %2446 = vperm.xlu0 %2445, %v1452
        %v2447 = vpop.permute.xlu0 %2446
        %2449 = vset.pattern.permute.xlu0 4
        %2450 = vperm.xlu0 %2449, %v1457
        %v2451 = vpop.permute.xlu0 %2450
        %2453 = vset.pattern.permute.xlu0 4
        %2454 = vperm.xlu0 %2453, %v1462
        %v2455 = vpop.permute.xlu0 %2454
        %2457 = vset.pattern.permute.xlu0 4
        %2458 = vperm.xlu0 %2457, %v1467
        %v2459 = vpop.permute.xlu0 %2458
        %2461 = vset.pattern.permute.xlu0 4
        %2462 = vperm.xlu0 %2461, %v1472
        %v2463 = vpop.permute.xlu0 %2462
        %2465 = vset.pattern.permute.xlu0 4
        %2466 = vperm.xlu0 %2465, %v1477
        %v2467 = vpop.permute.xlu0 %2466
        %2469 = vset.pattern.permute.xlu0 4
        %2470 = vperm.xlu0 %2469, %v1482
        %v2471 = vpop.permute.xlu0 %2470
        %2473 = vset.pattern.permute.xlu0 4
        %2474 = vperm.xlu0 %2473, %v1487
        %v2475 = vpop.permute.xlu0 %2474
        %2477 = vset.pattern.permute.xlu0 4
        %2478 = vperm.xlu0 %2477, %v1492
        %v2479 = vpop.permute.xlu0 %2478
        %2481 = vset.pattern.permute.xlu0 4
        %2482 = vperm.xlu0 %2481, %v1497
        %v2483 = vpop.permute.xlu0 %2482
        %2485 = vset.pattern.permute.xlu0 4
        %2486 = vperm.xlu0 %2485, %v1502
        %v2487 = vpop.permute.xlu0 %2486
        %2489 = vset.pattern.permute.xlu0 4
        %2490 = vperm.xlu0 %2489, %v1507
        %v2491 = vpop.permute.xlu0 %2490
        %2493 = vset.pattern.permute.xlu0 4
        %2494 = vperm.xlu0 %2493, %v1512
        %v2495 = vpop.permute.xlu0 %2494
        %2497 = vset.pattern.permute.xlu0 4
        %2498 = vperm.xlu0 %2497, %v1517
        %v2499 = vpop.permute.xlu0 %2498
        %2501 = vset.pattern.permute.xlu0 4
        %2502 = vperm.xlu0 %2501, %v1522
        %v2503 = vpop.permute.xlu0 %2502
        %2505 = vset.pattern.permute.xlu0 4
        %2506 = vperm.xlu0 %2505, %v1527
        %v2507 = vpop.permute.xlu0 %2506
        %v2509 = vlaneseq
        %v2510 = vshrl.u32 %v2509, 7
        %v2511 = vsub.s32 4, %v2510
        %v2512 = vrot.slane %v1741, %v2511
        %v2513 = vadd.f32 %v2447, %v2512
        %v2514 = vadd.f32 %v2451, %v2512
        %v2515 = vadd.f32 %v2455, %v2512
        %v2516 = vadd.f32 %v2459, %v2512
        %v2517 = vadd.f32 %v2463, %v2512
        %v2518 = vadd.f32 %v2467, %v2512
        %v2519 = vadd.f32 %v2471, %v2512
        %v2520 = vadd.f32 %v2475, %v2512
        %v2521 = vadd.f32 %v2479, %v2512
        %v2522 = vadd.f32 %v2483, %v2512
        %v2523 = vadd.f32 %v2487, %v2512
        %v2524 = vadd.f32 %v2491, %v2512
        %v2525 = vadd.f32 %v2495, %v2512
        %v2526 = vadd.f32 %v2499, %v2512
        %v2527 = vadd.f32 %v2503, %v2512
        %v2528 = vadd.f32 %v2507, %v2512
        %s2529 = sld [smem:[#allocation3 + $0x4]]
        %v2530 = vstv %s2529
        %v2531 = vmul.f32 %v1221, %v2530
        %v2532 = vmul.f32 %v1228, %v2530
        %v2533 = vmul.f32 %v1235, %v2530
        %v2534 = vmul.f32 %v1242, %v2530
        %v2535 = vmul.f32 %v1249, %v2530
        %v2536 = vmul.f32 %v1256, %v2530
        %v2537 = vmul.f32 %v1263, %v2530
        %v2538 = vmul.f32 %v1270, %v2530
        %v2539 = vmul.f32 %v1277, %v2530
        %v2540 = vmul.f32 %v1284, %v2530
        %v2541 = vmul.f32 %v1291, %v2530
        %v2542 = vmul.f32 %v1298, %v2530
        %v2543 = vmul.f32 %v1305, %v2530
        %v2544 = vmul.f32 %v1312, %v2530
        %v2545 = vmul.f32 %v1319, %v2530
        %v2546 = vmul.f32 %v1326, %v2530
        %v2547 = vadd.f32 %v2513, %v2531
        %v2548 = vadd.f32 %v2514, %v2532
        %v2549 = vadd.f32 %v2515, %v2533
        %v2550 = vadd.f32 %v2516, %v2534
        %v2551 = vadd.f32 %v2517, %v2535
        %v2552 = vadd.f32 %v2518, %v2536
        %v2553 = vadd.f32 %v2519, %v2537
        %v2554 = vadd.f32 %v2520, %v2538
        %v2555 = vadd.f32 %v2521, %v2539
        %v2556 = vadd.f32 %v2522, %v2540
        %v2557 = vadd.f32 %v2523, %v2541
        %v2558 = vadd.f32 %v2524, %v2542
        %v2559 = vadd.f32 %v2525, %v2543
        %v2560 = vadd.f32 %v2526, %v2544
        %v2561 = vadd.f32 %v2527, %v2545
        %v2562 = vadd.f32 %v2528, %v2546
        %v2563 = vmax.f32 %v2547, 0.0
        %v2564 = vmax.f32 %v2548, 0.0
        %v2565 = vmax.f32 %v2549, 0.0
        %v2566 = vmax.f32 %v2550, 0.0
        %v2567 = vmax.f32 %v2551, 0.0
        %v2568 = vmax.f32 %v2552, 0.0
        %v2569 = vmax.f32 %v2553, 0.0
        %v2570 = vmax.f32 %v2554, 0.0
        %v2571 = vmax.f32 %v2555, 0.0
        %v2572 = vmax.f32 %v2556, 0.0
        %v2573 = vmax.f32 %v2557, 0.0
        %v2574 = vmax.f32 %v2558, 0.0
        %v2575 = vmax.f32 %v2559, 0.0
        %v2576 = vmax.f32 %v2560, 0.0
        %v2577 = vmax.f32 %v2561, 0.0
        %v2578 = vmax.f32 %v2562, 0.0
        %s2579 = sld [smem:[#allocation5 + $0x4]]
        %v2580 = vstv %s2579
        %v2581 = vmul.f32 %v2563, %v2580
        %v2582 = vmul.f32 %v2564, %v2580
        %v2583 = vmul.f32 %v2565, %v2580
        %v2584 = vmul.f32 %v2566, %v2580
        %v2585 = vmul.f32 %v2567, %v2580
        %v2586 = vmul.f32 %v2568, %v2580
        %v2587 = vmul.f32 %v2569, %v2580
        %v2588 = vmul.f32 %v2570, %v2580
        %v2589 = vmul.f32 %v2571, %v2580
        %v2590 = vmul.f32 %v2572, %v2580
        %v2591 = vmul.f32 %v2573, %v2580
        %v2592 = vmul.f32 %v2574, %v2580
        %v2593 = vmul.f32 %v2575, %v2580
        %v2594 = vmul.f32 %v2576, %v2580
        %v2595 = vmul.f32 %v2577, %v2580
        %v2596 = vmul.f32 %v2578, %v2580
        %v2597 = vadd.f32 %v2429, %v2581
        %v2598 = vadd.f32 %v2430, %v2582
        %v2599 = vadd.f32 %v2431, %v2583
        %v2600 = vadd.f32 %v2432, %v2584
        %v2601 = vadd.f32 %v2433, %v2585
        %v2602 = vadd.f32 %v2434, %v2586
        %v2603 = vadd.f32 %v2435, %v2587
        %v2604 = vadd.f32 %v2436, %v2588
        %v2605 = vadd.f32 %v2437, %v2589
        %v2606 = vadd.f32 %v2438, %v2590
        %v2607 = vadd.f32 %v2439, %v2591
        %v2608 = vadd.f32 %v2440, %v2592
        %v2609 = vadd.f32 %v2441, %v2593
        %v2610 = vadd.f32 %v2442, %v2594
        %v2611 = vadd.f32 %v2443, %v2595
        %v2612 = vadd.f32 %v2444, %v2596
        %2613 = vset.pattern.permute.xlu0 5
        %2614 = vperm.xlu0 %2613, %v1452
        %v2615 = vpop.permute.xlu0 %2614
        %2617 = vset.pattern.permute.xlu0 5
        %2618 = vperm.xlu0 %2617, %v1457
        %v2619 = vpop.permute.xlu0 %2618
        %2621 = vset.pattern.permute.xlu0 5
        %2622 = vperm.xlu0 %2621, %v1462
        %v2623 = vpop.permute.xlu0 %2622
        %2625 = vset.pattern.permute.xlu0 5
        %2626 = vperm.xlu0 %2625, %v1467
        %v2627 = vpop.permute.xlu0 %2626
        %2629 = vset.pattern.permute.xlu0 5
        %2630 = vperm.xlu0 %2629, %v1472
        %v2631 = vpop.permute.xlu0 %2630
        %2633 = vset.pattern.permute.xlu0 5
        %2634 = vperm.xlu0 %2633, %v1477
        %v2635 = vpop.permute.xlu0 %2634
        %2637 = vset.pattern.permute.xlu0 5
        %2638 = vperm.xlu0 %2637, %v1482
        %v2639 = vpop.permute.xlu0 %2638
        %2641 = vset.pattern.permute.xlu0 5
        %2642 = vperm.xlu0 %2641, %v1487
        %v2643 = vpop.permute.xlu0 %2642
        %2645 = vset.pattern.permute.xlu0 5
        %2646 = vperm.xlu0 %2645, %v1492
        %v2647 = vpop.permute.xlu0 %2646
        %2649 = vset.pattern.permute.xlu0 5
        %2650 = vperm.xlu0 %2649, %v1497
        %v2651 = vpop.permute.xlu0 %2650
        %2653 = vset.pattern.permute.xlu0 5
        %2654 = vperm.xlu0 %2653, %v1502
        %v2655 = vpop.permute.xlu0 %2654
        %2657 = vset.pattern.permute.xlu0 5
        %2658 = vperm.xlu0 %2657, %v1507
        %v2659 = vpop.permute.xlu0 %2658
        %2661 = vset.pattern.permute.xlu0 5
        %2662 = vperm.xlu0 %2661, %v1512
        %v2663 = vpop.permute.xlu0 %2662
        %2665 = vset.pattern.permute.xlu0 5
        %2666 = vperm.xlu0 %2665, %v1517
        %v2667 = vpop.permute.xlu0 %2666
        %2669 = vset.pattern.permute.xlu0 5
        %2670 = vperm.xlu0 %2669, %v1522
        %v2671 = vpop.permute.xlu0 %2670
        %2673 = vset.pattern.permute.xlu0 5
        %2674 = vperm.xlu0 %2673, %v1527
        %v2675 = vpop.permute.xlu0 %2674
        %v2677 = vlaneseq
        %v2678 = vshrl.u32 %v2677, 7
        %v2679 = vsub.s32 5, %v2678
        %v2680 = vrot.slane %v1741, %v2679
        %v2681 = vadd.f32 %v2615, %v2680
        %v2682 = vadd.f32 %v2619, %v2680
        %v2683 = vadd.f32 %v2623, %v2680
        %v2684 = vadd.f32 %v2627, %v2680
        %v2685 = vadd.f32 %v2631, %v2680
        %v2686 = vadd.f32 %v2635, %v2680
        %v2687 = vadd.f32 %v2639, %v2680
        %v2688 = vadd.f32 %v2643, %v2680
        %v2689 = vadd.f32 %v2647, %v2680
        %v2690 = vadd.f32 %v2651, %v2680
        %v2691 = vadd.f32 %v2655, %v2680
        %v2692 = vadd.f32 %v2659, %v2680
        %v2693 = vadd.f32 %v2663, %v2680
        %v2694 = vadd.f32 %v2667, %v2680
        %v2695 = vadd.f32 %v2671, %v2680
        %v2696 = vadd.f32 %v2675, %v2680
        %s2697 = sld [smem:[#allocation3 + $0x5]]
        %v2698 = vstv %s2697
        %v2699 = vmul.f32 %v1221, %v2698
        %v2700 = vmul.f32 %v1228, %v2698
        %v2701 = vmul.f32 %v1235, %v2698
        %v2702 = vmul.f32 %v1242, %v2698
        %v2703 = vmul.f32 %v1249, %v2698
        %v2704 = vmul.f32 %v1256, %v2698
        %v2705 = vmul.f32 %v1263, %v2698
        %v2706 = vmul.f32 %v1270, %v2698
        %v2707 = vmul.f32 %v1277, %v2698
        %v2708 = vmul.f32 %v1284, %v2698
        %v2709 = vmul.f32 %v1291, %v2698
        %v2710 = vmul.f32 %v1298, %v2698
        %v2711 = vmul.f32 %v1305, %v2698
        %v2712 = vmul.f32 %v1312, %v2698
        %v2713 = vmul.f32 %v1319, %v2698
        %v2714 = vmul.f32 %v1326, %v2698
        %v2715 = vadd.f32 %v2681, %v2699
        %v2716 = vadd.f32 %v2682, %v2700
        %v2717 = vadd.f32 %v2683, %v2701
        %v2718 = vadd.f32 %v2684, %v2702
        %v2719 = vadd.f32 %v2685, %v2703
        %v2720 = vadd.f32 %v2686, %v2704
        %v2721 = vadd.f32 %v2687, %v2705
        %v2722 = vadd.f32 %v2688, %v2706
        %v2723 = vadd.f32 %v2689, %v2707
        %v2724 = vadd.f32 %v2690, %v2708
        %v2725 = vadd.f32 %v2691, %v2709
        %v2726 = vadd.f32 %v2692, %v2710
        %v2727 = vadd.f32 %v2693, %v2711
        %v2728 = vadd.f32 %v2694, %v2712
        %v2729 = vadd.f32 %v2695, %v2713
        %v2730 = vadd.f32 %v2696, %v2714
        %v2731 = vmax.f32 %v2715, 0.0
        %v2732 = vmax.f32 %v2716, 0.0
        %v2733 = vmax.f32 %v2717, 0.0
        %v2734 = vmax.f32 %v2718, 0.0
        %v2735 = vmax.f32 %v2719, 0.0
        %v2736 = vmax.f32 %v2720, 0.0
        %v2737 = vmax.f32 %v2721, 0.0
        %v2738 = vmax.f32 %v2722, 0.0
        %v2739 = vmax.f32 %v2723, 0.0
        %v2740 = vmax.f32 %v2724, 0.0
        %v2741 = vmax.f32 %v2725, 0.0
        %v2742 = vmax.f32 %v2726, 0.0
        %v2743 = vmax.f32 %v2727, 0.0
        %v2744 = vmax.f32 %v2728, 0.0
        %v2745 = vmax.f32 %v2729, 0.0
        %v2746 = vmax.f32 %v2730, 0.0
        %s2747 = sld [smem:[#allocation5 + $0x5]]
        %v2748 = vstv %s2747
        %v2749 = vmul.f32 %v2731, %v2748
        %v2750 = vmul.f32 %v2732, %v2748
        %v2751 = vmul.f32 %v2733, %v2748
        %v2752 = vmul.f32 %v2734, %v2748
        %v2753 = vmul.f32 %v2735, %v2748
        %v2754 = vmul.f32 %v2736, %v2748
        %v2755 = vmul.f32 %v2737, %v2748
        %v2756 = vmul.f32 %v2738, %v2748
        %v2757 = vmul.f32 %v2739, %v2748
        %v2758 = vmul.f32 %v2740, %v2748
        %v2759 = vmul.f32 %v2741, %v2748
        %v2760 = vmul.f32 %v2742, %v2748
        %v2761 = vmul.f32 %v2743, %v2748
        %v2762 = vmul.f32 %v2744, %v2748
        %v2763 = vmul.f32 %v2745, %v2748
        %v2764 = vmul.f32 %v2746, %v2748
        %v2765 = vadd.f32 %v2597, %v2749
        %v2766 = vadd.f32 %v2598, %v2750
        %v2767 = vadd.f32 %v2599, %v2751
        %v2768 = vadd.f32 %v2600, %v2752
        %v2769 = vadd.f32 %v2601, %v2753
        %v2770 = vadd.f32 %v2602, %v2754
        %v2771 = vadd.f32 %v2603, %v2755
        %v2772 = vadd.f32 %v2604, %v2756
        %v2773 = vadd.f32 %v2605, %v2757
        %v2774 = vadd.f32 %v2606, %v2758
        %v2775 = vadd.f32 %v2607, %v2759
        %v2776 = vadd.f32 %v2608, %v2760
        %v2777 = vadd.f32 %v2609, %v2761
        %v2778 = vadd.f32 %v2610, %v2762
        %v2779 = vadd.f32 %v2611, %v2763
        %v2780 = vadd.f32 %v2612, %v2764
        %2781 = vset.pattern.permute.xlu0 6
        %2782 = vperm.xlu0 %2781, %v1452
        %v2783 = vpop.permute.xlu0 %2782
        %2785 = vset.pattern.permute.xlu0 6
        %2786 = vperm.xlu0 %2785, %v1457
        %v2787 = vpop.permute.xlu0 %2786
        %2789 = vset.pattern.permute.xlu0 6
        %2790 = vperm.xlu0 %2789, %v1462
        %v2791 = vpop.permute.xlu0 %2790
        %2793 = vset.pattern.permute.xlu0 6
        %2794 = vperm.xlu0 %2793, %v1467
        %v2795 = vpop.permute.xlu0 %2794
        %2797 = vset.pattern.permute.xlu0 6
        %2798 = vperm.xlu0 %2797, %v1472
        %v2799 = vpop.permute.xlu0 %2798
        %2801 = vset.pattern.permute.xlu0 6
        %2802 = vperm.xlu0 %2801, %v1477
        %v2803 = vpop.permute.xlu0 %2802
        %2805 = vset.pattern.permute.xlu0 6
        %2806 = vperm.xlu0 %2805, %v1482
        %v2807 = vpop.permute.xlu0 %2806
        %2809 = vset.pattern.permute.xlu0 6
        %2810 = vperm.xlu0 %2809, %v1487
        %v2811 = vpop.permute.xlu0 %2810
        %2813 = vset.pattern.permute.xlu0 6
        %2814 = vperm.xlu0 %2813, %v1492
        %v2815 = vpop.permute.xlu0 %2814
        %2817 = vset.pattern.permute.xlu0 6
        %2818 = vperm.xlu0 %2817, %v1497
        %v2819 = vpop.permute.xlu0 %2818
        %2821 = vset.pattern.permute.xlu0 6
        %2822 = vperm.xlu0 %2821, %v1502
        %v2823 = vpop.permute.xlu0 %2822
        %2825 = vset.pattern.permute.xlu0 6
        %2826 = vperm.xlu0 %2825, %v1507
        %v2827 = vpop.permute.xlu0 %2826
        %2829 = vset.pattern.permute.xlu0 6
        %2830 = vperm.xlu0 %2829, %v1512
        %v2831 = vpop.permute.xlu0 %2830
        %2833 = vset.pattern.permute.xlu0 6
        %2834 = vperm.xlu0 %2833, %v1517
        %v2835 = vpop.permute.xlu0 %2834
        %2837 = vset.pattern.permute.xlu0 6
        %2838 = vperm.xlu0 %2837, %v1522
        %v2839 = vpop.permute.xlu0 %2838
        %2841 = vset.pattern.permute.xlu0 6
        %2842 = vperm.xlu0 %2841, %v1527
        %v2843 = vpop.permute.xlu0 %2842
        %v2845 = vlaneseq
        %v2846 = vshrl.u32 %v2845, 7
        %v2847 = vsub.s32 6, %v2846
        %v2848 = vrot.slane %v1741, %v2847
        %v2849 = vadd.f32 %v2783, %v2848
        %v2850 = vadd.f32 %v2787, %v2848
        %v2851 = vadd.f32 %v2791, %v2848
        %v2852 = vadd.f32 %v2795, %v2848
        %v2853 = vadd.f32 %v2799, %v2848
        %v2854 = vadd.f32 %v2803, %v2848
        %v2855 = vadd.f32 %v2807, %v2848
        %v2856 = vadd.f32 %v2811, %v2848
        %v2857 = vadd.f32 %v2815, %v2848
        %v2858 = vadd.f32 %v2819, %v2848
        %v2859 = vadd.f32 %v2823, %v2848
        %v2860 = vadd.f32 %v2827, %v2848
        %v2861 = vadd.f32 %v2831, %v2848
        %v2862 = vadd.f32 %v2835, %v2848
        %v2863 = vadd.f32 %v2839, %v2848
        %v2864 = vadd.f32 %v2843, %v2848
        %s2865 = sld [smem:[#allocation3 + $0x6]]
        %v2866 = vstv %s2865
        %v2867 = vmul.f32 %v1221, %v2866
        %v2868 = vmul.f32 %v1228, %v2866
        %v2869 = vmul.f32 %v1235, %v2866
        %v2870 = vmul.f32 %v1242, %v2866
        %v2871 = vmul.f32 %v1249, %v2866
        %v2872 = vmul.f32 %v1256, %v2866
        %v2873 = vmul.f32 %v1263, %v2866
        %v2874 = vmul.f32 %v1270, %v2866
        %v2875 = vmul.f32 %v1277, %v2866
        %v2876 = vmul.f32 %v1284, %v2866
        %v2877 = vmul.f32 %v1291, %v2866
        %v2878 = vmul.f32 %v1298, %v2866
        %v2879 = vmul.f32 %v1305, %v2866
        %v2880 = vmul.f32 %v1312, %v2866
        %v2881 = vmul.f32 %v1319, %v2866
        %v2882 = vmul.f32 %v1326, %v2866
        %v2883 = vadd.f32 %v2849, %v2867
        %v2884 = vadd.f32 %v2850, %v2868
        %v2885 = vadd.f32 %v2851, %v2869
        %v2886 = vadd.f32 %v2852, %v2870
        %v2887 = vadd.f32 %v2853, %v2871
        %v2888 = vadd.f32 %v2854, %v2872
        %v2889 = vadd.f32 %v2855, %v2873
        %v2890 = vadd.f32 %v2856, %v2874
        %v2891 = vadd.f32 %v2857, %v2875
        %v2892 = vadd.f32 %v2858, %v2876
        %v2893 = vadd.f32 %v2859, %v2877
        %v2894 = vadd.f32 %v2860, %v2878
        %v2895 = vadd.f32 %v2861, %v2879
        %v2896 = vadd.f32 %v2862, %v2880
        %v2897 = vadd.f32 %v2863, %v2881
        %v2898 = vadd.f32 %v2864, %v2882
        %v2899 = vmax.f32 %v2883, 0.0
        %v2900 = vmax.f32 %v2884, 0.0
        %v2901 = vmax.f32 %v2885, 0.0
        %v2902 = vmax.f32 %v2886, 0.0
        %v2903 = vmax.f32 %v2887, 0.0
        %v2904 = vmax.f32 %v2888, 0.0
        %v2905 = vmax.f32 %v2889, 0.0
        %v2906 = vmax.f32 %v2890, 0.0
        %v2907 = vmax.f32 %v2891, 0.0
        %v2908 = vmax.f32 %v2892, 0.0
        %v2909 = vmax.f32 %v2893, 0.0
        %v2910 = vmax.f32 %v2894, 0.0
        %v2911 = vmax.f32 %v2895, 0.0
        %v2912 = vmax.f32 %v2896, 0.0
        %v2913 = vmax.f32 %v2897, 0.0
        %v2914 = vmax.f32 %v2898, 0.0
        %s2915 = sld [smem:[#allocation5 + $0x6]]
        %v2916 = vstv %s2915
        %v2917 = vmul.f32 %v2899, %v2916
        %v2918 = vmul.f32 %v2900, %v2916
        %v2919 = vmul.f32 %v2901, %v2916
        %v2920 = vmul.f32 %v2902, %v2916
        %v2921 = vmul.f32 %v2903, %v2916
        %v2922 = vmul.f32 %v2904, %v2916
        %v2923 = vmul.f32 %v2905, %v2916
        %v2924 = vmul.f32 %v2906, %v2916
        %v2925 = vmul.f32 %v2907, %v2916
        %v2926 = vmul.f32 %v2908, %v2916
        %v2927 = vmul.f32 %v2909, %v2916
        %v2928 = vmul.f32 %v2910, %v2916
        %v2929 = vmul.f32 %v2911, %v2916
        %v2930 = vmul.f32 %v2912, %v2916
        %v2931 = vmul.f32 %v2913, %v2916
        %v2932 = vmul.f32 %v2914, %v2916
        %v2933 = vadd.f32 %v2765, %v2917
        %v2934 = vadd.f32 %v2766, %v2918
        %v2935 = vadd.f32 %v2767, %v2919
        %v2936 = vadd.f32 %v2768, %v2920
        %v2937 = vadd.f32 %v2769, %v2921
        %v2938 = vadd.f32 %v2770, %v2922
        %v2939 = vadd.f32 %v2771, %v2923
        %v2940 = vadd.f32 %v2772, %v2924
        %v2941 = vadd.f32 %v2773, %v2925
        %v2942 = vadd.f32 %v2774, %v2926
        %v2943 = vadd.f32 %v2775, %v2927
        %v2944 = vadd.f32 %v2776, %v2928
        %v2945 = vadd.f32 %v2777, %v2929
        %v2946 = vadd.f32 %v2778, %v2930
        %v2947 = vadd.f32 %v2779, %v2931
        %v2948 = vadd.f32 %v2780, %v2932
        %2949 = vset.pattern.permute.xlu0 7
        %2950 = vperm.xlu0 %2949, %v1452
        %v2951 = vpop.permute.xlu0 %2950
        %2953 = vset.pattern.permute.xlu0 7
        %2954 = vperm.xlu0 %2953, %v1457
        %v2955 = vpop.permute.xlu0 %2954
        %2957 = vset.pattern.permute.xlu0 7
        %2958 = vperm.xlu0 %2957, %v1462
        %v2959 = vpop.permute.xlu0 %2958
        %2961 = vset.pattern.permute.xlu0 7
        %2962 = vperm.xlu0 %2961, %v1467
        %v2963 = vpop.permute.xlu0 %2962
        %2965 = vset.pattern.permute.xlu0 7
        %2966 = vperm.xlu0 %2965, %v1472
        %v2967 = vpop.permute.xlu0 %2966
        %2969 = vset.pattern.permute.xlu0 7
        %2970 = vperm.xlu0 %2969, %v1477
        %v2971 = vpop.permute.xlu0 %2970
        %2973 = vset.pattern.permute.xlu0 7
        %2974 = vperm.xlu0 %2973, %v1482
        %v2975 = vpop.permute.xlu0 %2974
        %2977 = vset.pattern.permute.xlu0 7
        %2978 = vperm.xlu0 %2977, %v1487
        %v2979 = vpop.permute.xlu0 %2978
        %2981 = vset.pattern.permute.xlu0 7
        %2982 = vperm.xlu0 %2981, %v1492
        %v2983 = vpop.permute.xlu0 %2982
        %2985 = vset.pattern.permute.xlu0 7
        %2986 = vperm.xlu0 %2985, %v1497
        %v2987 = vpop.permute.xlu0 %2986
        %2989 = vset.pattern.permute.xlu0 7
        %2990 = vperm.xlu0 %2989, %v1502
        %v2991 = vpop.permute.xlu0 %2990
        %2993 = vset.pattern.permute.xlu0 7
        %2994 = vperm.xlu0 %2993, %v1507
        %v2995 = vpop.permute.xlu0 %2994
        %2997 = vset.pattern.permute.xlu0 7
        %2998 = vperm.xlu0 %2997, %v1512
        %v2999 = vpop.permute.xlu0 %2998
        %3001 = vset.pattern.permute.xlu0 7
        %3002 = vperm.xlu0 %3001, %v1517
        %v3003 = vpop.permute.xlu0 %3002
        %3005 = vset.pattern.permute.xlu0 7
        %3006 = vperm.xlu0 %3005, %v1522
        %v3007 = vpop.permute.xlu0 %3006
        %3009 = vset.pattern.permute.xlu0 7
        %3010 = vperm.xlu0 %3009, %v1527
        %v3011 = vpop.permute.xlu0 %3010
        %v3013 = vlaneseq
        %v3014 = vshrl.u32 %v3013, 7
        %v3015 = vsub.s32 7, %v3014
        %v3016 = vrot.slane %v1741, %v3015
        %v3017 = vadd.f32 %v2951, %v3016
        %v3018 = vadd.f32 %v2955, %v3016
        %v3019 = vadd.f32 %v2959, %v3016
        %v3020 = vadd.f32 %v2963, %v3016
        %v3021 = vadd.f32 %v2967, %v3016
        %v3022 = vadd.f32 %v2971, %v3016
        %v3023 = vadd.f32 %v2975, %v3016
        %v3024 = vadd.f32 %v2979, %v3016
        %v3025 = vadd.f32 %v2983, %v3016
        %v3026 = vadd.f32 %v2987, %v3016
        %v3027 = vadd.f32 %v2991, %v3016
        %v3028 = vadd.f32 %v2995, %v3016
        %v3029 = vadd.f32 %v2999, %v3016
        %v3030 = vadd.f32 %v3003, %v3016
        %v3031 = vadd.f32 %v3007, %v3016
        %v3032 = vadd.f32 %v3011, %v3016
        %s3033 = sld [smem:[#allocation3 + $0x7]]
        %v3034 = vstv %s3033
        %v3035 = vmul.f32 %v1221, %v3034
        %v3036 = vmul.f32 %v1228, %v3034
        %v3037 = vmul.f32 %v1235, %v3034
        %v3038 = vmul.f32 %v1242, %v3034
        %v3039 = vmul.f32 %v1249, %v3034
        %v3040 = vmul.f32 %v1256, %v3034
        %v3041 = vmul.f32 %v1263, %v3034
        %v3042 = vmul.f32 %v1270, %v3034
        %v3043 = vmul.f32 %v1277, %v3034
        %v3044 = vmul.f32 %v1284, %v3034
        %v3045 = vmul.f32 %v1291, %v3034
        %v3046 = vmul.f32 %v1298, %v3034
        %v3047 = vmul.f32 %v1305, %v3034
        %v3048 = vmul.f32 %v1312, %v3034
        %v3049 = vmul.f32 %v1319, %v3034
        %v3050 = vmul.f32 %v1326, %v3034
        %v3051 = vadd.f32 %v3017, %v3035
        %v3052 = vadd.f32 %v3018, %v3036
        %v3053 = vadd.f32 %v3019, %v3037
        %v3054 = vadd.f32 %v3020, %v3038
        %v3055 = vadd.f32 %v3021, %v3039
        %v3056 = vadd.f32 %v3022, %v3040
        %v3057 = vadd.f32 %v3023, %v3041
        %v3058 = vadd.f32 %v3024, %v3042
        %v3059 = vadd.f32 %v3025, %v3043
        %v3060 = vadd.f32 %v3026, %v3044
        %v3061 = vadd.f32 %v3027, %v3045
        %v3062 = vadd.f32 %v3028, %v3046
        %v3063 = vadd.f32 %v3029, %v3047
        %v3064 = vadd.f32 %v3030, %v3048
        %v3065 = vadd.f32 %v3031, %v3049
        %v3066 = vadd.f32 %v3032, %v3050
        %v3067 = vmax.f32 %v3051, 0.0
        %v3068 = vmax.f32 %v3052, 0.0
        %v3069 = vmax.f32 %v3053, 0.0
        %v3070 = vmax.f32 %v3054, 0.0
        %v3071 = vmax.f32 %v3055, 0.0
        %v3072 = vmax.f32 %v3056, 0.0
        %v3073 = vmax.f32 %v3057, 0.0
        %v3074 = vmax.f32 %v3058, 0.0
        %v3075 = vmax.f32 %v3059, 0.0
        %v3076 = vmax.f32 %v3060, 0.0
        %v3077 = vmax.f32 %v3061, 0.0
        %v3078 = vmax.f32 %v3062, 0.0
        %v3079 = vmax.f32 %v3063, 0.0
        %v3080 = vmax.f32 %v3064, 0.0
        %v3081 = vmax.f32 %v3065, 0.0
        %v3082 = vmax.f32 %v3066, 0.0
        %s3083 = sld [smem:[#allocation5 + $0x7]]
        %v3084 = vstv %s3083
        %v3085 = vmul.f32 %v3067, %v3084
        %v3086 = vmul.f32 %v3068, %v3084
        %v3087 = vmul.f32 %v3069, %v3084
        %v3088 = vmul.f32 %v3070, %v3084
        %v3089 = vmul.f32 %v3071, %v3084
        %v3090 = vmul.f32 %v3072, %v3084
        %v3091 = vmul.f32 %v3073, %v3084
        %v3092 = vmul.f32 %v3074, %v3084
        %v3093 = vmul.f32 %v3075, %v3084
        %v3094 = vmul.f32 %v3076, %v3084
        %v3095 = vmul.f32 %v3077, %v3084
        %v3096 = vmul.f32 %v3078, %v3084
        %v3097 = vmul.f32 %v3079, %v3084
        %v3098 = vmul.f32 %v3080, %v3084
        %v3099 = vmul.f32 %v3081, %v3084
        %v3100 = vmul.f32 %v3082, %v3084
        %v3101 = vadd.f32 %v2933, %v3085
        %v3102 = vadd.f32 %v2934, %v3086
        %v3103 = vadd.f32 %v2935, %v3087
        %v3104 = vadd.f32 %v2936, %v3088
        %v3105 = vadd.f32 %v2937, %v3089
        %v3106 = vadd.f32 %v2938, %v3090
        %v3107 = vadd.f32 %v2939, %v3091
        %v3108 = vadd.f32 %v2940, %v3092
        %v3109 = vadd.f32 %v2941, %v3093
        %v3110 = vadd.f32 %v2942, %v3094
        %v3111 = vadd.f32 %v2943, %v3095
        %v3112 = vadd.f32 %v2944, %v3096
        %v3113 = vadd.f32 %v2945, %v3097
        %v3114 = vadd.f32 %v2946, %v3098
        %v3115 = vadd.f32 %v2947, %v3099
        %v3116 = vadd.f32 %v2948, %v3100
        %3117 = vset.pattern.permute.xlu0 8
        %3118 = vperm.xlu0 %3117, %v1452
        %v3119 = vpop.permute.xlu0 %3118
        %3121 = vset.pattern.permute.xlu0 8
        %3122 = vperm.xlu0 %3121, %v1457
        %v3123 = vpop.permute.xlu0 %3122
        %3125 = vset.pattern.permute.xlu0 8
        %3126 = vperm.xlu0 %3125, %v1462
        %v3127 = vpop.permute.xlu0 %3126
        %3129 = vset.pattern.permute.xlu0 8
        %3130 = vperm.xlu0 %3129, %v1467
        %v3131 = vpop.permute.xlu0 %3130
        %3133 = vset.pattern.permute.xlu0 8
        %3134 = vperm.xlu0 %3133, %v1472
        %v3135 = vpop.permute.xlu0 %3134
        %3137 = vset.pattern.permute.xlu0 8
        %3138 = vperm.xlu0 %3137, %v1477
        %v3139 = vpop.permute.xlu0 %3138
        %3141 = vset.pattern.permute.xlu0 8
        %3142 = vperm.xlu0 %3141, %v1482
        %v3143 = vpop.permute.xlu0 %3142
        %3145 = vset.pattern.permute.xlu0 8
        %3146 = vperm.xlu0 %3145, %v1487
        %v3147 = vpop.permute.xlu0 %3146
        %3149 = vset.pattern.permute.xlu0 8
        %3150 = vperm.xlu0 %3149, %v1492
        %v3151 = vpop.permute.xlu0 %3150
        %3153 = vset.pattern.permute.xlu0 8
        %3154 = vperm.xlu0 %3153, %v1497
        %v3155 = vpop.permute.xlu0 %3154
        %3157 = vset.pattern.permute.xlu0 8
        %3158 = vperm.xlu0 %3157, %v1502
        %v3159 = vpop.permute.xlu0 %3158
        %3161 = vset.pattern.permute.xlu0 8
        %3162 = vperm.xlu0 %3161, %v1507
        %v3163 = vpop.permute.xlu0 %3162
        %3165 = vset.pattern.permute.xlu0 8
        %3166 = vperm.xlu0 %3165, %v1512
        %v3167 = vpop.permute.xlu0 %3166
        %3169 = vset.pattern.permute.xlu0 8
        %3170 = vperm.xlu0 %3169, %v1517
        %v3171 = vpop.permute.xlu0 %3170
        %3173 = vset.pattern.permute.xlu0 8
        %3174 = vperm.xlu0 %3173, %v1522
        %v3175 = vpop.permute.xlu0 %3174
        %3177 = vset.pattern.permute.xlu0 8
        %3178 = vperm.xlu0 %3177, %v1527
        %v3179 = vpop.permute.xlu0 %3178
        %v3181 = vlaneseq
        %v3182 = vshrl.u32 %v3181, 7
        %v3183 = vsub.s32 0, %v3182
        %v3184 = vrot.slane %v1742, %v3183
        %v3185 = vadd.f32 %v3119, %v3184
        %v3186 = vadd.f32 %v3123, %v3184
        %v3187 = vadd.f32 %v3127, %v3184
        %v3188 = vadd.f32 %v3131, %v3184
        %v3189 = vadd.f32 %v3135, %v3184
        %v3190 = vadd.f32 %v3139, %v3184
        %v3191 = vadd.f32 %v3143, %v3184
        %v3192 = vadd.f32 %v3147, %v3184
        %v3193 = vadd.f32 %v3151, %v3184
        %v3194 = vadd.f32 %v3155, %v3184
        %v3195 = vadd.f32 %v3159, %v3184
        %v3196 = vadd.f32 %v3163, %v3184
        %v3197 = vadd.f32 %v3167, %v3184
        %v3198 = vadd.f32 %v3171, %v3184
        %v3199 = vadd.f32 %v3175, %v3184
        %v3200 = vadd.f32 %v3179, %v3184
        %s3201 = sld [smem:[#allocation3 + $0x8]]
        %v3202 = vstv %s3201
        %v3203 = vmul.f32 %v1221, %v3202
        %v3204 = vmul.f32 %v1228, %v3202
        %v3205 = vmul.f32 %v1235, %v3202
        %v3206 = vmul.f32 %v1242, %v3202
        %v3207 = vmul.f32 %v1249, %v3202
        %v3208 = vmul.f32 %v1256, %v3202
        %v3209 = vmul.f32 %v1263, %v3202
        %v3210 = vmul.f32 %v1270, %v3202
        %v3211 = vmul.f32 %v1277, %v3202
        %v3212 = vmul.f32 %v1284, %v3202
        %v3213 = vmul.f32 %v1291, %v3202
        %v3214 = vmul.f32 %v1298, %v3202
        %v3215 = vmul.f32 %v1305, %v3202
        %v3216 = vmul.f32 %v1312, %v3202
        %v3217 = vmul.f32 %v1319, %v3202
        %v3218 = vmul.f32 %v1326, %v3202
        %v3219 = vadd.f32 %v3185, %v3203
        %v3220 = vadd.f32 %v3186, %v3204
        %v3221 = vadd.f32 %v3187, %v3205
        %v3222 = vadd.f32 %v3188, %v3206
        %v3223 = vadd.f32 %v3189, %v3207
        %v3224 = vadd.f32 %v3190, %v3208
        %v3225 = vadd.f32 %v3191, %v3209
        %v3226 = vadd.f32 %v3192, %v3210
        %v3227 = vadd.f32 %v3193, %v3211
        %v3228 = vadd.f32 %v3194, %v3212
        %v3229 = vadd.f32 %v3195, %v3213
        %v3230 = vadd.f32 %v3196, %v3214
        %v3231 = vadd.f32 %v3197, %v3215
        %v3232 = vadd.f32 %v3198, %v3216
        %v3233 = vadd.f32 %v3199, %v3217
        %v3234 = vadd.f32 %v3200, %v3218
        %v3235 = vmax.f32 %v3219, 0.0
        %v3236 = vmax.f32 %v3220, 0.0
        %v3237 = vmax.f32 %v3221, 0.0
        %v3238 = vmax.f32 %v3222, 0.0
        %v3239 = vmax.f32 %v3223, 0.0
        %v3240 = vmax.f32 %v3224, 0.0
        %v3241 = vmax.f32 %v3225, 0.0
        %v3242 = vmax.f32 %v3226, 0.0
        %v3243 = vmax.f32 %v3227, 0.0
        %v3244 = vmax.f32 %v3228, 0.0
        %v3245 = vmax.f32 %v3229, 0.0
        %v3246 = vmax.f32 %v3230, 0.0
        %v3247 = vmax.f32 %v3231, 0.0
        %v3248 = vmax.f32 %v3232, 0.0
        %v3249 = vmax.f32 %v3233, 0.0
        %v3250 = vmax.f32 %v3234, 0.0
        %s3251 = sld [smem:[#allocation5 + $0x8]]
        %v3252 = vstv %s3251
        %v3253 = vmul.f32 %v3235, %v3252
        %v3254 = vmul.f32 %v3236, %v3252
        %v3255 = vmul.f32 %v3237, %v3252
        %v3256 = vmul.f32 %v3238, %v3252
        %v3257 = vmul.f32 %v3239, %v3252
        %v3258 = vmul.f32 %v3240, %v3252
        %v3259 = vmul.f32 %v3241, %v3252
        %v3260 = vmul.f32 %v3242, %v3252
        %v3261 = vmul.f32 %v3243, %v3252
        %v3262 = vmul.f32 %v3244, %v3252
        %v3263 = vmul.f32 %v3245, %v3252
        %v3264 = vmul.f32 %v3246, %v3252
        %v3265 = vmul.f32 %v3247, %v3252
        %v3266 = vmul.f32 %v3248, %v3252
        %v3267 = vmul.f32 %v3249, %v3252
        %v3268 = vmul.f32 %v3250, %v3252
        %v3269 = vadd.f32 %v3101, %v3253
        %v3270 = vadd.f32 %v3102, %v3254
        %v3271 = vadd.f32 %v3103, %v3255
        %v3272 = vadd.f32 %v3104, %v3256
        %v3273 = vadd.f32 %v3105, %v3257
        %v3274 = vadd.f32 %v3106, %v3258
        %v3275 = vadd.f32 %v3107, %v3259
        %v3276 = vadd.f32 %v3108, %v3260
        %v3277 = vadd.f32 %v3109, %v3261
        %v3278 = vadd.f32 %v3110, %v3262
        %v3279 = vadd.f32 %v3111, %v3263
        %v3280 = vadd.f32 %v3112, %v3264
        %v3281 = vadd.f32 %v3113, %v3265
        %v3282 = vadd.f32 %v3114, %v3266
        %v3283 = vadd.f32 %v3115, %v3267
        %v3284 = vadd.f32 %v3116, %v3268
        %3285 = vset.pattern.permute.xlu0 9
        %3286 = vperm.xlu0 %3285, %v1452
        %v3287 = vpop.permute.xlu0 %3286
        %3289 = vset.pattern.permute.xlu0 9
        %3290 = vperm.xlu0 %3289, %v1457
        %v3291 = vpop.permute.xlu0 %3290
        %3293 = vset.pattern.permute.xlu0 9
        %3294 = vperm.xlu0 %3293, %v1462
        %v3295 = vpop.permute.xlu0 %3294
        %3297 = vset.pattern.permute.xlu0 9
        %3298 = vperm.xlu0 %3297, %v1467
        %v3299 = vpop.permute.xlu0 %3298
        %3301 = vset.pattern.permute.xlu0 9
        %3302 = vperm.xlu0 %3301, %v1472
        %v3303 = vpop.permute.xlu0 %3302
        %3305 = vset.pattern.permute.xlu0 9
        %3306 = vperm.xlu0 %3305, %v1477
        %v3307 = vpop.permute.xlu0 %3306
        %3309 = vset.pattern.permute.xlu0 9
        %3310 = vperm.xlu0 %3309, %v1482
        %v3311 = vpop.permute.xlu0 %3310
        %3313 = vset.pattern.permute.xlu0 9
        %3314 = vperm.xlu0 %3313, %v1487
        %v3315 = vpop.permute.xlu0 %3314
        %3317 = vset.pattern.permute.xlu0 9
        %3318 = vperm.xlu0 %3317, %v1492
        %v3319 = vpop.permute.xlu0 %3318
        %3321 = vset.pattern.permute.xlu0 9
        %3322 = vperm.xlu0 %3321, %v1497
        %v3323 = vpop.permute.xlu0 %3322
        %3325 = vset.pattern.permute.xlu0 9
        %3326 = vperm.xlu0 %3325, %v1502
        %v3327 = vpop.permute.xlu0 %3326
        %3329 = vset.pattern.permute.xlu0 9
        %3330 = vperm.xlu0 %3329, %v1507
        %v3331 = vpop.permute.xlu0 %3330
        %3333 = vset.pattern.permute.xlu0 9
        %3334 = vperm.xlu0 %3333, %v1512
        %v3335 = vpop.permute.xlu0 %3334
        %3337 = vset.pattern.permute.xlu0 9
        %3338 = vperm.xlu0 %3337, %v1517
        %v3339 = vpop.permute.xlu0 %3338
        %3341 = vset.pattern.permute.xlu0 9
        %3342 = vperm.xlu0 %3341, %v1522
        %v3343 = vpop.permute.xlu0 %3342
        %3345 = vset.pattern.permute.xlu0 9
        %3346 = vperm.xlu0 %3345, %v1527
        %v3347 = vpop.permute.xlu0 %3346
        %v3349 = vlaneseq
        %v3350 = vshrl.u32 %v3349, 7
        %v3351 = vsub.s32 1, %v3350
        %v3352 = vrot.slane %v1742, %v3351
        %v3353 = vadd.f32 %v3287, %v3352
        %v3354 = vadd.f32 %v3291, %v3352
        %v3355 = vadd.f32 %v3295, %v3352
        %v3356 = vadd.f32 %v3299, %v3352
        %v3357 = vadd.f32 %v3303, %v3352
        %v3358 = vadd.f32 %v3307, %v3352
        %v3359 = vadd.f32 %v3311, %v3352
        %v3360 = vadd.f32 %v3315, %v3352
        %v3361 = vadd.f32 %v3319, %v3352
        %v3362 = vadd.f32 %v3323, %v3352
        %v3363 = vadd.f32 %v3327, %v3352
        %v3364 = vadd.f32 %v3331, %v3352
        %v3365 = vadd.f32 %v3335, %v3352
        %v3366 = vadd.f32 %v3339, %v3352
        %v3367 = vadd.f32 %v3343, %v3352
        %v3368 = vadd.f32 %v3347, %v3352
        %s3369 = sld [smem:[#allocation3 + $0x9]]
        %v3370 = vstv %s3369
        %v3371 = vmul.f32 %v1221, %v3370
        %v3372 = vmul.f32 %v1228, %v3370
        %v3373 = vmul.f32 %v1235, %v3370
        %v3374 = vmul.f32 %v1242, %v3370
        %v3375 = vmul.f32 %v1249, %v3370
        %v3376 = vmul.f32 %v1256, %v3370
        %v3377 = vmul.f32 %v1263, %v3370
        %v3378 = vmul.f32 %v1270, %v3370
        %v3379 = vmul.f32 %v1277, %v3370
        %v3380 = vmul.f32 %v1284, %v3370
        %v3381 = vmul.f32 %v1291, %v3370
        %v3382 = vmul.f32 %v1298, %v3370
        %v3383 = vmul.f32 %v1305, %v3370
        %v3384 = vmul.f32 %v1312, %v3370
        %v3385 = vmul.f32 %v1319, %v3370
        %v3386 = vmul.f32 %v1326, %v3370
        %v3387 = vadd.f32 %v3353, %v3371
        %v3388 = vadd.f32 %v3354, %v3372
        %v3389 = vadd.f32 %v3355, %v3373
        %v3390 = vadd.f32 %v3356, %v3374
        %v3391 = vadd.f32 %v3357, %v3375
        %v3392 = vadd.f32 %v3358, %v3376
        %v3393 = vadd.f32 %v3359, %v3377
        %v3394 = vadd.f32 %v3360, %v3378
        %v3395 = vadd.f32 %v3361, %v3379
        %v3396 = vadd.f32 %v3362, %v3380
        %v3397 = vadd.f32 %v3363, %v3381
        %v3398 = vadd.f32 %v3364, %v3382
        %v3399 = vadd.f32 %v3365, %v3383
        %v3400 = vadd.f32 %v3366, %v3384
        %v3401 = vadd.f32 %v3367, %v3385
        %v3402 = vadd.f32 %v3368, %v3386
        %v3403 = vmax.f32 %v3387, 0.0
        %v3404 = vmax.f32 %v3388, 0.0
        %v3405 = vmax.f32 %v3389, 0.0
        %v3406 = vmax.f32 %v3390, 0.0
        %v3407 = vmax.f32 %v3391, 0.0
        %v3408 = vmax.f32 %v3392, 0.0
        %v3409 = vmax.f32 %v3393, 0.0
        %v3410 = vmax.f32 %v3394, 0.0
        %v3411 = vmax.f32 %v3395, 0.0
        %v3412 = vmax.f32 %v3396, 0.0
        %v3413 = vmax.f32 %v3397, 0.0
        %v3414 = vmax.f32 %v3398, 0.0
        %v3415 = vmax.f32 %v3399, 0.0
        %v3416 = vmax.f32 %v3400, 0.0
        %v3417 = vmax.f32 %v3401, 0.0
        %v3418 = vmax.f32 %v3402, 0.0
        %s3419 = sld [smem:[#allocation5 + $0x9]]
        %v3420 = vstv %s3419
        %v3421 = vmul.f32 %v3403, %v3420
        %v3422 = vmul.f32 %v3404, %v3420
        %v3423 = vmul.f32 %v3405, %v3420
        %v3424 = vmul.f32 %v3406, %v3420
        %v3425 = vmul.f32 %v3407, %v3420
        %v3426 = vmul.f32 %v3408, %v3420
        %v3427 = vmul.f32 %v3409, %v3420
        %v3428 = vmul.f32 %v3410, %v3420
        %v3429 = vmul.f32 %v3411, %v3420
        %v3430 = vmul.f32 %v3412, %v3420
        %v3431 = vmul.f32 %v3413, %v3420
        %v3432 = vmul.f32 %v3414, %v3420
        %v3433 = vmul.f32 %v3415, %v3420
        %v3434 = vmul.f32 %v3416, %v3420
        %v3435 = vmul.f32 %v3417, %v3420
        %v3436 = vmul.f32 %v3418, %v3420
        %v3437 = vadd.f32 %v3269, %v3421
        %v3438 = vadd.f32 %v3270, %v3422
        %v3439 = vadd.f32 %v3271, %v3423
        %v3440 = vadd.f32 %v3272, %v3424
        %v3441 = vadd.f32 %v3273, %v3425
        %v3442 = vadd.f32 %v3274, %v3426
        %v3443 = vadd.f32 %v3275, %v3427
        %v3444 = vadd.f32 %v3276, %v3428
        %v3445 = vadd.f32 %v3277, %v3429
        %v3446 = vadd.f32 %v3278, %v3430
        %v3447 = vadd.f32 %v3279, %v3431
        %v3448 = vadd.f32 %v3280, %v3432
        %v3449 = vadd.f32 %v3281, %v3433
        %v3450 = vadd.f32 %v3282, %v3434
        %v3451 = vadd.f32 %v3283, %v3435
        %v3452 = vadd.f32 %v3284, %v3436
        %3453 = vset.pattern.permute.xlu0 10
        %3454 = vperm.xlu0 %3453, %v1452
        %v3455 = vpop.permute.xlu0 %3454
        %3457 = vset.pattern.permute.xlu0 10
        %3458 = vperm.xlu0 %3457, %v1457
        %v3459 = vpop.permute.xlu0 %3458
        %3461 = vset.pattern.permute.xlu0 10
        %3462 = vperm.xlu0 %3461, %v1462
        %v3463 = vpop.permute.xlu0 %3462
        %3465 = vset.pattern.permute.xlu0 10
        %3466 = vperm.xlu0 %3465, %v1467
        %v3467 = vpop.permute.xlu0 %3466
        %3469 = vset.pattern.permute.xlu0 10
        %3470 = vperm.xlu0 %3469, %v1472
        %v3471 = vpop.permute.xlu0 %3470
        %3473 = vset.pattern.permute.xlu0 10
        %3474 = vperm.xlu0 %3473, %v1477
        %v3475 = vpop.permute.xlu0 %3474
        %3477 = vset.pattern.permute.xlu0 10
        %3478 = vperm.xlu0 %3477, %v1482
        %v3479 = vpop.permute.xlu0 %3478
        %3481 = vset.pattern.permute.xlu0 10
        %3482 = vperm.xlu0 %3481, %v1487
        %v3483 = vpop.permute.xlu0 %3482
        %3485 = vset.pattern.permute.xlu0 10
        %3486 = vperm.xlu0 %3485, %v1492
        %v3487 = vpop.permute.xlu0 %3486
        %3489 = vset.pattern.permute.xlu0 10
        %3490 = vperm.xlu0 %3489, %v1497
        %v3491 = vpop.permute.xlu0 %3490
        %3493 = vset.pattern.permute.xlu0 10
        %3494 = vperm.xlu0 %3493, %v1502
        %v3495 = vpop.permute.xlu0 %3494
        %3497 = vset.pattern.permute.xlu0 10
        %3498 = vperm.xlu0 %3497, %v1507
        %v3499 = vpop.permute.xlu0 %3498
        %3501 = vset.pattern.permute.xlu0 10
        %3502 = vperm.xlu0 %3501, %v1512
        %v3503 = vpop.permute.xlu0 %3502
        %3505 = vset.pattern.permute.xlu0 10
        %3506 = vperm.xlu0 %3505, %v1517
        %v3507 = vpop.permute.xlu0 %3506
        %3509 = vset.pattern.permute.xlu0 10
        %3510 = vperm.xlu0 %3509, %v1522
        %v3511 = vpop.permute.xlu0 %3510
        %3513 = vset.pattern.permute.xlu0 10
        %3514 = vperm.xlu0 %3513, %v1527
        %v3515 = vpop.permute.xlu0 %3514
        %v3517 = vlaneseq
        %v3518 = vshrl.u32 %v3517, 7
        %v3519 = vsub.s32 2, %v3518
        %v3520 = vrot.slane %v1742, %v3519
        %v3521 = vadd.f32 %v3455, %v3520
        %v3522 = vadd.f32 %v3459, %v3520
        %v3523 = vadd.f32 %v3463, %v3520
        %v3524 = vadd.f32 %v3467, %v3520
        %v3525 = vadd.f32 %v3471, %v3520
        %v3526 = vadd.f32 %v3475, %v3520
        %v3527 = vadd.f32 %v3479, %v3520
        %v3528 = vadd.f32 %v3483, %v3520
        %v3529 = vadd.f32 %v3487, %v3520
        %v3530 = vadd.f32 %v3491, %v3520
        %v3531 = vadd.f32 %v3495, %v3520
        %v3532 = vadd.f32 %v3499, %v3520
        %v3533 = vadd.f32 %v3503, %v3520
        %v3534 = vadd.f32 %v3507, %v3520
        %v3535 = vadd.f32 %v3511, %v3520
        %v3536 = vadd.f32 %v3515, %v3520
        %s3537 = sld [smem:[#allocation3 + $0xa]]
        %v3538 = vstv %s3537
        %v3539 = vmul.f32 %v1221, %v3538
        %v3540 = vmul.f32 %v1228, %v3538
        %v3541 = vmul.f32 %v1235, %v3538
        %v3542 = vmul.f32 %v1242, %v3538
        %v3543 = vmul.f32 %v1249, %v3538
        %v3544 = vmul.f32 %v1256, %v3538
        %v3545 = vmul.f32 %v1263, %v3538
        %v3546 = vmul.f32 %v1270, %v3538
        %v3547 = vmul.f32 %v1277, %v3538
        %v3548 = vmul.f32 %v1284, %v3538
        %v3549 = vmul.f32 %v1291, %v3538
        %v3550 = vmul.f32 %v1298, %v3538
        %v3551 = vmul.f32 %v1305, %v3538
        %v3552 = vmul.f32 %v1312, %v3538
        %v3553 = vmul.f32 %v1319, %v3538
        %v3554 = vmul.f32 %v1326, %v3538
        %v3555 = vadd.f32 %v3521, %v3539
        %v3556 = vadd.f32 %v3522, %v3540
        %v3557 = vadd.f32 %v3523, %v3541
        %v3558 = vadd.f32 %v3524, %v3542
        %v3559 = vadd.f32 %v3525, %v3543
        %v3560 = vadd.f32 %v3526, %v3544
        %v3561 = vadd.f32 %v3527, %v3545
        %v3562 = vadd.f32 %v3528, %v3546
        %v3563 = vadd.f32 %v3529, %v3547
        %v3564 = vadd.f32 %v3530, %v3548
        %v3565 = vadd.f32 %v3531, %v3549
        %v3566 = vadd.f32 %v3532, %v3550
        %v3567 = vadd.f32 %v3533, %v3551
        %v3568 = vadd.f32 %v3534, %v3552
        %v3569 = vadd.f32 %v3535, %v3553
        %v3570 = vadd.f32 %v3536, %v3554
        %v3571 = vmax.f32 %v3555, 0.0
        %v3572 = vmax.f32 %v3556, 0.0
        %v3573 = vmax.f32 %v3557, 0.0
        %v3574 = vmax.f32 %v3558, 0.0
        %v3575 = vmax.f32 %v3559, 0.0
        %v3576 = vmax.f32 %v3560, 0.0
        %v3577 = vmax.f32 %v3561, 0.0
        %v3578 = vmax.f32 %v3562, 0.0
        %v3579 = vmax.f32 %v3563, 0.0
        %v3580 = vmax.f32 %v3564, 0.0
        %v3581 = vmax.f32 %v3565, 0.0
        %v3582 = vmax.f32 %v3566, 0.0
        %v3583 = vmax.f32 %v3567, 0.0
        %v3584 = vmax.f32 %v3568, 0.0
        %v3585 = vmax.f32 %v3569, 0.0
        %v3586 = vmax.f32 %v3570, 0.0
        %s3587 = sld [smem:[#allocation5 + $0xa]]
        %v3588 = vstv %s3587
        %v3589 = vmul.f32 %v3571, %v3588
        %v3590 = vmul.f32 %v3572, %v3588
        %v3591 = vmul.f32 %v3573, %v3588
        %v3592 = vmul.f32 %v3574, %v3588
        %v3593 = vmul.f32 %v3575, %v3588
        %v3594 = vmul.f32 %v3576, %v3588
        %v3595 = vmul.f32 %v3577, %v3588
        %v3596 = vmul.f32 %v3578, %v3588
        %v3597 = vmul.f32 %v3579, %v3588
        %v3598 = vmul.f32 %v3580, %v3588
        %v3599 = vmul.f32 %v3581, %v3588
        %v3600 = vmul.f32 %v3582, %v3588
        %v3601 = vmul.f32 %v3583, %v3588
        %v3602 = vmul.f32 %v3584, %v3588
        %v3603 = vmul.f32 %v3585, %v3588
        %v3604 = vmul.f32 %v3586, %v3588
        %v3605 = vadd.f32 %v3437, %v3589
        %v3606 = vadd.f32 %v3438, %v3590
        %v3607 = vadd.f32 %v3439, %v3591
        %v3608 = vadd.f32 %v3440, %v3592
        %v3609 = vadd.f32 %v3441, %v3593
        %v3610 = vadd.f32 %v3442, %v3594
        %v3611 = vadd.f32 %v3443, %v3595
        %v3612 = vadd.f32 %v3444, %v3596
        %v3613 = vadd.f32 %v3445, %v3597
        %v3614 = vadd.f32 %v3446, %v3598
        %v3615 = vadd.f32 %v3447, %v3599
        %v3616 = vadd.f32 %v3448, %v3600
        %v3617 = vadd.f32 %v3449, %v3601
        %v3618 = vadd.f32 %v3450, %v3602
        %v3619 = vadd.f32 %v3451, %v3603
        %v3620 = vadd.f32 %v3452, %v3604
        %3621 = vset.pattern.permute.xlu0 11
        %3622 = vperm.xlu0 %3621, %v1452
        %v3623 = vpop.permute.xlu0 %3622
        %3625 = vset.pattern.permute.xlu0 11
        %3626 = vperm.xlu0 %3625, %v1457
        %v3627 = vpop.permute.xlu0 %3626
        %3629 = vset.pattern.permute.xlu0 11
        %3630 = vperm.xlu0 %3629, %v1462
        %v3631 = vpop.permute.xlu0 %3630
        %3633 = vset.pattern.permute.xlu0 11
        %3634 = vperm.xlu0 %3633, %v1467
        %v3635 = vpop.permute.xlu0 %3634
        %3637 = vset.pattern.permute.xlu0 11
        %3638 = vperm.xlu0 %3637, %v1472
        %v3639 = vpop.permute.xlu0 %3638
        %3641 = vset.pattern.permute.xlu0 11
        %3642 = vperm.xlu0 %3641, %v1477
        %v3643 = vpop.permute.xlu0 %3642
        %3645 = vset.pattern.permute.xlu0 11
        %3646 = vperm.xlu0 %3645, %v1482
        %v3647 = vpop.permute.xlu0 %3646
        %3649 = vset.pattern.permute.xlu0 11
        %3650 = vperm.xlu0 %3649, %v1487
        %v3651 = vpop.permute.xlu0 %3650
        %3653 = vset.pattern.permute.xlu0 11
        %3654 = vperm.xlu0 %3653, %v1492
        %v3655 = vpop.permute.xlu0 %3654
        %3657 = vset.pattern.permute.xlu0 11
        %3658 = vperm.xlu0 %3657, %v1497
        %v3659 = vpop.permute.xlu0 %3658
        %3661 = vset.pattern.permute.xlu0 11
        %3662 = vperm.xlu0 %3661, %v1502
        %v3663 = vpop.permute.xlu0 %3662
        %3665 = vset.pattern.permute.xlu0 11
        %3666 = vperm.xlu0 %3665, %v1507
        %v3667 = vpop.permute.xlu0 %3666
        %3669 = vset.pattern.permute.xlu0 11
        %3670 = vperm.xlu0 %3669, %v1512
        %v3671 = vpop.permute.xlu0 %3670
        %3673 = vset.pattern.permute.xlu0 11
        %3674 = vperm.xlu0 %3673, %v1517
        %v3675 = vpop.permute.xlu0 %3674
        %3677 = vset.pattern.permute.xlu0 11
        %3678 = vperm.xlu0 %3677, %v1522
        %v3679 = vpop.permute.xlu0 %3678
        %3681 = vset.pattern.permute.xlu0 11
        %3682 = vperm.xlu0 %3681, %v1527
        %v3683 = vpop.permute.xlu0 %3682
        %v3685 = vlaneseq
        %v3686 = vshrl.u32 %v3685, 7
        %v3687 = vsub.s32 3, %v3686
        %v3688 = vrot.slane %v1742, %v3687
        %v3689 = vadd.f32 %v3623, %v3688
        %v3690 = vadd.f32 %v3627, %v3688
        %v3691 = vadd.f32 %v3631, %v3688
        %v3692 = vadd.f32 %v3635, %v3688
        %v3693 = vadd.f32 %v3639, %v3688
        %v3694 = vadd.f32 %v3643, %v3688
        %v3695 = vadd.f32 %v3647, %v3688
        %v3696 = vadd.f32 %v3651, %v3688
        %v3697 = vadd.f32 %v3655, %v3688
        %v3698 = vadd.f32 %v3659, %v3688
        %v3699 = vadd.f32 %v3663, %v3688
        %v3700 = vadd.f32 %v3667, %v3688
        %v3701 = vadd.f32 %v3671, %v3688
        %v3702 = vadd.f32 %v3675, %v3688
        %v3703 = vadd.f32 %v3679, %v3688
        %v3704 = vadd.f32 %v3683, %v3688
        %s3705 = sld [smem:[#allocation3 + $0xb]]
        %v3706 = vstv %s3705
        %v3707 = vmul.f32 %v1221, %v3706
        %v3708 = vmul.f32 %v1228, %v3706
        %v3709 = vmul.f32 %v1235, %v3706
        %v3710 = vmul.f32 %v1242, %v3706
        %v3711 = vmul.f32 %v1249, %v3706
        %v3712 = vmul.f32 %v1256, %v3706
        %v3713 = vmul.f32 %v1263, %v3706
        %v3714 = vmul.f32 %v1270, %v3706
        %v3715 = vmul.f32 %v1277, %v3706
        %v3716 = vmul.f32 %v1284, %v3706
        %v3717 = vmul.f32 %v1291, %v3706
        %v3718 = vmul.f32 %v1298, %v3706
        %v3719 = vmul.f32 %v1305, %v3706
        %v3720 = vmul.f32 %v1312, %v3706
        %v3721 = vmul.f32 %v1319, %v3706
        %v3722 = vmul.f32 %v1326, %v3706
        %v3723 = vadd.f32 %v3689, %v3707
        %v3724 = vadd.f32 %v3690, %v3708
        %v3725 = vadd.f32 %v3691, %v3709
        %v3726 = vadd.f32 %v3692, %v3710
        %v3727 = vadd.f32 %v3693, %v3711
        %v3728 = vadd.f32 %v3694, %v3712
        %v3729 = vadd.f32 %v3695, %v3713
        %v3730 = vadd.f32 %v3696, %v3714
        %v3731 = vadd.f32 %v3697, %v3715
        %v3732 = vadd.f32 %v3698, %v3716
        %v3733 = vadd.f32 %v3699, %v3717
        %v3734 = vadd.f32 %v3700, %v3718
        %v3735 = vadd.f32 %v3701, %v3719
        %v3736 = vadd.f32 %v3702, %v3720
        %v3737 = vadd.f32 %v3703, %v3721
        %v3738 = vadd.f32 %v3704, %v3722
        %v3739 = vmax.f32 %v3723, 0.0
        %v3740 = vmax.f32 %v3724, 0.0
        %v3741 = vmax.f32 %v3725, 0.0
        %v3742 = vmax.f32 %v3726, 0.0
        %v3743 = vmax.f32 %v3727, 0.0
        %v3744 = vmax.f32 %v3728, 0.0
        %v3745 = vmax.f32 %v3729, 0.0
        %v3746 = vmax.f32 %v3730, 0.0
        %v3747 = vmax.f32 %v3731, 0.0
        %v3748 = vmax.f32 %v3732, 0.0
        %v3749 = vmax.f32 %v3733, 0.0
        %v3750 = vmax.f32 %v3734, 0.0
        %v3751 = vmax.f32 %v3735, 0.0
        %v3752 = vmax.f32 %v3736, 0.0
        %v3753 = vmax.f32 %v3737, 0.0
        %v3754 = vmax.f32 %v3738, 0.0
        %s3755 = sld [smem:[#allocation5 + $0xb]]
        %v3756 = vstv %s3755
        %v3757 = vmul.f32 %v3739, %v3756
        %v3758 = vmul.f32 %v3740, %v3756
        %v3759 = vmul.f32 %v3741, %v3756
        %v3760 = vmul.f32 %v3742, %v3756
        %v3761 = vmul.f32 %v3743, %v3756
        %v3762 = vmul.f32 %v3744, %v3756
        %v3763 = vmul.f32 %v3745, %v3756
        %v3764 = vmul.f32 %v3746, %v3756
        %v3765 = vmul.f32 %v3747, %v3756
        %v3766 = vmul.f32 %v3748, %v3756
        %v3767 = vmul.f32 %v3749, %v3756
        %v3768 = vmul.f32 %v3750, %v3756
        %v3769 = vmul.f32 %v3751, %v3756
        %v3770 = vmul.f32 %v3752, %v3756
        %v3771 = vmul.f32 %v3753, %v3756
        %v3772 = vmul.f32 %v3754, %v3756
        %v3773 = vadd.f32 %v3605, %v3757
        %v3774 = vadd.f32 %v3606, %v3758
        %v3775 = vadd.f32 %v3607, %v3759
        %v3776 = vadd.f32 %v3608, %v3760
        %v3777 = vadd.f32 %v3609, %v3761
        %v3778 = vadd.f32 %v3610, %v3762
        %v3779 = vadd.f32 %v3611, %v3763
        %v3780 = vadd.f32 %v3612, %v3764
        %v3781 = vadd.f32 %v3613, %v3765
        %v3782 = vadd.f32 %v3614, %v3766
        %v3783 = vadd.f32 %v3615, %v3767
        %v3784 = vadd.f32 %v3616, %v3768
        %v3785 = vadd.f32 %v3617, %v3769
        %v3786 = vadd.f32 %v3618, %v3770
        %v3787 = vadd.f32 %v3619, %v3771
        %v3788 = vadd.f32 %v3620, %v3772
        %3789 = vset.pattern.permute.xlu0 12
        %3790 = vperm.xlu0 %3789, %v1452
        %v3791 = vpop.permute.xlu0 %3790
        %3793 = vset.pattern.permute.xlu0 12
        %3794 = vperm.xlu0 %3793, %v1457
        %v3795 = vpop.permute.xlu0 %3794
        %3797 = vset.pattern.permute.xlu0 12
        %3798 = vperm.xlu0 %3797, %v1462
        %v3799 = vpop.permute.xlu0 %3798
        %3801 = vset.pattern.permute.xlu0 12
        %3802 = vperm.xlu0 %3801, %v1467
        %v3803 = vpop.permute.xlu0 %3802
        %3805 = vset.pattern.permute.xlu0 12
        %3806 = vperm.xlu0 %3805, %v1472
        %v3807 = vpop.permute.xlu0 %3806
        %3809 = vset.pattern.permute.xlu0 12
        %3810 = vperm.xlu0 %3809, %v1477
        %v3811 = vpop.permute.xlu0 %3810
        %3813 = vset.pattern.permute.xlu0 12
        %3814 = vperm.xlu0 %3813, %v1482
        %v3815 = vpop.permute.xlu0 %3814
        %3817 = vset.pattern.permute.xlu0 12
        %3818 = vperm.xlu0 %3817, %v1487
        %v3819 = vpop.permute.xlu0 %3818
        %3821 = vset.pattern.permute.xlu0 12
        %3822 = vperm.xlu0 %3821, %v1492
        %v3823 = vpop.permute.xlu0 %3822
        %3825 = vset.pattern.permute.xlu0 12
        %3826 = vperm.xlu0 %3825, %v1497
        %v3827 = vpop.permute.xlu0 %3826
        %3829 = vset.pattern.permute.xlu0 12
        %3830 = vperm.xlu0 %3829, %v1502
        %v3831 = vpop.permute.xlu0 %3830
        %3833 = vset.pattern.permute.xlu0 12
        %3834 = vperm.xlu0 %3833, %v1507
        %v3835 = vpop.permute.xlu0 %3834
        %3837 = vset.pattern.permute.xlu0 12
        %3838 = vperm.xlu0 %3837, %v1512
        %v3839 = vpop.permute.xlu0 %3838
        %3841 = vset.pattern.permute.xlu0 12
        %3842 = vperm.xlu0 %3841, %v1517
        %v3843 = vpop.permute.xlu0 %3842
        %3845 = vset.pattern.permute.xlu0 12
        %3846 = vperm.xlu0 %3845, %v1522
        %v3847 = vpop.permute.xlu0 %3846
        %3849 = vset.pattern.permute.xlu0 12
        %3850 = vperm.xlu0 %3849, %v1527
        %v3851 = vpop.permute.xlu0 %3850
        %v3853 = vlaneseq
        %v3854 = vshrl.u32 %v3853, 7
        %v3855 = vsub.s32 4, %v3854
        %v3856 = vrot.slane %v1742, %v3855
        %v3857 = vadd.f32 %v3791, %v3856
        %v3858 = vadd.f32 %v3795, %v3856
        %v3859 = vadd.f32 %v3799, %v3856
        %v3860 = vadd.f32 %v3803, %v3856
        %v3861 = vadd.f32 %v3807, %v3856
        %v3862 = vadd.f32 %v3811, %v3856
        %v3863 = vadd.f32 %v3815, %v3856
        %v3864 = vadd.f32 %v3819, %v3856
        %v3865 = vadd.f32 %v3823, %v3856
        %v3866 = vadd.f32 %v3827, %v3856
        %v3867 = vadd.f32 %v3831, %v3856
        %v3868 = vadd.f32 %v3835, %v3856
        %v3869 = vadd.f32 %v3839, %v3856
        %v3870 = vadd.f32 %v3843, %v3856
        %v3871 = vadd.f32 %v3847, %v3856
        %v3872 = vadd.f32 %v3851, %v3856
        %s3873 = sld [smem:[#allocation3 + $0xc]]
        %v3874 = vstv %s3873
        %v3875 = vmul.f32 %v1221, %v3874
        %v3876 = vmul.f32 %v1228, %v3874
        %v3877 = vmul.f32 %v1235, %v3874
        %v3878 = vmul.f32 %v1242, %v3874
        %v3879 = vmul.f32 %v1249, %v3874
        %v3880 = vmul.f32 %v1256, %v3874
        %v3881 = vmul.f32 %v1263, %v3874
        %v3882 = vmul.f32 %v1270, %v3874
        %v3883 = vmul.f32 %v1277, %v3874
        %v3884 = vmul.f32 %v1284, %v3874
        %v3885 = vmul.f32 %v1291, %v3874
        %v3886 = vmul.f32 %v1298, %v3874
        %v3887 = vmul.f32 %v1305, %v3874
        %v3888 = vmul.f32 %v1312, %v3874
        %v3889 = vmul.f32 %v1319, %v3874
        %v3890 = vmul.f32 %v1326, %v3874
        %v3891 = vadd.f32 %v3857, %v3875
        %v3892 = vadd.f32 %v3858, %v3876
        %v3893 = vadd.f32 %v3859, %v3877
        %v3894 = vadd.f32 %v3860, %v3878
        %v3895 = vadd.f32 %v3861, %v3879
        %v3896 = vadd.f32 %v3862, %v3880
        %v3897 = vadd.f32 %v3863, %v3881
        %v3898 = vadd.f32 %v3864, %v3882
        %v3899 = vadd.f32 %v3865, %v3883
        %v3900 = vadd.f32 %v3866, %v3884
        %v3901 = vadd.f32 %v3867, %v3885
        %v3902 = vadd.f32 %v3868, %v3886
        %v3903 = vadd.f32 %v3869, %v3887
        %v3904 = vadd.f32 %v3870, %v3888
        %v3905 = vadd.f32 %v3871, %v3889
        %v3906 = vadd.f32 %v3872, %v3890
        %v3907 = vmax.f32 %v3891, 0.0
        %v3908 = vmax.f32 %v3892, 0.0
        %v3909 = vmax.f32 %v3893, 0.0
        %v3910 = vmax.f32 %v3894, 0.0
        %v3911 = vmax.f32 %v3895, 0.0
        %v3912 = vmax.f32 %v3896, 0.0
        %v3913 = vmax.f32 %v3897, 0.0
        %v3914 = vmax.f32 %v3898, 0.0
        %v3915 = vmax.f32 %v3899, 0.0
        %v3916 = vmax.f32 %v3900, 0.0
        %v3917 = vmax.f32 %v3901, 0.0
        %v3918 = vmax.f32 %v3902, 0.0
        %v3919 = vmax.f32 %v3903, 0.0
        %v3920 = vmax.f32 %v3904, 0.0
        %v3921 = vmax.f32 %v3905, 0.0
        %v3922 = vmax.f32 %v3906, 0.0
        %s3923 = sld [smem:[#allocation5 + $0xc]]
        %v3924 = vstv %s3923
        %v3925 = vmul.f32 %v3907, %v3924
        %v3926 = vmul.f32 %v3908, %v3924
        %v3927 = vmul.f32 %v3909, %v3924
        %v3928 = vmul.f32 %v3910, %v3924
        %v3929 = vmul.f32 %v3911, %v3924
        %v3930 = vmul.f32 %v3912, %v3924
        %v3931 = vmul.f32 %v3913, %v3924
        %v3932 = vmul.f32 %v3914, %v3924
        %v3933 = vmul.f32 %v3915, %v3924
        %v3934 = vmul.f32 %v3916, %v3924
        %v3935 = vmul.f32 %v3917, %v3924
        %v3936 = vmul.f32 %v3918, %v3924
        %v3937 = vmul.f32 %v3919, %v3924
        %v3938 = vmul.f32 %v3920, %v3924
        %v3939 = vmul.f32 %v3921, %v3924
        %v3940 = vmul.f32 %v3922, %v3924
        %v3941 = vadd.f32 %v3773, %v3925
        %v3942 = vadd.f32 %v3774, %v3926
        %v3943 = vadd.f32 %v3775, %v3927
        %v3944 = vadd.f32 %v3776, %v3928
        %v3945 = vadd.f32 %v3777, %v3929
        %v3946 = vadd.f32 %v3778, %v3930
        %v3947 = vadd.f32 %v3779, %v3931
        %v3948 = vadd.f32 %v3780, %v3932
        %v3949 = vadd.f32 %v3781, %v3933
        %v3950 = vadd.f32 %v3782, %v3934
        %v3951 = vadd.f32 %v3783, %v3935
        %v3952 = vadd.f32 %v3784, %v3936
        %v3953 = vadd.f32 %v3785, %v3937
        %v3954 = vadd.f32 %v3786, %v3938
        %v3955 = vadd.f32 %v3787, %v3939
        %v3956 = vadd.f32 %v3788, %v3940
        %3957 = vset.pattern.permute.xlu0 13
        %3958 = vperm.xlu0 %3957, %v1452
        %v3959 = vpop.permute.xlu0 %3958
        %3961 = vset.pattern.permute.xlu0 13
        %3962 = vperm.xlu0 %3961, %v1457
        %v3963 = vpop.permute.xlu0 %3962
        %3965 = vset.pattern.permute.xlu0 13
        %3966 = vperm.xlu0 %3965, %v1462
        %v3967 = vpop.permute.xlu0 %3966
        %3969 = vset.pattern.permute.xlu0 13
        %3970 = vperm.xlu0 %3969, %v1467
        %v3971 = vpop.permute.xlu0 %3970
        %3973 = vset.pattern.permute.xlu0 13
        %3974 = vperm.xlu0 %3973, %v1472
        %v3975 = vpop.permute.xlu0 %3974
        %3977 = vset.pattern.permute.xlu0 13
        %3978 = vperm.xlu0 %3977, %v1477
        %v3979 = vpop.permute.xlu0 %3978
        %3981 = vset.pattern.permute.xlu0 13
        %3982 = vperm.xlu0 %3981, %v1482
        %v3983 = vpop.permute.xlu0 %3982
        %3985 = vset.pattern.permute.xlu0 13
        %3986 = vperm.xlu0 %3985, %v1487
        %v3987 = vpop.permute.xlu0 %3986
        %3989 = vset.pattern.permute.xlu0 13
        %3990 = vperm.xlu0 %3989, %v1492
        %v3991 = vpop.permute.xlu0 %3990
        %3993 = vset.pattern.permute.xlu0 13
        %3994 = vperm.xlu0 %3993, %v1497
        %v3995 = vpop.permute.xlu0 %3994
        %3997 = vset.pattern.permute.xlu0 13
        %3998 = vperm.xlu0 %3997, %v1502
        %v3999 = vpop.permute.xlu0 %3998
        %4001 = vset.pattern.permute.xlu0 13
        %4002 = vperm.xlu0 %4001, %v1507
        %v4003 = vpop.permute.xlu0 %4002
        %4005 = vset.pattern.permute.xlu0 13
        %4006 = vperm.xlu0 %4005, %v1512
        %v4007 = vpop.permute.xlu0 %4006
        %4009 = vset.pattern.permute.xlu0 13
        %4010 = vperm.xlu0 %4009, %v1517
        %v4011 = vpop.permute.xlu0 %4010
        %4013 = vset.pattern.permute.xlu0 13
        %4014 = vperm.xlu0 %4013, %v1522
        %v4015 = vpop.permute.xlu0 %4014
        %4017 = vset.pattern.permute.xlu0 13
        %4018 = vperm.xlu0 %4017, %v1527
        %v4019 = vpop.permute.xlu0 %4018
        %v4021 = vlaneseq
        %v4022 = vshrl.u32 %v4021, 7
        %v4023 = vsub.s32 5, %v4022
        %v4024 = vrot.slane %v1742, %v4023
        %v4025 = vadd.f32 %v3959, %v4024
        %v4026 = vadd.f32 %v3963, %v4024
        %v4027 = vadd.f32 %v3967, %v4024
        %v4028 = vadd.f32 %v3971, %v4024
        %v4029 = vadd.f32 %v3975, %v4024
        %v4030 = vadd.f32 %v3979, %v4024
        %v4031 = vadd.f32 %v3983, %v4024
        %v4032 = vadd.f32 %v3987, %v4024
        %v4033 = vadd.f32 %v3991, %v4024
        %v4034 = vadd.f32 %v3995, %v4024
        %v4035 = vadd.f32 %v3999, %v4024
        %v4036 = vadd.f32 %v4003, %v4024
        %v4037 = vadd.f32 %v4007, %v4024
        %v4038 = vadd.f32 %v4011, %v4024
        %v4039 = vadd.f32 %v4015, %v4024
        %v4040 = vadd.f32 %v4019, %v4024
        %s4041 = sld [smem:[#allocation3 + $0xd]]
        %v4042 = vstv %s4041
        %v4043 = vmul.f32 %v1221, %v4042
        %v4044 = vmul.f32 %v1228, %v4042
        %v4045 = vmul.f32 %v1235, %v4042
        %v4046 = vmul.f32 %v1242, %v4042
        %v4047 = vmul.f32 %v1249, %v4042
        %v4048 = vmul.f32 %v1256, %v4042
        %v4049 = vmul.f32 %v1263, %v4042
        %v4050 = vmul.f32 %v1270, %v4042
        %v4051 = vmul.f32 %v1277, %v4042
        %v4052 = vmul.f32 %v1284, %v4042
        %v4053 = vmul.f32 %v1291, %v4042
        %v4054 = vmul.f32 %v1298, %v4042
        %v4055 = vmul.f32 %v1305, %v4042
        %v4056 = vmul.f32 %v1312, %v4042
        %v4057 = vmul.f32 %v1319, %v4042
        %v4058 = vmul.f32 %v1326, %v4042
        %v4059 = vadd.f32 %v4025, %v4043
        %v4060 = vadd.f32 %v4026, %v4044
        %v4061 = vadd.f32 %v4027, %v4045
        %v4062 = vadd.f32 %v4028, %v4046
        %v4063 = vadd.f32 %v4029, %v4047
        %v4064 = vadd.f32 %v4030, %v4048
        %v4065 = vadd.f32 %v4031, %v4049
        %v4066 = vadd.f32 %v4032, %v4050
        %v4067 = vadd.f32 %v4033, %v4051
        %v4068 = vadd.f32 %v4034, %v4052
        %v4069 = vadd.f32 %v4035, %v4053
        %v4070 = vadd.f32 %v4036, %v4054
        %v4071 = vadd.f32 %v4037, %v4055
        %v4072 = vadd.f32 %v4038, %v4056
        %v4073 = vadd.f32 %v4039, %v4057
        %v4074 = vadd.f32 %v4040, %v4058
        %v4075 = vmax.f32 %v4059, 0.0
        %v4076 = vmax.f32 %v4060, 0.0
        %v4077 = vmax.f32 %v4061, 0.0
        %v4078 = vmax.f32 %v4062, 0.0
        %v4079 = vmax.f32 %v4063, 0.0
        %v4080 = vmax.f32 %v4064, 0.0
        %v4081 = vmax.f32 %v4065, 0.0
        %v4082 = vmax.f32 %v4066, 0.0
        %v4083 = vmax.f32 %v4067, 0.0
        %v4084 = vmax.f32 %v4068, 0.0
        %v4085 = vmax.f32 %v4069, 0.0
        %v4086 = vmax.f32 %v4070, 0.0
        %v4087 = vmax.f32 %v4071, 0.0
        %v4088 = vmax.f32 %v4072, 0.0
        %v4089 = vmax.f32 %v4073, 0.0
        %v4090 = vmax.f32 %v4074, 0.0
        %s4091 = sld [smem:[#allocation5 + $0xd]]
        %v4092 = vstv %s4091
        %v4093 = vmul.f32 %v4075, %v4092
        %v4094 = vmul.f32 %v4076, %v4092
        %v4095 = vmul.f32 %v4077, %v4092
        %v4096 = vmul.f32 %v4078, %v4092
        %v4097 = vmul.f32 %v4079, %v4092
        %v4098 = vmul.f32 %v4080, %v4092
        %v4099 = vmul.f32 %v4081, %v4092
        %v4100 = vmul.f32 %v4082, %v4092
        %v4101 = vmul.f32 %v4083, %v4092
        %v4102 = vmul.f32 %v4084, %v4092
        %v4103 = vmul.f32 %v4085, %v4092
        %v4104 = vmul.f32 %v4086, %v4092
        %v4105 = vmul.f32 %v4087, %v4092
        %v4106 = vmul.f32 %v4088, %v4092
        %v4107 = vmul.f32 %v4089, %v4092
        %v4108 = vmul.f32 %v4090, %v4092
        %v4109 = vadd.f32 %v3941, %v4093
        %v4110 = vadd.f32 %v3942, %v4094
        %v4111 = vadd.f32 %v3943, %v4095
        %v4112 = vadd.f32 %v3944, %v4096
        %v4113 = vadd.f32 %v3945, %v4097
        %v4114 = vadd.f32 %v3946, %v4098
        %v4115 = vadd.f32 %v3947, %v4099
        %v4116 = vadd.f32 %v3948, %v4100
        %v4117 = vadd.f32 %v3949, %v4101
        %v4118 = vadd.f32 %v3950, %v4102
        %v4119 = vadd.f32 %v3951, %v4103
        %v4120 = vadd.f32 %v3952, %v4104
        %v4121 = vadd.f32 %v3953, %v4105
        %v4122 = vadd.f32 %v3954, %v4106
        %v4123 = vadd.f32 %v3955, %v4107
        %v4124 = vadd.f32 %v3956, %v4108
        %4125 = vset.pattern.permute.xlu0 14
        %4126 = vperm.xlu0 %4125, %v1452
        %v4127 = vpop.permute.xlu0 %4126
        %4129 = vset.pattern.permute.xlu0 14
        %4130 = vperm.xlu0 %4129, %v1457
        %v4131 = vpop.permute.xlu0 %4130
        %4133 = vset.pattern.permute.xlu0 14
        %4134 = vperm.xlu0 %4133, %v1462
        %v4135 = vpop.permute.xlu0 %4134
        %4137 = vset.pattern.permute.xlu0 14
        %4138 = vperm.xlu0 %4137, %v1467
        %v4139 = vpop.permute.xlu0 %4138
        %4141 = vset.pattern.permute.xlu0 14
        %4142 = vperm.xlu0 %4141, %v1472
        %v4143 = vpop.permute.xlu0 %4142
        %4145 = vset.pattern.permute.xlu0 14
        %4146 = vperm.xlu0 %4145, %v1477
        %v4147 = vpop.permute.xlu0 %4146
        %4149 = vset.pattern.permute.xlu0 14
        %4150 = vperm.xlu0 %4149, %v1482
        %v4151 = vpop.permute.xlu0 %4150
        %4153 = vset.pattern.permute.xlu0 14
        %4154 = vperm.xlu0 %4153, %v1487
        %v4155 = vpop.permute.xlu0 %4154
        %4157 = vset.pattern.permute.xlu0 14
        %4158 = vperm.xlu0 %4157, %v1492
        %v4159 = vpop.permute.xlu0 %4158
        %4161 = vset.pattern.permute.xlu0 14
        %4162 = vperm.xlu0 %4161, %v1497
        %v4163 = vpop.permute.xlu0 %4162
        %4165 = vset.pattern.permute.xlu0 14
        %4166 = vperm.xlu0 %4165, %v1502
        %v4167 = vpop.permute.xlu0 %4166
        %4169 = vset.pattern.permute.xlu0 14
        %4170 = vperm.xlu0 %4169, %v1507
        %v4171 = vpop.permute.xlu0 %4170
        %4173 = vset.pattern.permute.xlu0 14
        %4174 = vperm.xlu0 %4173, %v1512
        %v4175 = vpop.permute.xlu0 %4174
        %4177 = vset.pattern.permute.xlu0 14
        %4178 = vperm.xlu0 %4177, %v1517
        %v4179 = vpop.permute.xlu0 %4178
        %4181 = vset.pattern.permute.xlu0 14
        %4182 = vperm.xlu0 %4181, %v1522
        %v4183 = vpop.permute.xlu0 %4182
        %4185 = vset.pattern.permute.xlu0 14
        %4186 = vperm.xlu0 %4185, %v1527
        %v4187 = vpop.permute.xlu0 %4186
        %v4189 = vlaneseq
        %v4190 = vshrl.u32 %v4189, 7
        %v4191 = vsub.s32 6, %v4190
        %v4192 = vrot.slane %v1742, %v4191
        %v4193 = vadd.f32 %v4127, %v4192
        %v4194 = vadd.f32 %v4131, %v4192
        %v4195 = vadd.f32 %v4135, %v4192
        %v4196 = vadd.f32 %v4139, %v4192
        %v4197 = vadd.f32 %v4143, %v4192
        %v4198 = vadd.f32 %v4147, %v4192
        %v4199 = vadd.f32 %v4151, %v4192
        %v4200 = vadd.f32 %v4155, %v4192
        %v4201 = vadd.f32 %v4159, %v4192
        %v4202 = vadd.f32 %v4163, %v4192
        %v4203 = vadd.f32 %v4167, %v4192
        %v4204 = vadd.f32 %v4171, %v4192
        %v4205 = vadd.f32 %v4175, %v4192
        %v4206 = vadd.f32 %v4179, %v4192
        %v4207 = vadd.f32 %v4183, %v4192
        %v4208 = vadd.f32 %v4187, %v4192
        %s4209 = sld [smem:[#allocation3 + $0xe]]
        %v4210 = vstv %s4209
        %v4211 = vmul.f32 %v1221, %v4210
        %v4212 = vmul.f32 %v1228, %v4210
        %v4213 = vmul.f32 %v1235, %v4210
        %v4214 = vmul.f32 %v1242, %v4210
        %v4215 = vmul.f32 %v1249, %v4210
        %v4216 = vmul.f32 %v1256, %v4210
        %v4217 = vmul.f32 %v1263, %v4210
        %v4218 = vmul.f32 %v1270, %v4210
        %v4219 = vmul.f32 %v1277, %v4210
        %v4220 = vmul.f32 %v1284, %v4210
        %v4221 = vmul.f32 %v1291, %v4210
        %v4222 = vmul.f32 %v1298, %v4210
        %v4223 = vmul.f32 %v1305, %v4210
        %v4224 = vmul.f32 %v1312, %v4210
        %v4225 = vmul.f32 %v1319, %v4210
        %v4226 = vmul.f32 %v1326, %v4210
        %v4227 = vadd.f32 %v4193, %v4211
        %v4228 = vadd.f32 %v4194, %v4212
        %v4229 = vadd.f32 %v4195, %v4213
        %v4230 = vadd.f32 %v4196, %v4214
        %v4231 = vadd.f32 %v4197, %v4215
        %v4232 = vadd.f32 %v4198, %v4216
        %v4233 = vadd.f32 %v4199, %v4217
        %v4234 = vadd.f32 %v4200, %v4218
        %v4235 = vadd.f32 %v4201, %v4219
        %v4236 = vadd.f32 %v4202, %v4220
        %v4237 = vadd.f32 %v4203, %v4221
        %v4238 = vadd.f32 %v4204, %v4222
        %v4239 = vadd.f32 %v4205, %v4223
        %v4240 = vadd.f32 %v4206, %v4224
        %v4241 = vadd.f32 %v4207, %v4225
        %v4242 = vadd.f32 %v4208, %v4226
        %v4243 = vmax.f32 %v4227, 0.0
        %v4244 = vmax.f32 %v4228, 0.0
        %v4245 = vmax.f32 %v4229, 0.0
        %v4246 = vmax.f32 %v4230, 0.0
        %v4247 = vmax.f32 %v4231, 0.0
        %v4248 = vmax.f32 %v4232, 0.0
        %v4249 = vmax.f32 %v4233, 0.0
        %v4250 = vmax.f32 %v4234, 0.0
        %v4251 = vmax.f32 %v4235, 0.0
        %v4252 = vmax.f32 %v4236, 0.0
        %v4253 = vmax.f32 %v4237, 0.0
        %v4254 = vmax.f32 %v4238, 0.0
        %v4255 = vmax.f32 %v4239, 0.0
        %v4256 = vmax.f32 %v4240, 0.0
        %v4257 = vmax.f32 %v4241, 0.0
        %v4258 = vmax.f32 %v4242, 0.0
        %s4259 = sld [smem:[#allocation5 + $0xe]]
        %v4260 = vstv %s4259
        %v4261 = vmul.f32 %v4243, %v4260
        %v4262 = vmul.f32 %v4244, %v4260
        %v4263 = vmul.f32 %v4245, %v4260
        %v4264 = vmul.f32 %v4246, %v4260
        %v4265 = vmul.f32 %v4247, %v4260
        %v4266 = vmul.f32 %v4248, %v4260
        %v4267 = vmul.f32 %v4249, %v4260
        %v4268 = vmul.f32 %v4250, %v4260
        %v4269 = vmul.f32 %v4251, %v4260
        %v4270 = vmul.f32 %v4252, %v4260
        %v4271 = vmul.f32 %v4253, %v4260
        %v4272 = vmul.f32 %v4254, %v4260
        %v4273 = vmul.f32 %v4255, %v4260
        %v4274 = vmul.f32 %v4256, %v4260
        %v4275 = vmul.f32 %v4257, %v4260
        %v4276 = vmul.f32 %v4258, %v4260
        %v4277 = vadd.f32 %v4109, %v4261
        %v4278 = vadd.f32 %v4110, %v4262
        %v4279 = vadd.f32 %v4111, %v4263
        %v4280 = vadd.f32 %v4112, %v4264
        %v4281 = vadd.f32 %v4113, %v4265
        %v4282 = vadd.f32 %v4114, %v4266
        %v4283 = vadd.f32 %v4115, %v4267
        %v4284 = vadd.f32 %v4116, %v4268
        %v4285 = vadd.f32 %v4117, %v4269
        %v4286 = vadd.f32 %v4118, %v4270
        %v4287 = vadd.f32 %v4119, %v4271
        %v4288 = vadd.f32 %v4120, %v4272
        %v4289 = vadd.f32 %v4121, %v4273
        %v4290 = vadd.f32 %v4122, %v4274
        %v4291 = vadd.f32 %v4123, %v4275
        %v4292 = vadd.f32 %v4124, %v4276
        %4293 = vset.pattern.permute.xlu0 15
        %4294 = vperm.xlu0 %4293, %v1452
        %v4295 = vpop.permute.xlu0 %4294
        %4297 = vset.pattern.permute.xlu0 15
        %4298 = vperm.xlu0 %4297, %v1457
        %v4299 = vpop.permute.xlu0 %4298
        %4301 = vset.pattern.permute.xlu0 15
        %4302 = vperm.xlu0 %4301, %v1462
        %v4303 = vpop.permute.xlu0 %4302
        %4305 = vset.pattern.permute.xlu0 15
        %4306 = vperm.xlu0 %4305, %v1467
        %v4307 = vpop.permute.xlu0 %4306
        %4309 = vset.pattern.permute.xlu0 15
        %4310 = vperm.xlu0 %4309, %v1472
        %v4311 = vpop.permute.xlu0 %4310
        %4313 = vset.pattern.permute.xlu0 15
        %4314 = vperm.xlu0 %4313, %v1477
        %v4315 = vpop.permute.xlu0 %4314
        %4317 = vset.pattern.permute.xlu0 15
        %4318 = vperm.xlu0 %4317, %v1482
        %v4319 = vpop.permute.xlu0 %4318
        %4321 = vset.pattern.permute.xlu0 15
        %4322 = vperm.xlu0 %4321, %v1487
        %v4323 = vpop.permute.xlu0 %4322
        %4325 = vset.pattern.permute.xlu0 15
        %4326 = vperm.xlu0 %4325, %v1492
        %v4327 = vpop.permute.xlu0 %4326
        %4329 = vset.pattern.permute.xlu0 15
        %4330 = vperm.xlu0 %4329, %v1497
        %v4331 = vpop.permute.xlu0 %4330
        %4333 = vset.pattern.permute.xlu0 15
        %4334 = vperm.xlu0 %4333, %v1502
        %v4335 = vpop.permute.xlu0 %4334
        %4337 = vset.pattern.permute.xlu0 15
        %4338 = vperm.xlu0 %4337, %v1507
        %v4339 = vpop.permute.xlu0 %4338
        %4341 = vset.pattern.permute.xlu0 15
        %4342 = vperm.xlu0 %4341, %v1512
        %v4343 = vpop.permute.xlu0 %4342
        %4345 = vset.pattern.permute.xlu0 15
        %4346 = vperm.xlu0 %4345, %v1517
        %v4347 = vpop.permute.xlu0 %4346
        %4349 = vset.pattern.permute.xlu0 15
        %4350 = vperm.xlu0 %4349, %v1522
        %v4351 = vpop.permute.xlu0 %4350
        %4353 = vset.pattern.permute.xlu0 15
        %4354 = vperm.xlu0 %4353, %v1527
        %v4355 = vpop.permute.xlu0 %4354
        %v4357 = vlaneseq
        %v4358 = vshrl.u32 %v4357, 7
        %v4359 = vsub.s32 7, %v4358
        %v4360 = vrot.slane %v1742, %v4359
        %v4361 = vadd.f32 %v4295, %v4360
        %v4362 = vadd.f32 %v4299, %v4360
        %v4363 = vadd.f32 %v4303, %v4360
        %v4364 = vadd.f32 %v4307, %v4360
        %v4365 = vadd.f32 %v4311, %v4360
        %v4366 = vadd.f32 %v4315, %v4360
        %v4367 = vadd.f32 %v4319, %v4360
        %v4368 = vadd.f32 %v4323, %v4360
        %v4369 = vadd.f32 %v4327, %v4360
        %v4370 = vadd.f32 %v4331, %v4360
        %v4371 = vadd.f32 %v4335, %v4360
        %v4372 = vadd.f32 %v4339, %v4360
        %v4373 = vadd.f32 %v4343, %v4360
        %v4374 = vadd.f32 %v4347, %v4360
        %v4375 = vadd.f32 %v4351, %v4360
        %v4376 = vadd.f32 %v4355, %v4360
        %s4377 = sld [smem:[#allocation3 + $0xf]]
        %v4378 = vstv %s4377
        %v4379 = vmul.f32 %v1221, %v4378
        %v4380 = vmul.f32 %v1228, %v4378
        %v4381 = vmul.f32 %v1235, %v4378
        %v4382 = vmul.f32 %v1242, %v4378
        %v4383 = vmul.f32 %v1249, %v4378
        %v4384 = vmul.f32 %v1256, %v4378
        %v4385 = vmul.f32 %v1263, %v4378
        %v4386 = vmul.f32 %v1270, %v4378
        %v4387 = vmul.f32 %v1277, %v4378
        %v4388 = vmul.f32 %v1284, %v4378
        %v4389 = vmul.f32 %v1291, %v4378
        %v4390 = vmul.f32 %v1298, %v4378
        %v4391 = vmul.f32 %v1305, %v4378
        %v4392 = vmul.f32 %v1312, %v4378
        %v4393 = vmul.f32 %v1319, %v4378
        %v4394 = vmul.f32 %v1326, %v4378
        %v4395 = vadd.f32 %v4361, %v4379
        %v4396 = vadd.f32 %v4362, %v4380
        %v4397 = vadd.f32 %v4363, %v4381
        %v4398 = vadd.f32 %v4364, %v4382
        %v4399 = vadd.f32 %v4365, %v4383
        %v4400 = vadd.f32 %v4366, %v4384
        %v4401 = vadd.f32 %v4367, %v4385
        %v4402 = vadd.f32 %v4368, %v4386
        %v4403 = vadd.f32 %v4369, %v4387
        %v4404 = vadd.f32 %v4370, %v4388
        %v4405 = vadd.f32 %v4371, %v4389
        %v4406 = vadd.f32 %v4372, %v4390
        %v4407 = vadd.f32 %v4373, %v4391
        %v4408 = vadd.f32 %v4374, %v4392
        %v4409 = vadd.f32 %v4375, %v4393
        %v4410 = vadd.f32 %v4376, %v4394
        %v4411 = vmax.f32 %v4395, 0.0
        %v4412 = vmax.f32 %v4396, 0.0
        %v4413 = vmax.f32 %v4397, 0.0
        %v4414 = vmax.f32 %v4398, 0.0
        %v4415 = vmax.f32 %v4399, 0.0
        %v4416 = vmax.f32 %v4400, 0.0
        %v4417 = vmax.f32 %v4401, 0.0
        %v4418 = vmax.f32 %v4402, 0.0
        %v4419 = vmax.f32 %v4403, 0.0
        %v4420 = vmax.f32 %v4404, 0.0
        %v4421 = vmax.f32 %v4405, 0.0
        %v4422 = vmax.f32 %v4406, 0.0
        %v4423 = vmax.f32 %v4407, 0.0
        %v4424 = vmax.f32 %v4408, 0.0
        %v4425 = vmax.f32 %v4409, 0.0
        %v4426 = vmax.f32 %v4410, 0.0
        %s4427 = sld [smem:[#allocation5 + $0xf]]
        %v4428 = vstv %s4427
        %v4429 = vmul.f32 %v4411, %v4428
        %v4430 = vmul.f32 %v4412, %v4428
        %v4431 = vmul.f32 %v4413, %v4428
        %v4432 = vmul.f32 %v4414, %v4428
        %v4433 = vmul.f32 %v4415, %v4428
        %v4434 = vmul.f32 %v4416, %v4428
        %v4435 = vmul.f32 %v4417, %v4428
        %v4436 = vmul.f32 %v4418, %v4428
        %v4437 = vmul.f32 %v4419, %v4428
        %v4438 = vmul.f32 %v4420, %v4428
        %v4439 = vmul.f32 %v4421, %v4428
        %v4440 = vmul.f32 %v4422, %v4428
        %v4441 = vmul.f32 %v4423, %v4428
        %v4442 = vmul.f32 %v4424, %v4428
        %v4443 = vmul.f32 %v4425, %v4428
        %v4444 = vmul.f32 %v4426, %v4428
        %v4445 = vadd.f32 %v4277, %v4429
        %v4446 = vadd.f32 %v4278, %v4430
        %v4447 = vadd.f32 %v4279, %v4431
        %v4448 = vadd.f32 %v4280, %v4432
        %v4449 = vadd.f32 %v4281, %v4433
        %v4450 = vadd.f32 %v4282, %v4434
        %v4451 = vadd.f32 %v4283, %v4435
        %v4452 = vadd.f32 %v4284, %v4436
        %v4453 = vadd.f32 %v4285, %v4437
        %v4454 = vadd.f32 %v4286, %v4438
        %v4455 = vadd.f32 %v4287, %v4439
        %v4456 = vadd.f32 %v4288, %v4440
        %v4457 = vadd.f32 %v4289, %v4441
        %v4458 = vadd.f32 %v4290, %v4442
        %v4459 = vadd.f32 %v4291, %v4443
        %v4460 = vadd.f32 %v4292, %v4444
        %4461 = vset.pattern.permute.xlu0 16
        %4462 = vperm.xlu0 %4461, %v1452
        %v4463 = vpop.permute.xlu0 %4462
        %4465 = vset.pattern.permute.xlu0 16
        %4466 = vperm.xlu0 %4465, %v1457
        %v4467 = vpop.permute.xlu0 %4466
        %4469 = vset.pattern.permute.xlu0 16
        %4470 = vperm.xlu0 %4469, %v1462
        %v4471 = vpop.permute.xlu0 %4470
        %4473 = vset.pattern.permute.xlu0 16
        %4474 = vperm.xlu0 %4473, %v1467
        %v4475 = vpop.permute.xlu0 %4474
        %4477 = vset.pattern.permute.xlu0 16
        %4478 = vperm.xlu0 %4477, %v1472
        %v4479 = vpop.permute.xlu0 %4478
        %4481 = vset.pattern.permute.xlu0 16
        %4482 = vperm.xlu0 %4481, %v1477
        %v4483 = vpop.permute.xlu0 %4482
        %4485 = vset.pattern.permute.xlu0 16
        %4486 = vperm.xlu0 %4485, %v1482
        %v4487 = vpop.permute.xlu0 %4486
        %4489 = vset.pattern.permute.xlu0 16
        %4490 = vperm.xlu0 %4489, %v1487
        %v4491 = vpop.permute.xlu0 %4490
        %4493 = vset.pattern.permute.xlu0 16
        %4494 = vperm.xlu0 %4493, %v1492
        %v4495 = vpop.permute.xlu0 %4494
        %4497 = vset.pattern.permute.xlu0 16
        %4498 = vperm.xlu0 %4497, %v1497
        %v4499 = vpop.permute.xlu0 %4498
        %4501 = vset.pattern.permute.xlu0 16
        %4502 = vperm.xlu0 %4501, %v1502
        %v4503 = vpop.permute.xlu0 %4502
        %4505 = vset.pattern.permute.xlu0 16
        %4506 = vperm.xlu0 %4505, %v1507
        %v4507 = vpop.permute.xlu0 %4506
        %4509 = vset.pattern.permute.xlu0 16
        %4510 = vperm.xlu0 %4509, %v1512
        %v4511 = vpop.permute.xlu0 %4510
        %4513 = vset.pattern.permute.xlu0 16
        %4514 = vperm.xlu0 %4513, %v1517
        %v4515 = vpop.permute.xlu0 %4514
        %4517 = vset.pattern.permute.xlu0 16
        %4518 = vperm.xlu0 %4517, %v1522
        %v4519 = vpop.permute.xlu0 %4518
        %4521 = vset.pattern.permute.xlu0 16
        %4522 = vperm.xlu0 %4521, %v1527
        %v4523 = vpop.permute.xlu0 %4522
        %v4525 = vlaneseq
        %v4526 = vshrl.u32 %v4525, 7
        %v4527 = vsub.s32 0, %v4526
        %v4528 = vrot.slane %v1743, %v4527
        %v4529 = vadd.f32 %v4463, %v4528
        %v4530 = vadd.f32 %v4467, %v4528
        %v4531 = vadd.f32 %v4471, %v4528
        %v4532 = vadd.f32 %v4475, %v4528
        %v4533 = vadd.f32 %v4479, %v4528
        %v4534 = vadd.f32 %v4483, %v4528
        %v4535 = vadd.f32 %v4487, %v4528
        %v4536 = vadd.f32 %v4491, %v4528
        %v4537 = vadd.f32 %v4495, %v4528
        %v4538 = vadd.f32 %v4499, %v4528
        %v4539 = vadd.f32 %v4503, %v4528
        %v4540 = vadd.f32 %v4507, %v4528
        %v4541 = vadd.f32 %v4511, %v4528
        %v4542 = vadd.f32 %v4515, %v4528
        %v4543 = vadd.f32 %v4519, %v4528
        %v4544 = vadd.f32 %v4523, %v4528
        %s4545 = sld [smem:[#allocation3 + $0x10]]
        %v4546 = vstv %s4545
        %v4547 = vmul.f32 %v1221, %v4546
        %v4548 = vmul.f32 %v1228, %v4546
        %v4549 = vmul.f32 %v1235, %v4546
        %v4550 = vmul.f32 %v1242, %v4546
        %v4551 = vmul.f32 %v1249, %v4546
        %v4552 = vmul.f32 %v1256, %v4546
        %v4553 = vmul.f32 %v1263, %v4546
        %v4554 = vmul.f32 %v1270, %v4546
        %v4555 = vmul.f32 %v1277, %v4546
        %v4556 = vmul.f32 %v1284, %v4546
        %v4557 = vmul.f32 %v1291, %v4546
        %v4558 = vmul.f32 %v1298, %v4546
        %v4559 = vmul.f32 %v1305, %v4546
        %v4560 = vmul.f32 %v1312, %v4546
        %v4561 = vmul.f32 %v1319, %v4546
        %v4562 = vmul.f32 %v1326, %v4546
        %v4563 = vadd.f32 %v4529, %v4547
        %v4564 = vadd.f32 %v4530, %v4548
        %v4565 = vadd.f32 %v4531, %v4549
        %v4566 = vadd.f32 %v4532, %v4550
        %v4567 = vadd.f32 %v4533, %v4551
        %v4568 = vadd.f32 %v4534, %v4552
        %v4569 = vadd.f32 %v4535, %v4553
        %v4570 = vadd.f32 %v4536, %v4554
        %v4571 = vadd.f32 %v4537, %v4555
        %v4572 = vadd.f32 %v4538, %v4556
        %v4573 = vadd.f32 %v4539, %v4557
        %v4574 = vadd.f32 %v4540, %v4558
        %v4575 = vadd.f32 %v4541, %v4559
        %v4576 = vadd.f32 %v4542, %v4560
        %v4577 = vadd.f32 %v4543, %v4561
        %v4578 = vadd.f32 %v4544, %v4562
        %v4579 = vmax.f32 %v4563, 0.0
        %v4580 = vmax.f32 %v4564, 0.0
        %v4581 = vmax.f32 %v4565, 0.0
        %v4582 = vmax.f32 %v4566, 0.0
        %v4583 = vmax.f32 %v4567, 0.0
        %v4584 = vmax.f32 %v4568, 0.0
        %v4585 = vmax.f32 %v4569, 0.0
        %v4586 = vmax.f32 %v4570, 0.0
        %v4587 = vmax.f32 %v4571, 0.0
        %v4588 = vmax.f32 %v4572, 0.0
        %v4589 = vmax.f32 %v4573, 0.0
        %v4590 = vmax.f32 %v4574, 0.0
        %v4591 = vmax.f32 %v4575, 0.0
        %v4592 = vmax.f32 %v4576, 0.0
        %v4593 = vmax.f32 %v4577, 0.0
        %v4594 = vmax.f32 %v4578, 0.0
        %s4595 = sld [smem:[#allocation5 + $0x10]]
        %v4596 = vstv %s4595
        %v4597 = vmul.f32 %v4579, %v4596
        %v4598 = vmul.f32 %v4580, %v4596
        %v4599 = vmul.f32 %v4581, %v4596
        %v4600 = vmul.f32 %v4582, %v4596
        %v4601 = vmul.f32 %v4583, %v4596
        %v4602 = vmul.f32 %v4584, %v4596
        %v4603 = vmul.f32 %v4585, %v4596
        %v4604 = vmul.f32 %v4586, %v4596
        %v4605 = vmul.f32 %v4587, %v4596
        %v4606 = vmul.f32 %v4588, %v4596
        %v4607 = vmul.f32 %v4589, %v4596
        %v4608 = vmul.f32 %v4590, %v4596
        %v4609 = vmul.f32 %v4591, %v4596
        %v4610 = vmul.f32 %v4592, %v4596
        %v4611 = vmul.f32 %v4593, %v4596
        %v4612 = vmul.f32 %v4594, %v4596
        %v4613 = vadd.f32 %v4445, %v4597
        %v4614 = vadd.f32 %v4446, %v4598
        %v4615 = vadd.f32 %v4447, %v4599
        %v4616 = vadd.f32 %v4448, %v4600
        %v4617 = vadd.f32 %v4449, %v4601
        %v4618 = vadd.f32 %v4450, %v4602
        %v4619 = vadd.f32 %v4451, %v4603
        %v4620 = vadd.f32 %v4452, %v4604
        %v4621 = vadd.f32 %v4453, %v4605
        %v4622 = vadd.f32 %v4454, %v4606
        %v4623 = vadd.f32 %v4455, %v4607
        %v4624 = vadd.f32 %v4456, %v4608
        %v4625 = vadd.f32 %v4457, %v4609
        %v4626 = vadd.f32 %v4458, %v4610
        %v4627 = vadd.f32 %v4459, %v4611
        %v4628 = vadd.f32 %v4460, %v4612
        %4629 = vset.pattern.permute.xlu0 17
        %4630 = vperm.xlu0 %4629, %v1452
        %v4631 = vpop.permute.xlu0 %4630
        %4633 = vset.pattern.permute.xlu0 17
        %4634 = vperm.xlu0 %4633, %v1457
        %v4635 = vpop.permute.xlu0 %4634
        %4637 = vset.pattern.permute.xlu0 17
        %4638 = vperm.xlu0 %4637, %v1462
        %v4639 = vpop.permute.xlu0 %4638
        %4641 = vset.pattern.permute.xlu0 17
        %4642 = vperm.xlu0 %4641, %v1467
        %v4643 = vpop.permute.xlu0 %4642
        %4645 = vset.pattern.permute.xlu0 17
        %4646 = vperm.xlu0 %4645, %v1472
        %v4647 = vpop.permute.xlu0 %4646
        %4649 = vset.pattern.permute.xlu0 17
        %4650 = vperm.xlu0 %4649, %v1477
        %v4651 = vpop.permute.xlu0 %4650
        %4653 = vset.pattern.permute.xlu0 17
        %4654 = vperm.xlu0 %4653, %v1482
        %v4655 = vpop.permute.xlu0 %4654
        %4657 = vset.pattern.permute.xlu0 17
        %4658 = vperm.xlu0 %4657, %v1487
        %v4659 = vpop.permute.xlu0 %4658
        %4661 = vset.pattern.permute.xlu0 17
        %4662 = vperm.xlu0 %4661, %v1492
        %v4663 = vpop.permute.xlu0 %4662
        %4665 = vset.pattern.permute.xlu0 17
        %4666 = vperm.xlu0 %4665, %v1497
        %v4667 = vpop.permute.xlu0 %4666
        %4669 = vset.pattern.permute.xlu0 17
        %4670 = vperm.xlu0 %4669, %v1502
        %v4671 = vpop.permute.xlu0 %4670
        %4673 = vset.pattern.permute.xlu0 17
        %4674 = vperm.xlu0 %4673, %v1507
        %v4675 = vpop.permute.xlu0 %4674
        %4677 = vset.pattern.permute.xlu0 17
        %4678 = vperm.xlu0 %4677, %v1512
        %v4679 = vpop.permute.xlu0 %4678
        %4681 = vset.pattern.permute.xlu0 17
        %4682 = vperm.xlu0 %4681, %v1517
        %v4683 = vpop.permute.xlu0 %4682
        %4685 = vset.pattern.permute.xlu0 17
        %4686 = vperm.xlu0 %4685, %v1522
        %v4687 = vpop.permute.xlu0 %4686
        %4689 = vset.pattern.permute.xlu0 17
        %4690 = vperm.xlu0 %4689, %v1527
        %v4691 = vpop.permute.xlu0 %4690
        %v4693 = vlaneseq
        %v4694 = vshrl.u32 %v4693, 7
        %v4695 = vsub.s32 1, %v4694
        %v4696 = vrot.slane %v1743, %v4695
        %v4697 = vadd.f32 %v4631, %v4696
        %v4698 = vadd.f32 %v4635, %v4696
        %v4699 = vadd.f32 %v4639, %v4696
        %v4700 = vadd.f32 %v4643, %v4696
        %v4701 = vadd.f32 %v4647, %v4696
        %v4702 = vadd.f32 %v4651, %v4696
        %v4703 = vadd.f32 %v4655, %v4696
        %v4704 = vadd.f32 %v4659, %v4696
        %v4705 = vadd.f32 %v4663, %v4696
        %v4706 = vadd.f32 %v4667, %v4696
        %v4707 = vadd.f32 %v4671, %v4696
        %v4708 = vadd.f32 %v4675, %v4696
        %v4709 = vadd.f32 %v4679, %v4696
        %v4710 = vadd.f32 %v4683, %v4696
        %v4711 = vadd.f32 %v4687, %v4696
        %v4712 = vadd.f32 %v4691, %v4696
        %s4713 = sld [smem:[#allocation3 + $0x11]]
        %v4714 = vstv %s4713
        %v4715 = vmul.f32 %v1221, %v4714
        %v4716 = vmul.f32 %v1228, %v4714
        %v4717 = vmul.f32 %v1235, %v4714
        %v4718 = vmul.f32 %v1242, %v4714
        %v4719 = vmul.f32 %v1249, %v4714
        %v4720 = vmul.f32 %v1256, %v4714
        %v4721 = vmul.f32 %v1263, %v4714
        %v4722 = vmul.f32 %v1270, %v4714
        %v4723 = vmul.f32 %v1277, %v4714
        %v4724 = vmul.f32 %v1284, %v4714
        %v4725 = vmul.f32 %v1291, %v4714
        %v4726 = vmul.f32 %v1298, %v4714
        %v4727 = vmul.f32 %v1305, %v4714
        %v4728 = vmul.f32 %v1312, %v4714
        %v4729 = vmul.f32 %v1319, %v4714
        %v4730 = vmul.f32 %v1326, %v4714
        %v4731 = vadd.f32 %v4697, %v4715
        %v4732 = vadd.f32 %v4698, %v4716
        %v4733 = vadd.f32 %v4699, %v4717
        %v4734 = vadd.f32 %v4700, %v4718
        %v4735 = vadd.f32 %v4701, %v4719
        %v4736 = vadd.f32 %v4702, %v4720
        %v4737 = vadd.f32 %v4703, %v4721
        %v4738 = vadd.f32 %v4704, %v4722
        %v4739 = vadd.f32 %v4705, %v4723
        %v4740 = vadd.f32 %v4706, %v4724
        %v4741 = vadd.f32 %v4707, %v4725
        %v4742 = vadd.f32 %v4708, %v4726
        %v4743 = vadd.f32 %v4709, %v4727
        %v4744 = vadd.f32 %v4710, %v4728
        %v4745 = vadd.f32 %v4711, %v4729
        %v4746 = vadd.f32 %v4712, %v4730
        %v4747 = vmax.f32 %v4731, 0.0
        %v4748 = vmax.f32 %v4732, 0.0
        %v4749 = vmax.f32 %v4733, 0.0
        %v4750 = vmax.f32 %v4734, 0.0
        %v4751 = vmax.f32 %v4735, 0.0
        %v4752 = vmax.f32 %v4736, 0.0
        %v4753 = vmax.f32 %v4737, 0.0
        %v4754 = vmax.f32 %v4738, 0.0
        %v4755 = vmax.f32 %v4739, 0.0
        %v4756 = vmax.f32 %v4740, 0.0
        %v4757 = vmax.f32 %v4741, 0.0
        %v4758 = vmax.f32 %v4742, 0.0
        %v4759 = vmax.f32 %v4743, 0.0
        %v4760 = vmax.f32 %v4744, 0.0
        %v4761 = vmax.f32 %v4745, 0.0
        %v4762 = vmax.f32 %v4746, 0.0
        %s4763 = sld [smem:[#allocation5 + $0x11]]
        %v4764 = vstv %s4763
        %v4765 = vmul.f32 %v4747, %v4764
        %v4766 = vmul.f32 %v4748, %v4764
        %v4767 = vmul.f32 %v4749, %v4764
        %v4768 = vmul.f32 %v4750, %v4764
        %v4769 = vmul.f32 %v4751, %v4764
        %v4770 = vmul.f32 %v4752, %v4764
        %v4771 = vmul.f32 %v4753, %v4764
        %v4772 = vmul.f32 %v4754, %v4764
        %v4773 = vmul.f32 %v4755, %v4764
        %v4774 = vmul.f32 %v4756, %v4764
        %v4775 = vmul.f32 %v4757, %v4764
        %v4776 = vmul.f32 %v4758, %v4764
        %v4777 = vmul.f32 %v4759, %v4764
        %v4778 = vmul.f32 %v4760, %v4764
        %v4779 = vmul.f32 %v4761, %v4764
        %v4780 = vmul.f32 %v4762, %v4764
        %v4781 = vadd.f32 %v4613, %v4765
        %v4782 = vadd.f32 %v4614, %v4766
        %v4783 = vadd.f32 %v4615, %v4767
        %v4784 = vadd.f32 %v4616, %v4768
        %v4785 = vadd.f32 %v4617, %v4769
        %v4786 = vadd.f32 %v4618, %v4770
        %v4787 = vadd.f32 %v4619, %v4771
        %v4788 = vadd.f32 %v4620, %v4772
        %v4789 = vadd.f32 %v4621, %v4773
        %v4790 = vadd.f32 %v4622, %v4774
        %v4791 = vadd.f32 %v4623, %v4775
        %v4792 = vadd.f32 %v4624, %v4776
        %v4793 = vadd.f32 %v4625, %v4777
        %v4794 = vadd.f32 %v4626, %v4778
        %v4795 = vadd.f32 %v4627, %v4779
        %v4796 = vadd.f32 %v4628, %v4780
        %4797 = vset.pattern.permute.xlu0 18
        %4798 = vperm.xlu0 %4797, %v1452
        %v4799 = vpop.permute.xlu0 %4798
        %4801 = vset.pattern.permute.xlu0 18
        %4802 = vperm.xlu0 %4801, %v1457
        %v4803 = vpop.permute.xlu0 %4802
        %4805 = vset.pattern.permute.xlu0 18
        %4806 = vperm.xlu0 %4805, %v1462
        %v4807 = vpop.permute.xlu0 %4806
        %4809 = vset.pattern.permute.xlu0 18
        %4810 = vperm.xlu0 %4809, %v1467
        %v4811 = vpop.permute.xlu0 %4810
        %4813 = vset.pattern.permute.xlu0 18
        %4814 = vperm.xlu0 %4813, %v1472
        %v4815 = vpop.permute.xlu0 %4814
        %4817 = vset.pattern.permute.xlu0 18
        %4818 = vperm.xlu0 %4817, %v1477
        %v4819 = vpop.permute.xlu0 %4818
        %4821 = vset.pattern.permute.xlu0 18
        %4822 = vperm.xlu0 %4821, %v1482
        %v4823 = vpop.permute.xlu0 %4822
        %4825 = vset.pattern.permute.xlu0 18
        %4826 = vperm.xlu0 %4825, %v1487
        %v4827 = vpop.permute.xlu0 %4826
        %4829 = vset.pattern.permute.xlu0 18
        %4830 = vperm.xlu0 %4829, %v1492
        %v4831 = vpop.permute.xlu0 %4830
        %4833 = vset.pattern.permute.xlu0 18
        %4834 = vperm.xlu0 %4833, %v1497
        %v4835 = vpop.permute.xlu0 %4834
        %4837 = vset.pattern.permute.xlu0 18
        %4838 = vperm.xlu0 %4837, %v1502
        %v4839 = vpop.permute.xlu0 %4838
        %4841 = vset.pattern.permute.xlu0 18
        %4842 = vperm.xlu0 %4841, %v1507
        %v4843 = vpop.permute.xlu0 %4842
        %4845 = vset.pattern.permute.xlu0 18
        %4846 = vperm.xlu0 %4845, %v1512
        %v4847 = vpop.permute.xlu0 %4846
        %4849 = vset.pattern.permute.xlu0 18
        %4850 = vperm.xlu0 %4849, %v1517
        %v4851 = vpop.permute.xlu0 %4850
        %4853 = vset.pattern.permute.xlu0 18
        %4854 = vperm.xlu0 %4853, %v1522
        %v4855 = vpop.permute.xlu0 %4854
        %4857 = vset.pattern.permute.xlu0 18
        %4858 = vperm.xlu0 %4857, %v1527
        %v4859 = vpop.permute.xlu0 %4858
        %v4861 = vlaneseq
        %v4862 = vshrl.u32 %v4861, 7
        %v4863 = vsub.s32 2, %v4862
        %v4864 = vrot.slane %v1743, %v4863
        %v4865 = vadd.f32 %v4799, %v4864
        %v4866 = vadd.f32 %v4803, %v4864
        %v4867 = vadd.f32 %v4807, %v4864
        %v4868 = vadd.f32 %v4811, %v4864
        %v4869 = vadd.f32 %v4815, %v4864
        %v4870 = vadd.f32 %v4819, %v4864
        %v4871 = vadd.f32 %v4823, %v4864
        %v4872 = vadd.f32 %v4827, %v4864
        %v4873 = vadd.f32 %v4831, %v4864
        %v4874 = vadd.f32 %v4835, %v4864
        %v4875 = vadd.f32 %v4839, %v4864
        %v4876 = vadd.f32 %v4843, %v4864
        %v4877 = vadd.f32 %v4847, %v4864
        %v4878 = vadd.f32 %v4851, %v4864
        %v4879 = vadd.f32 %v4855, %v4864
        %v4880 = vadd.f32 %v4859, %v4864
        %s4881 = sld [smem:[#allocation3 + $0x12]]
        %v4882 = vstv %s4881
        %v4883 = vmul.f32 %v1221, %v4882
        %v4884 = vmul.f32 %v1228, %v4882
        %v4885 = vmul.f32 %v1235, %v4882
        %v4886 = vmul.f32 %v1242, %v4882
        %v4887 = vmul.f32 %v1249, %v4882
        %v4888 = vmul.f32 %v1256, %v4882
        %v4889 = vmul.f32 %v1263, %v4882
        %v4890 = vmul.f32 %v1270, %v4882
        %v4891 = vmul.f32 %v1277, %v4882
        %v4892 = vmul.f32 %v1284, %v4882
        %v4893 = vmul.f32 %v1291, %v4882
        %v4894 = vmul.f32 %v1298, %v4882
        %v4895 = vmul.f32 %v1305, %v4882
        %v4896 = vmul.f32 %v1312, %v4882
        %v4897 = vmul.f32 %v1319, %v4882
        %v4898 = vmul.f32 %v1326, %v4882
        %v4899 = vadd.f32 %v4865, %v4883
        %v4900 = vadd.f32 %v4866, %v4884
        %v4901 = vadd.f32 %v4867, %v4885
        %v4902 = vadd.f32 %v4868, %v4886
        %v4903 = vadd.f32 %v4869, %v4887
        %v4904 = vadd.f32 %v4870, %v4888
        %v4905 = vadd.f32 %v4871, %v4889
        %v4906 = vadd.f32 %v4872, %v4890
        %v4907 = vadd.f32 %v4873, %v4891
        %v4908 = vadd.f32 %v4874, %v4892
        %v4909 = vadd.f32 %v4875, %v4893
        %v4910 = vadd.f32 %v4876, %v4894
        %v4911 = vadd.f32 %v4877, %v4895
        %v4912 = vadd.f32 %v4878, %v4896
        %v4913 = vadd.f32 %v4879, %v4897
        %v4914 = vadd.f32 %v4880, %v4898
        %v4915 = vmax.f32 %v4899, 0.0
        %v4916 = vmax.f32 %v4900, 0.0
        %v4917 = vmax.f32 %v4901, 0.0
        %v4918 = vmax.f32 %v4902, 0.0
        %v4919 = vmax.f32 %v4903, 0.0
        %v4920 = vmax.f32 %v4904, 0.0
        %v4921 = vmax.f32 %v4905, 0.0
        %v4922 = vmax.f32 %v4906, 0.0
        %v4923 = vmax.f32 %v4907, 0.0
        %v4924 = vmax.f32 %v4908, 0.0
        %v4925 = vmax.f32 %v4909, 0.0
        %v4926 = vmax.f32 %v4910, 0.0
        %v4927 = vmax.f32 %v4911, 0.0
        %v4928 = vmax.f32 %v4912, 0.0
        %v4929 = vmax.f32 %v4913, 0.0
        %v4930 = vmax.f32 %v4914, 0.0
        %s4931 = sld [smem:[#allocation5 + $0x12]]
        %v4932 = vstv %s4931
        %v4933 = vmul.f32 %v4915, %v4932
        %v4934 = vmul.f32 %v4916, %v4932
        %v4935 = vmul.f32 %v4917, %v4932
        %v4936 = vmul.f32 %v4918, %v4932
        %v4937 = vmul.f32 %v4919, %v4932
        %v4938 = vmul.f32 %v4920, %v4932
        %v4939 = vmul.f32 %v4921, %v4932
        %v4940 = vmul.f32 %v4922, %v4932
        %v4941 = vmul.f32 %v4923, %v4932
        %v4942 = vmul.f32 %v4924, %v4932
        %v4943 = vmul.f32 %v4925, %v4932
        %v4944 = vmul.f32 %v4926, %v4932
        %v4945 = vmul.f32 %v4927, %v4932
        %v4946 = vmul.f32 %v4928, %v4932
        %v4947 = vmul.f32 %v4929, %v4932
        %v4948 = vmul.f32 %v4930, %v4932
        %v4949 = vadd.f32 %v4781, %v4933
        %v4950 = vadd.f32 %v4782, %v4934
        %v4951 = vadd.f32 %v4783, %v4935
        %v4952 = vadd.f32 %v4784, %v4936
        %v4953 = vadd.f32 %v4785, %v4937
        %v4954 = vadd.f32 %v4786, %v4938
        %v4955 = vadd.f32 %v4787, %v4939
        %v4956 = vadd.f32 %v4788, %v4940
        %v4957 = vadd.f32 %v4789, %v4941
        %v4958 = vadd.f32 %v4790, %v4942
        %v4959 = vadd.f32 %v4791, %v4943
        %v4960 = vadd.f32 %v4792, %v4944
        %v4961 = vadd.f32 %v4793, %v4945
        %v4962 = vadd.f32 %v4794, %v4946
        %v4963 = vadd.f32 %v4795, %v4947
        %v4964 = vadd.f32 %v4796, %v4948
        %4965 = vset.pattern.permute.xlu0 19
        %4966 = vperm.xlu0 %4965, %v1452
        %v4967 = vpop.permute.xlu0 %4966
        %4969 = vset.pattern.permute.xlu0 19
        %4970 = vperm.xlu0 %4969, %v1457
        %v4971 = vpop.permute.xlu0 %4970
        %4973 = vset.pattern.permute.xlu0 19
        %4974 = vperm.xlu0 %4973, %v1462
        %v4975 = vpop.permute.xlu0 %4974
        %4977 = vset.pattern.permute.xlu0 19
        %4978 = vperm.xlu0 %4977, %v1467
        %v4979 = vpop.permute.xlu0 %4978
        %4981 = vset.pattern.permute.xlu0 19
        %4982 = vperm.xlu0 %4981, %v1472
        %v4983 = vpop.permute.xlu0 %4982
        %4985 = vset.pattern.permute.xlu0 19
        %4986 = vperm.xlu0 %4985, %v1477
        %v4987 = vpop.permute.xlu0 %4986
        %4989 = vset.pattern.permute.xlu0 19
        %4990 = vperm.xlu0 %4989, %v1482
        %v4991 = vpop.permute.xlu0 %4990
        %4993 = vset.pattern.permute.xlu0 19
        %4994 = vperm.xlu0 %4993, %v1487
        %v4995 = vpop.permute.xlu0 %4994
        %4997 = vset.pattern.permute.xlu0 19
        %4998 = vperm.xlu0 %4997, %v1492
        %v4999 = vpop.permute.xlu0 %4998
        %5001 = vset.pattern.permute.xlu0 19
        %5002 = vperm.xlu0 %5001, %v1497
        %v5003 = vpop.permute.xlu0 %5002
        %5005 = vset.pattern.permute.xlu0 19
        %5006 = vperm.xlu0 %5005, %v1502
        %v5007 = vpop.permute.xlu0 %5006
        %5009 = vset.pattern.permute.xlu0 19
        %5010 = vperm.xlu0 %5009, %v1507
        %v5011 = vpop.permute.xlu0 %5010
        %5013 = vset.pattern.permute.xlu0 19
        %5014 = vperm.xlu0 %5013, %v1512
        %v5015 = vpop.permute.xlu0 %5014
        %5017 = vset.pattern.permute.xlu0 19
        %5018 = vperm.xlu0 %5017, %v1517
        %v5019 = vpop.permute.xlu0 %5018
        %5021 = vset.pattern.permute.xlu0 19
        %5022 = vperm.xlu0 %5021, %v1522
        %v5023 = vpop.permute.xlu0 %5022
        %5025 = vset.pattern.permute.xlu0 19
        %5026 = vperm.xlu0 %5025, %v1527
        %v5027 = vpop.permute.xlu0 %5026
        %v5029 = vlaneseq
        %v5030 = vshrl.u32 %v5029, 7
        %v5031 = vsub.s32 3, %v5030
        %v5032 = vrot.slane %v1743, %v5031
        %v5033 = vadd.f32 %v4967, %v5032
        %v5034 = vadd.f32 %v4971, %v5032
        %v5035 = vadd.f32 %v4975, %v5032
        %v5036 = vadd.f32 %v4979, %v5032
        %v5037 = vadd.f32 %v4983, %v5032
        %v5038 = vadd.f32 %v4987, %v5032
        %v5039 = vadd.f32 %v4991, %v5032
        %v5040 = vadd.f32 %v4995, %v5032
        %v5041 = vadd.f32 %v4999, %v5032
        %v5042 = vadd.f32 %v5003, %v5032
        %v5043 = vadd.f32 %v5007, %v5032
        %v5044 = vadd.f32 %v5011, %v5032
        %v5045 = vadd.f32 %v5015, %v5032
        %v5046 = vadd.f32 %v5019, %v5032
        %v5047 = vadd.f32 %v5023, %v5032
        %v5048 = vadd.f32 %v5027, %v5032
        %s5049 = sld [smem:[#allocation3 + $0x13]]
        %v5050 = vstv %s5049
        %v5051 = vmul.f32 %v1221, %v5050
        %v5052 = vmul.f32 %v1228, %v5050
        %v5053 = vmul.f32 %v1235, %v5050
        %v5054 = vmul.f32 %v1242, %v5050
        %v5055 = vmul.f32 %v1249, %v5050
        %v5056 = vmul.f32 %v1256, %v5050
        %v5057 = vmul.f32 %v1263, %v5050
        %v5058 = vmul.f32 %v1270, %v5050
        %v5059 = vmul.f32 %v1277, %v5050
        %v5060 = vmul.f32 %v1284, %v5050
        %v5061 = vmul.f32 %v1291, %v5050
        %v5062 = vmul.f32 %v1298, %v5050
        %v5063 = vmul.f32 %v1305, %v5050
        %v5064 = vmul.f32 %v1312, %v5050
        %v5065 = vmul.f32 %v1319, %v5050
        %v5066 = vmul.f32 %v1326, %v5050
        %v5067 = vadd.f32 %v5033, %v5051
        %v5068 = vadd.f32 %v5034, %v5052
        %v5069 = vadd.f32 %v5035, %v5053
        %v5070 = vadd.f32 %v5036, %v5054
        %v5071 = vadd.f32 %v5037, %v5055
        %v5072 = vadd.f32 %v5038, %v5056
        %v5073 = vadd.f32 %v5039, %v5057
        %v5074 = vadd.f32 %v5040, %v5058
        %v5075 = vadd.f32 %v5041, %v5059
        %v5076 = vadd.f32 %v5042, %v5060
        %v5077 = vadd.f32 %v5043, %v5061
        %v5078 = vadd.f32 %v5044, %v5062
        %v5079 = vadd.f32 %v5045, %v5063
        %v5080 = vadd.f32 %v5046, %v5064
        %v5081 = vadd.f32 %v5047, %v5065
        %v5082 = vadd.f32 %v5048, %v5066
        %v5083 = vmax.f32 %v5067, 0.0
        %v5084 = vmax.f32 %v5068, 0.0
        %v5085 = vmax.f32 %v5069, 0.0
        %v5086 = vmax.f32 %v5070, 0.0
        %v5087 = vmax.f32 %v5071, 0.0
        %v5088 = vmax.f32 %v5072, 0.0
        %v5089 = vmax.f32 %v5073, 0.0
        %v5090 = vmax.f32 %v5074, 0.0
        %v5091 = vmax.f32 %v5075, 0.0
        %v5092 = vmax.f32 %v5076, 0.0
        %v5093 = vmax.f32 %v5077, 0.0
        %v5094 = vmax.f32 %v5078, 0.0
        %v5095 = vmax.f32 %v5079, 0.0
        %v5096 = vmax.f32 %v5080, 0.0
        %v5097 = vmax.f32 %v5081, 0.0
        %v5098 = vmax.f32 %v5082, 0.0
        %s5099 = sld [smem:[#allocation5 + $0x13]]
        %v5100 = vstv %s5099
        %v5101 = vmul.f32 %v5083, %v5100
        %v5102 = vmul.f32 %v5084, %v5100
        %v5103 = vmul.f32 %v5085, %v5100
        %v5104 = vmul.f32 %v5086, %v5100
        %v5105 = vmul.f32 %v5087, %v5100
        %v5106 = vmul.f32 %v5088, %v5100
        %v5107 = vmul.f32 %v5089, %v5100
        %v5108 = vmul.f32 %v5090, %v5100
        %v5109 = vmul.f32 %v5091, %v5100
        %v5110 = vmul.f32 %v5092, %v5100
        %v5111 = vmul.f32 %v5093, %v5100
        %v5112 = vmul.f32 %v5094, %v5100
        %v5113 = vmul.f32 %v5095, %v5100
        %v5114 = vmul.f32 %v5096, %v5100
        %v5115 = vmul.f32 %v5097, %v5100
        %v5116 = vmul.f32 %v5098, %v5100
        %v5117 = vadd.f32 %v4949, %v5101
        %v5118 = vadd.f32 %v4950, %v5102
        %v5119 = vadd.f32 %v4951, %v5103
        %v5120 = vadd.f32 %v4952, %v5104
        %v5121 = vadd.f32 %v4953, %v5105
        %v5122 = vadd.f32 %v4954, %v5106
        %v5123 = vadd.f32 %v4955, %v5107
        %v5124 = vadd.f32 %v4956, %v5108
        %v5125 = vadd.f32 %v4957, %v5109
        %v5126 = vadd.f32 %v4958, %v5110
        %v5127 = vadd.f32 %v4959, %v5111
        %v5128 = vadd.f32 %v4960, %v5112
        %v5129 = vadd.f32 %v4961, %v5113
        %v5130 = vadd.f32 %v4962, %v5114
        %v5131 = vadd.f32 %v4963, %v5115
        %v5132 = vadd.f32 %v4964, %v5116
        %5133 = vset.pattern.permute.xlu0 20
        %5134 = vperm.xlu0 %5133, %v1452
        %v5135 = vpop.permute.xlu0 %5134
        %5137 = vset.pattern.permute.xlu0 20
        %5138 = vperm.xlu0 %5137, %v1457
        %v5139 = vpop.permute.xlu0 %5138
        %5141 = vset.pattern.permute.xlu0 20
        %5142 = vperm.xlu0 %5141, %v1462
        %v5143 = vpop.permute.xlu0 %5142
        %5145 = vset.pattern.permute.xlu0 20
        %5146 = vperm.xlu0 %5145, %v1467
        %v5147 = vpop.permute.xlu0 %5146
        %5149 = vset.pattern.permute.xlu0 20
        %5150 = vperm.xlu0 %5149, %v1472
        %v5151 = vpop.permute.xlu0 %5150
        %5153 = vset.pattern.permute.xlu0 20
        %5154 = vperm.xlu0 %5153, %v1477
        %v5155 = vpop.permute.xlu0 %5154
        %5157 = vset.pattern.permute.xlu0 20
        %5158 = vperm.xlu0 %5157, %v1482
        %v5159 = vpop.permute.xlu0 %5158
        %5161 = vset.pattern.permute.xlu0 20
        %5162 = vperm.xlu0 %5161, %v1487
        %v5163 = vpop.permute.xlu0 %5162
        %5165 = vset.pattern.permute.xlu0 20
        %5166 = vperm.xlu0 %5165, %v1492
        %v5167 = vpop.permute.xlu0 %5166
        %5169 = vset.pattern.permute.xlu0 20
        %5170 = vperm.xlu0 %5169, %v1497
        %v5171 = vpop.permute.xlu0 %5170
        %5173 = vset.pattern.permute.xlu0 20
        %5174 = vperm.xlu0 %5173, %v1502
        %v5175 = vpop.permute.xlu0 %5174
        %5177 = vset.pattern.permute.xlu0 20
        %5178 = vperm.xlu0 %5177, %v1507
        %v5179 = vpop.permute.xlu0 %5178
        %5181 = vset.pattern.permute.xlu0 20
        %5182 = vperm.xlu0 %5181, %v1512
        %v5183 = vpop.permute.xlu0 %5182
        %5185 = vset.pattern.permute.xlu0 20
        %5186 = vperm.xlu0 %5185, %v1517
        %v5187 = vpop.permute.xlu0 %5186
        %5189 = vset.pattern.permute.xlu0 20
        %5190 = vperm.xlu0 %5189, %v1522
        %v5191 = vpop.permute.xlu0 %5190
        %5193 = vset.pattern.permute.xlu0 20
        %5194 = vperm.xlu0 %5193, %v1527
        %v5195 = vpop.permute.xlu0 %5194
        %v5197 = vlaneseq
        %v5198 = vshrl.u32 %v5197, 7
        %v5199 = vsub.s32 4, %v5198
        %v5200 = vrot.slane %v1743, %v5199
        %v5201 = vadd.f32 %v5135, %v5200
        %v5202 = vadd.f32 %v5139, %v5200
        %v5203 = vadd.f32 %v5143, %v5200
        %v5204 = vadd.f32 %v5147, %v5200
        %v5205 = vadd.f32 %v5151, %v5200
        %v5206 = vadd.f32 %v5155, %v5200
        %v5207 = vadd.f32 %v5159, %v5200
        %v5208 = vadd.f32 %v5163, %v5200
        %v5209 = vadd.f32 %v5167, %v5200
        %v5210 = vadd.f32 %v5171, %v5200
        %v5211 = vadd.f32 %v5175, %v5200
        %v5212 = vadd.f32 %v5179, %v5200
        %v5213 = vadd.f32 %v5183, %v5200
        %v5214 = vadd.f32 %v5187, %v5200
        %v5215 = vadd.f32 %v5191, %v5200
        %v5216 = vadd.f32 %v5195, %v5200
        %s5217 = sld [smem:[#allocation3 + $0x14]]
        %v5218 = vstv %s5217
        %v5219 = vmul.f32 %v1221, %v5218
        %v5220 = vmul.f32 %v1228, %v5218
        %v5221 = vmul.f32 %v1235, %v5218
        %v5222 = vmul.f32 %v1242, %v5218
        %v5223 = vmul.f32 %v1249, %v5218
        %v5224 = vmul.f32 %v1256, %v5218
        %v5225 = vmul.f32 %v1263, %v5218
        %v5226 = vmul.f32 %v1270, %v5218
        %v5227 = vmul.f32 %v1277, %v5218
        %v5228 = vmul.f32 %v1284, %v5218
        %v5229 = vmul.f32 %v1291, %v5218
        %v5230 = vmul.f32 %v1298, %v5218
        %v5231 = vmul.f32 %v1305, %v5218
        %v5232 = vmul.f32 %v1312, %v5218
        %v5233 = vmul.f32 %v1319, %v5218
        %v5234 = vmul.f32 %v1326, %v5218
        %v5235 = vadd.f32 %v5201, %v5219
        %v5236 = vadd.f32 %v5202, %v5220
        %v5237 = vadd.f32 %v5203, %v5221
        %v5238 = vadd.f32 %v5204, %v5222
        %v5239 = vadd.f32 %v5205, %v5223
        %v5240 = vadd.f32 %v5206, %v5224
        %v5241 = vadd.f32 %v5207, %v5225
        %v5242 = vadd.f32 %v5208, %v5226
        %v5243 = vadd.f32 %v5209, %v5227
        %v5244 = vadd.f32 %v5210, %v5228
        %v5245 = vadd.f32 %v5211, %v5229
        %v5246 = vadd.f32 %v5212, %v5230
        %v5247 = vadd.f32 %v5213, %v5231
        %v5248 = vadd.f32 %v5214, %v5232
        %v5249 = vadd.f32 %v5215, %v5233
        %v5250 = vadd.f32 %v5216, %v5234
        %v5251 = vmax.f32 %v5235, 0.0
        %v5252 = vmax.f32 %v5236, 0.0
        %v5253 = vmax.f32 %v5237, 0.0
        %v5254 = vmax.f32 %v5238, 0.0
        %v5255 = vmax.f32 %v5239, 0.0
        %v5256 = vmax.f32 %v5240, 0.0
        %v5257 = vmax.f32 %v5241, 0.0
        %v5258 = vmax.f32 %v5242, 0.0
        %v5259 = vmax.f32 %v5243, 0.0
        %v5260 = vmax.f32 %v5244, 0.0
        %v5261 = vmax.f32 %v5245, 0.0
        %v5262 = vmax.f32 %v5246, 0.0
        %v5263 = vmax.f32 %v5247, 0.0
        %v5264 = vmax.f32 %v5248, 0.0
        %v5265 = vmax.f32 %v5249, 0.0
        %v5266 = vmax.f32 %v5250, 0.0
        %s5267 = sld [smem:[#allocation5 + $0x14]]
        %v5268 = vstv %s5267
        %v5269 = vmul.f32 %v5251, %v5268
        %v5270 = vmul.f32 %v5252, %v5268
        %v5271 = vmul.f32 %v5253, %v5268
        %v5272 = vmul.f32 %v5254, %v5268
        %v5273 = vmul.f32 %v5255, %v5268
        %v5274 = vmul.f32 %v5256, %v5268
        %v5275 = vmul.f32 %v5257, %v5268
        %v5276 = vmul.f32 %v5258, %v5268
        %v5277 = vmul.f32 %v5259, %v5268
        %v5278 = vmul.f32 %v5260, %v5268
        %v5279 = vmul.f32 %v5261, %v5268
        %v5280 = vmul.f32 %v5262, %v5268
        %v5281 = vmul.f32 %v5263, %v5268
        %v5282 = vmul.f32 %v5264, %v5268
        %v5283 = vmul.f32 %v5265, %v5268
        %v5284 = vmul.f32 %v5266, %v5268
        %v5285 = vadd.f32 %v5117, %v5269
        %v5286 = vadd.f32 %v5118, %v5270
        %v5287 = vadd.f32 %v5119, %v5271
        %v5288 = vadd.f32 %v5120, %v5272
        %v5289 = vadd.f32 %v5121, %v5273
        %v5290 = vadd.f32 %v5122, %v5274
        %v5291 = vadd.f32 %v5123, %v5275
        %v5292 = vadd.f32 %v5124, %v5276
        %v5293 = vadd.f32 %v5125, %v5277
        %v5294 = vadd.f32 %v5126, %v5278
        %v5295 = vadd.f32 %v5127, %v5279
        %v5296 = vadd.f32 %v5128, %v5280
        %v5297 = vadd.f32 %v5129, %v5281
        %v5298 = vadd.f32 %v5130, %v5282
        %v5299 = vadd.f32 %v5131, %v5283
        %v5300 = vadd.f32 %v5132, %v5284
        %5301 = vset.pattern.permute.xlu0 21
        %5302 = vperm.xlu0 %5301, %v1452
        %v5303 = vpop.permute.xlu0 %5302
        %5305 = vset.pattern.permute.xlu0 21
        %5306 = vperm.xlu0 %5305, %v1457
        %v5307 = vpop.permute.xlu0 %5306
        %5309 = vset.pattern.permute.xlu0 21
        %5310 = vperm.xlu0 %5309, %v1462
        %v5311 = vpop.permute.xlu0 %5310
        %5313 = vset.pattern.permute.xlu0 21
        %5314 = vperm.xlu0 %5313, %v1467
        %v5315 = vpop.permute.xlu0 %5314
        %5317 = vset.pattern.permute.xlu0 21
        %5318 = vperm.xlu0 %5317, %v1472
        %v5319 = vpop.permute.xlu0 %5318
        %5321 = vset.pattern.permute.xlu0 21
        %5322 = vperm.xlu0 %5321, %v1477
        %v5323 = vpop.permute.xlu0 %5322
        %5325 = vset.pattern.permute.xlu0 21
        %5326 = vperm.xlu0 %5325, %v1482
        %v5327 = vpop.permute.xlu0 %5326
        %5329 = vset.pattern.permute.xlu0 21
        %5330 = vperm.xlu0 %5329, %v1487
        %v5331 = vpop.permute.xlu0 %5330
        %5333 = vset.pattern.permute.xlu0 21
        %5334 = vperm.xlu0 %5333, %v1492
        %v5335 = vpop.permute.xlu0 %5334
        %5337 = vset.pattern.permute.xlu0 21
        %5338 = vperm.xlu0 %5337, %v1497
        %v5339 = vpop.permute.xlu0 %5338
        %5341 = vset.pattern.permute.xlu0 21
        %5342 = vperm.xlu0 %5341, %v1502
        %v5343 = vpop.permute.xlu0 %5342
        %5345 = vset.pattern.permute.xlu0 21
        %5346 = vperm.xlu0 %5345, %v1507
        %v5347 = vpop.permute.xlu0 %5346
        %5349 = vset.pattern.permute.xlu0 21
        %5350 = vperm.xlu0 %5349, %v1512
        %v5351 = vpop.permute.xlu0 %5350
        %5353 = vset.pattern.permute.xlu0 21
        %5354 = vperm.xlu0 %5353, %v1517
        %v5355 = vpop.permute.xlu0 %5354
        %5357 = vset.pattern.permute.xlu0 21
        %5358 = vperm.xlu0 %5357, %v1522
        %v5359 = vpop.permute.xlu0 %5358
        %5361 = vset.pattern.permute.xlu0 21
        %5362 = vperm.xlu0 %5361, %v1527
        %v5363 = vpop.permute.xlu0 %5362
        %v5365 = vlaneseq
        %v5366 = vshrl.u32 %v5365, 7
        %v5367 = vsub.s32 5, %v5366
        %v5368 = vrot.slane %v1743, %v5367
        %v5369 = vadd.f32 %v5303, %v5368
        %v5370 = vadd.f32 %v5307, %v5368
        %v5371 = vadd.f32 %v5311, %v5368
        %v5372 = vadd.f32 %v5315, %v5368
        %v5373 = vadd.f32 %v5319, %v5368
        %v5374 = vadd.f32 %v5323, %v5368
        %v5375 = vadd.f32 %v5327, %v5368
        %v5376 = vadd.f32 %v5331, %v5368
        %v5377 = vadd.f32 %v5335, %v5368
        %v5378 = vadd.f32 %v5339, %v5368
        %v5379 = vadd.f32 %v5343, %v5368
        %v5380 = vadd.f32 %v5347, %v5368
        %v5381 = vadd.f32 %v5351, %v5368
        %v5382 = vadd.f32 %v5355, %v5368
        %v5383 = vadd.f32 %v5359, %v5368
        %v5384 = vadd.f32 %v5363, %v5368
        %s5385 = sld [smem:[#allocation3 + $0x15]]
        %v5386 = vstv %s5385
        %v5387 = vmul.f32 %v1221, %v5386
        %v5388 = vmul.f32 %v1228, %v5386
        %v5389 = vmul.f32 %v1235, %v5386
        %v5390 = vmul.f32 %v1242, %v5386
        %v5391 = vmul.f32 %v1249, %v5386
        %v5392 = vmul.f32 %v1256, %v5386
        %v5393 = vmul.f32 %v1263, %v5386
        %v5394 = vmul.f32 %v1270, %v5386
        %v5395 = vmul.f32 %v1277, %v5386
        %v5396 = vmul.f32 %v1284, %v5386
        %v5397 = vmul.f32 %v1291, %v5386
        %v5398 = vmul.f32 %v1298, %v5386
        %v5399 = vmul.f32 %v1305, %v5386
        %v5400 = vmul.f32 %v1312, %v5386
        %v5401 = vmul.f32 %v1319, %v5386
        %v5402 = vmul.f32 %v1326, %v5386
        %v5403 = vadd.f32 %v5369, %v5387
        %v5404 = vadd.f32 %v5370, %v5388
        %v5405 = vadd.f32 %v5371, %v5389
        %v5406 = vadd.f32 %v5372, %v5390
        %v5407 = vadd.f32 %v5373, %v5391
        %v5408 = vadd.f32 %v5374, %v5392
        %v5409 = vadd.f32 %v5375, %v5393
        %v5410 = vadd.f32 %v5376, %v5394
        %v5411 = vadd.f32 %v5377, %v5395
        %v5412 = vadd.f32 %v5378, %v5396
        %v5413 = vadd.f32 %v5379, %v5397
        %v5414 = vadd.f32 %v5380, %v5398
        %v5415 = vadd.f32 %v5381, %v5399
        %v5416 = vadd.f32 %v5382, %v5400
        %v5417 = vadd.f32 %v5383, %v5401
        %v5418 = vadd.f32 %v5384, %v5402
        %v5419 = vmax.f32 %v5403, 0.0
        %v5420 = vmax.f32 %v5404, 0.0
        %v5421 = vmax.f32 %v5405, 0.0
        %v5422 = vmax.f32 %v5406, 0.0
        %v5423 = vmax.f32 %v5407, 0.0
        %v5424 = vmax.f32 %v5408, 0.0
        %v5425 = vmax.f32 %v5409, 0.0
        %v5426 = vmax.f32 %v5410, 0.0
        %v5427 = vmax.f32 %v5411, 0.0
        %v5428 = vmax.f32 %v5412, 0.0
        %v5429 = vmax.f32 %v5413, 0.0
        %v5430 = vmax.f32 %v5414, 0.0
        %v5431 = vmax.f32 %v5415, 0.0
        %v5432 = vmax.f32 %v5416, 0.0
        %v5433 = vmax.f32 %v5417, 0.0
        %v5434 = vmax.f32 %v5418, 0.0
        %s5435 = sld [smem:[#allocation5 + $0x15]]
        %v5436 = vstv %s5435
        %v5437 = vmul.f32 %v5419, %v5436
        %v5438 = vmul.f32 %v5420, %v5436
        %v5439 = vmul.f32 %v5421, %v5436
        %v5440 = vmul.f32 %v5422, %v5436
        %v5441 = vmul.f32 %v5423, %v5436
        %v5442 = vmul.f32 %v5424, %v5436
        %v5443 = vmul.f32 %v5425, %v5436
        %v5444 = vmul.f32 %v5426, %v5436
        %v5445 = vmul.f32 %v5427, %v5436
        %v5446 = vmul.f32 %v5428, %v5436
        %v5447 = vmul.f32 %v5429, %v5436
        %v5448 = vmul.f32 %v5430, %v5436
        %v5449 = vmul.f32 %v5431, %v5436
        %v5450 = vmul.f32 %v5432, %v5436
        %v5451 = vmul.f32 %v5433, %v5436
        %v5452 = vmul.f32 %v5434, %v5436
        %v5453 = vadd.f32 %v5285, %v5437
        %v5454 = vadd.f32 %v5286, %v5438
        %v5455 = vadd.f32 %v5287, %v5439
        %v5456 = vadd.f32 %v5288, %v5440
        %v5457 = vadd.f32 %v5289, %v5441
        %v5458 = vadd.f32 %v5290, %v5442
        %v5459 = vadd.f32 %v5291, %v5443
        %v5460 = vadd.f32 %v5292, %v5444
        %v5461 = vadd.f32 %v5293, %v5445
        %v5462 = vadd.f32 %v5294, %v5446
        %v5463 = vadd.f32 %v5295, %v5447
        %v5464 = vadd.f32 %v5296, %v5448
        %v5465 = vadd.f32 %v5297, %v5449
        %v5466 = vadd.f32 %v5298, %v5450
        %v5467 = vadd.f32 %v5299, %v5451
        %v5468 = vadd.f32 %v5300, %v5452
        %5469 = vset.pattern.permute.xlu0 22
        %5470 = vperm.xlu0 %5469, %v1452
        %v5471 = vpop.permute.xlu0 %5470
        %5473 = vset.pattern.permute.xlu0 22
        %5474 = vperm.xlu0 %5473, %v1457
        %v5475 = vpop.permute.xlu0 %5474
        %5477 = vset.pattern.permute.xlu0 22
        %5478 = vperm.xlu0 %5477, %v1462
        %v5479 = vpop.permute.xlu0 %5478
        %5481 = vset.pattern.permute.xlu0 22
        %5482 = vperm.xlu0 %5481, %v1467
        %v5483 = vpop.permute.xlu0 %5482
        %5485 = vset.pattern.permute.xlu0 22
        %5486 = vperm.xlu0 %5485, %v1472
        %v5487 = vpop.permute.xlu0 %5486
        %5489 = vset.pattern.permute.xlu0 22
        %5490 = vperm.xlu0 %5489, %v1477
        %v5491 = vpop.permute.xlu0 %5490
        %5493 = vset.pattern.permute.xlu0 22
        %5494 = vperm.xlu0 %5493, %v1482
        %v5495 = vpop.permute.xlu0 %5494
        %5497 = vset.pattern.permute.xlu0 22
        %5498 = vperm.xlu0 %5497, %v1487
        %v5499 = vpop.permute.xlu0 %5498
        %5501 = vset.pattern.permute.xlu0 22
        %5502 = vperm.xlu0 %5501, %v1492
        %v5503 = vpop.permute.xlu0 %5502
        %5505 = vset.pattern.permute.xlu0 22
        %5506 = vperm.xlu0 %5505, %v1497
        %v5507 = vpop.permute.xlu0 %5506
        %5509 = vset.pattern.permute.xlu0 22
        %5510 = vperm.xlu0 %5509, %v1502
        %v5511 = vpop.permute.xlu0 %5510
        %5513 = vset.pattern.permute.xlu0 22
        %5514 = vperm.xlu0 %5513, %v1507
        %v5515 = vpop.permute.xlu0 %5514
        %5517 = vset.pattern.permute.xlu0 22
        %5518 = vperm.xlu0 %5517, %v1512
        %v5519 = vpop.permute.xlu0 %5518
        %5521 = vset.pattern.permute.xlu0 22
        %5522 = vperm.xlu0 %5521, %v1517
        %v5523 = vpop.permute.xlu0 %5522
        %5525 = vset.pattern.permute.xlu0 22
        %5526 = vperm.xlu0 %5525, %v1522
        %v5527 = vpop.permute.xlu0 %5526
        %5529 = vset.pattern.permute.xlu0 22
        %5530 = vperm.xlu0 %5529, %v1527
        %v5531 = vpop.permute.xlu0 %5530
        %v5533 = vlaneseq
        %v5534 = vshrl.u32 %v5533, 7
        %v5535 = vsub.s32 6, %v5534
        %v5536 = vrot.slane %v1743, %v5535
        %v5537 = vadd.f32 %v5471, %v5536
        %v5538 = vadd.f32 %v5475, %v5536
        %v5539 = vadd.f32 %v5479, %v5536
        %v5540 = vadd.f32 %v5483, %v5536
        %v5541 = vadd.f32 %v5487, %v5536
        %v5542 = vadd.f32 %v5491, %v5536
        %v5543 = vadd.f32 %v5495, %v5536
        %v5544 = vadd.f32 %v5499, %v5536
        %v5545 = vadd.f32 %v5503, %v5536
        %v5546 = vadd.f32 %v5507, %v5536
        %v5547 = vadd.f32 %v5511, %v5536
        %v5548 = vadd.f32 %v5515, %v5536
        %v5549 = vadd.f32 %v5519, %v5536
        %v5550 = vadd.f32 %v5523, %v5536
        %v5551 = vadd.f32 %v5527, %v5536
        %v5552 = vadd.f32 %v5531, %v5536
        %s5553 = sld [smem:[#allocation3 + $0x16]]
        %v5554 = vstv %s5553
        %v5555 = vmul.f32 %v1221, %v5554
        %v5556 = vmul.f32 %v1228, %v5554
        %v5557 = vmul.f32 %v1235, %v5554
        %v5558 = vmul.f32 %v1242, %v5554
        %v5559 = vmul.f32 %v1249, %v5554
        %v5560 = vmul.f32 %v1256, %v5554
        %v5561 = vmul.f32 %v1263, %v5554
        %v5562 = vmul.f32 %v1270, %v5554
        %v5563 = vmul.f32 %v1277, %v5554
        %v5564 = vmul.f32 %v1284, %v5554
        %v5565 = vmul.f32 %v1291, %v5554
        %v5566 = vmul.f32 %v1298, %v5554
        %v5567 = vmul.f32 %v1305, %v5554
        %v5568 = vmul.f32 %v1312, %v5554
        %v5569 = vmul.f32 %v1319, %v5554
        %v5570 = vmul.f32 %v1326, %v5554
        %v5571 = vadd.f32 %v5537, %v5555
        %v5572 = vadd.f32 %v5538, %v5556
        %v5573 = vadd.f32 %v5539, %v5557
        %v5574 = vadd.f32 %v5540, %v5558
        %v5575 = vadd.f32 %v5541, %v5559
        %v5576 = vadd.f32 %v5542, %v5560
        %v5577 = vadd.f32 %v5543, %v5561
        %v5578 = vadd.f32 %v5544, %v5562
        %v5579 = vadd.f32 %v5545, %v5563
        %v5580 = vadd.f32 %v5546, %v5564
        %v5581 = vadd.f32 %v5547, %v5565
        %v5582 = vadd.f32 %v5548, %v5566
        %v5583 = vadd.f32 %v5549, %v5567
        %v5584 = vadd.f32 %v5550, %v5568
        %v5585 = vadd.f32 %v5551, %v5569
        %v5586 = vadd.f32 %v5552, %v5570
        %v5587 = vmax.f32 %v5571, 0.0
        %v5588 = vmax.f32 %v5572, 0.0
        %v5589 = vmax.f32 %v5573, 0.0
        %v5590 = vmax.f32 %v5574, 0.0
        %v5591 = vmax.f32 %v5575, 0.0
        %v5592 = vmax.f32 %v5576, 0.0
        %v5593 = vmax.f32 %v5577, 0.0
        %v5594 = vmax.f32 %v5578, 0.0
        %v5595 = vmax.f32 %v5579, 0.0
        %v5596 = vmax.f32 %v5580, 0.0
        %v5597 = vmax.f32 %v5581, 0.0
        %v5598 = vmax.f32 %v5582, 0.0
        %v5599 = vmax.f32 %v5583, 0.0
        %v5600 = vmax.f32 %v5584, 0.0
        %v5601 = vmax.f32 %v5585, 0.0
        %v5602 = vmax.f32 %v5586, 0.0
        %s5603 = sld [smem:[#allocation5 + $0x16]]
        %v5604 = vstv %s5603
        %v5605 = vmul.f32 %v5587, %v5604
        %v5606 = vmul.f32 %v5588, %v5604
        %v5607 = vmul.f32 %v5589, %v5604
        %v5608 = vmul.f32 %v5590, %v5604
        %v5609 = vmul.f32 %v5591, %v5604
        %v5610 = vmul.f32 %v5592, %v5604
        %v5611 = vmul.f32 %v5593, %v5604
        %v5612 = vmul.f32 %v5594, %v5604
        %v5613 = vmul.f32 %v5595, %v5604
        %v5614 = vmul.f32 %v5596, %v5604
        %v5615 = vmul.f32 %v5597, %v5604
        %v5616 = vmul.f32 %v5598, %v5604
        %v5617 = vmul.f32 %v5599, %v5604
        %v5618 = vmul.f32 %v5600, %v5604
        %v5619 = vmul.f32 %v5601, %v5604
        %v5620 = vmul.f32 %v5602, %v5604
        %v5621 = vadd.f32 %v5453, %v5605
        %v5622 = vadd.f32 %v5454, %v5606
        %v5623 = vadd.f32 %v5455, %v5607
        %v5624 = vadd.f32 %v5456, %v5608
        %v5625 = vadd.f32 %v5457, %v5609
        %v5626 = vadd.f32 %v5458, %v5610
        %v5627 = vadd.f32 %v5459, %v5611
        %v5628 = vadd.f32 %v5460, %v5612
        %v5629 = vadd.f32 %v5461, %v5613
        %v5630 = vadd.f32 %v5462, %v5614
        %v5631 = vadd.f32 %v5463, %v5615
        %v5632 = vadd.f32 %v5464, %v5616
        %v5633 = vadd.f32 %v5465, %v5617
        %v5634 = vadd.f32 %v5466, %v5618
        %v5635 = vadd.f32 %v5467, %v5619
        %v5636 = vadd.f32 %v5468, %v5620
        %5637 = vset.pattern.permute.xlu0 23
        %5638 = vperm.xlu0 %5637, %v1452
        %v5639 = vpop.permute.xlu0 %5638
        %5641 = vset.pattern.permute.xlu0 23
        %5642 = vperm.xlu0 %5641, %v1457
        %v5643 = vpop.permute.xlu0 %5642
        %5645 = vset.pattern.permute.xlu0 23
        %5646 = vperm.xlu0 %5645, %v1462
        %v5647 = vpop.permute.xlu0 %5646
        %5649 = vset.pattern.permute.xlu0 23
        %5650 = vperm.xlu0 %5649, %v1467
        %v5651 = vpop.permute.xlu0 %5650
        %5653 = vset.pattern.permute.xlu0 23
        %5654 = vperm.xlu0 %5653, %v1472
        %v5655 = vpop.permute.xlu0 %5654
        %5657 = vset.pattern.permute.xlu0 23
        %5658 = vperm.xlu0 %5657, %v1477
        %v5659 = vpop.permute.xlu0 %5658
        %5661 = vset.pattern.permute.xlu0 23
        %5662 = vperm.xlu0 %5661, %v1482
        %v5663 = vpop.permute.xlu0 %5662
        %5665 = vset.pattern.permute.xlu0 23
        %5666 = vperm.xlu0 %5665, %v1487
        %v5667 = vpop.permute.xlu0 %5666
        %5669 = vset.pattern.permute.xlu0 23
        %5670 = vperm.xlu0 %5669, %v1492
        %v5671 = vpop.permute.xlu0 %5670
        %5673 = vset.pattern.permute.xlu0 23
        %5674 = vperm.xlu0 %5673, %v1497
        %v5675 = vpop.permute.xlu0 %5674
        %5677 = vset.pattern.permute.xlu0 23
        %5678 = vperm.xlu0 %5677, %v1502
        %v5679 = vpop.permute.xlu0 %5678
        %5681 = vset.pattern.permute.xlu0 23
        %5682 = vperm.xlu0 %5681, %v1507
        %v5683 = vpop.permute.xlu0 %5682
        %5685 = vset.pattern.permute.xlu0 23
        %5686 = vperm.xlu0 %5685, %v1512
        %v5687 = vpop.permute.xlu0 %5686
        %5689 = vset.pattern.permute.xlu0 23
        %5690 = vperm.xlu0 %5689, %v1517
        %v5691 = vpop.permute.xlu0 %5690
        %5693 = vset.pattern.permute.xlu0 23
        %5694 = vperm.xlu0 %5693, %v1522
        %v5695 = vpop.permute.xlu0 %5694
        %5697 = vset.pattern.permute.xlu0 23
        %5698 = vperm.xlu0 %5697, %v1527
        %v5699 = vpop.permute.xlu0 %5698
        %v5701 = vlaneseq
        %v5702 = vshrl.u32 %v5701, 7
        %v5703 = vsub.s32 7, %v5702
        %v5704 = vrot.slane %v1743, %v5703
        %v5705 = vadd.f32 %v5639, %v5704
        %v5706 = vadd.f32 %v5643, %v5704
        %v5707 = vadd.f32 %v5647, %v5704
        %v5708 = vadd.f32 %v5651, %v5704
        %v5709 = vadd.f32 %v5655, %v5704
        %v5710 = vadd.f32 %v5659, %v5704
        %v5711 = vadd.f32 %v5663, %v5704
        %v5712 = vadd.f32 %v5667, %v5704
        %v5713 = vadd.f32 %v5671, %v5704
        %v5714 = vadd.f32 %v5675, %v5704
        %v5715 = vadd.f32 %v5679, %v5704
        %v5716 = vadd.f32 %v5683, %v5704
        %v5717 = vadd.f32 %v5687, %v5704
        %v5718 = vadd.f32 %v5691, %v5704
        %v5719 = vadd.f32 %v5695, %v5704
        %v5720 = vadd.f32 %v5699, %v5704
        %s5721 = sld [smem:[#allocation3 + $0x17]]
        %v5722 = vstv %s5721
        %v5723 = vmul.f32 %v1221, %v5722
        %v5724 = vmul.f32 %v1228, %v5722
        %v5725 = vmul.f32 %v1235, %v5722
        %v5726 = vmul.f32 %v1242, %v5722
        %v5727 = vmul.f32 %v1249, %v5722
        %v5728 = vmul.f32 %v1256, %v5722
        %v5729 = vmul.f32 %v1263, %v5722
        %v5730 = vmul.f32 %v1270, %v5722
        %v5731 = vmul.f32 %v1277, %v5722
        %v5732 = vmul.f32 %v1284, %v5722
        %v5733 = vmul.f32 %v1291, %v5722
        %v5734 = vmul.f32 %v1298, %v5722
        %v5735 = vmul.f32 %v1305, %v5722
        %v5736 = vmul.f32 %v1312, %v5722
        %v5737 = vmul.f32 %v1319, %v5722
        %v5738 = vmul.f32 %v1326, %v5722
        %v5739 = vadd.f32 %v5705, %v5723
        %v5740 = vadd.f32 %v5706, %v5724
        %v5741 = vadd.f32 %v5707, %v5725
        %v5742 = vadd.f32 %v5708, %v5726
        %v5743 = vadd.f32 %v5709, %v5727
        %v5744 = vadd.f32 %v5710, %v5728
        %v5745 = vadd.f32 %v5711, %v5729
        %v5746 = vadd.f32 %v5712, %v5730
        %v5747 = vadd.f32 %v5713, %v5731
        %v5748 = vadd.f32 %v5714, %v5732
        %v5749 = vadd.f32 %v5715, %v5733
        %v5750 = vadd.f32 %v5716, %v5734
        %v5751 = vadd.f32 %v5717, %v5735
        %v5752 = vadd.f32 %v5718, %v5736
        %v5753 = vadd.f32 %v5719, %v5737
        %v5754 = vadd.f32 %v5720, %v5738
        %v5755 = vmax.f32 %v5739, 0.0
        %v5756 = vmax.f32 %v5740, 0.0
        %v5757 = vmax.f32 %v5741, 0.0
        %v5758 = vmax.f32 %v5742, 0.0
        %v5759 = vmax.f32 %v5743, 0.0
        %v5760 = vmax.f32 %v5744, 0.0
        %v5761 = vmax.f32 %v5745, 0.0
        %v5762 = vmax.f32 %v5746, 0.0
        %v5763 = vmax.f32 %v5747, 0.0
        %v5764 = vmax.f32 %v5748, 0.0
        %v5765 = vmax.f32 %v5749, 0.0
        %v5766 = vmax.f32 %v5750, 0.0
        %v5767 = vmax.f32 %v5751, 0.0
        %v5768 = vmax.f32 %v5752, 0.0
        %v5769 = vmax.f32 %v5753, 0.0
        %v5770 = vmax.f32 %v5754, 0.0
        %s5771 = sld [smem:[#allocation5 + $0x17]]
        %v5772 = vstv %s5771
        %v5773 = vmul.f32 %v5755, %v5772
        %v5774 = vmul.f32 %v5756, %v5772
        %v5775 = vmul.f32 %v5757, %v5772
        %v5776 = vmul.f32 %v5758, %v5772
        %v5777 = vmul.f32 %v5759, %v5772
        %v5778 = vmul.f32 %v5760, %v5772
        %v5779 = vmul.f32 %v5761, %v5772
        %v5780 = vmul.f32 %v5762, %v5772
        %v5781 = vmul.f32 %v5763, %v5772
        %v5782 = vmul.f32 %v5764, %v5772
        %v5783 = vmul.f32 %v5765, %v5772
        %v5784 = vmul.f32 %v5766, %v5772
        %v5785 = vmul.f32 %v5767, %v5772
        %v5786 = vmul.f32 %v5768, %v5772
        %v5787 = vmul.f32 %v5769, %v5772
        %v5788 = vmul.f32 %v5770, %v5772
        %v5789 = vadd.f32 %v5621, %v5773
        %v5790 = vadd.f32 %v5622, %v5774
        %v5791 = vadd.f32 %v5623, %v5775
        %v5792 = vadd.f32 %v5624, %v5776
        %v5793 = vadd.f32 %v5625, %v5777
        %v5794 = vadd.f32 %v5626, %v5778
        %v5795 = vadd.f32 %v5627, %v5779
        %v5796 = vadd.f32 %v5628, %v5780
        %v5797 = vadd.f32 %v5629, %v5781
        %v5798 = vadd.f32 %v5630, %v5782
        %v5799 = vadd.f32 %v5631, %v5783
        %v5800 = vadd.f32 %v5632, %v5784
        %v5801 = vadd.f32 %v5633, %v5785
        %v5802 = vadd.f32 %v5634, %v5786
        %v5803 = vadd.f32 %v5635, %v5787
        %v5804 = vadd.f32 %v5636, %v5788
        %5805 = vset.pattern.permute.xlu0 24
        %5806 = vperm.xlu0 %5805, %v1452
        %v5807 = vpop.permute.xlu0 %5806
        %5809 = vset.pattern.permute.xlu0 24
        %5810 = vperm.xlu0 %5809, %v1457
        %v5811 = vpop.permute.xlu0 %5810
        %5813 = vset.pattern.permute.xlu0 24
        %5814 = vperm.xlu0 %5813, %v1462
        %v5815 = vpop.permute.xlu0 %5814
        %5817 = vset.pattern.permute.xlu0 24
        %5818 = vperm.xlu0 %5817, %v1467
        %v5819 = vpop.permute.xlu0 %5818
        %5821 = vset.pattern.permute.xlu0 24
        %5822 = vperm.xlu0 %5821, %v1472
        %v5823 = vpop.permute.xlu0 %5822
        %5825 = vset.pattern.permute.xlu0 24
        %5826 = vperm.xlu0 %5825, %v1477
        %v5827 = vpop.permute.xlu0 %5826
        %5829 = vset.pattern.permute.xlu0 24
        %5830 = vperm.xlu0 %5829, %v1482
        %v5831 = vpop.permute.xlu0 %5830
        %5833 = vset.pattern.permute.xlu0 24
        %5834 = vperm.xlu0 %5833, %v1487
        %v5835 = vpop.permute.xlu0 %5834
        %5837 = vset.pattern.permute.xlu0 24
        %5838 = vperm.xlu0 %5837, %v1492
        %v5839 = vpop.permute.xlu0 %5838
        %5841 = vset.pattern.permute.xlu0 24
        %5842 = vperm.xlu0 %5841, %v1497
        %v5843 = vpop.permute.xlu0 %5842
        %5845 = vset.pattern.permute.xlu0 24
        %5846 = vperm.xlu0 %5845, %v1502
        %v5847 = vpop.permute.xlu0 %5846
        %5849 = vset.pattern.permute.xlu0 24
        %5850 = vperm.xlu0 %5849, %v1507
        %v5851 = vpop.permute.xlu0 %5850
        %5853 = vset.pattern.permute.xlu0 24
        %5854 = vperm.xlu0 %5853, %v1512
        %v5855 = vpop.permute.xlu0 %5854
        %5857 = vset.pattern.permute.xlu0 24
        %5858 = vperm.xlu0 %5857, %v1517
        %v5859 = vpop.permute.xlu0 %5858
        %5861 = vset.pattern.permute.xlu0 24
        %5862 = vperm.xlu0 %5861, %v1522
        %v5863 = vpop.permute.xlu0 %5862
        %5865 = vset.pattern.permute.xlu0 24
        %5866 = vperm.xlu0 %5865, %v1527
        %v5867 = vpop.permute.xlu0 %5866
        %v5869 = vlaneseq
        %v5870 = vshrl.u32 %v5869, 7
        %v5871 = vsub.s32 0, %v5870
        %v5872 = vrot.slane %v1744, %v5871
        %v5873 = vadd.f32 %v5807, %v5872
        %v5874 = vadd.f32 %v5811, %v5872
        %v5875 = vadd.f32 %v5815, %v5872
        %v5876 = vadd.f32 %v5819, %v5872
        %v5877 = vadd.f32 %v5823, %v5872
        %v5878 = vadd.f32 %v5827, %v5872
        %v5879 = vadd.f32 %v5831, %v5872
        %v5880 = vadd.f32 %v5835, %v5872
        %v5881 = vadd.f32 %v5839, %v5872
        %v5882 = vadd.f32 %v5843, %v5872
        %v5883 = vadd.f32 %v5847, %v5872
        %v5884 = vadd.f32 %v5851, %v5872
        %v5885 = vadd.f32 %v5855, %v5872
        %v5886 = vadd.f32 %v5859, %v5872
        %v5887 = vadd.f32 %v5863, %v5872
        %v5888 = vadd.f32 %v5867, %v5872
        %s5889 = sld [smem:[#allocation3 + $0x18]]
        %v5890 = vstv %s5889
        %v5891 = vmul.f32 %v1221, %v5890
        %v5892 = vmul.f32 %v1228, %v5890
        %v5893 = vmul.f32 %v1235, %v5890
        %v5894 = vmul.f32 %v1242, %v5890
        %v5895 = vmul.f32 %v1249, %v5890
        %v5896 = vmul.f32 %v1256, %v5890
        %v5897 = vmul.f32 %v1263, %v5890
        %v5898 = vmul.f32 %v1270, %v5890
        %v5899 = vmul.f32 %v1277, %v5890
        %v5900 = vmul.f32 %v1284, %v5890
        %v5901 = vmul.f32 %v1291, %v5890
        %v5902 = vmul.f32 %v1298, %v5890
        %v5903 = vmul.f32 %v1305, %v5890
        %v5904 = vmul.f32 %v1312, %v5890
        %v5905 = vmul.f32 %v1319, %v5890
        %v5906 = vmul.f32 %v1326, %v5890
        %v5907 = vadd.f32 %v5873, %v5891
        %v5908 = vadd.f32 %v5874, %v5892
        %v5909 = vadd.f32 %v5875, %v5893
        %v5910 = vadd.f32 %v5876, %v5894
        %v5911 = vadd.f32 %v5877, %v5895
        %v5912 = vadd.f32 %v5878, %v5896
        %v5913 = vadd.f32 %v5879, %v5897
        %v5914 = vadd.f32 %v5880, %v5898
        %v5915 = vadd.f32 %v5881, %v5899
        %v5916 = vadd.f32 %v5882, %v5900
        %v5917 = vadd.f32 %v5883, %v5901
        %v5918 = vadd.f32 %v5884, %v5902
        %v5919 = vadd.f32 %v5885, %v5903
        %v5920 = vadd.f32 %v5886, %v5904
        %v5921 = vadd.f32 %v5887, %v5905
        %v5922 = vadd.f32 %v5888, %v5906
        %v5923 = vmax.f32 %v5907, 0.0
        %v5924 = vmax.f32 %v5908, 0.0
        %v5925 = vmax.f32 %v5909, 0.0
        %v5926 = vmax.f32 %v5910, 0.0
        %v5927 = vmax.f32 %v5911, 0.0
        %v5928 = vmax.f32 %v5912, 0.0
        %v5929 = vmax.f32 %v5913, 0.0
        %v5930 = vmax.f32 %v5914, 0.0
        %v5931 = vmax.f32 %v5915, 0.0
        %v5932 = vmax.f32 %v5916, 0.0
        %v5933 = vmax.f32 %v5917, 0.0
        %v5934 = vmax.f32 %v5918, 0.0
        %v5935 = vmax.f32 %v5919, 0.0
        %v5936 = vmax.f32 %v5920, 0.0
        %v5937 = vmax.f32 %v5921, 0.0
        %v5938 = vmax.f32 %v5922, 0.0
        %s5939 = sld [smem:[#allocation5 + $0x18]]
        %v5940 = vstv %s5939
        %v5941 = vmul.f32 %v5923, %v5940
        %v5942 = vmul.f32 %v5924, %v5940
        %v5943 = vmul.f32 %v5925, %v5940
        %v5944 = vmul.f32 %v5926, %v5940
        %v5945 = vmul.f32 %v5927, %v5940
        %v5946 = vmul.f32 %v5928, %v5940
        %v5947 = vmul.f32 %v5929, %v5940
        %v5948 = vmul.f32 %v5930, %v5940
        %v5949 = vmul.f32 %v5931, %v5940
        %v5950 = vmul.f32 %v5932, %v5940
        %v5951 = vmul.f32 %v5933, %v5940
        %v5952 = vmul.f32 %v5934, %v5940
        %v5953 = vmul.f32 %v5935, %v5940
        %v5954 = vmul.f32 %v5936, %v5940
        %v5955 = vmul.f32 %v5937, %v5940
        %v5956 = vmul.f32 %v5938, %v5940
        %v5957 = vadd.f32 %v5789, %v5941
        %v5958 = vadd.f32 %v5790, %v5942
        %v5959 = vadd.f32 %v5791, %v5943
        %v5960 = vadd.f32 %v5792, %v5944
        %v5961 = vadd.f32 %v5793, %v5945
        %v5962 = vadd.f32 %v5794, %v5946
        %v5963 = vadd.f32 %v5795, %v5947
        %v5964 = vadd.f32 %v5796, %v5948
        %v5965 = vadd.f32 %v5797, %v5949
        %v5966 = vadd.f32 %v5798, %v5950
        %v5967 = vadd.f32 %v5799, %v5951
        %v5968 = vadd.f32 %v5800, %v5952
        %v5969 = vadd.f32 %v5801, %v5953
        %v5970 = vadd.f32 %v5802, %v5954
        %v5971 = vadd.f32 %v5803, %v5955
        %v5972 = vadd.f32 %v5804, %v5956
        %5973 = vset.pattern.permute.xlu0 25
        %5974 = vperm.xlu0 %5973, %v1452
        %v5975 = vpop.permute.xlu0 %5974
        %5977 = vset.pattern.permute.xlu0 25
        %5978 = vperm.xlu0 %5977, %v1457
        %v5979 = vpop.permute.xlu0 %5978
        %5981 = vset.pattern.permute.xlu0 25
        %5982 = vperm.xlu0 %5981, %v1462
        %v5983 = vpop.permute.xlu0 %5982
        %5985 = vset.pattern.permute.xlu0 25
        %5986 = vperm.xlu0 %5985, %v1467
        %v5987 = vpop.permute.xlu0 %5986
        %5989 = vset.pattern.permute.xlu0 25
        %5990 = vperm.xlu0 %5989, %v1472
        %v5991 = vpop.permute.xlu0 %5990
        %5993 = vset.pattern.permute.xlu0 25
        %5994 = vperm.xlu0 %5993, %v1477
        %v5995 = vpop.permute.xlu0 %5994
        %5997 = vset.pattern.permute.xlu0 25
        %5998 = vperm.xlu0 %5997, %v1482
        %v5999 = vpop.permute.xlu0 %5998
        %6001 = vset.pattern.permute.xlu0 25
        %6002 = vperm.xlu0 %6001, %v1487
        %v6003 = vpop.permute.xlu0 %6002
        %6005 = vset.pattern.permute.xlu0 25
        %6006 = vperm.xlu0 %6005, %v1492
        %v6007 = vpop.permute.xlu0 %6006
        %6009 = vset.pattern.permute.xlu0 25
        %6010 = vperm.xlu0 %6009, %v1497
        %v6011 = vpop.permute.xlu0 %6010
        %6013 = vset.pattern.permute.xlu0 25
        %6014 = vperm.xlu0 %6013, %v1502
        %v6015 = vpop.permute.xlu0 %6014
        %6017 = vset.pattern.permute.xlu0 25
        %6018 = vperm.xlu0 %6017, %v1507
        %v6019 = vpop.permute.xlu0 %6018
        %6021 = vset.pattern.permute.xlu0 25
        %6022 = vperm.xlu0 %6021, %v1512
        %v6023 = vpop.permute.xlu0 %6022
        %6025 = vset.pattern.permute.xlu0 25
        %6026 = vperm.xlu0 %6025, %v1517
        %v6027 = vpop.permute.xlu0 %6026
        %6029 = vset.pattern.permute.xlu0 25
        %6030 = vperm.xlu0 %6029, %v1522
        %v6031 = vpop.permute.xlu0 %6030
        %6033 = vset.pattern.permute.xlu0 25
        %6034 = vperm.xlu0 %6033, %v1527
        %v6035 = vpop.permute.xlu0 %6034
        %v6037 = vlaneseq
        %v6038 = vshrl.u32 %v6037, 7
        %v6039 = vsub.s32 1, %v6038
        %v6040 = vrot.slane %v1744, %v6039
        %v6041 = vadd.f32 %v5975, %v6040
        %v6042 = vadd.f32 %v5979, %v6040
        %v6043 = vadd.f32 %v5983, %v6040
        %v6044 = vadd.f32 %v5987, %v6040
        %v6045 = vadd.f32 %v5991, %v6040
        %v6046 = vadd.f32 %v5995, %v6040
        %v6047 = vadd.f32 %v5999, %v6040
        %v6048 = vadd.f32 %v6003, %v6040
        %v6049 = vadd.f32 %v6007, %v6040
        %v6050 = vadd.f32 %v6011, %v6040
        %v6051 = vadd.f32 %v6015, %v6040
        %v6052 = vadd.f32 %v6019, %v6040
        %v6053 = vadd.f32 %v6023, %v6040
        %v6054 = vadd.f32 %v6027, %v6040
        %v6055 = vadd.f32 %v6031, %v6040
        %v6056 = vadd.f32 %v6035, %v6040
        %s6057 = sld [smem:[#allocation3 + $0x19]]
        %v6058 = vstv %s6057
        %v6059 = vmul.f32 %v1221, %v6058
        %v6060 = vmul.f32 %v1228, %v6058
        %v6061 = vmul.f32 %v1235, %v6058
        %v6062 = vmul.f32 %v1242, %v6058
        %v6063 = vmul.f32 %v1249, %v6058
        %v6064 = vmul.f32 %v1256, %v6058
        %v6065 = vmul.f32 %v1263, %v6058
        %v6066 = vmul.f32 %v1270, %v6058
        %v6067 = vmul.f32 %v1277, %v6058
        %v6068 = vmul.f32 %v1284, %v6058
        %v6069 = vmul.f32 %v1291, %v6058
        %v6070 = vmul.f32 %v1298, %v6058
        %v6071 = vmul.f32 %v1305, %v6058
        %v6072 = vmul.f32 %v1312, %v6058
        %v6073 = vmul.f32 %v1319, %v6058
        %v6074 = vmul.f32 %v1326, %v6058
        %v6075 = vadd.f32 %v6041, %v6059
        %v6076 = vadd.f32 %v6042, %v6060
        %v6077 = vadd.f32 %v6043, %v6061
        %v6078 = vadd.f32 %v6044, %v6062
        %v6079 = vadd.f32 %v6045, %v6063
        %v6080 = vadd.f32 %v6046, %v6064
        %v6081 = vadd.f32 %v6047, %v6065
        %v6082 = vadd.f32 %v6048, %v6066
        %v6083 = vadd.f32 %v6049, %v6067
        %v6084 = vadd.f32 %v6050, %v6068
        %v6085 = vadd.f32 %v6051, %v6069
        %v6086 = vadd.f32 %v6052, %v6070
        %v6087 = vadd.f32 %v6053, %v6071
        %v6088 = vadd.f32 %v6054, %v6072
        %v6089 = vadd.f32 %v6055, %v6073
        %v6090 = vadd.f32 %v6056, %v6074
        %v6091 = vmax.f32 %v6075, 0.0
        %v6092 = vmax.f32 %v6076, 0.0
        %v6093 = vmax.f32 %v6077, 0.0
        %v6094 = vmax.f32 %v6078, 0.0
        %v6095 = vmax.f32 %v6079, 0.0
        %v6096 = vmax.f32 %v6080, 0.0
        %v6097 = vmax.f32 %v6081, 0.0
        %v6098 = vmax.f32 %v6082, 0.0
        %v6099 = vmax.f32 %v6083, 0.0
        %v6100 = vmax.f32 %v6084, 0.0
        %v6101 = vmax.f32 %v6085, 0.0
        %v6102 = vmax.f32 %v6086, 0.0
        %v6103 = vmax.f32 %v6087, 0.0
        %v6104 = vmax.f32 %v6088, 0.0
        %v6105 = vmax.f32 %v6089, 0.0
        %v6106 = vmax.f32 %v6090, 0.0
        %s6107 = sld [smem:[#allocation5 + $0x19]]
        %v6108 = vstv %s6107
        %v6109 = vmul.f32 %v6091, %v6108
        %v6110 = vmul.f32 %v6092, %v6108
        %v6111 = vmul.f32 %v6093, %v6108
        %v6112 = vmul.f32 %v6094, %v6108
        %v6113 = vmul.f32 %v6095, %v6108
        %v6114 = vmul.f32 %v6096, %v6108
        %v6115 = vmul.f32 %v6097, %v6108
        %v6116 = vmul.f32 %v6098, %v6108
        %v6117 = vmul.f32 %v6099, %v6108
        %v6118 = vmul.f32 %v6100, %v6108
        %v6119 = vmul.f32 %v6101, %v6108
        %v6120 = vmul.f32 %v6102, %v6108
        %v6121 = vmul.f32 %v6103, %v6108
        %v6122 = vmul.f32 %v6104, %v6108
        %v6123 = vmul.f32 %v6105, %v6108
        %v6124 = vmul.f32 %v6106, %v6108
        %v6125 = vadd.f32 %v5957, %v6109
        %v6126 = vadd.f32 %v5958, %v6110
        %v6127 = vadd.f32 %v5959, %v6111
        %v6128 = vadd.f32 %v5960, %v6112
        %v6129 = vadd.f32 %v5961, %v6113
        %v6130 = vadd.f32 %v5962, %v6114
        %v6131 = vadd.f32 %v5963, %v6115
        %v6132 = vadd.f32 %v5964, %v6116
        %v6133 = vadd.f32 %v5965, %v6117
        %v6134 = vadd.f32 %v5966, %v6118
        %v6135 = vadd.f32 %v5967, %v6119
        %v6136 = vadd.f32 %v5968, %v6120
        %v6137 = vadd.f32 %v5969, %v6121
        %v6138 = vadd.f32 %v5970, %v6122
        %v6139 = vadd.f32 %v5971, %v6123
        %v6140 = vadd.f32 %v5972, %v6124
        %6141 = vset.pattern.permute.xlu0 26
        %6142 = vperm.xlu0 %6141, %v1452
        %v6143 = vpop.permute.xlu0 %6142
        %6145 = vset.pattern.permute.xlu0 26
        %6146 = vperm.xlu0 %6145, %v1457
        %v6147 = vpop.permute.xlu0 %6146
        %6149 = vset.pattern.permute.xlu0 26
        %6150 = vperm.xlu0 %6149, %v1462
        %v6151 = vpop.permute.xlu0 %6150
        %6153 = vset.pattern.permute.xlu0 26
        %6154 = vperm.xlu0 %6153, %v1467
        %v6155 = vpop.permute.xlu0 %6154
        %6157 = vset.pattern.permute.xlu0 26
        %6158 = vperm.xlu0 %6157, %v1472
        %v6159 = vpop.permute.xlu0 %6158
        %6161 = vset.pattern.permute.xlu0 26
        %6162 = vperm.xlu0 %6161, %v1477
        %v6163 = vpop.permute.xlu0 %6162
        %6165 = vset.pattern.permute.xlu0 26
        %6166 = vperm.xlu0 %6165, %v1482
        %v6167 = vpop.permute.xlu0 %6166
        %6169 = vset.pattern.permute.xlu0 26
        %6170 = vperm.xlu0 %6169, %v1487
        %v6171 = vpop.permute.xlu0 %6170
        %6173 = vset.pattern.permute.xlu0 26
        %6174 = vperm.xlu0 %6173, %v1492
        %v6175 = vpop.permute.xlu0 %6174
        %6177 = vset.pattern.permute.xlu0 26
        %6178 = vperm.xlu0 %6177, %v1497
        %v6179 = vpop.permute.xlu0 %6178
        %6181 = vset.pattern.permute.xlu0 26
        %6182 = vperm.xlu0 %6181, %v1502
        %v6183 = vpop.permute.xlu0 %6182
        %6185 = vset.pattern.permute.xlu0 26
        %6186 = vperm.xlu0 %6185, %v1507
        %v6187 = vpop.permute.xlu0 %6186
        %6189 = vset.pattern.permute.xlu0 26
        %6190 = vperm.xlu0 %6189, %v1512
        %v6191 = vpop.permute.xlu0 %6190
        %6193 = vset.pattern.permute.xlu0 26
        %6194 = vperm.xlu0 %6193, %v1517
        %v6195 = vpop.permute.xlu0 %6194
        %6197 = vset.pattern.permute.xlu0 26
        %6198 = vperm.xlu0 %6197, %v1522
        %v6199 = vpop.permute.xlu0 %6198
        %6201 = vset.pattern.permute.xlu0 26
        %6202 = vperm.xlu0 %6201, %v1527
        %v6203 = vpop.permute.xlu0 %6202
        %v6205 = vlaneseq
        %v6206 = vshrl.u32 %v6205, 7
        %v6207 = vsub.s32 2, %v6206
        %v6208 = vrot.slane %v1744, %v6207
        %v6209 = vadd.f32 %v6143, %v6208
        %v6210 = vadd.f32 %v6147, %v6208
        %v6211 = vadd.f32 %v6151, %v6208
        %v6212 = vadd.f32 %v6155, %v6208
        %v6213 = vadd.f32 %v6159, %v6208
        %v6214 = vadd.f32 %v6163, %v6208
        %v6215 = vadd.f32 %v6167, %v6208
        %v6216 = vadd.f32 %v6171, %v6208
        %v6217 = vadd.f32 %v6175, %v6208
        %v6218 = vadd.f32 %v6179, %v6208
        %v6219 = vadd.f32 %v6183, %v6208
        %v6220 = vadd.f32 %v6187, %v6208
        %v6221 = vadd.f32 %v6191, %v6208
        %v6222 = vadd.f32 %v6195, %v6208
        %v6223 = vadd.f32 %v6199, %v6208
        %v6224 = vadd.f32 %v6203, %v6208
        %s6225 = sld [smem:[#allocation3 + $0x1a]]
        %v6226 = vstv %s6225
        %v6227 = vmul.f32 %v1221, %v6226
        %v6228 = vmul.f32 %v1228, %v6226
        %v6229 = vmul.f32 %v1235, %v6226
        %v6230 = vmul.f32 %v1242, %v6226
        %v6231 = vmul.f32 %v1249, %v6226
        %v6232 = vmul.f32 %v1256, %v6226
        %v6233 = vmul.f32 %v1263, %v6226
        %v6234 = vmul.f32 %v1270, %v6226
        %v6235 = vmul.f32 %v1277, %v6226
        %v6236 = vmul.f32 %v1284, %v6226
        %v6237 = vmul.f32 %v1291, %v6226
        %v6238 = vmul.f32 %v1298, %v6226
        %v6239 = vmul.f32 %v1305, %v6226
        %v6240 = vmul.f32 %v1312, %v6226
        %v6241 = vmul.f32 %v1319, %v6226
        %v6242 = vmul.f32 %v1326, %v6226
        %v6243 = vadd.f32 %v6209, %v6227
        %v6244 = vadd.f32 %v6210, %v6228
        %v6245 = vadd.f32 %v6211, %v6229
        %v6246 = vadd.f32 %v6212, %v6230
        %v6247 = vadd.f32 %v6213, %v6231
        %v6248 = vadd.f32 %v6214, %v6232
        %v6249 = vadd.f32 %v6215, %v6233
        %v6250 = vadd.f32 %v6216, %v6234
        %v6251 = vadd.f32 %v6217, %v6235
        %v6252 = vadd.f32 %v6218, %v6236
        %v6253 = vadd.f32 %v6219, %v6237
        %v6254 = vadd.f32 %v6220, %v6238
        %v6255 = vadd.f32 %v6221, %v6239
        %v6256 = vadd.f32 %v6222, %v6240
        %v6257 = vadd.f32 %v6223, %v6241
        %v6258 = vadd.f32 %v6224, %v6242
        %v6259 = vmax.f32 %v6243, 0.0
        %v6260 = vmax.f32 %v6244, 0.0
        %v6261 = vmax.f32 %v6245, 0.0
        %v6262 = vmax.f32 %v6246, 0.0
        %v6263 = vmax.f32 %v6247, 0.0
        %v6264 = vmax.f32 %v6248, 0.0
        %v6265 = vmax.f32 %v6249, 0.0
        %v6266 = vmax.f32 %v6250, 0.0
        %v6267 = vmax.f32 %v6251, 0.0
        %v6268 = vmax.f32 %v6252, 0.0
        %v6269 = vmax.f32 %v6253, 0.0
        %v6270 = vmax.f32 %v6254, 0.0
        %v6271 = vmax.f32 %v6255, 0.0
        %v6272 = vmax.f32 %v6256, 0.0
        %v6273 = vmax.f32 %v6257, 0.0
        %v6274 = vmax.f32 %v6258, 0.0
        %s6275 = sld [smem:[#allocation5 + $0x1a]]
        %v6276 = vstv %s6275
        %v6277 = vmul.f32 %v6259, %v6276
        %v6278 = vmul.f32 %v6260, %v6276
        %v6279 = vmul.f32 %v6261, %v6276
        %v6280 = vmul.f32 %v6262, %v6276
        %v6281 = vmul.f32 %v6263, %v6276
        %v6282 = vmul.f32 %v6264, %v6276
        %v6283 = vmul.f32 %v6265, %v6276
        %v6284 = vmul.f32 %v6266, %v6276
        %v6285 = vmul.f32 %v6267, %v6276
        %v6286 = vmul.f32 %v6268, %v6276
        %v6287 = vmul.f32 %v6269, %v6276
        %v6288 = vmul.f32 %v6270, %v6276
        %v6289 = vmul.f32 %v6271, %v6276
        %v6290 = vmul.f32 %v6272, %v6276
        %v6291 = vmul.f32 %v6273, %v6276
        %v6292 = vmul.f32 %v6274, %v6276
        %v6293 = vadd.f32 %v6125, %v6277
        %v6294 = vadd.f32 %v6126, %v6278
        %v6295 = vadd.f32 %v6127, %v6279
        %v6296 = vadd.f32 %v6128, %v6280
        %v6297 = vadd.f32 %v6129, %v6281
        %v6298 = vadd.f32 %v6130, %v6282
        %v6299 = vadd.f32 %v6131, %v6283
        %v6300 = vadd.f32 %v6132, %v6284
        %v6301 = vadd.f32 %v6133, %v6285
        %v6302 = vadd.f32 %v6134, %v6286
        %v6303 = vadd.f32 %v6135, %v6287
        %v6304 = vadd.f32 %v6136, %v6288
        %v6305 = vadd.f32 %v6137, %v6289
        %v6306 = vadd.f32 %v6138, %v6290
        %v6307 = vadd.f32 %v6139, %v6291
        %v6308 = vadd.f32 %v6140, %v6292
        %6309 = vset.pattern.permute.xlu0 27
        %6310 = vperm.xlu0 %6309, %v1452
        %v6311 = vpop.permute.xlu0 %6310
        %6313 = vset.pattern.permute.xlu0 27
        %6314 = vperm.xlu0 %6313, %v1457
        %v6315 = vpop.permute.xlu0 %6314
        %6317 = vset.pattern.permute.xlu0 27
        %6318 = vperm.xlu0 %6317, %v1462
        %v6319 = vpop.permute.xlu0 %6318
        %6321 = vset.pattern.permute.xlu0 27
        %6322 = vperm.xlu0 %6321, %v1467
        %v6323 = vpop.permute.xlu0 %6322
        %6325 = vset.pattern.permute.xlu0 27
        %6326 = vperm.xlu0 %6325, %v1472
        %v6327 = vpop.permute.xlu0 %6326
        %6329 = vset.pattern.permute.xlu0 27
        %6330 = vperm.xlu0 %6329, %v1477
        %v6331 = vpop.permute.xlu0 %6330
        %6333 = vset.pattern.permute.xlu0 27
        %6334 = vperm.xlu0 %6333, %v1482
        %v6335 = vpop.permute.xlu0 %6334
        %6337 = vset.pattern.permute.xlu0 27
        %6338 = vperm.xlu0 %6337, %v1487
        %v6339 = vpop.permute.xlu0 %6338
        %6341 = vset.pattern.permute.xlu0 27
        %6342 = vperm.xlu0 %6341, %v1492
        %v6343 = vpop.permute.xlu0 %6342
        %6345 = vset.pattern.permute.xlu0 27
        %6346 = vperm.xlu0 %6345, %v1497
        %v6347 = vpop.permute.xlu0 %6346
        %6349 = vset.pattern.permute.xlu0 27
        %6350 = vperm.xlu0 %6349, %v1502
        %v6351 = vpop.permute.xlu0 %6350
        %6353 = vset.pattern.permute.xlu0 27
        %6354 = vperm.xlu0 %6353, %v1507
        %v6355 = vpop.permute.xlu0 %6354
        %6357 = vset.pattern.permute.xlu0 27
        %6358 = vperm.xlu0 %6357, %v1512
        %v6359 = vpop.permute.xlu0 %6358
        %6361 = vset.pattern.permute.xlu0 27
        %6362 = vperm.xlu0 %6361, %v1517
        %v6363 = vpop.permute.xlu0 %6362
        %6365 = vset.pattern.permute.xlu0 27
        %6366 = vperm.xlu0 %6365, %v1522
        %v6367 = vpop.permute.xlu0 %6366
        %6369 = vset.pattern.permute.xlu0 27
        %6370 = vperm.xlu0 %6369, %v1527
        %v6371 = vpop.permute.xlu0 %6370
        %v6373 = vlaneseq
        %v6374 = vshrl.u32 %v6373, 7
        %v6375 = vsub.s32 3, %v6374
        %v6376 = vrot.slane %v1744, %v6375
        %v6377 = vadd.f32 %v6311, %v6376
        %v6378 = vadd.f32 %v6315, %v6376
        %v6379 = vadd.f32 %v6319, %v6376
        %v6380 = vadd.f32 %v6323, %v6376
        %v6381 = vadd.f32 %v6327, %v6376
        %v6382 = vadd.f32 %v6331, %v6376
        %v6383 = vadd.f32 %v6335, %v6376
        %v6384 = vadd.f32 %v6339, %v6376
        %v6385 = vadd.f32 %v6343, %v6376
        %v6386 = vadd.f32 %v6347, %v6376
        %v6387 = vadd.f32 %v6351, %v6376
        %v6388 = vadd.f32 %v6355, %v6376
        %v6389 = vadd.f32 %v6359, %v6376
        %v6390 = vadd.f32 %v6363, %v6376
        %v6391 = vadd.f32 %v6367, %v6376
        %v6392 = vadd.f32 %v6371, %v6376
        %s6393 = sld [smem:[#allocation3 + $0x1b]]
        %v6394 = vstv %s6393
        %v6395 = vmul.f32 %v1221, %v6394
        %v6396 = vmul.f32 %v1228, %v6394
        %v6397 = vmul.f32 %v1235, %v6394
        %v6398 = vmul.f32 %v1242, %v6394
        %v6399 = vmul.f32 %v1249, %v6394
        %v6400 = vmul.f32 %v1256, %v6394
        %v6401 = vmul.f32 %v1263, %v6394
        %v6402 = vmul.f32 %v1270, %v6394
        %v6403 = vmul.f32 %v1277, %v6394
        %v6404 = vmul.f32 %v1284, %v6394
        %v6405 = vmul.f32 %v1291, %v6394
        %v6406 = vmul.f32 %v1298, %v6394
        %v6407 = vmul.f32 %v1305, %v6394
        %v6408 = vmul.f32 %v1312, %v6394
        %v6409 = vmul.f32 %v1319, %v6394
        %v6410 = vmul.f32 %v1326, %v6394
        %v6411 = vadd.f32 %v6377, %v6395
        %v6412 = vadd.f32 %v6378, %v6396
        %v6413 = vadd.f32 %v6379, %v6397
        %v6414 = vadd.f32 %v6380, %v6398
        %v6415 = vadd.f32 %v6381, %v6399
        %v6416 = vadd.f32 %v6382, %v6400
        %v6417 = vadd.f32 %v6383, %v6401
        %v6418 = vadd.f32 %v6384, %v6402
        %v6419 = vadd.f32 %v6385, %v6403
        %v6420 = vadd.f32 %v6386, %v6404
        %v6421 = vadd.f32 %v6387, %v6405
        %v6422 = vadd.f32 %v6388, %v6406
        %v6423 = vadd.f32 %v6389, %v6407
        %v6424 = vadd.f32 %v6390, %v6408
        %v6425 = vadd.f32 %v6391, %v6409
        %v6426 = vadd.f32 %v6392, %v6410
        %v6427 = vmax.f32 %v6411, 0.0
        %v6428 = vmax.f32 %v6412, 0.0
        %v6429 = vmax.f32 %v6413, 0.0
        %v6430 = vmax.f32 %v6414, 0.0
        %v6431 = vmax.f32 %v6415, 0.0
        %v6432 = vmax.f32 %v6416, 0.0
        %v6433 = vmax.f32 %v6417, 0.0
        %v6434 = vmax.f32 %v6418, 0.0
        %v6435 = vmax.f32 %v6419, 0.0
        %v6436 = vmax.f32 %v6420, 0.0
        %v6437 = vmax.f32 %v6421, 0.0
        %v6438 = vmax.f32 %v6422, 0.0
        %v6439 = vmax.f32 %v6423, 0.0
        %v6440 = vmax.f32 %v6424, 0.0
        %v6441 = vmax.f32 %v6425, 0.0
        %v6442 = vmax.f32 %v6426, 0.0
        %s6443 = sld [smem:[#allocation5 + $0x1b]]
        %v6444 = vstv %s6443
        %v6445 = vmul.f32 %v6427, %v6444
        %v6446 = vmul.f32 %v6428, %v6444
        %v6447 = vmul.f32 %v6429, %v6444
        %v6448 = vmul.f32 %v6430, %v6444
        %v6449 = vmul.f32 %v6431, %v6444
        %v6450 = vmul.f32 %v6432, %v6444
        %v6451 = vmul.f32 %v6433, %v6444
        %v6452 = vmul.f32 %v6434, %v6444
        %v6453 = vmul.f32 %v6435, %v6444
        %v6454 = vmul.f32 %v6436, %v6444
        %v6455 = vmul.f32 %v6437, %v6444
        %v6456 = vmul.f32 %v6438, %v6444
        %v6457 = vmul.f32 %v6439, %v6444
        %v6458 = vmul.f32 %v6440, %v6444
        %v6459 = vmul.f32 %v6441, %v6444
        %v6460 = vmul.f32 %v6442, %v6444
        %v6461 = vadd.f32 %v6293, %v6445
        %v6462 = vadd.f32 %v6294, %v6446
        %v6463 = vadd.f32 %v6295, %v6447
        %v6464 = vadd.f32 %v6296, %v6448
        %v6465 = vadd.f32 %v6297, %v6449
        %v6466 = vadd.f32 %v6298, %v6450
        %v6467 = vadd.f32 %v6299, %v6451
        %v6468 = vadd.f32 %v6300, %v6452
        %v6469 = vadd.f32 %v6301, %v6453
        %v6470 = vadd.f32 %v6302, %v6454
        %v6471 = vadd.f32 %v6303, %v6455
        %v6472 = vadd.f32 %v6304, %v6456
        %v6473 = vadd.f32 %v6305, %v6457
        %v6474 = vadd.f32 %v6306, %v6458
        %v6475 = vadd.f32 %v6307, %v6459
        %v6476 = vadd.f32 %v6308, %v6460
        %6477 = vset.pattern.permute.xlu0 28
        %6478 = vperm.xlu0 %6477, %v1452
        %v6479 = vpop.permute.xlu0 %6478
        %6481 = vset.pattern.permute.xlu0 28
        %6482 = vperm.xlu0 %6481, %v1457
        %v6483 = vpop.permute.xlu0 %6482
        %6485 = vset.pattern.permute.xlu0 28
        %6486 = vperm.xlu0 %6485, %v1462
        %v6487 = vpop.permute.xlu0 %6486
        %6489 = vset.pattern.permute.xlu0 28
        %6490 = vperm.xlu0 %6489, %v1467
        %v6491 = vpop.permute.xlu0 %6490
        %6493 = vset.pattern.permute.xlu0 28
        %6494 = vperm.xlu0 %6493, %v1472
        %v6495 = vpop.permute.xlu0 %6494
        %6497 = vset.pattern.permute.xlu0 28
        %6498 = vperm.xlu0 %6497, %v1477
        %v6499 = vpop.permute.xlu0 %6498
        %6501 = vset.pattern.permute.xlu0 28
        %6502 = vperm.xlu0 %6501, %v1482
        %v6503 = vpop.permute.xlu0 %6502
        %6505 = vset.pattern.permute.xlu0 28
        %6506 = vperm.xlu0 %6505, %v1487
        %v6507 = vpop.permute.xlu0 %6506
        %6509 = vset.pattern.permute.xlu0 28
        %6510 = vperm.xlu0 %6509, %v1492
        %v6511 = vpop.permute.xlu0 %6510
        %6513 = vset.pattern.permute.xlu0 28
        %6514 = vperm.xlu0 %6513, %v1497
        %v6515 = vpop.permute.xlu0 %6514
        %6517 = vset.pattern.permute.xlu0 28
        %6518 = vperm.xlu0 %6517, %v1502
        %v6519 = vpop.permute.xlu0 %6518
        %6521 = vset.pattern.permute.xlu0 28
        %6522 = vperm.xlu0 %6521, %v1507
        %v6523 = vpop.permute.xlu0 %6522
        %6525 = vset.pattern.permute.xlu0 28
        %6526 = vperm.xlu0 %6525, %v1512
        %v6527 = vpop.permute.xlu0 %6526
        %6529 = vset.pattern.permute.xlu0 28
        %6530 = vperm.xlu0 %6529, %v1517
        %v6531 = vpop.permute.xlu0 %6530
        %6533 = vset.pattern.permute.xlu0 28
        %6534 = vperm.xlu0 %6533, %v1522
        %v6535 = vpop.permute.xlu0 %6534
        %6537 = vset.pattern.permute.xlu0 28
        %6538 = vperm.xlu0 %6537, %v1527
        %v6539 = vpop.permute.xlu0 %6538
        %v6541 = vlaneseq
        %v6542 = vshrl.u32 %v6541, 7
        %v6543 = vsub.s32 4, %v6542
        %v6544 = vrot.slane %v1744, %v6543
        %v6545 = vadd.f32 %v6479, %v6544
        %v6546 = vadd.f32 %v6483, %v6544
        %v6547 = vadd.f32 %v6487, %v6544
        %v6548 = vadd.f32 %v6491, %v6544
        %v6549 = vadd.f32 %v6495, %v6544
        %v6550 = vadd.f32 %v6499, %v6544
        %v6551 = vadd.f32 %v6503, %v6544
        %v6552 = vadd.f32 %v6507, %v6544
        %v6553 = vadd.f32 %v6511, %v6544
        %v6554 = vadd.f32 %v6515, %v6544
        %v6555 = vadd.f32 %v6519, %v6544
        %v6556 = vadd.f32 %v6523, %v6544
        %v6557 = vadd.f32 %v6527, %v6544
        %v6558 = vadd.f32 %v6531, %v6544
        %v6559 = vadd.f32 %v6535, %v6544
        %v6560 = vadd.f32 %v6539, %v6544
        %s6561 = sld [smem:[#allocation3 + $0x1c]]
        %v6562 = vstv %s6561
        %v6563 = vmul.f32 %v1221, %v6562
        %v6564 = vmul.f32 %v1228, %v6562
        %v6565 = vmul.f32 %v1235, %v6562
        %v6566 = vmul.f32 %v1242, %v6562
        %v6567 = vmul.f32 %v1249, %v6562
        %v6568 = vmul.f32 %v1256, %v6562
        %v6569 = vmul.f32 %v1263, %v6562
        %v6570 = vmul.f32 %v1270, %v6562
        %v6571 = vmul.f32 %v1277, %v6562
        %v6572 = vmul.f32 %v1284, %v6562
        %v6573 = vmul.f32 %v1291, %v6562
        %v6574 = vmul.f32 %v1298, %v6562
        %v6575 = vmul.f32 %v1305, %v6562
        %v6576 = vmul.f32 %v1312, %v6562
        %v6577 = vmul.f32 %v1319, %v6562
        %v6578 = vmul.f32 %v1326, %v6562
        %v6579 = vadd.f32 %v6545, %v6563
        %v6580 = vadd.f32 %v6546, %v6564
        %v6581 = vadd.f32 %v6547, %v6565
        %v6582 = vadd.f32 %v6548, %v6566
        %v6583 = vadd.f32 %v6549, %v6567
        %v6584 = vadd.f32 %v6550, %v6568
        %v6585 = vadd.f32 %v6551, %v6569
        %v6586 = vadd.f32 %v6552, %v6570
        %v6587 = vadd.f32 %v6553, %v6571
        %v6588 = vadd.f32 %v6554, %v6572
        %v6589 = vadd.f32 %v6555, %v6573
        %v6590 = vadd.f32 %v6556, %v6574
        %v6591 = vadd.f32 %v6557, %v6575
        %v6592 = vadd.f32 %v6558, %v6576
        %v6593 = vadd.f32 %v6559, %v6577
        %v6594 = vadd.f32 %v6560, %v6578
        %v6595 = vmax.f32 %v6579, 0.0
        %v6596 = vmax.f32 %v6580, 0.0
        %v6597 = vmax.f32 %v6581, 0.0
        %v6598 = vmax.f32 %v6582, 0.0
        %v6599 = vmax.f32 %v6583, 0.0
        %v6600 = vmax.f32 %v6584, 0.0
        %v6601 = vmax.f32 %v6585, 0.0
        %v6602 = vmax.f32 %v6586, 0.0
        %v6603 = vmax.f32 %v6587, 0.0
        %v6604 = vmax.f32 %v6588, 0.0
        %v6605 = vmax.f32 %v6589, 0.0
        %v6606 = vmax.f32 %v6590, 0.0
        %v6607 = vmax.f32 %v6591, 0.0
        %v6608 = vmax.f32 %v6592, 0.0
        %v6609 = vmax.f32 %v6593, 0.0
        %v6610 = vmax.f32 %v6594, 0.0
        %s6611 = sld [smem:[#allocation5 + $0x1c]]
        %v6612 = vstv %s6611
        %v6613 = vmul.f32 %v6595, %v6612
        %v6614 = vmul.f32 %v6596, %v6612
        %v6615 = vmul.f32 %v6597, %v6612
        %v6616 = vmul.f32 %v6598, %v6612
        %v6617 = vmul.f32 %v6599, %v6612
        %v6618 = vmul.f32 %v6600, %v6612
        %v6619 = vmul.f32 %v6601, %v6612
        %v6620 = vmul.f32 %v6602, %v6612
        %v6621 = vmul.f32 %v6603, %v6612
        %v6622 = vmul.f32 %v6604, %v6612
        %v6623 = vmul.f32 %v6605, %v6612
        %v6624 = vmul.f32 %v6606, %v6612
        %v6625 = vmul.f32 %v6607, %v6612
        %v6626 = vmul.f32 %v6608, %v6612
        %v6627 = vmul.f32 %v6609, %v6612
        %v6628 = vmul.f32 %v6610, %v6612
        %v6629 = vadd.f32 %v6461, %v6613
        %v6630 = vadd.f32 %v6462, %v6614
        %v6631 = vadd.f32 %v6463, %v6615
        %v6632 = vadd.f32 %v6464, %v6616
        %v6633 = vadd.f32 %v6465, %v6617
        %v6634 = vadd.f32 %v6466, %v6618
        %v6635 = vadd.f32 %v6467, %v6619
        %v6636 = vadd.f32 %v6468, %v6620
        %v6637 = vadd.f32 %v6469, %v6621
        %v6638 = vadd.f32 %v6470, %v6622
        %v6639 = vadd.f32 %v6471, %v6623
        %v6640 = vadd.f32 %v6472, %v6624
        %v6641 = vadd.f32 %v6473, %v6625
        %v6642 = vadd.f32 %v6474, %v6626
        %v6643 = vadd.f32 %v6475, %v6627
        %v6644 = vadd.f32 %v6476, %v6628
        %6645 = vset.pattern.permute.xlu0 29
        %6646 = vperm.xlu0 %6645, %v1452
        %v6647 = vpop.permute.xlu0 %6646
        %6649 = vset.pattern.permute.xlu0 29
        %6650 = vperm.xlu0 %6649, %v1457
        %v6651 = vpop.permute.xlu0 %6650
        %6653 = vset.pattern.permute.xlu0 29
        %6654 = vperm.xlu0 %6653, %v1462
        %v6655 = vpop.permute.xlu0 %6654
        %6657 = vset.pattern.permute.xlu0 29
        %6658 = vperm.xlu0 %6657, %v1467
        %v6659 = vpop.permute.xlu0 %6658
        %6661 = vset.pattern.permute.xlu0 29
        %6662 = vperm.xlu0 %6661, %v1472
        %v6663 = vpop.permute.xlu0 %6662
        %6665 = vset.pattern.permute.xlu0 29
        %6666 = vperm.xlu0 %6665, %v1477
        %v6667 = vpop.permute.xlu0 %6666
        %6669 = vset.pattern.permute.xlu0 29
        %6670 = vperm.xlu0 %6669, %v1482
        %v6671 = vpop.permute.xlu0 %6670
        %6673 = vset.pattern.permute.xlu0 29
        %6674 = vperm.xlu0 %6673, %v1487
        %v6675 = vpop.permute.xlu0 %6674
        %6677 = vset.pattern.permute.xlu0 29
        %6678 = vperm.xlu0 %6677, %v1492
        %v6679 = vpop.permute.xlu0 %6678
        %6681 = vset.pattern.permute.xlu0 29
        %6682 = vperm.xlu0 %6681, %v1497
        %v6683 = vpop.permute.xlu0 %6682
        %6685 = vset.pattern.permute.xlu0 29
        %6686 = vperm.xlu0 %6685, %v1502
        %v6687 = vpop.permute.xlu0 %6686
        %6689 = vset.pattern.permute.xlu0 29
        %6690 = vperm.xlu0 %6689, %v1507
        %v6691 = vpop.permute.xlu0 %6690
        %6693 = vset.pattern.permute.xlu0 29
        %6694 = vperm.xlu0 %6693, %v1512
        %v6695 = vpop.permute.xlu0 %6694
        %6697 = vset.pattern.permute.xlu0 29
        %6698 = vperm.xlu0 %6697, %v1517
        %v6699 = vpop.permute.xlu0 %6698
        %6701 = vset.pattern.permute.xlu0 29
        %6702 = vperm.xlu0 %6701, %v1522
        %v6703 = vpop.permute.xlu0 %6702
        %6705 = vset.pattern.permute.xlu0 29
        %6706 = vperm.xlu0 %6705, %v1527
        %v6707 = vpop.permute.xlu0 %6706
        %v6709 = vlaneseq
        %v6710 = vshrl.u32 %v6709, 7
        %v6711 = vsub.s32 5, %v6710
        %v6712 = vrot.slane %v1744, %v6711
        %v6713 = vadd.f32 %v6647, %v6712
        %v6714 = vadd.f32 %v6651, %v6712
        %v6715 = vadd.f32 %v6655, %v6712
        %v6716 = vadd.f32 %v6659, %v6712
        %v6717 = vadd.f32 %v6663, %v6712
        %v6718 = vadd.f32 %v6667, %v6712
        %v6719 = vadd.f32 %v6671, %v6712
        %v6720 = vadd.f32 %v6675, %v6712
        %v6721 = vadd.f32 %v6679, %v6712
        %v6722 = vadd.f32 %v6683, %v6712
        %v6723 = vadd.f32 %v6687, %v6712
        %v6724 = vadd.f32 %v6691, %v6712
        %v6725 = vadd.f32 %v6695, %v6712
        %v6726 = vadd.f32 %v6699, %v6712
        %v6727 = vadd.f32 %v6703, %v6712
        %v6728 = vadd.f32 %v6707, %v6712
        %s6729 = sld [smem:[#allocation3 + $0x1d]]
        %v6730 = vstv %s6729
        %v6731 = vmul.f32 %v1221, %v6730
        %v6732 = vmul.f32 %v1228, %v6730
        %v6733 = vmul.f32 %v1235, %v6730
        %v6734 = vmul.f32 %v1242, %v6730
        %v6735 = vmul.f32 %v1249, %v6730
        %v6736 = vmul.f32 %v1256, %v6730
        %v6737 = vmul.f32 %v1263, %v6730
        %v6738 = vmul.f32 %v1270, %v6730
        %v6739 = vmul.f32 %v1277, %v6730
        %v6740 = vmul.f32 %v1284, %v6730
        %v6741 = vmul.f32 %v1291, %v6730
        %v6742 = vmul.f32 %v1298, %v6730
        %v6743 = vmul.f32 %v1305, %v6730
        %v6744 = vmul.f32 %v1312, %v6730
        %v6745 = vmul.f32 %v1319, %v6730
        %v6746 = vmul.f32 %v1326, %v6730
        %v6747 = vadd.f32 %v6713, %v6731
        %v6748 = vadd.f32 %v6714, %v6732
        %v6749 = vadd.f32 %v6715, %v6733
        %v6750 = vadd.f32 %v6716, %v6734
        %v6751 = vadd.f32 %v6717, %v6735
        %v6752 = vadd.f32 %v6718, %v6736
        %v6753 = vadd.f32 %v6719, %v6737
        %v6754 = vadd.f32 %v6720, %v6738
        %v6755 = vadd.f32 %v6721, %v6739
        %v6756 = vadd.f32 %v6722, %v6740
        %v6757 = vadd.f32 %v6723, %v6741
        %v6758 = vadd.f32 %v6724, %v6742
        %v6759 = vadd.f32 %v6725, %v6743
        %v6760 = vadd.f32 %v6726, %v6744
        %v6761 = vadd.f32 %v6727, %v6745
        %v6762 = vadd.f32 %v6728, %v6746
        %v6763 = vmax.f32 %v6747, 0.0
        %v6764 = vmax.f32 %v6748, 0.0
        %v6765 = vmax.f32 %v6749, 0.0
        %v6766 = vmax.f32 %v6750, 0.0
        %v6767 = vmax.f32 %v6751, 0.0
        %v6768 = vmax.f32 %v6752, 0.0
        %v6769 = vmax.f32 %v6753, 0.0
        %v6770 = vmax.f32 %v6754, 0.0
        %v6771 = vmax.f32 %v6755, 0.0
        %v6772 = vmax.f32 %v6756, 0.0
        %v6773 = vmax.f32 %v6757, 0.0
        %v6774 = vmax.f32 %v6758, 0.0
        %v6775 = vmax.f32 %v6759, 0.0
        %v6776 = vmax.f32 %v6760, 0.0
        %v6777 = vmax.f32 %v6761, 0.0
        %v6778 = vmax.f32 %v6762, 0.0
        %s6779 = sld [smem:[#allocation5 + $0x1d]]
        %v6780 = vstv %s6779
        %v6781 = vmul.f32 %v6763, %v6780
        %v6782 = vmul.f32 %v6764, %v6780
        %v6783 = vmul.f32 %v6765, %v6780
        %v6784 = vmul.f32 %v6766, %v6780
        %v6785 = vmul.f32 %v6767, %v6780
        %v6786 = vmul.f32 %v6768, %v6780
        %v6787 = vmul.f32 %v6769, %v6780
        %v6788 = vmul.f32 %v6770, %v6780
        %v6789 = vmul.f32 %v6771, %v6780
        %v6790 = vmul.f32 %v6772, %v6780
        %v6791 = vmul.f32 %v6773, %v6780
        %v6792 = vmul.f32 %v6774, %v6780
        %v6793 = vmul.f32 %v6775, %v6780
        %v6794 = vmul.f32 %v6776, %v6780
        %v6795 = vmul.f32 %v6777, %v6780
        %v6796 = vmul.f32 %v6778, %v6780
        %v6797 = vadd.f32 %v6629, %v6781
        %v6798 = vadd.f32 %v6630, %v6782
        %v6799 = vadd.f32 %v6631, %v6783
        %v6800 = vadd.f32 %v6632, %v6784
        %v6801 = vadd.f32 %v6633, %v6785
        %v6802 = vadd.f32 %v6634, %v6786
        %v6803 = vadd.f32 %v6635, %v6787
        %v6804 = vadd.f32 %v6636, %v6788
        %v6805 = vadd.f32 %v6637, %v6789
        %v6806 = vadd.f32 %v6638, %v6790
        %v6807 = vadd.f32 %v6639, %v6791
        %v6808 = vadd.f32 %v6640, %v6792
        %v6809 = vadd.f32 %v6641, %v6793
        %v6810 = vadd.f32 %v6642, %v6794
        %v6811 = vadd.f32 %v6643, %v6795
        %v6812 = vadd.f32 %v6644, %v6796
        %6813 = vset.pattern.permute.xlu0 30
        %6814 = vperm.xlu0 %6813, %v1452
        %v6815 = vpop.permute.xlu0 %6814
        %6817 = vset.pattern.permute.xlu0 30
        %6818 = vperm.xlu0 %6817, %v1457
        %v6819 = vpop.permute.xlu0 %6818
        %6821 = vset.pattern.permute.xlu0 30
        %6822 = vperm.xlu0 %6821, %v1462
        %v6823 = vpop.permute.xlu0 %6822
        %6825 = vset.pattern.permute.xlu0 30
        %6826 = vperm.xlu0 %6825, %v1467
        %v6827 = vpop.permute.xlu0 %6826
        %6829 = vset.pattern.permute.xlu0 30
        %6830 = vperm.xlu0 %6829, %v1472
        %v6831 = vpop.permute.xlu0 %6830
        %6833 = vset.pattern.permute.xlu0 30
        %6834 = vperm.xlu0 %6833, %v1477
        %v6835 = vpop.permute.xlu0 %6834
        %6837 = vset.pattern.permute.xlu0 30
        %6838 = vperm.xlu0 %6837, %v1482
        %v6839 = vpop.permute.xlu0 %6838
        %6841 = vset.pattern.permute.xlu0 30
        %6842 = vperm.xlu0 %6841, %v1487
        %v6843 = vpop.permute.xlu0 %6842
        %6845 = vset.pattern.permute.xlu0 30
        %6846 = vperm.xlu0 %6845, %v1492
        %v6847 = vpop.permute.xlu0 %6846
        %6849 = vset.pattern.permute.xlu0 30
        %6850 = vperm.xlu0 %6849, %v1497
        %v6851 = vpop.permute.xlu0 %6850
        %6853 = vset.pattern.permute.xlu0 30
        %6854 = vperm.xlu0 %6853, %v1502
        %v6855 = vpop.permute.xlu0 %6854
        %6857 = vset.pattern.permute.xlu0 30
        %6858 = vperm.xlu0 %6857, %v1507
        %v6859 = vpop.permute.xlu0 %6858
        %6861 = vset.pattern.permute.xlu0 30
        %6862 = vperm.xlu0 %6861, %v1512
        %v6863 = vpop.permute.xlu0 %6862
        %6865 = vset.pattern.permute.xlu0 30
        %6866 = vperm.xlu0 %6865, %v1517
        %v6867 = vpop.permute.xlu0 %6866
        %6869 = vset.pattern.permute.xlu0 30
        %6870 = vperm.xlu0 %6869, %v1522
        %v6871 = vpop.permute.xlu0 %6870
        %6873 = vset.pattern.permute.xlu0 30
        %6874 = vperm.xlu0 %6873, %v1527
        %v6875 = vpop.permute.xlu0 %6874
        %v6877 = vlaneseq
        %v6878 = vshrl.u32 %v6877, 7
        %v6879 = vsub.s32 6, %v6878
        %v6880 = vrot.slane %v1744, %v6879
        %v6881 = vadd.f32 %v6815, %v6880
        %v6882 = vadd.f32 %v6819, %v6880
        %v6883 = vadd.f32 %v6823, %v6880
        %v6884 = vadd.f32 %v6827, %v6880
        %v6885 = vadd.f32 %v6831, %v6880
        %v6886 = vadd.f32 %v6835, %v6880
        %v6887 = vadd.f32 %v6839, %v6880
        %v6888 = vadd.f32 %v6843, %v6880
        %v6889 = vadd.f32 %v6847, %v6880
        %v6890 = vadd.f32 %v6851, %v6880
        %v6891 = vadd.f32 %v6855, %v6880
        %v6892 = vadd.f32 %v6859, %v6880
        %v6893 = vadd.f32 %v6863, %v6880
        %v6894 = vadd.f32 %v6867, %v6880
        %v6895 = vadd.f32 %v6871, %v6880
        %v6896 = vadd.f32 %v6875, %v6880
        %s6897 = sld [smem:[#allocation3 + $0x1e]]
        %v6898 = vstv %s6897
        %v6899 = vmul.f32 %v1221, %v6898
        %v6900 = vmul.f32 %v1228, %v6898
        %v6901 = vmul.f32 %v1235, %v6898
        %v6902 = vmul.f32 %v1242, %v6898
        %v6903 = vmul.f32 %v1249, %v6898
        %v6904 = vmul.f32 %v1256, %v6898
        %v6905 = vmul.f32 %v1263, %v6898
        %v6906 = vmul.f32 %v1270, %v6898
        %v6907 = vmul.f32 %v1277, %v6898
        %v6908 = vmul.f32 %v1284, %v6898
        %v6909 = vmul.f32 %v1291, %v6898
        %v6910 = vmul.f32 %v1298, %v6898
        %v6911 = vmul.f32 %v1305, %v6898
        %v6912 = vmul.f32 %v1312, %v6898
        %v6913 = vmul.f32 %v1319, %v6898
        %v6914 = vmul.f32 %v1326, %v6898
        %v6915 = vadd.f32 %v6881, %v6899
        %v6916 = vadd.f32 %v6882, %v6900
        %v6917 = vadd.f32 %v6883, %v6901
        %v6918 = vadd.f32 %v6884, %v6902
        %v6919 = vadd.f32 %v6885, %v6903
        %v6920 = vadd.f32 %v6886, %v6904
        %v6921 = vadd.f32 %v6887, %v6905
        %v6922 = vadd.f32 %v6888, %v6906
        %v6923 = vadd.f32 %v6889, %v6907
        %v6924 = vadd.f32 %v6890, %v6908
        %v6925 = vadd.f32 %v6891, %v6909
        %v6926 = vadd.f32 %v6892, %v6910
        %v6927 = vadd.f32 %v6893, %v6911
        %v6928 = vadd.f32 %v6894, %v6912
        %v6929 = vadd.f32 %v6895, %v6913
        %v6930 = vadd.f32 %v6896, %v6914
        %v6931 = vmax.f32 %v6915, 0.0
        %v6932 = vmax.f32 %v6916, 0.0
        %v6933 = vmax.f32 %v6917, 0.0
        %v6934 = vmax.f32 %v6918, 0.0
        %v6935 = vmax.f32 %v6919, 0.0
        %v6936 = vmax.f32 %v6920, 0.0
        %v6937 = vmax.f32 %v6921, 0.0
        %v6938 = vmax.f32 %v6922, 0.0
        %v6939 = vmax.f32 %v6923, 0.0
        %v6940 = vmax.f32 %v6924, 0.0
        %v6941 = vmax.f32 %v6925, 0.0
        %v6942 = vmax.f32 %v6926, 0.0
        %v6943 = vmax.f32 %v6927, 0.0
        %v6944 = vmax.f32 %v6928, 0.0
        %v6945 = vmax.f32 %v6929, 0.0
        %v6946 = vmax.f32 %v6930, 0.0
        %s6947 = sld [smem:[#allocation5 + $0x1e]]
        %v6948 = vstv %s6947
        %v6949 = vmul.f32 %v6931, %v6948
        %v6950 = vmul.f32 %v6932, %v6948
        %v6951 = vmul.f32 %v6933, %v6948
        %v6952 = vmul.f32 %v6934, %v6948
        %v6953 = vmul.f32 %v6935, %v6948
        %v6954 = vmul.f32 %v6936, %v6948
        %v6955 = vmul.f32 %v6937, %v6948
        %v6956 = vmul.f32 %v6938, %v6948
        %v6957 = vmul.f32 %v6939, %v6948
        %v6958 = vmul.f32 %v6940, %v6948
        %v6959 = vmul.f32 %v6941, %v6948
        %v6960 = vmul.f32 %v6942, %v6948
        %v6961 = vmul.f32 %v6943, %v6948
        %v6962 = vmul.f32 %v6944, %v6948
        %v6963 = vmul.f32 %v6945, %v6948
        %v6964 = vmul.f32 %v6946, %v6948
        %v6965 = vadd.f32 %v6797, %v6949
        %v6966 = vadd.f32 %v6798, %v6950
        %v6967 = vadd.f32 %v6799, %v6951
        %v6968 = vadd.f32 %v6800, %v6952
        %v6969 = vadd.f32 %v6801, %v6953
        %v6970 = vadd.f32 %v6802, %v6954
        %v6971 = vadd.f32 %v6803, %v6955
        %v6972 = vadd.f32 %v6804, %v6956
        %v6973 = vadd.f32 %v6805, %v6957
        %v6974 = vadd.f32 %v6806, %v6958
        %v6975 = vadd.f32 %v6807, %v6959
        %v6976 = vadd.f32 %v6808, %v6960
        %v6977 = vadd.f32 %v6809, %v6961
        %v6978 = vadd.f32 %v6810, %v6962
        %v6979 = vadd.f32 %v6811, %v6963
        %v6980 = vadd.f32 %v6812, %v6964
        %6981 = vset.pattern.permute.xlu0 31
        %6982 = vperm.xlu0 %6981, %v1452
        %v6983 = vpop.permute.xlu0 %6982
        %6985 = vset.pattern.permute.xlu0 31
        %6986 = vperm.xlu0 %6985, %v1457
        %v6987 = vpop.permute.xlu0 %6986
        %6989 = vset.pattern.permute.xlu0 31
        %6990 = vperm.xlu0 %6989, %v1462
        %v6991 = vpop.permute.xlu0 %6990
        %6993 = vset.pattern.permute.xlu0 31
        %6994 = vperm.xlu0 %6993, %v1467
        %v6995 = vpop.permute.xlu0 %6994
        %6997 = vset.pattern.permute.xlu0 31
        %6998 = vperm.xlu0 %6997, %v1472
        %v6999 = vpop.permute.xlu0 %6998
        %7001 = vset.pattern.permute.xlu0 31
        %7002 = vperm.xlu0 %7001, %v1477
        %v7003 = vpop.permute.xlu0 %7002
        %7005 = vset.pattern.permute.xlu0 31
        %7006 = vperm.xlu0 %7005, %v1482
        %v7007 = vpop.permute.xlu0 %7006
        %7009 = vset.pattern.permute.xlu0 31
        %7010 = vperm.xlu0 %7009, %v1487
        %v7011 = vpop.permute.xlu0 %7010
        %7013 = vset.pattern.permute.xlu0 31
        %7014 = vperm.xlu0 %7013, %v1492
        %v7015 = vpop.permute.xlu0 %7014
        %7017 = vset.pattern.permute.xlu0 31
        %7018 = vperm.xlu0 %7017, %v1497
        %v7019 = vpop.permute.xlu0 %7018
        %7021 = vset.pattern.permute.xlu0 31
        %7022 = vperm.xlu0 %7021, %v1502
        %v7023 = vpop.permute.xlu0 %7022
        %7025 = vset.pattern.permute.xlu0 31
        %7026 = vperm.xlu0 %7025, %v1507
        %v7027 = vpop.permute.xlu0 %7026
        %7029 = vset.pattern.permute.xlu0 31
        %7030 = vperm.xlu0 %7029, %v1512
        %v7031 = vpop.permute.xlu0 %7030
        %7033 = vset.pattern.permute.xlu0 31
        %7034 = vperm.xlu0 %7033, %v1517
        %v7035 = vpop.permute.xlu0 %7034
        %7037 = vset.pattern.permute.xlu0 31
        %7038 = vperm.xlu0 %7037, %v1522
        %v7039 = vpop.permute.xlu0 %7038
        %7041 = vset.pattern.permute.xlu0 31
        %7042 = vperm.xlu0 %7041, %v1527
        %v7043 = vpop.permute.xlu0 %7042
        %v7045 = vlaneseq
        %v7046 = vshrl.u32 %v7045, 7
        %v7047 = vsub.s32 7, %v7046
        %v7048 = vrot.slane %v1744, %v7047
        %v7049 = vadd.f32 %v6983, %v7048
        %v7050 = vadd.f32 %v6987, %v7048
        %v7051 = vadd.f32 %v6991, %v7048
        %v7052 = vadd.f32 %v6995, %v7048
        %v7053 = vadd.f32 %v6999, %v7048
        %v7054 = vadd.f32 %v7003, %v7048
        %v7055 = vadd.f32 %v7007, %v7048
        %v7056 = vadd.f32 %v7011, %v7048
        %v7057 = vadd.f32 %v7015, %v7048
        %v7058 = vadd.f32 %v7019, %v7048
        %v7059 = vadd.f32 %v7023, %v7048
        %v7060 = vadd.f32 %v7027, %v7048
        %v7061 = vadd.f32 %v7031, %v7048
        %v7062 = vadd.f32 %v7035, %v7048
        %v7063 = vadd.f32 %v7039, %v7048
        %v7064 = vadd.f32 %v7043, %v7048
        %s7065 = sld [smem:[#allocation3 + $0x1f]]
        %v7066 = vstv %s7065
        %v7067 = vmul.f32 %v1221, %v7066
        %v7068 = vmul.f32 %v1228, %v7066
        %v7069 = vmul.f32 %v1235, %v7066
        %v7070 = vmul.f32 %v1242, %v7066
        %v7071 = vmul.f32 %v1249, %v7066
        %v7072 = vmul.f32 %v1256, %v7066
        %v7073 = vmul.f32 %v1263, %v7066
        %v7074 = vmul.f32 %v1270, %v7066
        %v7075 = vmul.f32 %v1277, %v7066
        %v7076 = vmul.f32 %v1284, %v7066
        %v7077 = vmul.f32 %v1291, %v7066
        %v7078 = vmul.f32 %v1298, %v7066
        %v7079 = vmul.f32 %v1305, %v7066
        %v7080 = vmul.f32 %v1312, %v7066
        %v7081 = vmul.f32 %v1319, %v7066
        %v7082 = vmul.f32 %v1326, %v7066
        %v7083 = vadd.f32 %v7049, %v7067
        %v7084 = vadd.f32 %v7050, %v7068
        %v7085 = vadd.f32 %v7051, %v7069
        %v7086 = vadd.f32 %v7052, %v7070
        %v7087 = vadd.f32 %v7053, %v7071
        %v7088 = vadd.f32 %v7054, %v7072
        %v7089 = vadd.f32 %v7055, %v7073
        %v7090 = vadd.f32 %v7056, %v7074
        %v7091 = vadd.f32 %v7057, %v7075
        %v7092 = vadd.f32 %v7058, %v7076
        %v7093 = vadd.f32 %v7059, %v7077
        %v7094 = vadd.f32 %v7060, %v7078
        %v7095 = vadd.f32 %v7061, %v7079
        %v7096 = vadd.f32 %v7062, %v7080
        %v7097 = vadd.f32 %v7063, %v7081
        %v7098 = vadd.f32 %v7064, %v7082
        %v7099 = vmax.f32 %v7083, 0.0
        %v7100 = vmax.f32 %v7084, 0.0
        %v7101 = vmax.f32 %v7085, 0.0
        %v7102 = vmax.f32 %v7086, 0.0
        %v7103 = vmax.f32 %v7087, 0.0
        %v7104 = vmax.f32 %v7088, 0.0
        %v7105 = vmax.f32 %v7089, 0.0
        %v7106 = vmax.f32 %v7090, 0.0
        %v7107 = vmax.f32 %v7091, 0.0
        %v7108 = vmax.f32 %v7092, 0.0
        %v7109 = vmax.f32 %v7093, 0.0
        %v7110 = vmax.f32 %v7094, 0.0
        %v7111 = vmax.f32 %v7095, 0.0
        %v7112 = vmax.f32 %v7096, 0.0
        %v7113 = vmax.f32 %v7097, 0.0
        %v7114 = vmax.f32 %v7098, 0.0
        %s7115 = sld [smem:[#allocation5 + $0x1f]]
        %v7116 = vstv %s7115
        %v7117 = vmul.f32 %v7099, %v7116
        %v7118 = vmul.f32 %v7100, %v7116
        %v7119 = vmul.f32 %v7101, %v7116
        %v7120 = vmul.f32 %v7102, %v7116
        %v7121 = vmul.f32 %v7103, %v7116
        %v7122 = vmul.f32 %v7104, %v7116
        %v7123 = vmul.f32 %v7105, %v7116
        %v7124 = vmul.f32 %v7106, %v7116
        %v7125 = vmul.f32 %v7107, %v7116
        %v7126 = vmul.f32 %v7108, %v7116
        %v7127 = vmul.f32 %v7109, %v7116
        %v7128 = vmul.f32 %v7110, %v7116
        %v7129 = vmul.f32 %v7111, %v7116
        %v7130 = vmul.f32 %v7112, %v7116
        %v7131 = vmul.f32 %v7113, %v7116
        %v7132 = vmul.f32 %v7114, %v7116
        %v7133 = vadd.f32 %v6965, %v7117
        %v7134 = vadd.f32 %v6966, %v7118
        %v7135 = vadd.f32 %v6967, %v7119
        %v7136 = vadd.f32 %v6968, %v7120
        %v7137 = vadd.f32 %v6969, %v7121
        %v7138 = vadd.f32 %v6970, %v7122
        %v7139 = vadd.f32 %v6971, %v7123
        %v7140 = vadd.f32 %v6972, %v7124
        %v7141 = vadd.f32 %v6973, %v7125
        %v7142 = vadd.f32 %v6974, %v7126
        %v7143 = vadd.f32 %v6975, %v7127
        %v7144 = vadd.f32 %v6976, %v7128
        %v7145 = vadd.f32 %v6977, %v7129
        %v7146 = vadd.f32 %v6978, %v7130
        %v7147 = vadd.f32 %v6979, %v7131
        %v7148 = vadd.f32 %v6980, %v7132
        %v7149 = vld [vmem:[#allocation2] sm:$0x1]
        %v7151 = vlaneseq
        %v7152 = vshrl.u32 %v7151, 7
        %v7153 = vsub.s32 0, %v7152
        %v7154 = vrot.slane %v7149, %v7153
        %7155 = vset.pattern.permute.xlu0 0
        %7156 = vperm.xlu0 %7155, %v7154
        %v7157 = vpop.permute.xlu0 %7156
        %v7159 = vadd.f32 %v7133, %v7157
        %v7160 = vadd.f32 %v7134, %v7157
        %v7161 = vadd.f32 %v7135, %v7157
        %v7162 = vadd.f32 %v7136, %v7157
        %v7163 = vadd.f32 %v7137, %v7157
        %v7164 = vadd.f32 %v7138, %v7157
        %v7165 = vadd.f32 %v7139, %v7157
        %v7166 = vadd.f32 %v7140, %v7157
        %v7167 = vadd.f32 %v7141, %v7157
        %v7168 = vadd.f32 %v7142, %v7157
        %v7169 = vadd.f32 %v7143, %v7157
        %v7170 = vadd.f32 %v7144, %v7157
        %v7171 = vadd.f32 %v7145, %v7157
        %v7172 = vadd.f32 %v7146, %v7157
        %v7173 = vadd.f32 %v7147, %v7157
        %v7174 = vadd.f32 %v7148, %v7157
        %v7175 = vxor.u32 %v7159, 2147483648
        %v7176 = vxor.u32 %v7160, 2147483648
        %v7177 = vxor.u32 %v7161, 2147483648
        %v7178 = vxor.u32 %v7162, 2147483648
        %v7179 = vxor.u32 %v7163, 2147483648
        %v7180 = vxor.u32 %v7164, 2147483648
        %v7181 = vxor.u32 %v7165, 2147483648
        %v7182 = vxor.u32 %v7166, 2147483648
        %v7183 = vxor.u32 %v7167, 2147483648
        %v7184 = vxor.u32 %v7168, 2147483648
        %v7185 = vxor.u32 %v7169, 2147483648
        %v7186 = vxor.u32 %v7170, 2147483648
        %v7187 = vxor.u32 %v7171, 2147483648
        %v7188 = vxor.u32 %v7172, 2147483648
        %v7189 = vxor.u32 %v7173, 2147483648
        %v7190 = vxor.u32 %v7174, 2147483648
        %v7191 = vmul.f32 %v7175, 1.442695
        %v7192 = vpow.pop %v7191
        %v7193 = vmul.f32 %v7176, 1.442695
        %v7194 = vpow.pop %v7193
        %v7195 = vmul.f32 %v7177, 1.442695
        %v7196 = vpow.pop %v7195
        %v7197 = vmul.f32 %v7178, 1.442695
        %v7198 = vpow.pop %v7197
        %v7199 = vmul.f32 %v7179, 1.442695
        %v7200 = vpow.pop %v7199
        %v7201 = vmul.f32 %v7180, 1.442695
        %v7202 = vpow.pop %v7201
        %v7203 = vmul.f32 %v7181, 1.442695
        %v7204 = vpow.pop %v7203
        %v7205 = vmul.f32 %v7182, 1.442695
        %v7206 = vpow.pop %v7205
        %v7207 = vmul.f32 %v7183, 1.442695
        %v7208 = vpow.pop %v7207
        %v7209 = vmul.f32 %v7184, 1.442695
        %v7210 = vpow.pop %v7209
        %v7211 = vmul.f32 %v7185, 1.442695
        %v7212 = vpow.pop %v7211
        %v7213 = vmul.f32 %v7186, 1.442695
        %v7214 = vpow.pop %v7213
        %v7215 = vmul.f32 %v7187, 1.442695
        %v7216 = vpow.pop %v7215
        %v7217 = vmul.f32 %v7188, 1.442695
        %v7218 = vpow.pop %v7217
        %v7219 = vmul.f32 %v7189, 1.442695
        %v7220 = vpow.pop %v7219
        %v7221 = vmul.f32 %v7190, 1.442695
        %v7222 = vpow.pop %v7221
        %v7223 = vadd.f32 %v7192, 1.0
        %v7224 = vadd.f32 %v7194, 1.0
        %v7225 = vadd.f32 %v7196, 1.0
        %v7226 = vadd.f32 %v7198, 1.0
        %v7227 = vadd.f32 %v7200, 1.0
        %v7228 = vadd.f32 %v7202, 1.0
        %v7229 = vadd.f32 %v7204, 1.0
        %v7230 = vadd.f32 %v7206, 1.0
        %v7231 = vadd.f32 %v7208, 1.0
        %v7232 = vadd.f32 %v7210, 1.0
        %v7233 = vadd.f32 %v7212, 1.0
        %v7234 = vadd.f32 %v7214, 1.0
        %v7235 = vadd.f32 %v7216, 1.0
        %v7236 = vadd.f32 %v7218, 1.0
        %v7237 = vadd.f32 %v7220, 1.0
        %v7238 = vadd.f32 %v7222, 1.0
        %v7239 = vrcp.pop %v7223
        %v7240 = vmul.f32 1.0, %v7239
        %v7241 = vrcp.pop %v7224
        %v7242 = vmul.f32 1.0, %v7241
        %v7243 = vrcp.pop %v7225
        %v7244 = vmul.f32 1.0, %v7243
        %v7245 = vrcp.pop %v7226
        %v7246 = vmul.f32 1.0, %v7245
        %v7247 = vrcp.pop %v7227
        %v7248 = vmul.f32 1.0, %v7247
        %v7249 = vrcp.pop %v7228
        %v7250 = vmul.f32 1.0, %v7249
        %v7251 = vrcp.pop %v7229
        %v7252 = vmul.f32 1.0, %v7251
        %v7253 = vrcp.pop %v7230
        %v7254 = vmul.f32 1.0, %v7253
        %v7255 = vrcp.pop %v7231
        %v7256 = vmul.f32 1.0, %v7255
        %v7257 = vrcp.pop %v7232
        %v7258 = vmul.f32 1.0, %v7257
        %v7259 = vrcp.pop %v7233
        %v7260 = vmul.f32 1.0, %v7259
        %v7261 = vrcp.pop %v7234
        %v7262 = vmul.f32 1.0, %v7261
        %v7263 = vrcp.pop %v7235
        %v7264 = vmul.f32 1.0, %v7263
        %v7265 = vrcp.pop %v7236
        %v7266 = vmul.f32 1.0, %v7265
        %v7267 = vrcp.pop %v7237
        %v7268 = vmul.f32 1.0, %v7267
        %v7269 = vrcp.pop %v7238
        %v7270 = vmul.f32 1.0, %v7269
        %7271 = vst [vmem:[%s502] sm:$0xff] %v7240
        %7272 = vst [vmem:[%s502 + $0x8] sm:$0xff] %v7242
        %7273 = vst [vmem:[%s502 + $0x10] sm:$0xff] %v7244
        %7274 = vst [vmem:[%s502 + $0x18] sm:$0xff] %v7246
        %7275 = vst [vmem:[%s502 + $0x20] sm:$0xff] %v7248
        %7276 = vst [vmem:[%s502 + $0x28] sm:$0xff] %v7250
        %7277 = vst [vmem:[%s502 + $0x30] sm:$0xff] %v7252
        %7278 = vst [vmem:[%s502 + $0x38] sm:$0xff] %v7254
        %7279 = vst [vmem:[%s502 + $0x40] sm:$0xff] %v7256
        %7280 = vst [vmem:[%s502 + $0x48] sm:$0xff] %v7258
        %7281 = vst [vmem:[%s502 + $0x50] sm:$0xff] %v7260
        %7282 = vst [vmem:[%s502 + $0x58] sm:$0xff] %v7262
        %7283 = vst [vmem:[%s502 + $0x60] sm:$0xff] %v7264
        %7284 = vst [vmem:[%s502 + $0x68] sm:$0xff] %v7266
        %7285 = vst [vmem:[%s502 + $0x70] sm:$0xff] %v7268
        %7286 = vst [vmem:[%s502 + $0x78] sm:$0xff] %v7270
        %s7287 = smul.u32 16, %s30
        %p7288 = scmp.lt.s32.totalorder %s29, 1
        %s7289 = scalar_select %p7288, %s29, 1
        %p7290 = scmp.lt.s32.totalorder %s7287, 15
        %s7291 = scalar_select %p7290, %s7287, 15
        %s7292 = smul.addr %s7289, 16
        %s7293 = sadd.s32 %s7291, %s7292
        %s7294 = smul.addr %s7293, 8
        %s7295 = scalar_lea.vmem %s10, %s7294
        // Predicated region
        $region69: #{uedm_forward.5} parent=59 // pred_check
          %p7296 = pneg %p291
        $region70: #{uedm_forward.5} parent=59 // pred_check_branch
          %7298 = sbr.rel (%p7296) target = $region72
        $region71: #{uedm_forward.5} parent=59 // pred_region
          %s7299 = smul.u32 16, %s30
        $region72: #{uedm_forward.5} parent=59 // pred_fallthru
          _
      $region60: #{uedm_forward.5} parent=5 // pred_fallthru
        _
      %p7300 = scmp.le.s32.totalorder 2, %s20
      // Predicated region
      $region73: #{uedm_forward.5} parent=5 // pred_check
        %p7301 = pneg %p7300
      $region74: #{uedm_forward.5} parent=5 // pred_check_branch
        %7303 = sbr.rel (%p7301) target = $region76
      $region75: #{uedm_forward.5} parent=5 // pred_region
        %s7304 = ssub.s32 %s20, 2
        // Predicated region
        $region77: #{uedm_forward.5} parent=75 // pred_check
          %p7305 = pneg %p297
        $region78: #{uedm_forward.5} parent=75 // pred_check_branch
          %7307 = sbr.rel (%p7305) target = $region80
        $region79: #{uedm_forward.5} parent=75 // pred_region
          %s7308 = smul.u32 16, %s32
          %p7309 = scmp.lt.s32.totalorder %s31, 1
          %s7310 = scalar_select %p7309, %s31, 1
          %p7311 = scmp.lt.s32.totalorder %s7308, 15
          %s7312 = scalar_select %p7311, %s7308, 15
          %s7313 = smul.addr %s7310, 16
          %s7314 = sadd.s32 %s7312, %s7313
          %s7315 = smul.addr %s7314, 8
          %s7316 = scalar_lea.vmem %s10, %s7315
        $region80: #{uedm_forward.5} parent=75 // pred_fallthru
          _
      $region76: #{uedm_forward.5} parent=5 // pred_fallthru
        _
    $region6: #{uedm_forward.5} parent=1 // loop_footer
      %s24 = sadd.s32 1, %s20
    $region7: #{uedm_forward.5} parent=1 // loop_footer_branch
      %19 = sbr.rel target = $region3
    $region8: #{uedm_forward.5} parent=1 // loop_exit
      _
    %7317 = vsyncpa [#allocation4], 1
    %s7318 = scalar_lea.sflag [#allocation4], 1
    %7319 = vsyncpa %s7318, 1
    %7320 = vsyncpa [#allocation6], 1

</llo_original>
